<compile_context>
chip_gen: v7x
topology: tpu7x:2x2x1
jax: 0.10.0
libtpu: 0.0.40
codegen_flags: <defaults>
</compile_context>

<pallas_src>
import functools

import jax
import jax.numpy as jnp
from jax import lax
from jax.experimental import pallas as pl
from jax.experimental.pallas import tpu as pltpu


def _round_up(a, b):
    return (a + b - 1) // b * b


def _device_kind():
    try:
        return jax.devices()[0].device_kind.lower()
    except Exception:
        return ""


def _vmem_capacity_bytes():
    try:
        return int(pltpu.get_tpu_info().vmem_capacity_bytes)
    except Exception:
        return 64 * 1024 * 1024   # conservative fallback (v7x per-TC capacity)


# ----------------------------------------------------------------------------
# Pallas kernel: per (batch, HW-tile) deformable sampling + fused tap conv
# ----------------------------------------------------------------------------
def _deform_kernel(*refs, ks, Hp, Wp, Hp_pad, C_pad, CB, tap_batch,
                   modulation, elem_bf16):
    if modulation:
        x_ref, p_ref, m_ref, w_ref, o_ref, xoff_ref = refs
    else:
        x_ref, p_ref, w_ref, o_ref, xoff_ref = refs
        m_ref = None

    N = ks * ks
    T = p_ref.shape[1]                    # HW tile width (multiple of 128 lanes)
    n_blocks = C_pad // CB

    p = p_ref[...]                        # (2N, T) f32 absolute sample coords
    pr, pc = p[:N], p[N:]                 # per-tap row / col coordinates

    fr, fc = jnp.floor(pr), jnp.floor(pc)
    q_lt_r = jnp.clip(fr, 0.0, Hp - 1.0)
    q_rb_r = jnp.clip(fr + 1.0, 0.0, Hp - 1.0)
    q_lt_c = jnp.clip(fc, 0.0, Wp - 1.0)
    q_rb_c = jnp.clip(fc + 1.0, 0.0, Wp - 1.0)
    pr_cl = jnp.clip(pr, 0.0, Hp - 1.0)
    pc_cl = jnp.clip(pc, 0.0, Wp - 1.0)

    # separable bilinear weights (exact DCN reference formula incl. clamp quirks:
    # coincident clamped corners sum their weights, like the torch gather form).
    wr_lt = 1.0 + (q_lt_r - pr_cl)        # (N, T)
    wr_rb = 1.0 - (q_rb_r - pr_cl)
    wc_lt = 1.0 + (q_lt_c - pc_cl)
    wc_rb = 1.0 - (q_rb_c - pc_cl)

    if modulation:
        # fold sigmoid(m) into the column weights: every corner picks it up once
        sig = jax.nn.sigmoid(m_ref[...])  # (N, T)
        wc_lt = wc_lt * sig
        wc_rb = wc_rb * sig

    # exact integer corner indices (avoids f32-equality aliasing for large images)
    i_lt_r = q_lt_r.astype(jnp.int32)
    i_rb_r = q_rb_r.astype(jnp.int32)
    i_lt_c = q_lt_c.astype(jnp.int32)
    i_rb_c = q_rb_c.astype(jnp.int32)

    ri = lax.broadcasted_iota(jnp.int32, (Hp_pad, T), 0)
    ci = lax.broadcasted_iota(jnp.int32, (Wp, T), 0)

    elem_dt = jnp.bfloat16 if elem_bf16 else jnp.float32

    for g0 in range(0, N, tap_batch):     # static unroll over tap groups
        taps = list(range(g0, min(g0 + tap_batch, N)))
        nt = len(taps)

        cms, Rs = [], []
        for n in taps:
            # column one-hot sampler (Wp, T): 2 weighted nonzeros per output column
            Cm = (jnp.where(ci == i_lt_c[n:n + 1], wc_lt[n:n + 1], 0.0)
                  + jnp.where(ci == i_rb_c[n:n + 1], wc_rb[n:n + 1], 0.0))
            cms.append(Cm.astype(jnp.bfloat16))
            # row one-hot weights (Hp_pad, T)
            R = (jnp.where(ri == i_lt_r[n:n + 1], wr_lt[n:n + 1], 0.0)
                 + jnp.where(ri == i_rb_r[n:n + 1], wr_rb[n:n + 1], 0.0))
            Rs.append(R.astype(elem_dt))
        # batched tap group RHS for the MXU: (Wp, nt*T) bf16
        Cm_g = cms[0] if nt == 1 else jnp.concatenate(cms, axis=1)

        def run_block(blk):
            dyn = not isinstance(blk, int)
            start = blk * (CB * Hp_pad)
            if dyn:
                start = pl.multiple_of(start, 8)
            # one CB-channel block of the resident input (bf16)
            xblk = x_ref[pl.ds(start, CB * Hp_pad), :]          # (CB*Hp_pad, Wp)
            # column gather for all taps in the group on the MXU (f32 accumulate)
            z = jnp.dot(xblk, Cm_g,
                        preferred_element_type=jnp.float32)     # (CB*Hp_pad, nt*T)
            z = z.astype(elem_dt)
            for ti, n in enumerate(taps):
                zt = z[:, ti * T:(ti + 1) * T]                  # (CB*Hp_pad, T)
                # per-channel row-weighted reduce, assembled into one (CB, T) slab
                rows = [jnp.sum(zt[c * Hp_pad:(c + 1) * Hp_pad, :] * Rs[ti],
                                axis=0, keepdims=True) for c in range(CB)]
                s = jnp.concatenate(rows, axis=0)               # (CB, T)
                row0 = n * C_pad + blk * CB
                if dyn:
                    row0 = pl.multiple_of(row0, 8)
                # single sublane-aligned (CB, T) store per tap/block
                xoff_ref[pl.ds(row0, CB), :] = s.astype(xoff_ref.dtype)

        if n_blocks <= 2:
            for blk in range(n_blocks):
                run_block(blk)
        else:
            def body(blk, carry):
                run_block(blk)
                return carry
            lax.fori_loop(0, n_blocks, body, None)

    # fused ks*ks-tap conv: one (outc, N*C_pad) @ (N*C_pad, T) bf16 matmul, f32 acc
    o_ref[...] = jnp.dot(w_ref[...], xoff_ref[...],
                         preferred_element_type=jnp.float32)


# ----------------------------------------------------------------------------
# Glue: parameters, offset/modulation convs, layout plumbing, pallas_call
# ----------------------------------------------------------------------------
def conv2d_nchw(x, w, b, stride, padding, precision=None):
    out = lax.conv_general_dilated(
        x, w, window_strides=(stride, stride),
        padding=[(padding, padding), (padding, padding)],
        dimension_numbers=("NCHW", "OIHW", "NCHW"),
        precision=precision)
    if b is not None:
        out = out + b.reshape(1, -1, 1, 1)
    return out


class DeformConv2dPallas:
    def __init__(self, key, inc, outc, kernel_size=3, padding=1, stride=1,
                 modulation=False, hw_tile=512, channel_block=8):
        assert channel_block % 8 == 0, "channel_block must be a multiple of 8"
        self.ks = kernel_size
        self.padding = padding
        self.stride = stride
        self.modulation = modulation
        self.hw_tile = hw_tile            # lane tile for the output spatial axis
        self.cb = channel_block           # channel block for the fused gather
        self.tap_batch = min(kernel_size, 3)
        N = kernel_size * kernel_size
        k1, k2, k3, k4, k5 = jax.random.split(key, 5)
        # main conv: nn.Conv2d(inc, outc, ks, stride=ks, bias=None) -> no bias
        self.conv_w = 0.1 * jax.random.normal(
            k1, (outc, inc, kernel_size, kernel_size), jnp.float32)
        # p_conv: reference inits weight to 0 (constant offsets from the bias);
        # use small random weights so the deformable path is actually exercised.
        self.p_w = 0.1 * jax.random.normal(k2, (2 * N, inc, 3, 3), jnp.float32)
        self.p_b = 0.1 * jax.random.normal(k3, (2 * N,), jnp.float32)
        if modulation:
            self.m_w = 0.1 * jax.random.normal(k4, (N, inc, 3, 3), jnp.float32)
            self.m_b = 0.1 * jax.random.normal(k5, (N,), jnp.float32)
        # TODO(synk): _set_lr backward hook is training-only gradient scaling;
        # it has no forward-pass equivalent and is intentionally omitted.

    def _p_base(self, h, w, dtype):
        ks, N, s = self.ks, self.ks * self.ks, self.stride
        # p_0: output-pixel centers (1-based, stride spacing)
        p0_r = (1.0 + s * jnp.arange(h, dtype=dtype))[:, None] * jnp.ones((1, w), dtype)
        p0_c = jnp.ones((h, 1), dtype) * (1.0 + s * jnp.arange(w, dtype=dtype))[None, :]
        p0 = jnp.concatenate([jnp.broadcast_to(p0_r, (N, h, w)),
                              jnp.broadcast_to(p0_c, (N, h, w))], axis=0)
        # p_n: regular kernel-tap offsets, tap index n = i*ks + j
        r = jnp.arange(-(ks - 1) // 2, (ks - 1) // 2 + 1, dtype=dtype)
        pn = jnp.concatenate([jnp.repeat(r, ks), jnp.tile(r, ks)], axis=0)
        return p0 + pn.reshape(2 * N, 1, 1)        # (2N, h, w)

    def __call__(self, x):
        B, C, H, W = x.shape
        ks, N, pad, CB = self.ks, self.ks * self.ks, self.padding, self.cb

        offset = conv2d_nchw(x, self.p_w, self.p_b, self.stride, 1)     # (B,2N,h,w)
        h, w = offset.shape[2], offset.shape[3]
        m_pre = None
        if self.modulation:
            m_pre = conv2d_nchw(x, self.m_w, self.m_b, self.stride, 1)  # (B,N,h,w)

        if pad:
            x = jnp.pad(x, ((0, 0), (0, 0), (pad, pad), (pad, pad)))
        Hp, Wp = x.shape[2], x.shape[3]

        # absolute sampling coordinates (f32 end-to-end; do NOT cast to bf16)
        p = self._p_base(h, w, jnp.float32)[None] + offset               # (B,2N,h,w)

        # orient the separable gather: contract (MXU) over the larger spatial
        # dim, reduce (VPU) over the smaller one.  Swapping here keeps the
        # kernel oblivious: transpose x spatially and swap the coord halves.
        if Hp > Wp:
            x = jnp.transpose(x, (0, 1, 3, 2))
            p = jnp.concatenate([p[:, N:], p[:, :N]], axis=1)
            Hp, Wp = Wp, Hp

        # input layout for the column-gather matmul: (B, C_pad*Hp_pad, Wp);
        # rows padded to multiples of 8 and channels padded to the block size
        # so per-block sublane slices and (CB, T) stores stay aligned.
        Hp_pad = _round_up(Hp, 8)
        C_pad = _round_up(C, CB)
        x_in = jnp.pad(x, ((0, 0), (0, C_pad - C), (0, Hp_pad - Hp), (0, 0)))
        x_in = x_in.reshape(B, C_pad * Hp_pad, Wp).astype(jnp.bfloat16)

        HW = h * w
        outc = self.conv_w.shape[0]

        # generation-aware tile size / VMEM limit derived from actual buffers
        cap = _vmem_capacity_bytes()
        budget = int(cap * 0.85)

        def est_bytes(T):
            b = 2 * (C_pad * Hp_pad * Wp * 2)             # x (bf16, dbl-buffered)
            b += 2 * (2 * N * T * 4)                      # p
            if self.modulation:
                b += 2 * (N * T * 4)                      # m
            b += 2 * (outc * N * C_pad * 2)               # w2 (bf16)
            b += 2 * (outc * T * 4)                       # out
            b += N * C_pad * T * 2                        # xoff scratch (bf16)
            b += CB * Hp_pad * self.tap_batch * T * 4     # z slab (f32 acc)
            b += (Wp + Hp_pad) * self.tap_batch * T * 4   # one-hot temporaries
            return b

        T = _round_up(min(self.hw_tile, _round_up(HW, 128)), 128)
        while T > 128 and est_bytes(T) > budget:
            T = _round_up(T // 2, 128)
        HW_pad = _round_up(HW, T)
        vmem_limit = int(min(budget,
                             max(min(48 * 1024 * 1024, budget),
                                 int(est_bytes(T) * 1.3) + 4 * 1024 * 1024)))

        p_in = jnp.pad(p.reshape(B, 2 * N, HW),
                       ((0, 0), (0, 0), (0, HW_pad - HW)))
        if self.modulation:
            m_in = jnp.pad(m_pre.reshape(B, N, HW),
                           ((0, 0), (0, 0), (0, HW_pad - HW)))

        # fused lane-dense main-conv weight: (outc, N*C_pad), column n*C_pad + c,
        # tap n = i*ks + j; padded channels get zero weight.  bf16 MXU operand.
        w2 = jnp.transpose(self.conv_w, (0, 2, 3, 1)).reshape(outc, N, C)
        w2 = jnp.pad(w2, ((0, 0), (0, 0), (0, C_pad - C)))
        w2 = w2.reshape(outc, N * C_pad).astype(jnp.bfloat16)

        # bf16 elementwise z*R stage on v6e/v7x (bf16 VALUs); f32 on v5e.
        kind = _device_kind()
        elem_bf16 = not any(t in kind for t in ("v5 lite", "v5lite", "v5e"))

        kernel = functools.partial(
            _deform_kernel, ks=ks, Hp=Hp, Wp=Wp, Hp_pad=Hp_pad, C_pad=C_pad,
            CB=CB, tap_batch=self.tap_batch, modulation=self.modulation,
            elem_bf16=elem_bf16)

        in_specs = [
            # padded input stays resident across the HW tiles (constant over t)
            pl.BlockSpec((None, C_pad * Hp_pad, Wp), lambda b, t: (b, 0, 0)),
            pl.BlockSpec((None, 2 * N, T), lambda b, t: (b, 0, t)),
        ]
        args = [x_in, p_in]
        if self.modulation:
            in_specs.append(pl.BlockSpec((None, N, T), lambda b, t: (b, 0, t)))
            args.append(m_in)
        in_specs.append(pl.BlockSpec((outc, N * C_pad), lambda b, t: (0, 0)))
        args.append(w2)

        out = pl.pallas_call(
            kernel,
            out_shape=jax.ShapeDtypeStruct((B, outc, HW_pad), jnp.float32),
            grid_spec=pltpu.PrefetchScalarGridSpec(
                num_scalar_prefetch=0,
                grid=(B, HW_pad // T),
                in_specs=in_specs,
                out_specs=pl.BlockSpec((None, outc, T), lambda b, t: (b, 0, t)),
                scratch_shapes=[pltpu.VMEM((N * C_pad, T), jnp.bfloat16)]),
            compiler_params=pltpu.CompilerParams(
                dimension_semantics=("parallel", "parallel"),
                vmem_limit_bytes=vmem_limit),
        )(*args)
        return out[:, :, :HW].reshape(B, outc, h, w)


# ----------------------------------------------------------------------------
# Pure-JAX reference (literal transcription of the PyTorch forward) for checking
# ----------------------------------------------------------------------------
def deform_conv_ref(model, x):
    ks, N, pad, s = model.ks, model.ks * model.ks, model.padding, model.stride
    offset = conv2d_nchw(x, model.p_w, model.p_b, s, 1)
    if model.modulation:
        m = jax.nn.sigmoid(conv2d_nchw(x, model.m_w, model.m_b, s, 1))
    B, C, H, W = x.shape
    h, w = offset.shape[2], offset.shape[3]
    if pad:
        x = jnp.pad(x, ((0, 0), (0, 0), (pad, pad), (pad, pad)))
    Hp, Wp = x.shape[2], x.shape[3]
    p = model._p_base(h, w, jnp.float32)[None] + offset
    p = jnp.transpose(p, (0, 2, 3, 1))                                  # (B,h,w,2N)
    q_lt = jnp.floor(p)
    q_rb = q_lt + 1.0
    cr = lambda q: jnp.clip(q, 0.0, Hp - 1.0)
    cc = lambda q: jnp.clip(q, 0.0, Wp - 1.0)
    q_lt = jnp.concatenate([cr(q_lt[..., :N]), cc(q_lt[..., N:])], -1)
    q_rb = jnp.concatenate([cr(q_rb[..., :N]), cc(q_rb[..., N:])], -1)
    q_lb = jnp.concatenate([q_lt[..., :N], q_rb[..., N:]], -1)
    q_rt = jnp.concatenate([q_rb[..., :N], q_lt[..., N:]], -1)
    p = jnp.concatenate([cr(p[..., :N]), cc(p[..., N:])], -1)
    g_lt = (1 + (q_lt[..., :N] - p[..., :N])) * (1 + (q_lt[..., N:] - p[..., N:]))
    g_rb = (1 - (q_rb[..., :N] - p[..., :N])) * (1 - (q_rb[..., N:] - p[..., N:]))
    g_lb = (1 + (q_lb[..., :N] - p[..., :N])) * (1 - (q_lb[..., N:] - p[..., N:]))
    g_rt = (1 - (q_rt[..., :N] - p[..., :N])) * (1 + (q_rt[..., N:] - p[..., N:]))

    def get_x_q(q):
        x_flat = x.reshape(B, C, Hp * Wp)
        idx = (q[..., :N] * Wp + q[..., N:]).astype(jnp.int32)          # (B,h,w,N)
        idx = jnp.broadcast_to(idx.reshape(B, 1, h * w * N), (B, C, h * w * N))
        return jnp.take_along_axis(x_flat, idx, axis=2).reshape(B, C, h, w, N)

    x_off = (g_lt[:, None] * get_x_q(q_lt) + g_rb[:, None] * get_x_q(q_rb)
             + g_lb[:, None] * get_x_q(q_lb) + g_rt[:, None] * get_x_q(q_rt))
    if model.modulation:
        x_off = x_off * jnp.transpose(m, (0, 2, 3, 1))[:, None]
    x_off = x_off.reshape(B, C, h, w, ks, ks)
    x_off = jnp.transpose(x_off, (0, 1, 2, 4, 3, 5)).reshape(B, C, h * ks, w * ks)
    return lax.conv_general_dilated(x_off, model.conv_w, (ks, ks), "VALID",
                                    dimension_numbers=("NCHW", "OIHW", "NCHW"),
                                    precision=lax.Precision.HIGHEST)


if __name__ == "__main__":
    key = jax.random.PRNGKey(0)
    kp, kx = jax.random.split(key)
    B, Cin, H, W, Cout = 2, 4, 16, 16, 8

    model = DeformConv2dPallas(kp, Cin, Cout, kernel_size=3, padding=1, stride=1,
                               modulation=True)
    x = jax.random.normal(kx, (B, Cin, H, W), jnp.float32)

    out = model(x)
    jax.block_until_ready(out)

    ref = deform_conv_ref(model, x)
    assert out.shape == ref.shape == (B, Cout, H, W), (out.shape, ref.shape)
    # kernel runs bf16 MXU operands + f32 accumulation; reference is f32-highest
    scale = float(jnp.max(jnp.abs(ref)))
    err = float(jnp.max(jnp.abs(out - ref)))
    assert err <= 0.05 * scale + 0.05, f"max abs err {err} (ref scale {scale})"
    print("KERNEL_OK")
</pallas_src>

<mosaic_0001>
module attributes {stable_mosaic.version = 11 : i64} {
  func.func @_deform_kernel(%arg0: i32, %arg1: i32, %arg2: memref<1x192x18xbf16, #tpu.memory_space<vmem>>, %arg3: memref<1x18x256xf32, #tpu.memory_space<vmem>>, %arg4: memref<1x9x256xf32, #tpu.memory_space<vmem>>, %arg5: memref<8x72xbf16, #tpu.memory_space<vmem>>, %arg6: memref<1x8x256xf32, #tpu.memory_space<vmem>>, %arg7: memref<72x256xbf16, #tpu.memory_space<vmem>>) attributes {dimension_semantics = [#tpu.dimension_semantics<parallel>, #tpu.dimension_semantics<parallel>], iteration_bounds = array<i64: 2, 1>, scalar_prefetch = 0 : i64, scratch_operands = 1 : i64, tpu.core_type = #tpu.core_type<tc>, window_params = [{transform_indices = @transform_0, window_bounds = array<i64: 1, 192, 18>}, {transform_indices = @transform_1, window_bounds = array<i64: 1, 18, 256>}, {transform_indices = @transform_2, window_bounds = array<i64: 1, 9, 256>}, {pipeline_mode = #tpu.pipeline_mode<synchronous>, transform_indices = @transform_3, window_bounds = array<i64: 8, 72>}, {transform_indices = @transform_4, window_bounds = array<i64: 1, 8, 256>}]} {
    %c0 = arith.constant 0 : index
    %c0_0 = arith.constant 0 : index
    %c0_1 = arith.constant 0 : index
    %0 = vector.load %arg3[%c0, %c0_0, %c0_1] : memref<1x18x256xf32, #tpu.memory_space<vmem>>, vector<1x18x256xf32>
    %1 = vector.shape_cast %0 : vector<1x18x256xf32> to vector<18x256xf32>
    %2 = vector.extract_strided_slice %1 {offsets = [0, 0], sizes = [9, 256], strides = [1, 1]} : vector<18x256xf32> to vector<9x256xf32>
    %3 = vector.extract_strided_slice %1 {offsets = [9, 0], sizes = [9, 256], strides = [1, 1]} : vector<18x256xf32> to vector<9x256xf32>
    %4 = math.floor %2 : vector<9x256xf32>
    %5 = math.floor %3 : vector<9x256xf32>
    %cst = arith.constant 0.000000e+00 : f32
    %cst_2 = arith.constant 1.700000e+01 : f32
    %6 = vector.broadcast %cst : f32 to vector<9x256xf32>
    %7 = arith.maximumf %6, %4 : vector<9x256xf32>
    %8 = vector.broadcast %cst_2 : f32 to vector<9x256xf32>
    %9 = arith.minimumf %8, %7 : vector<9x256xf32>
    %cst_3 = arith.constant 1.000000e+00 : f32
    %10 = vector.broadcast %cst_3 : f32 to vector<9x256xf32>
    %11 = arith.addf %4, %10 : vector<9x256xf32>
    %cst_4 = arith.constant 0.000000e+00 : f32
    %cst_5 = arith.constant 1.700000e+01 : f32
    %12 = vector.broadcast %cst_4 : f32 to vector<9x256xf32>
    %13 = arith.maximumf %12, %11 : vector<9x256xf32>
    %14 = vector.broadcast %cst_5 : f32 to vector<9x256xf32>
    %15 = arith.minimumf %14, %13 : vector<9x256xf32>
    %cst_6 = arith.constant 0.000000e+00 : f32
    %cst_7 = arith.constant 1.700000e+01 : f32
    %16 = vector.broadcast %cst_6 : f32 to vector<9x256xf32>
    %17 = arith.maximumf %16, %5 : vector<9x256xf32>
    %18 = vector.broadcast %cst_7 : f32 to vector<9x256xf32>
    %19 = arith.minimumf %18, %17 : vector<9x256xf32>
    %cst_8 = arith.constant 1.000000e+00 : f32
    %20 = vector.broadcast %cst_8 : f32 to vector<9x256xf32>
    %21 = arith.addf %5, %20 : vector<9x256xf32>
    %cst_9 = arith.constant 0.000000e+00 : f32
    %cst_10 = arith.constant 1.700000e+01 : f32
    %22 = vector.broadcast %cst_9 : f32 to vector<9x256xf32>
    %23 = arith.maximumf %22, %21 : vector<9x256xf32>
    %24 = vector.broadcast %cst_10 : f32 to vector<9x256xf32>
    %25 = arith.minimumf %24, %23 : vector<9x256xf32>
    %cst_11 = arith.constant 0.000000e+00 : f32
    %cst_12 = arith.constant 1.700000e+01 : f32
    %26 = vector.broadcast %cst_11 : f32 to vector<9x256xf32>
    %27 = arith.maximumf %26, %2 : vector<9x256xf32>
    %28 = vector.broadcast %cst_12 : f32 to vector<9x256xf32>
    %29 = arith.minimumf %28, %27 : vector<9x256xf32>
    %cst_13 = arith.constant 0.000000e+00 : f32
    %cst_14 = arith.constant 1.700000e+01 : f32
    %30 = vector.broadcast %cst_13 : f32 to vector<9x256xf32>
    %31 = arith.maximumf %30, %3 : vector<9x256xf32>
    %32 = vector.broadcast %cst_14 : f32 to vector<9x256xf32>
    %33 = arith.minimumf %32, %31 : vector<9x256xf32>
    %34 = arith.subf %9, %29 : vector<9x256xf32>
    %cst_15 = arith.constant 1.000000e+00 : f32
    %35 = vector.broadcast %cst_15 : f32 to vector<9x256xf32>
    %36 = arith.addf %35, %34 : vector<9x256xf32>
    %37 = arith.subf %15, %29 : vector<9x256xf32>
    %cst_16 = arith.constant 1.000000e+00 : f32
    %38 = vector.broadcast %cst_16 : f32 to vector<9x256xf32>
    %39 = arith.subf %38, %37 : vector<9x256xf32>
    %40 = arith.subf %19, %33 : vector<9x256xf32>
    %cst_17 = arith.constant 1.000000e+00 : f32
    %41 = vector.broadcast %cst_17 : f32 to vector<9x256xf32>
    %42 = arith.addf %41, %40 : vector<9x256xf32>
    %43 = arith.subf %25, %33 : vector<9x256xf32>
    %cst_18 = arith.constant 1.000000e+00 : f32
    %44 = vector.broadcast %cst_18 : f32 to vector<9x256xf32>
    %45 = arith.subf %44, %43 : vector<9x256xf32>
    %c0_19 = arith.constant 0 : index
    %c0_20 = arith.constant 0 : index
    %c0_21 = arith.constant 0 : index
    %46 = vector.load %arg4[%c0_19, %c0_20, %c0_21] : memref<1x9x256xf32, #tpu.memory_space<vmem>>, vector<1x9x256xf32>
    %47 = vector.shape_cast %46 : vector<1x9x256xf32> to vector<9x256xf32>
    %48 = arith.negf %47 : vector<9x256xf32>
    %49 = math.exp %48 : vector<9x256xf32>
    %cst_22 = arith.constant 1.000000e+00 : f32
    %50 = vector.broadcast %cst_22 : f32 to vector<9x256xf32>
    %51 = arith.addf %50, %49 : vector<9x256xf32>
    %52 = arith.divf %50, %51 : vector<9x256xf32>
    %53 = arith.mulf %42, %52 : vector<9x256xf32>
    %54 = arith.mulf %45, %52 : vector<9x256xf32>
    %55 = arith.fptosi %9 : vector<9x256xf32> to vector<9x256xi32>
    %56 = arith.fptosi %15 : vector<9x256xf32> to vector<9x256xi32>
    %57 = arith.fptosi %19 : vector<9x256xf32> to vector<9x256xi32>
    %58 = arith.fptosi %25 : vector<9x256xf32> to vector<9x256xi32>
    %59 = tpu.iota {dimensions = array<i32: 0>} : vector<24x256xi32>
    %60 = tpu.iota {dimensions = array<i32: 0>} : vector<18x256xi32>
    %61 = vector.extract_strided_slice %57 {offsets = [0, 0], sizes = [1, 256], strides = [1, 1]} : vector<9x256xi32> to vector<1x256xi32>
    %62 = vector.broadcast %61 : vector<1x256xi32> to vector<18x256xi32>
    %63 = arith.cmpi eq, %60, %62 : vector<18x256xi32>
    %64 = vector.extract_strided_slice %53 {offsets = [0, 0], sizes = [1, 256], strides = [1, 1]} : vector<9x256xf32> to vector<1x256xf32>
    %cst_23 = arith.constant 0.000000e+00 : f32
    %65 = vector.shape_cast %64 : vector<1x256xf32> to vector<1x256xf32>
    %66 = vector.broadcast %65 : vector<1x256xf32> to vector<18x256xf32>
    %67 = vector.broadcast %cst_23 : f32 to vector<18x256xf32>
    %68 = arith.select %63, %66, %67 : vector<18x256xi1>, vector<18x256xf32>
    %69 = vector.extract_strided_slice %58 {offsets = [0, 0], sizes = [1, 256], strides = [1, 1]} : vector<9x256xi32> to vector<1x256xi32>
    %70 = vector.broadcast %69 : vector<1x256xi32> to vector<18x256xi32>
    %71 = arith.cmpi eq, %60, %70 : vector<18x256xi32>
    %72 = vector.extract_strided_slice %54 {offsets = [0, 0], sizes = [1, 256], strides = [1, 1]} : vector<9x256xf32> to vector<1x256xf32>
    %cst_24 = arith.constant 0.000000e+00 : f32
    %73 = vector.shape_cast %72 : vector<1x256xf32> to vector<1x256xf32>
    %74 = vector.broadcast %73 : vector<1x256xf32> to vector<18x256xf32>
    %75 = vector.broadcast %cst_24 : f32 to vector<18x256xf32>
    %76 = arith.select %71, %74, %75 : vector<18x256xi1>, vector<18x256xf32>
    %77 = arith.addf %68, %76 : vector<18x256xf32>
    %78 = arith.truncf %77 : vector<18x256xf32> to vector<18x256xbf16>
    %79 = vector.extract_strided_slice %55 {offsets = [0, 0], sizes = [1, 256], strides = [1, 1]} : vector<9x256xi32> to vector<1x256xi32>
    %80 = vector.broadcast %79 : vector<1x256xi32> to vector<24x256xi32>
    %81 = arith.cmpi eq, %59, %80 : vector<24x256xi32>
    %82 = vector.extract_strided_slice %36 {offsets = [0, 0], sizes = [1, 256], strides = [1, 1]} : vector<9x256xf32> to vector<1x256xf32>
    %cst_25 = arith.constant 0.000000e+00 : f32
    %83 = vector.shape_cast %82 : vector<1x256xf32> to vector<1x256xf32>
    %84 = vector.broadcast %83 : vector<1x256xf32> to vector<24x256xf32>
    %85 = vector.broadcast %cst_25 : f32 to vector<24x256xf32>
    %86 = arith.select %81, %84, %85 : vector<24x256xi1>, vector<24x256xf32>
    %87 = vector.extract_strided_slice %56 {offsets = [0, 0], sizes = [1, 256], strides = [1, 1]} : vector<9x256xi32> to vector<1x256xi32>
    %88 = vector.broadcast %87 : vector<1x256xi32> to vector<24x256xi32>
    %89 = arith.cmpi eq, %59, %88 : vector<24x256xi32>
    %90 = vector.extract_strided_slice %39 {offsets = [0, 0], sizes = [1, 256], strides = [1, 1]} : vector<9x256xf32> to vector<1x256xf32>
    %cst_26 = arith.constant 0.000000e+00 : f32
    %91 = vector.shape_cast %90 : vector<1x256xf32> to vector<1x256xf32>
    %92 = vector.broadcast %91 : vector<1x256xf32> to vector<24x256xf32>
    %93 = vector.broadcast %cst_26 : f32 to vector<24x256xf32>
    %94 = arith.select %89, %92, %93 : vector<24x256xi1>, vector<24x256xf32>
    %95 = arith.addf %86, %94 : vector<24x256xf32>
    %96 = arith.truncf %95 : vector<24x256xf32> to vector<24x256xbf16>
    %97 = vector.extract_strided_slice %57 {offsets = [1, 0], sizes = [1, 256], strides = [1, 1]} : vector<9x256xi32> to vector<1x256xi32>
    %98 = vector.broadcast %97 : vector<1x256xi32> to vector<18x256xi32>
    %99 = arith.cmpi eq, %60, %98 : vector<18x256xi32>
    %100 = vector.extract_strided_slice %53 {offsets = [1, 0], sizes = [1, 256], strides = [1, 1]} : vector<9x256xf32> to vector<1x256xf32>
    %cst_27 = arith.constant 0.000000e+00 : f32
    %101 = vector.shape_cast %100 : vector<1x256xf32> to vector<1x256xf32>
    %102 = vector.broadcast %101 : vector<1x256xf32> to vector<18x256xf32>
    %103 = vector.broadcast %cst_27 : f32 to vector<18x256xf32>
    %104 = arith.select %99, %102, %103 : vector<18x256xi1>, vector<18x256xf32>
    %105 = vector.extract_strided_slice %58 {offsets = [1, 0], sizes = [1, 256], strides = [1, 1]} : vector<9x256xi32> to vector<1x256xi32>
    %106 = vector.broadcast %105 : vector<1x256xi32> to vector<18x256xi32>
    %107 = arith.cmpi eq, %60, %106 : vector<18x256xi32>
    %108 = vector.extract_strided_slice %54 {offsets = [1, 0], sizes = [1, 256], strides = [1, 1]} : vector<9x256xf32> to vector<1x256xf32>
    %cst_28 = arith.constant 0.000000e+00 : f32
    %109 = vector.shape_cast %108 : vector<1x256xf32> to vector<1x256xf32>
    %110 = vector.broadcast %109 : vector<1x256xf32> to vector<18x256xf32>
    %111 = vector.broadcast %cst_28 : f32 to vector<18x256xf32>
    %112 = arith.select %107, %110, %111 : vector<18x256xi1>, vector<18x256xf32>
    %113 = arith.addf %104, %112 : vector<18x256xf32>
    %114 = arith.truncf %113 : vector<18x256xf32> to vector<18x256xbf16>
    %115 = vector.extract_strided_slice %55 {offsets = [1, 0], sizes = [1, 256], strides = [1, 1]} : vector<9x256xi32> to vector<1x256xi32>
    %116 = vector.broadcast %115 : vector<1x256xi32> to vector<24x256xi32>
    %117 = arith.cmpi eq, %59, %116 : vector<24x256xi32>
    %118 = vector.extract_strided_slice %36 {offsets = [1, 0], sizes = [1, 256], strides = [1, 1]} : vector<9x256xf32> to vector<1x256xf32>
    %cst_29 = arith.constant 0.000000e+00 : f32
    %119 = vector.shape_cast %118 : vector<1x256xf32> to vector<1x256xf32>
    %120 = vector.broadcast %119 : vector<1x256xf32> to vector<24x256xf32>
    %121 = vector.broadcast %cst_29 : f32 to vector<24x256xf32>
    %122 = arith.select %117, %120, %121 : vector<24x256xi1>, vector<24x256xf32>
    %123 = vector.extract_strided_slice %56 {offsets = [1, 0], sizes = [1, 256], strides = [1, 1]} : vector<9x256xi32> to vector<1x256xi32>
    %124 = vector.broadcast %123 : vector<1x256xi32> to vector<24x256xi32>
    %125 = arith.cmpi eq, %59, %124 : vector<24x256xi32>
    %126 = vector.extract_strided_slice %39 {offsets = [1, 0], sizes = [1, 256], strides = [1, 1]} : vector<9x256xf32> to vector<1x256xf32>
    %cst_30 = arith.constant 0.000000e+00 : f32
    %127 = vector.shape_cast %126 : vector<1x256xf32> to vector<1x256xf32>
    %128 = vector.broadcast %127 : vector<1x256xf32> to vector<24x256xf32>
    %129 = vector.broadcast %cst_30 : f32 to vector<24x256xf32>
    %130 = arith.select %125, %128, %129 : vector<24x256xi1>, vector<24x256xf32>
    %131 = arith.addf %122, %130 : vector<24x256xf32>
    %132 = arith.truncf %131 : vector<24x256xf32> to vector<24x256xbf16>
    %133 = vector.extract_strided_slice %57 {offsets = [2, 0], sizes = [1, 256], strides = [1, 1]} : vector<9x256xi32> to vector<1x256xi32>
    %134 = vector.broadcast %133 : vector<1x256xi32> to vector<18x256xi32>
    %135 = arith.cmpi eq, %60, %134 : vector<18x256xi32>
    %136 = vector.extract_strided_slice %53 {offsets = [2, 0], sizes = [1, 256], strides = [1, 1]} : vector<9x256xf32> to vector<1x256xf32>
    %cst_31 = arith.constant 0.000000e+00 : f32
    %137 = vector.shape_cast %136 : vector<1x256xf32> to vector<1x256xf32>
    %138 = vector.broadcast %137 : vector<1x256xf32> to vector<18x256xf32>
    %139 = vector.broadcast %cst_31 : f32 to vector<18x256xf32>
    %140 = arith.select %135, %138, %139 : vector<18x256xi1>, vector<18x256xf32>
    %141 = vector.extract_strided_slice %58 {offsets = [2, 0], sizes = [1, 256], strides = [1, 1]} : vector<9x256xi32> to vector<1x256xi32>
    %142 = vector.broadcast %141 : vector<1x256xi32> to vector<18x256xi32>
    %143 = arith.cmpi eq, %60, %142 : vector<18x256xi32>
    %144 = vector.extract_strided_slice %54 {offsets = [2, 0], sizes = [1, 256], strides = [1, 1]} : vector<9x256xf32> to vector<1x256xf32>
    %cst_32 = arith.constant 0.000000e+00 : f32
    %145 = vector.shape_cast %144 : vector<1x256xf32> to vector<1x256xf32>
    %146 = vector.broadcast %145 : vector<1x256xf32> to vector<18x256xf32>
    %147 = vector.broadcast %cst_32 : f32 to vector<18x256xf32>
    %148 = arith.select %143, %146, %147 : vector<18x256xi1>, vector<18x256xf32>
    %149 = arith.addf %140, %148 : vector<18x256xf32>
    %150 = arith.truncf %149 : vector<18x256xf32> to vector<18x256xbf16>
    %151 = vector.extract_strided_slice %55 {offsets = [2, 0], sizes = [1, 256], strides = [1, 1]} : vector<9x256xi32> to vector<1x256xi32>
    %152 = vector.broadcast %151 : vector<1x256xi32> to vector<24x256xi32>
    %153 = arith.cmpi eq, %59, %152 : vector<24x256xi32>
    %154 = vector.extract_strided_slice %36 {offsets = [2, 0], sizes = [1, 256], strides = [1, 1]} : vector<9x256xf32> to vector<1x256xf32>
    %cst_33 = arith.constant 0.000000e+00 : f32
    %155 = vector.shape_cast %154 : vector<1x256xf32> to vector<1x256xf32>
    %156 = vector.broadcast %155 : vector<1x256xf32> to vector<24x256xf32>
    %157 = vector.broadcast %cst_33 : f32 to vector<24x256xf32>
    %158 = arith.select %153, %156, %157 : vector<24x256xi1>, vector<24x256xf32>
    %159 = vector.extract_strided_slice %56 {offsets = [2, 0], sizes = [1, 256], strides = [1, 1]} : vector<9x256xi32> to vector<1x256xi32>
    %160 = vector.broadcast %159 : vector<1x256xi32> to vector<24x256xi32>
    %161 = arith.cmpi eq, %59, %160 : vector<24x256xi32>
    %162 = vector.extract_strided_slice %39 {offsets = [2, 0], sizes = [1, 256], strides = [1, 1]} : vector<9x256xf32> to vector<1x256xf32>
    %cst_34 = arith.constant 0.000000e+00 : f32
    %163 = vector.shape_cast %162 : vector<1x256xf32> to vector<1x256xf32>
    %164 = vector.broadcast %163 : vector<1x256xf32> to vector<24x256xf32>
    %165 = vector.broadcast %cst_34 : f32 to vector<24x256xf32>
    %166 = arith.select %161, %164, %165 : vector<24x256xi1>, vector<24x256xf32>
    %167 = arith.addf %158, %166 : vector<24x256xf32>
    %168 = arith.truncf %167 : vector<24x256xf32> to vector<24x256xbf16>
    %169 = tpu.concatenate %78, %114, %150 in 1 : vector<18x256xbf16>, vector<18x256xbf16>, vector<18x256xbf16> -> vector<18x768xbf16>
    %c0_35 = arith.constant 0 : index
    %c0_36 = arith.constant 0 : index
    %c0_37 = arith.constant 0 : index
    %170 = vector.load %arg2[%c0_35, %c0_36, %c0_37] : memref<1x192x18xbf16, #tpu.memory_space<vmem>>, vector<1x192x18xbf16>
    %171 = vector.shape_cast %170 : vector<1x192x18xbf16> to vector<192x18xbf16>
    %cst_38 = arith.constant dense<0.000000e+00> : vector<192x768xf32>
    %172 = tpu.matmul %171, %169, %cst_38 {dimension_numbers = #tpu.dot_dimension_numbers<[1], [0], [0], [1], [0, 0, 1, 1], [], []>} : vector<192x18xbf16>, vector<18x768xbf16>, vector<192x768xf32> -> vector<192x768xf32>
    %173 = arith.truncf %172 : vector<192x768xf32> to vector<192x768xbf16>
    %174 = vector.extract_strided_slice %173 {offsets = [0, 0], sizes = [192, 256], strides = [1, 1]} : vector<192x768xbf16> to vector<192x256xbf16>
    %175 = vector.extract_strided_slice %174 {offsets = [0, 0], sizes = [24, 256], strides = [1, 1]} : vector<192x256xbf16> to vector<24x256xbf16>
    %176 = arith.mulf %175, %96 : vector<24x256xbf16>
    %177 = arith.extf %176 : vector<24x256xbf16> to vector<24x256xf32>
    %cst_39 = arith.constant dense<0.000000e+00> : vector<256xf32>
    %178 = vector.multi_reduction <add>, %177, %cst_39 [0] : vector<24x256xf32> to vector<256xf32>
    %179 = vector.shape_cast %178 : vector<256xf32> to vector<1x256xf32>
    %180 = arith.truncf %179 : vector<1x256xf32> to vector<1x256xbf16>
    %181 = vector.extract_strided_slice %174 {offsets = [24, 0], sizes = [24, 256], strides = [1, 1]} : vector<192x256xbf16> to vector<24x256xbf16>
    %182 = arith.mulf %181, %96 : vector<24x256xbf16>
    %183 = arith.extf %182 : vector<24x256xbf16> to vector<24x256xf32>
    %cst_40 = arith.constant dense<0.000000e+00> : vector<256xf32>
    %184 = vector.multi_reduction <add>, %183, %cst_40 [0] : vector<24x256xf32> to vector<256xf32>
    %185 = vector.shape_cast %184 : vector<256xf32> to vector<1x256xf32>
    %186 = arith.truncf %185 : vector<1x256xf32> to vector<1x256xbf16>
    %187 = vector.extract_strided_slice %174 {offsets = [48, 0], sizes = [24, 256], strides = [1, 1]} : vector<192x256xbf16> to vector<24x256xbf16>
    %188 = arith.mulf %187, %96 : vector<24x256xbf16>
    %189 = arith.extf %188 : vector<24x256xbf16> to vector<24x256xf32>
    %cst_41 = arith.constant dense<0.000000e+00> : vector<256xf32>
    %190 = vector.multi_reduction <add>, %189, %cst_41 [0] : vector<24x256xf32> to vector<256xf32>
    %191 = vector.shape_cast %190 : vector<256xf32> to vector<1x256xf32>
    %192 = arith.truncf %191 : vector<1x256xf32> to vector<1x256xbf16>
    %193 = vector.extract_strided_slice %174 {offsets = [72, 0], sizes = [24, 256], strides = [1, 1]} : vector<192x256xbf16> to vector<24x256xbf16>
    %194 = arith.mulf %193, %96 : vector<24x256xbf16>
    %195 = arith.extf %194 : vector<24x256xbf16> to vector<24x256xf32>
    %cst_42 = arith.constant dense<0.000000e+00> : vector<256xf32>
    %196 = vector.multi_reduction <add>, %195, %cst_42 [0] : vector<24x256xf32> to vector<256xf32>
    %197 = vector.shape_cast %196 : vector<256xf32> to vector<1x256xf32>
    %198 = arith.truncf %197 : vector<1x256xf32> to vector<1x256xbf16>
    %199 = vector.extract_strided_slice %174 {offsets = [96, 0], sizes = [24, 256], strides = [1, 1]} : vector<192x256xbf16> to vector<24x256xbf16>
    %200 = arith.mulf %199, %96 : vector<24x256xbf16>
    %201 = arith.extf %200 : vector<24x256xbf16> to vector<24x256xf32>
    %cst_43 = arith.constant dense<0.000000e+00> : vector<256xf32>
    %202 = vector.multi_reduction <add>, %201, %cst_43 [0] : vector<24x256xf32> to vector<256xf32>
    %203 = vector.shape_cast %202 : vector<256xf32> to vector<1x256xf32>
    %204 = arith.truncf %203 : vector<1x256xf32> to vector<1x256xbf16>
    %205 = vector.extract_strided_slice %174 {offsets = [120, 0], sizes = [24, 256], strides = [1, 1]} : vector<192x256xbf16> to vector<24x256xbf16>
    %206 = arith.mulf %205, %96 : vector<24x256xbf16>
    %207 = arith.extf %206 : vector<24x256xbf16> to vector<24x256xf32>
    %cst_44 = arith.constant dense<0.000000e+00> : vector<256xf32>
    %208 = vector.multi_reduction <add>, %207, %cst_44 [0] : vector<24x256xf32> to vector<256xf32>
    %209 = vector.shape_cast %208 : vector<256xf32> to vector<1x256xf32>
    %210 = arith.truncf %209 : vector<1x256xf32> to vector<1x256xbf16>
    %211 = vector.extract_strided_slice %174 {offsets = [144, 0], sizes = [24, 256], strides = [1, 1]} : vector<192x256xbf16> to vector<24x256xbf16>
    %212 = arith.mulf %211, %96 : vector<24x256xbf16>
    %213 = arith.extf %212 : vector<24x256xbf16> to vector<24x256xf32>
    %cst_45 = arith.constant dense<0.000000e+00> : vector<256xf32>
    %214 = vector.multi_reduction <add>, %213, %cst_45 [0] : vector<24x256xf32> to vector<256xf32>
    %215 = vector.shape_cast %214 : vector<256xf32> to vector<1x256xf32>
    %216 = arith.truncf %215 : vector<1x256xf32> to vector<1x256xbf16>
    %217 = vector.extract_strided_slice %174 {offsets = [168, 0], sizes = [24, 256], strides = [1, 1]} : vector<192x256xbf16> to vector<24x256xbf16>
    %218 = arith.mulf %217, %96 : vector<24x256xbf16>
    %219 = arith.extf %218 : vector<24x256xbf16> to vector<24x256xf32>
    %cst_46 = arith.constant dense<0.000000e+00> : vector<256xf32>
    %220 = vector.multi_reduction <add>, %219, %cst_46 [0] : vector<24x256xf32> to vector<256xf32>
    %221 = vector.shape_cast %220 : vector<256xf32> to vector<1x256xf32>
    %222 = arith.truncf %221 : vector<1x256xf32> to vector<1x256xbf16>
    %223 = tpu.concatenate %180, %186, %192, %198, %204, %210, %216, %222 in 0 : vector<1x256xbf16>, vector<1x256xbf16>, vector<1x256xbf16>, vector<1x256xbf16>, vector<1x256xbf16>, vector<1x256xbf16>, vector<1x256xbf16>, vector<1x256xbf16> -> vector<8x256xbf16>
    %c0_47 = arith.constant 0 : index
    %c0_48 = arith.constant 0 : index
    %224 = vector.load %arg7[%c0_47, %c0_48] : memref<72x256xbf16, #tpu.memory_space<vmem>>, vector<8x256xbf16>
    tpu.vector_store %arg7[%c0_47, %c0_48], %223 {strides = array<i32>} : memref<72x256xbf16, #tpu.memory_space<vmem>>, vector<8x256xbf16>,
    %225 = vector.extract_strided_slice %173 {offsets = [0, 256], sizes = [192, 256], strides = [1, 1]} : vector<192x768xbf16> to vector<192x256xbf16>
    %226 = vector.extract_strided_slice %225 {offsets = [0, 0], sizes = [24, 256], strides = [1, 1]} : vector<192x256xbf16> to vector<24x256xbf16>
    %227 = arith.mulf %226, %132 : vector<24x256xbf16>
    %228 = arith.extf %227 : vector<24x256xbf16> to vector<24x256xf32>
    %cst_49 = arith.constant dense<0.000000e+00> : vector<256xf32>
    %229 = vector.multi_reduction <add>, %228, %cst_49 [0] : vector<24x256xf32> to vector<256xf32>
    %230 = vector.shape_cast %229 : vector<256xf32> to vector<1x256xf32>
    %231 = arith.truncf %230 : vector<1x256xf32> to vector<1x256xbf16>
    %232 = vector.extract_strided_slice %225 {offsets = [24, 0], sizes = [24, 256], strides = [1, 1]} : vector<192x256xbf16> to vector<24x256xbf16>
    %233 = arith.mulf %232, %132 : vector<24x256xbf16>
    %234 = arith.extf %233 : vector<24x256xbf16> to vector<24x256xf32>
    %cst_50 = arith.constant dense<0.000000e+00> : vector<256xf32>
    %235 = vector.multi_reduction <add>, %234, %cst_50 [0] : vector<24x256xf32> to vector<256xf32>
    %236 = vector.shape_cast %235 : vector<256xf32> to vector<1x256xf32>
    %237 = arith.truncf %236 : vector<1x256xf32> to vector<1x256xbf16>
    %238 = vector.extract_strided_slice %225 {offsets = [48, 0], sizes = [24, 256], strides = [1, 1]} : vector<192x256xbf16> to vector<24x256xbf16>
    %239 = arith.mulf %238, %132 : vector<24x256xbf16>
    %240 = arith.extf %239 : vector<24x256xbf16> to vector<24x256xf32>
    %cst_51 = arith.constant dense<0.000000e+00> : vector<256xf32>
    %241 = vector.multi_reduction <add>, %240, %cst_51 [0] : vector<24x256xf32> to vector<256xf32>
    %242 = vector.shape_cast %241 : vector<256xf32> to vector<1x256xf32>
    %243 = arith.truncf %242 : vector<1x256xf32> to vector<1x256xbf16>
    %244 = vector.extract_strided_slice %225 {offsets = [72, 0], sizes = [24, 256], strides = [1, 1]} : vector<192x256xbf16> to vector<24x256xbf16>
    %245 = arith.mulf %244, %132 : vector<24x256xbf16>
    %246 = arith.extf %245 : vector<24x256xbf16> to vector<24x256xf32>
    %cst_52 = arith.constant dense<0.000000e+00> : vector<256xf32>
    %247 = vector.multi_reduction <add>, %246, %cst_52 [0] : vector<24x256xf32> to vector<256xf32>
    %248 = vector.shape_cast %247 : vector<256xf32> to vector<1x256xf32>
    %249 = arith.truncf %248 : vector<1x256xf32> to vector<1x256xbf16>
    %250 = vector.extract_strided_slice %225 {offsets = [96, 0], sizes = [24, 256], strides = [1, 1]} : vector<192x256xbf16> to vector<24x256xbf16>
    %251 = arith.mulf %250, %132 : vector<24x256xbf16>
    %252 = arith.extf %251 : vector<24x256xbf16> to vector<24x256xf32>
    %cst_53 = arith.constant dense<0.000000e+00> : vector<256xf32>
    %253 = vector.multi_reduction <add>, %252, %cst_53 [0] : vector<24x256xf32> to vector<256xf32>
    %254 = vector.shape_cast %253 : vector<256xf32> to vector<1x256xf32>
    %255 = arith.truncf %254 : vector<1x256xf32> to vector<1x256xbf16>
    %256 = vector.extract_strided_slice %225 {offsets = [120, 0], sizes = [24, 256], strides = [1, 1]} : vector<192x256xbf16> to vector<24x256xbf16>
    %257 = arith.mulf %256, %132 : vector<24x256xbf16>
    %258 = arith.extf %257 : vector<24x256xbf16> to vector<24x256xf32>
    %cst_54 = arith.constant dense<0.000000e+00> : vector<256xf32>
    %259 = vector.multi_reduction <add>, %258, %cst_54 [0] : vector<24x256xf32> to vector<256xf32>
    %260 = vector.shape_cast %259 : vector<256xf32> to vector<1x256xf32>
    %261 = arith.truncf %260 : vector<1x256xf32> to vector<1x256xbf16>
    %262 = vector.extract_strided_slice %225 {offsets = [144, 0], sizes = [24, 256], strides = [1, 1]} : vector<192x256xbf16> to vector<24x256xbf16>
    %263 = arith.mulf %262, %132 : vector<24x256xbf16>
    %264 = arith.extf %263 : vector<24x256xbf16> to vector<24x256xf32>
    %cst_55 = arith.constant dense<0.000000e+00> : vector<256xf32>
    %265 = vector.multi_reduction <add>, %264, %cst_55 [0] : vector<24x256xf32> to vector<256xf32>
    %266 = vector.shape_cast %265 : vector<256xf32> to vector<1x256xf32>
    %267 = arith.truncf %266 : vector<1x256xf32> to vector<1x256xbf16>
    %268 = vector.extract_strided_slice %225 {offsets = [168, 0], sizes = [24, 256], strides = [1, 1]} : vector<192x256xbf16> to vector<24x256xbf16>
    %269 = arith.mulf %268, %132 : vector<24x256xbf16>
    %270 = arith.extf %269 : vector<24x256xbf16> to vector<24x256xf32>
    %cst_56 = arith.constant dense<0.000000e+00> : vector<256xf32>
    %271 = vector.multi_reduction <add>, %270, %cst_56 [0] : vector<24x256xf32> to vector<256xf32>
    %272 = vector.shape_cast %271 : vector<256xf32> to vector<1x256xf32>
    %273 = arith.truncf %272 : vector<1x256xf32> to vector<1x256xbf16>
    %274 = tpu.concatenate %231, %237, %243, %249, %255, %261, %267, %273 in 0 : vector<1x256xbf16>, vector<1x256xbf16>, vector<1x256xbf16>, vector<1x256xbf16>, vector<1x256xbf16>, vector<1x256xbf16>, vector<1x256xbf16>, vector<1x256xbf16> -> vector<8x256xbf16>
    %c8 = arith.constant 8 : index
    %c0_57 = arith.constant 0 : index
    %275 = vector.load %arg7[%c8, %c0_57] : memref<72x256xbf16, #tpu.memory_space<vmem>>, vector<8x256xbf16>
    tpu.vector_store %arg7[%c8, %c0_57], %274 {strides = array<i32>} : memref<72x256xbf16, #tpu.memory_space<vmem>>, vector<8x256xbf16>,
    %276 = vector.extract_strided_slice %173 {offsets = [0, 512], sizes = [192, 256], strides = [1, 1]} : vector<192x768xbf16> to vector<192x256xbf16>
    %277 = vector.extract_strided_slice %276 {offsets = [0, 0], sizes = [24, 256], strides = [1, 1]} : vector<192x256xbf16> to vector<24x256xbf16>
    %278 = arith.mulf %277, %168 : vector<24x256xbf16>
    %279 = arith.extf %278 : vector<24x256xbf16> to vector<24x256xf32>
    %cst_58 = arith.constant dense<0.000000e+00> : vector<256xf32>
    %280 = vector.multi_reduction <add>, %279, %cst_58 [0] : vector<24x256xf32> to vector<256xf32>
    %281 = vector.shape_cast %280 : vector<256xf32> to vector<1x256xf32>
    %282 = arith.truncf %281 : vector<1x256xf32> to vector<1x256xbf16>
    %283 = vector.extract_strided_slice %276 {offsets = [24, 0], sizes = [24, 256], strides = [1, 1]} : vector<192x256xbf16> to vector<24x256xbf16>
    %284 = arith.mulf %283, %168 : vector<24x256xbf16>
    %285 = arith.extf %284 : vector<24x256xbf16> to vector<24x256xf32>
    %cst_59 = arith.constant dense<0.000000e+00> : vector<256xf32>
    %286 = vector.multi_reduction <add>, %285, %cst_59 [0] : vector<24x256xf32> to vector<256xf32>
    %287 = vector.shape_cast %286 : vector<256xf32> to vector<1x256xf32>
    %288 = arith.truncf %287 : vector<1x256xf32> to vector<1x256xbf16>
    %289 = vector.extract_strided_slice %276 {offsets = [48, 0], sizes = [24, 256], strides = [1, 1]} : vector<192x256xbf16> to vector<24x256xbf16>
    %290 = arith.mulf %289, %168 : vector<24x256xbf16>
    %291 = arith.extf %290 : vector<24x256xbf16> to vector<24x256xf32>
    %cst_60 = arith.constant dense<0.000000e+00> : vector<256xf32>
    %292 = vector.multi_reduction <add>, %291, %cst_60 [0] : vector<24x256xf32> to vector<256xf32>
    %293 = vector.shape_cast %292 : vector<256xf32> to vector<1x256xf32>
    %294 = arith.truncf %293 : vector<1x256xf32> to vector<1x256xbf16>
    %295 = vector.extract_strided_slice %276 {offsets = [72, 0], sizes = [24, 256], strides = [1, 1]} : vector<192x256xbf16> to vector<24x256xbf16>
    %296 = arith.mulf %295, %168 : vector<24x256xbf16>
    %297 = arith.extf %296 : vector<24x256xbf16> to vector<24x256xf32>
    %cst_61 = arith.constant dense<0.000000e+00> : vector<256xf32>
    %298 = vector.multi_reduction <add>, %297, %cst_61 [0] : vector<24x256xf32> to vector<256xf32>
    %299 = vector.shape_cast %298 : vector<256xf32> to vector<1x256xf32>
    %300 = arith.truncf %299 : vector<1x256xf32> to vector<1x256xbf16>
    %301 = vector.extract_strided_slice %276 {offsets = [96, 0], sizes = [24, 256], strides = [1, 1]} : vector<192x256xbf16> to vector<24x256xbf16>
    %302 = arith.mulf %301, %168 : vector<24x256xbf16>
    %303 = arith.extf %302 : vector<24x256xbf16> to vector<24x256xf32>
    %cst_62 = arith.constant dense<0.000000e+00> : vector<256xf32>
    %304 = vector.multi_reduction <add>, %303, %cst_62 [0] : vector<24x256xf32> to vector<256xf32>
    %305 = vector.shape_cast %304 : vector<256xf32> to vector<1x256xf32>
    %306 = arith.truncf %305 : vector<1x256xf32> to vector<1x256xbf16>
    %307 = vector.extract_strided_slice %276 {offsets = [120, 0], sizes = [24, 256], strides = [1, 1]} : vector<192x256xbf16> to vector<24x256xbf16>
    %308 = arith.mulf %307, %168 : vector<24x256xbf16>
    %309 = arith.extf %308 : vector<24x256xbf16> to vector<24x256xf32>
    %cst_63 = arith.constant dense<0.000000e+00> : vector<256xf32>
    %310 = vector.multi_reduction <add>, %309, %cst_63 [0] : vector<24x256xf32> to vector<256xf32>
    %311 = vector.shape_cast %310 : vector<256xf32> to vector<1x256xf32>
    %312 = arith.truncf %311 : vector<1x256xf32> to vector<1x256xbf16>
    %313 = vector.extract_strided_slice %276 {offsets = [144, 0], sizes = [24, 256], strides = [1, 1]} : vector<192x256xbf16> to vector<24x256xbf16>
    %314 = arith.mulf %313, %168 : vector<24x256xbf16>
    %315 = arith.extf %314 : vector<24x256xbf16> to vector<24x256xf32>
    %cst_64 = arith.constant dense<0.000000e+00> : vector<256xf32>
    %316 = vector.multi_reduction <add>, %315, %cst_64 [0] : vector<24x256xf32> to vector<256xf32>
    %317 = vector.shape_cast %316 : vector<256xf32> to vector<1x256xf32>
    %318 = arith.truncf %317 : vector<1x256xf32> to vector<1x256xbf16>
    %319 = vector.extract_strided_slice %276 {offsets = [168, 0], sizes = [24, 256], strides = [1, 1]} : vector<192x256xbf16> to vector<24x256xbf16>
    %320 = arith.mulf %319, %168 : vector<24x256xbf16>
    %321 = arith.extf %320 : vector<24x256xbf16> to vector<24x256xf32>
    %cst_65 = arith.constant dense<0.000000e+00> : vector<256xf32>
    %322 = vector.multi_reduction <add>, %321, %cst_65 [0] : vector<24x256xf32> to vector<256xf32>
    %323 = vector.shape_cast %322 : vector<256xf32> to vector<1x256xf32>
    %324 = arith.truncf %323 : vector<1x256xf32> to vector<1x256xbf16>
    %325 = tpu.concatenate %282, %288, %294, %300, %306, %312, %318, %324 in 0 : vector<1x256xbf16>, vector<1x256xbf16>, vector<1x256xbf16>, vector<1x256xbf16>, vector<1x256xbf16>, vector<1x256xbf16>, vector<1x256xbf16>, vector<1x256xbf16> -> vector<8x256xbf16>
    %c16 = arith.constant 16 : index
    %c0_66 = arith.constant 0 : index
    %326 = vector.load %arg7[%c16, %c0_66] : memref<72x256xbf16, #tpu.memory_space<vmem>>, vector<8x256xbf16>
    tpu.vector_store %arg7[%c16, %c0_66], %325 {strides = array<i32>} : memref<72x256xbf16, #tpu.memory_space<vmem>>, vector<8x256xbf16>,
    %327 = vector.extract_strided_slice %57 {offsets = [3, 0], sizes = [1, 256], strides = [1, 1]} : vector<9x256xi32> to vector<1x256xi32>
    %328 = vector.broadcast %327 : vector<1x256xi32> to vector<18x256xi32>
    %329 = arith.cmpi eq, %60, %328 : vector<18x256xi32>
    %330 = vector.extract_strided_slice %53 {offsets = [3, 0], sizes = [1, 256], strides = [1, 1]} : vector<9x256xf32> to vector<1x256xf32>
    %cst_67 = arith.constant 0.000000e+00 : f32
    %331 = vector.shape_cast %330 : vector<1x256xf32> to vector<1x256xf32>
    %332 = vector.broadcast %331 : vector<1x256xf32> to vector<18x256xf32>
    %333 = vector.broadcast %cst_67 : f32 to vector<18x256xf32>
    %334 = arith.select %329, %332, %333 : vector<18x256xi1>, vector<18x256xf32>
    %335 = vector.extract_strided_slice %58 {offsets = [3, 0], sizes = [1, 256], strides = [1, 1]} : vector<9x256xi32> to vector<1x256xi32>
    %336 = vector.broadcast %335 : vector<1x256xi32> to vector<18x256xi32>
    %337 = arith.cmpi eq, %60, %336 : vector<18x256xi32>
    %338 = vector.extract_strided_slice %54 {offsets = [3, 0], sizes = [1, 256], strides = [1, 1]} : vector<9x256xf32> to vector<1x256xf32>
    %cst_68 = arith.constant 0.000000e+00 : f32
    %339 = vector.shape_cast %338 : vector<1x256xf32> to vector<1x256xf32>
    %340 = vector.broadcast %339 : vector<1x256xf32> to vector<18x256xf32>
    %341 = vector.broadcast %cst_68 : f32 to vector<18x256xf32>
    %342 = arith.select %337, %340, %341 : vector<18x256xi1>, vector<18x256xf32>
    %343 = arith.addf %334, %342 : vector<18x256xf32>
    %344 = arith.truncf %343 : vector<18x256xf32> to vector<18x256xbf16>
    %345 = vector.extract_strided_slice %55 {offsets = [3, 0], sizes = [1, 256], strides = [1, 1]} : vector<9x256xi32> to vector<1x256xi32>
    %346 = vector.broadcast %345 : vector<1x256xi32> to vector<24x256xi32>
    %347 = arith.cmpi eq, %59, %346 : vector<24x256xi32>
    %348 = vector.extract_strided_slice %36 {offsets = [3, 0], sizes = [1, 256], strides = [1, 1]} : vector<9x256xf32> to vector<1x256xf32>
    %cst_69 = arith.constant 0.000000e+00 : f32
    %349 = vector.shape_cast %348 : vector<1x256xf32> to vector<1x256xf32>
    %350 = vector.broadcast %349 : vector<1x256xf32> to vector<24x256xf32>
    %351 = vector.broadcast %cst_69 : f32 to vector<24x256xf32>
    %352 = arith.select %347, %350, %351 : vector<24x256xi1>, vector<24x256xf32>
    %353 = vector.extract_strided_slice %56 {offsets = [3, 0], sizes = [1, 256], strides = [1, 1]} : vector<9x256xi32> to vector<1x256xi32>
    %354 = vector.broadcast %353 : vector<1x256xi32> to vector<24x256xi32>
    %355 = arith.cmpi eq, %59, %354 : vector<24x256xi32>
    %356 = vector.extract_strided_slice %39 {offsets = [3, 0], sizes = [1, 256], strides = [1, 1]} : vector<9x256xf32> to vector<1x256xf32>
    %cst_70 = arith.constant 0.000000e+00 : f32
    %357 = vector.shape_cast %356 : vector<1x256xf32> to vector<1x256xf32>
    %358 = vector.broadcast %357 : vector<1x256xf32> to vector<24x256xf32>
    %359 = vector.broadcast %cst_70 : f32 to vector<24x256xf32>
    %360 = arith.select %355, %358, %359 : vector<24x256xi1>, vector<24x256xf32>
    %361 = arith.addf %352, %360 : vector<24x256xf32>
    %362 = arith.truncf %361 : vector<24x256xf32> to vector<24x256xbf16>
    %363 = vector.extract_strided_slice %57 {offsets = [4, 0], sizes = [1, 256], strides = [1, 1]} : vector<9x256xi32> to vector<1x256xi32>
    %364 = vector.broadcast %363 : vector<1x256xi32> to vector<18x256xi32>
    %365 = arith.cmpi eq, %60, %364 : vector<18x256xi32>
    %366 = vector.extract_strided_slice %53 {offsets = [4, 0], sizes = [1, 256], strides = [1, 1]} : vector<9x256xf32> to vector<1x256xf32>
    %cst_71 = arith.constant 0.000000e+00 : f32
    %367 = vector.shape_cast %366 : vector<1x256xf32> to vector<1x256xf32>
    %368 = vector.broadcast %367 : vector<1x256xf32> to vector<18x256xf32>
    %369 = vector.broadcast %cst_71 : f32 to vector<18x256xf32>
    %370 = arith.select %365, %368, %369 : vector<18x256xi1>, vector<18x256xf32>
    %371 = vector.extract_strided_slice %58 {offsets = [4, 0], sizes = [1, 256], strides = [1, 1]} : vector<9x256xi32> to vector<1x256xi32>
    %372 = vector.broadcast %371 : vector<1x256xi32> to vector<18x256xi32>
    %373 = arith.cmpi eq, %60, %372 : vector<18x256xi32>
    %374 = vector.extract_strided_slice %54 {offsets = [4, 0], sizes = [1, 256], strides = [1, 1]} : vector<9x256xf32> to vector<1x256xf32>
    %cst_72 = arith.constant 0.000000e+00 : f32
    %375 = vector.shape_cast %374 : vector<1x256xf32> to vector<1x256xf32>
    %376 = vector.broadcast %375 : vector<1x256xf32> to vector<18x256xf32>
    %377 = vector.broadcast %cst_72 : f32 to vector<18x256xf32>
    %378 = arith.select %373, %376, %377 : vector<18x256xi1>, vector<18x256xf32>
    %379 = arith.addf %370, %378 : vector<18x256xf32>
    %380 = arith.truncf %379 : vector<18x256xf32> to vector<18x256xbf16>
    %381 = vector.extract_strided_slice %55 {offsets = [4, 0], sizes = [1, 256], strides = [1, 1]} : vector<9x256xi32> to vector<1x256xi32>
    %382 = vector.broadcast %381 : vector<1x256xi32> to vector<24x256xi32>
    %383 = arith.cmpi eq, %59, %382 : vector<24x256xi32>
    %384 = vector.extract_strided_slice %36 {offsets = [4, 0], sizes = [1, 256], strides = [1, 1]} : vector<9x256xf32> to vector<1x256xf32>
    %cst_73 = arith.constant 0.000000e+00 : f32
    %385 = vector.shape_cast %384 : vector<1x256xf32> to vector<1x256xf32>
    %386 = vector.broadcast %385 : vector<1x256xf32> to vector<24x256xf32>
    %387 = vector.broadcast %cst_73 : f32 to vector<24x256xf32>
    %388 = arith.select %383, %386, %387 : vector<24x256xi1>, vector<24x256xf32>
    %389 = vector.extract_strided_slice %56 {offsets = [4, 0], sizes = [1, 256], strides = [1, 1]} : vector<9x256xi32> to vector<1x256xi32>
    %390 = vector.broadcast %389 : vector<1x256xi32> to vector<24x256xi32>
    %391 = arith.cmpi eq, %59, %390 : vector<24x256xi32>
    %392 = vector.extract_strided_slice %39 {offsets = [4, 0], sizes = [1, 256], strides = [1, 1]} : vector<9x256xf32> to vector<1x256xf32>
    %cst_74 = arith.constant 0.000000e+00 : f32
    %393 = vector.shape_cast %392 : vector<1x256xf32> to vector<1x256xf32>
    %394 = vector.broadcast %393 : vector<1x256xf32> to vector<24x256xf32>
    %395 = vector.broadcast %cst_74 : f32 to vector<24x256xf32>
    %396 = arith.select %391, %394, %395 : vector<24x256xi1>, vector<24x256xf32>
    %397 = arith.addf %388, %396 : vector<24x256xf32>
    %398 = arith.truncf %397 : vector<24x256xf32> to vector<24x256xbf16>
    %399 = vector.extract_strided_slice %57 {offsets = [5, 0], sizes = [1, 256], strides = [1, 1]} : vector<9x256xi32> to vector<1x256xi32>
    %400 = vector.broadcast %399 : vector<1x256xi32> to vector<18x256xi32>
    %401 = arith.cmpi eq, %60, %400 : vector<18x256xi32>
    %402 = vector.extract_strided_slice %53 {offsets = [5, 0], sizes = [1, 256], strides = [1, 1]} : vector<9x256xf32> to vector<1x256xf32>
    %cst_75 = arith.constant 0.000000e+00 : f32
    %403 = vector.shape_cast %402 : vector<1x256xf32> to vector<1x256xf32>
    %404 = vector.broadcast %403 : vector<1x256xf32> to vector<18x256xf32>
    %405 = vector.broadcast %cst_75 : f32 to vector<18x256xf32>
    %406 = arith.select %401, %404, %405 : vector<18x256xi1>, vector<18x256xf32>
    %407 = vector.extract_strided_slice %58 {offsets = [5, 0], sizes = [1, 256], strides = [1, 1]} : vector<9x256xi32> to vector<1x256xi32>
    %408 = vector.broadcast %407 : vector<1x256xi32> to vector<18x256xi32>
    %409 = arith.cmpi eq, %60, %408 : vector<18x256xi32>
    %410 = vector.extract_strided_slice %54 {offsets = [5, 0], sizes = [1, 256], strides = [1, 1]} : vector<9x256xf32> to vector<1x256xf32>
    %cst_76 = arith.constant 0.000000e+00 : f32
    %411 = vector.shape_cast %410 : vector<1x256xf32> to vector<1x256xf32>
    %412 = vector.broadcast %411 : vector<1x256xf32> to vector<18x256xf32>
    %413 = vector.broadcast %cst_76 : f32 to vector<18x256xf32>
    %414 = arith.select %409, %412, %413 : vector<18x256xi1>, vector<18x256xf32>
    %415 = arith.addf %406, %414 : vector<18x256xf32>
    %416 = arith.truncf %415 : vector<18x256xf32> to vector<18x256xbf16>
    %417 = vector.extract_strided_slice %55 {offsets = [5, 0], sizes = [1, 256], strides = [1, 1]} : vector<9x256xi32> to vector<1x256xi32>
    %418 = vector.broadcast %417 : vector<1x256xi32> to vector<24x256xi32>
    %419 = arith.cmpi eq, %59, %418 : vector<24x256xi32>
    %420 = vector.extract_strided_slice %36 {offsets = [5, 0], sizes = [1, 256], strides = [1, 1]} : vector<9x256xf32> to vector<1x256xf32>
    %cst_77 = arith.constant 0.000000e+00 : f32
    %421 = vector.shape_cast %420 : vector<1x256xf32> to vector<1x256xf32>
    %422 = vector.broadcast %421 : vector<1x256xf32> to vector<24x256xf32>
    %423 = vector.broadcast %cst_77 : f32 to vector<24x256xf32>
    %424 = arith.select %419, %422, %423 : vector<24x256xi1>, vector<24x256xf32>
    %425 = vector.extract_strided_slice %56 {offsets = [5, 0], sizes = [1, 256], strides = [1, 1]} : vector<9x256xi32> to vector<1x256xi32>
    %426 = vector.broadcast %425 : vector<1x256xi32> to vector<24x256xi32>
    %427 = arith.cmpi eq, %59, %426 : vector<24x256xi32>
    %428 = vector.extract_strided_slice %39 {offsets = [5, 0], sizes = [1, 256], strides = [1, 1]} : vector<9x256xf32> to vector<1x256xf32>
    %cst_78 = arith.constant 0.000000e+00 : f32
    %429 = vector.shape_cast %428 : vector<1x256xf32> to vector<1x256xf32>
    %430 = vector.broadcast %429 : vector<1x256xf32> to vector<24x256xf32>
    %431 = vector.broadcast %cst_78 : f32 to vector<24x256xf32>
    %432 = arith.select %427, %430, %431 : vector<24x256xi1>, vector<24x256xf32>
    %433 = arith.addf %424, %432 : vector<24x256xf32>
    %434 = arith.truncf %433 : vector<24x256xf32> to vector<24x256xbf16>
    %435 = tpu.concatenate %344, %380, %416 in 1 : vector<18x256xbf16>, vector<18x256xbf16>, vector<18x256xbf16> -> vector<18x768xbf16>
    %c0_79 = arith.constant 0 : index
    %c0_80 = arith.constant 0 : index
    %c0_81 = arith.constant 0 : index
    %436 = vector.load %arg2[%c0_79, %c0_80, %c0_81] : memref<1x192x18xbf16, #tpu.memory_space<vmem>>, vector<1x192x18xbf16>
    %437 = vector.shape_cast %436 : vector<1x192x18xbf16> to vector<192x18xbf16>
    %cst_82 = arith.constant dense<0.000000e+00> : vector<192x768xf32>
    %438 = tpu.matmul %437, %435, %cst_82 {dimension_numbers = #tpu.dot_dimension_numbers<[1], [0], [0], [1], [0, 0, 1, 1], [], []>} : vector<192x18xbf16>, vector<18x768xbf16>, vector<192x768xf32> -> vector<192x768xf32>
    %439 = arith.truncf %438 : vector<192x768xf32> to vector<192x768xbf16>
    %440 = vector.extract_strided_slice %439 {offsets = [0, 0], sizes = [192, 256], strides = [1, 1]} : vector<192x768xbf16> to vector<192x256xbf16>
    %441 = vector.extract_strided_slice %440 {offsets = [0, 0], sizes = [24, 256], strides = [1, 1]} : vector<192x256xbf16> to vector<24x256xbf16>
    %442 = arith.mulf %441, %362 : vector<24x256xbf16>
    %443 = arith.extf %442 : vector<24x256xbf16> to vector<24x256xf32>
    %cst_83 = arith.constant dense<0.000000e+00> : vector<256xf32>
    %444 = vector.multi_reduction <add>, %443, %cst_83 [0] : vector<24x256xf32> to vector<256xf32>
    %445 = vector.shape_cast %444 : vector<256xf32> to vector<1x256xf32>
    %446 = arith.truncf %445 : vector<1x256xf32> to vector<1x256xbf16>
    %447 = vector.extract_strided_slice %440 {offsets = [24, 0], sizes = [24, 256], strides = [1, 1]} : vector<192x256xbf16> to vector<24x256xbf16>
    %448 = arith.mulf %447, %362 : vector<24x256xbf16>
    %449 = arith.extf %448 : vector<24x256xbf16> to vector<24x256xf32>
    %cst_84 = arith.constant dense<0.000000e+00> : vector<256xf32>
    %450 = vector.multi_reduction <add>, %449, %cst_84 [0] : vector<24x256xf32> to vector<256xf32>
    %451 = vector.shape_cast %450 : vector<256xf32> to vector<1x256xf32>
    %452 = arith.truncf %451 : vector<1x256xf32> to vector<1x256xbf16>
    %453 = vector.extract_strided_slice %440 {offsets = [48, 0], sizes = [24, 256], strides = [1, 1]} : vector<192x256xbf16> to vector<24x256xbf16>
    %454 = arith.mulf %453, %362 : vector<24x256xbf16>
    %455 = arith.extf %454 : vector<24x256xbf16> to vector<24x256xf32>
    %cst_85 = arith.constant dense<0.000000e+00> : vector<256xf32>
    %456 = vector.multi_reduction <add>, %455, %cst_85 [0] : vector<24x256xf32> to vector<256xf32>
    %457 = vector.shape_cast %456 : vector<256xf32> to vector<1x256xf32>
    %458 = arith.truncf %457 : vector<1x256xf32> to vector<1x256xbf16>
    %459 = vector.extract_strided_slice %440 {offsets = [72, 0], sizes = [24, 256], strides = [1, 1]} : vector<192x256xbf16> to vector<24x256xbf16>
    %460 = arith.mulf %459, %362 : vector<24x256xbf16>
    %461 = arith.extf %460 : vector<24x256xbf16> to vector<24x256xf32>
    %cst_86 = arith.constant dense<0.000000e+00> : vector<256xf32>
    %462 = vector.multi_reduction <add>, %461, %cst_86 [0] : vector<24x256xf32> to vector<256xf32>
    %463 = vector.shape_cast %462 : vector<256xf32> to vector<1x256xf32>
    %464 = arith.truncf %463 : vector<1x256xf32> to vector<1x256xbf16>
    %465 = vector.extract_strided_slice %440 {offsets = [96, 0], sizes = [24, 256], strides = [1, 1]} : vector<192x256xbf16> to vector<24x256xbf16>
    %466 = arith.mulf %465, %362 : vector<24x256xbf16>
    %467 = arith.extf %466 : vector<24x256xbf16> to vector<24x256xf32>
    %cst_87 = arith.constant dense<0.000000e+00> : vector<256xf32>
    %468 = vector.multi_reduction <add>, %467, %cst_87 [0] : vector<24x256xf32> to vector<256xf32>
    %469 = vector.shape_cast %468 : vector<256xf32> to vector<1x256xf32>
    %470 = arith.truncf %469 : vector<1x256xf32> to vector<1x256xbf16>
    %471 = vector.extract_strided_slice %440 {offsets = [120, 0], sizes = [24, 256], strides = [1, 1]} : vector<192x256xbf16> to vector<24x256xbf16>
    %472 = arith.mulf %471, %362 : vector<24x256xbf16>
    %473 = arith.extf %472 : vector<24x256xbf16> to vector<24x256xf32>
    %cst_88 = arith.constant dense<0.000000e+00> : vector<256xf32>
    %474 = vector.multi_reduction <add>, %473, %cst_88 [0] : vector<24x256xf32> to vector<256xf32>
    %475 = vector.shape_cast %474 : vector<256xf32> to vector<1x256xf32>
    %476 = arith.truncf %475 : vector<1x256xf32> to vector<1x256xbf16>
    %477 = vector.extract_strided_slice %440 {offsets = [144, 0], sizes = [24, 256], strides = [1, 1]} : vector<192x256xbf16> to vector<24x256xbf16>
    %478 = arith.mulf %477, %362 : vector<24x256xbf16>
    %479 = arith.extf %478 : vector<24x256xbf16> to vector<24x256xf32>
    %cst_89 = arith.constant dense<0.000000e+00> : vector<256xf32>
    %480 = vector.multi_reduction <add>, %479, %cst_89 [0] : vector<24x256xf32> to vector<256xf32>
    %481 = vector.shape_cast %480 : vector<256xf32> to vector<1x256xf32>
    %482 = arith.truncf %481 : vector<1x256xf32> to vector<1x256xbf16>
    %483 = vector.extract_strided_slice %440 {offsets = [168, 0], sizes = [24, 256], strides = [1, 1]} : vector<192x256xbf16> to vector<24x256xbf16>
    %484 = arith.mulf %483, %362 : vector<24x256xbf16>
    %485 = arith.extf %484 : vector<24x256xbf16> to vector<24x256xf32>
    %cst_90 = arith.constant dense<0.000000e+00> : vector<256xf32>
    %486 = vector.multi_reduction <add>, %485, %cst_90 [0] : vector<24x256xf32> to vector<256xf32>
    %487 = vector.shape_cast %486 : vector<256xf32> to vector<1x256xf32>
    %488 = arith.truncf %487 : vector<1x256xf32> to vector<1x256xbf16>
    %489 = tpu.concatenate %446, %452, %458, %464, %470, %476, %482, %488 in 0 : vector<1x256xbf16>, vector<1x256xbf16>, vector<1x256xbf16>, vector<1x256xbf16>, vector<1x256xbf16>, vector<1x256xbf16>, vector<1x256xbf16>, vector<1x256xbf16> -> vector<8x256xbf16>
    %c24 = arith.constant 24 : index
    %c0_91 = arith.constant 0 : index
    %490 = vector.load %arg7[%c24, %c0_91] : memref<72x256xbf16, #tpu.memory_space<vmem>>, vector<8x256xbf16>
    tpu.vector_store %arg7[%c24, %c0_91], %489 {strides = array<i32>} : memref<72x256xbf16, #tpu.memory_space<vmem>>, vector<8x256xbf16>,
    %491 = vector.extract_strided_slice %439 {offsets = [0, 256], sizes = [192, 256], strides = [1, 1]} : vector<192x768xbf16> to vector<192x256xbf16>
    %492 = vector.extract_strided_slice %491 {offsets = [0, 0], sizes = [24, 256], strides = [1, 1]} : vector<192x256xbf16> to vector<24x256xbf16>
    %493 = arith.mulf %492, %398 : vector<24x256xbf16>
    %494 = arith.extf %493 : vector<24x256xbf16> to vector<24x256xf32>
    %cst_92 = arith.constant dense<0.000000e+00> : vector<256xf32>
    %495 = vector.multi_reduction <add>, %494, %cst_92 [0] : vector<24x256xf32> to vector<256xf32>
    %496 = vector.shape_cast %495 : vector<256xf32> to vector<1x256xf32>
    %497 = arith.truncf %496 : vector<1x256xf32> to vector<1x256xbf16>
    %498 = vector.extract_strided_slice %491 {offsets = [24, 0], sizes = [24, 256], strides = [1, 1]} : vector<192x256xbf16> to vector<24x256xbf16>
    %499 = arith.mulf %498, %398 : vector<24x256xbf16>
    %500 = arith.extf %499 : vector<24x256xbf16> to vector<24x256xf32>
    %cst_93 = arith.constant dense<0.000000e+00> : vector<256xf32>
    %501 = vector.multi_reduction <add>, %500, %cst_93 [0] : vector<24x256xf32> to vector<256xf32>
    %502 = vector.shape_cast %501 : vector<256xf32> to vector<1x256xf32>
    %503 = arith.truncf %502 : vector<1x256xf32> to vector<1x256xbf16>
    %504 = vector.extract_strided_slice %491 {offsets = [48, 0], sizes = [24, 256], strides = [1, 1]} : vector<192x256xbf16> to vector<24x256xbf16>
    %505 = arith.mulf %504, %398 : vector<24x256xbf16>
    %506 = arith.extf %505 : vector<24x256xbf16> to vector<24x256xf32>
    %cst_94 = arith.constant dense<0.000000e+00> : vector<256xf32>
    %507 = vector.multi_reduction <add>, %506, %cst_94 [0] : vector<24x256xf32> to vector<256xf32>
    %508 = vector.shape_cast %507 : vector<256xf32> to vector<1x256xf32>
    %509 = arith.truncf %508 : vector<1x256xf32> to vector<1x256xbf16>
    %510 = vector.extract_strided_slice %491 {offsets = [72, 0], sizes = [24, 256], strides = [1, 1]} : vector<192x256xbf16> to vector<24x256xbf16>
    %511 = arith.mulf %510, %398 : vector<24x256xbf16>
    %512 = arith.extf %511 : vector<24x256xbf16> to vector<24x256xf32>
    %cst_95 = arith.constant dense<0.000000e+00> : vector<256xf32>
    %513 = vector.multi_reduction <add>, %512, %cst_95 [0] : vector<24x256xf32> to vector<256xf32>
    %514 = vector.shape_cast %513 : vector<256xf32> to vector<1x256xf32>
    %515 = arith.truncf %514 : vector<1x256xf32> to vector<1x256xbf16>
    %516 = vector.extract_strided_slice %491 {offsets = [96, 0], sizes = [24, 256], strides = [1, 1]} : vector<192x256xbf16> to vector<24x256xbf16>
    %517 = arith.mulf %516, %398 : vector<24x256xbf16>
    %518 = arith.extf %517 : vector<24x256xbf16> to vector<24x256xf32>
    %cst_96 = arith.constant dense<0.000000e+00> : vector<256xf32>
    %519 = vector.multi_reduction <add>, %518, %cst_96 [0] : vector<24x256xf32> to vector<256xf32>
    %520 = vector.shape_cast %519 : vector<256xf32> to vector<1x256xf32>
    %521 = arith.truncf %520 : vector<1x256xf32> to vector<1x256xbf16>
    %522 = vector.extract_strided_slice %491 {offsets = [120, 0], sizes = [24, 256], strides = [1, 1]} : vector<192x256xbf16> to vector<24x256xbf16>
    %523 = arith.mulf %522, %398 : vector<24x256xbf16>
    %524 = arith.extf %523 : vector<24x256xbf16> to vector<24x256xf32>
    %cst_97 = arith.constant dense<0.000000e+00> : vector<256xf32>
    %525 = vector.multi_reduction <add>, %524, %cst_97 [0] : vector<24x256xf32> to vector<256xf32>
    %526 = vector.shape_cast %525 : vector<256xf32> to vector<1x256xf32>
    %527 = arith.truncf %526 : vector<1x256xf32> to vector<1x256xbf16>
    %528 = vector.extract_strided_slice %491 {offsets = [144, 0], sizes = [24, 256], strides = [1, 1]} : vector<192x256xbf16> to vector<24x256xbf16>
    %529 = arith.mulf %528, %398 : vector<24x256xbf16>
    %530 = arith.extf %529 : vector<24x256xbf16> to vector<24x256xf32>
    %cst_98 = arith.constant dense<0.000000e+00> : vector<256xf32>
    %531 = vector.multi_reduction <add>, %530, %cst_98 [0] : vector<24x256xf32> to vector<256xf32>
    %532 = vector.shape_cast %531 : vector<256xf32> to vector<1x256xf32>
    %533 = arith.truncf %532 : vector<1x256xf32> to vector<1x256xbf16>
    %534 = vector.extract_strided_slice %491 {offsets = [168, 0], sizes = [24, 256], strides = [1, 1]} : vector<192x256xbf16> to vector<24x256xbf16>
    %535 = arith.mulf %534, %398 : vector<24x256xbf16>
    %536 = arith.extf %535 : vector<24x256xbf16> to vector<24x256xf32>
    %cst_99 = arith.constant dense<0.000000e+00> : vector<256xf32>
    %537 = vector.multi_reduction <add>, %536, %cst_99 [0] : vector<24x256xf32> to vector<256xf32>
    %538 = vector.shape_cast %537 : vector<256xf32> to vector<1x256xf32>
    %539 = arith.truncf %538 : vector<1x256xf32> to vector<1x256xbf16>
    %540 = tpu.concatenate %497, %503, %509, %515, %521, %527, %533, %539 in 0 : vector<1x256xbf16>, vector<1x256xbf16>, vector<1x256xbf16>, vector<1x256xbf16>, vector<1x256xbf16>, vector<1x256xbf16>, vector<1x256xbf16>, vector<1x256xbf16> -> vector<8x256xbf16>
    %c32 = arith.constant 32 : index
    %c0_100 = arith.constant 0 : index
    %541 = vector.load %arg7[%c32, %c0_100] : memref<72x256xbf16, #tpu.memory_space<vmem>>, vector<8x256xbf16>
    tpu.vector_store %arg7[%c32, %c0_100], %540 {strides = array<i32>} : memref<72x256xbf16, #tpu.memory_space<vmem>>, vector<8x256xbf16>,
    %542 = vector.extract_strided_slice %439 {offsets = [0, 512], sizes = [192, 256], strides = [1, 1]} : vector<192x768xbf16> to vector<192x256xbf16>
    %543 = vector.extract_strided_slice %542 {offsets = [0, 0], sizes = [24, 256], strides = [1, 1]} : vector<192x256xbf16> to vector<24x256xbf16>
    %544 = arith.mulf %543, %434 : vector<24x256xbf16>
    %545 = arith.extf %544 : vector<24x256xbf16> to vector<24x256xf32>
    %cst_101 = arith.constant dense<0.000000e+00> : vector<256xf32>
    %546 = vector.multi_reduction <add>, %545, %cst_101 [0] : vector<24x256xf32> to vector<256xf32>
    %547 = vector.shape_cast %546 : vector<256xf32> to vector<1x256xf32>
    %548 = arith.truncf %547 : vector<1x256xf32> to vector<1x256xbf16>
    %549 = vector.extract_strided_slice %542 {offsets = [24, 0], sizes = [24, 256], strides = [1, 1]} : vector<192x256xbf16> to vector<24x256xbf16>
    %550 = arith.mulf %549, %434 : vector<24x256xbf16>
    %551 = arith.extf %550 : vector<24x256xbf16> to vector<24x256xf32>
    %cst_102 = arith.constant dense<0.000000e+00> : vector<256xf32>
    %552 = vector.multi_reduction <add>, %551, %cst_102 [0] : vector<24x256xf32> to vector<256xf32>
    %553 = vector.shape_cast %552 : vector<256xf32> to vector<1x256xf32>
    %554 = arith.truncf %553 : vector<1x256xf32> to vector<1x256xbf16>
    %555 = vector.extract_strided_slice %542 {offsets = [48, 0], sizes = [24, 256], strides = [1, 1]} : vector<192x256xbf16> to vector<24x256xbf16>
    %556 = arith.mulf %555, %434 : vector<24x256xbf16>
    %557 = arith.extf %556 : vector<24x256xbf16> to vector<24x256xf32>
    %cst_103 = arith.constant dense<0.000000e+00> : vector<256xf32>
    %558 = vector.multi_reduction <add>, %557, %cst_103 [0] : vector<24x256xf32> to vector<256xf32>
    %559 = vector.shape_cast %558 : vector<256xf32> to vector<1x256xf32>
    %560 = arith.truncf %559 : vector<1x256xf32> to vector<1x256xbf16>
    %561 = vector.extract_strided_slice %542 {offsets = [72, 0], sizes = [24, 256], strides = [1, 1]} : vector<192x256xbf16> to vector<24x256xbf16>
    %562 = arith.mulf %561, %434 : vector<24x256xbf16>
    %563 = arith.extf %562 : vector<24x256xbf16> to vector<24x256xf32>
    %cst_104 = arith.constant dense<0.000000e+00> : vector<256xf32>
    %564 = vector.multi_reduction <add>, %563, %cst_104 [0] : vector<24x256xf32> to vector<256xf32>
    %565 = vector.shape_cast %564 : vector<256xf32> to vector<1x256xf32>
    %566 = arith.truncf %565 : vector<1x256xf32> to vector<1x256xbf16>
    %567 = vector.extract_strided_slice %542 {offsets = [96, 0], sizes = [24, 256], strides = [1, 1]} : vector<192x256xbf16> to vector<24x256xbf16>
    %568 = arith.mulf %567, %434 : vector<24x256xbf16>
    %569 = arith.extf %568 : vector<24x256xbf16> to vector<24x256xf32>
    %cst_105 = arith.constant dense<0.000000e+00> : vector<256xf32>
    %570 = vector.multi_reduction <add>, %569, %cst_105 [0] : vector<24x256xf32> to vector<256xf32>
    %571 = vector.shape_cast %570 : vector<256xf32> to vector<1x256xf32>
    %572 = arith.truncf %571 : vector<1x256xf32> to vector<1x256xbf16>
    %573 = vector.extract_strided_slice %542 {offsets = [120, 0], sizes = [24, 256], strides = [1, 1]} : vector<192x256xbf16> to vector<24x256xbf16>
    %574 = arith.mulf %573, %434 : vector<24x256xbf16>
    %575 = arith.extf %574 : vector<24x256xbf16> to vector<24x256xf32>
    %cst_106 = arith.constant dense<0.000000e+00> : vector<256xf32>
    %576 = vector.multi_reduction <add>, %575, %cst_106 [0] : vector<24x256xf32> to vector<256xf32>
    %577 = vector.shape_cast %576 : vector<256xf32> to vector<1x256xf32>
    %578 = arith.truncf %577 : vector<1x256xf32> to vector<1x256xbf16>
    %579 = vector.extract_strided_slice %542 {offsets = [144, 0], sizes = [24, 256], strides = [1, 1]} : vector<192x256xbf16> to vector<24x256xbf16>
    %580 = arith.mulf %579, %434 : vector<24x256xbf16>
    %581 = arith.extf %580 : vector<24x256xbf16> to vector<24x256xf32>
    %cst_107 = arith.constant dense<0.000000e+00> : vector<256xf32>
    %582 = vector.multi_reduction <add>, %581, %cst_107 [0] : vector<24x256xf32> to vector<256xf32>
    %583 = vector.shape_cast %582 : vector<256xf32> to vector<1x256xf32>
    %584 = arith.truncf %583 : vector<1x256xf32> to vector<1x256xbf16>
    %585 = vector.extract_strided_slice %542 {offsets = [168, 0], sizes = [24, 256], strides = [1, 1]} : vector<192x256xbf16> to vector<24x256xbf16>
    %586 = arith.mulf %585, %434 : vector<24x256xbf16>
    %587 = arith.extf %586 : vector<24x256xbf16> to vector<24x256xf32>
    %cst_108 = arith.constant dense<0.000000e+00> : vector<256xf32>
    %588 = vector.multi_reduction <add>, %587, %cst_108 [0] : vector<24x256xf32> to vector<256xf32>
    %589 = vector.shape_cast %588 : vector<256xf32> to vector<1x256xf32>
    %590 = arith.truncf %589 : vector<1x256xf32> to vector<1x256xbf16>
    %591 = tpu.concatenate %548, %554, %560, %566, %572, %578, %584, %590 in 0 : vector<1x256xbf16>, vector<1x256xbf16>, vector<1x256xbf16>, vector<1x256xbf16>, vector<1x256xbf16>, vector<1x256xbf16>, vector<1x256xbf16>, vector<1x256xbf16> -> vector<8x256xbf16>
    %c40 = arith.constant 40 : index
    %c0_109 = arith.constant 0 : index
    %592 = vector.load %arg7[%c40, %c0_109] : memref<72x256xbf16, #tpu.memory_space<vmem>>, vector<8x256xbf16>
    tpu.vector_store %arg7[%c40, %c0_109], %591 {strides = array<i32>} : memref<72x256xbf16, #tpu.memory_space<vmem>>, vector<8x256xbf16>,
    %593 = vector.extract_strided_slice %57 {offsets = [6, 0], sizes = [1, 256], strides = [1, 1]} : vector<9x256xi32> to vector<1x256xi32>
    %594 = vector.broadcast %593 : vector<1x256xi32> to vector<18x256xi32>
    %595 = arith.cmpi eq, %60, %594 : vector<18x256xi32>
    %596 = vector.extract_strided_slice %53 {offsets = [6, 0], sizes = [1, 256], strides = [1, 1]} : vector<9x256xf32> to vector<1x256xf32>
    %cst_110 = arith.constant 0.000000e+00 : f32
    %597 = vector.shape_cast %596 : vector<1x256xf32> to vector<1x256xf32>
    %598 = vector.broadcast %597 : vector<1x256xf32> to vector<18x256xf32>
    %599 = vector.broadcast %cst_110 : f32 to vector<18x256xf32>
    %600 = arith.select %595, %598, %599 : vector<18x256xi1>, vector<18x256xf32>
    %601 = vector.extract_strided_slice %58 {offsets = [6, 0], sizes = [1, 256], strides = [1, 1]} : vector<9x256xi32> to vector<1x256xi32>
    %602 = vector.broadcast %601 : vector<1x256xi32> to vector<18x256xi32>
    %603 = arith.cmpi eq, %60, %602 : vector<18x256xi32>
    %604 = vector.extract_strided_slice %54 {offsets = [6, 0], sizes = [1, 256], strides = [1, 1]} : vector<9x256xf32> to vector<1x256xf32>
    %cst_111 = arith.constant 0.000000e+00 : f32
    %605 = vector.shape_cast %604 : vector<1x256xf32> to vector<1x256xf32>
    %606 = vector.broadcast %605 : vector<1x256xf32> to vector<18x256xf32>
    %607 = vector.broadcast %cst_111 : f32 to vector<18x256xf32>
    %608 = arith.select %603, %606, %607 : vector<18x256xi1>, vector<18x256xf32>
    %609 = arith.addf %600, %608 : vector<18x256xf32>
    %610 = arith.truncf %609 : vector<18x256xf32> to vector<18x256xbf16>
    %611 = vector.extract_strided_slice %55 {offsets = [6, 0], sizes = [1, 256], strides = [1, 1]} : vector<9x256xi32> to vector<1x256xi32>
    %612 = vector.broadcast %611 : vector<1x256xi32> to vector<24x256xi32>
    %613 = arith.cmpi eq, %59, %612 : vector<24x256xi32>
    %614 = vector.extract_strided_slice %36 {offsets = [6, 0], sizes = [1, 256], strides = [1, 1]} : vector<9x256xf32> to vector<1x256xf32>
    %cst_112 = arith.constant 0.000000e+00 : f32
    %615 = vector.shape_cast %614 : vector<1x256xf32> to vector<1x256xf32>
    %616 = vector.broadcast %615 : vector<1x256xf32> to vector<24x256xf32>
    %617 = vector.broadcast %cst_112 : f32 to vector<24x256xf32>
    %618 = arith.select %613, %616, %617 : vector<24x256xi1>, vector<24x256xf32>
    %619 = vector.extract_strided_slice %56 {offsets = [6, 0], sizes = [1, 256], strides = [1, 1]} : vector<9x256xi32> to vector<1x256xi32>
    %620 = vector.broadcast %619 : vector<1x256xi32> to vector<24x256xi32>
    %621 = arith.cmpi eq, %59, %620 : vector<24x256xi32>
    %622 = vector.extract_strided_slice %39 {offsets = [6, 0], sizes = [1, 256], strides = [1, 1]} : vector<9x256xf32> to vector<1x256xf32>
    %cst_113 = arith.constant 0.000000e+00 : f32
    %623 = vector.shape_cast %622 : vector<1x256xf32> to vector<1x256xf32>
    %624 = vector.broadcast %623 : vector<1x256xf32> to vector<24x256xf32>
    %625 = vector.broadcast %cst_113 : f32 to vector<24x256xf32>
    %626 = arith.select %621, %624, %625 : vector<24x256xi1>, vector<24x256xf32>
    %627 = arith.addf %618, %626 : vector<24x256xf32>
    %628 = arith.truncf %627 : vector<24x256xf32> to vector<24x256xbf16>
    %629 = vector.extract_strided_slice %57 {offsets = [7, 0], sizes = [1, 256], strides = [1, 1]} : vector<9x256xi32> to vector<1x256xi32>
    %630 = vector.broadcast %629 : vector<1x256xi32> to vector<18x256xi32>
    %631 = arith.cmpi eq, %60, %630 : vector<18x256xi32>
    %632 = vector.extract_strided_slice %53 {offsets = [7, 0], sizes = [1, 256], strides = [1, 1]} : vector<9x256xf32> to vector<1x256xf32>
    %cst_114 = arith.constant 0.000000e+00 : f32
    %633 = vector.shape_cast %632 : vector<1x256xf32> to vector<1x256xf32>
    %634 = vector.broadcast %633 : vector<1x256xf32> to vector<18x256xf32>
    %635 = vector.broadcast %cst_114 : f32 to vector<18x256xf32>
    %636 = arith.select %631, %634, %635 : vector<18x256xi1>, vector<18x256xf32>
    %637 = vector.extract_strided_slice %58 {offsets = [7, 0], sizes = [1, 256], strides = [1, 1]} : vector<9x256xi32> to vector<1x256xi32>
    %638 = vector.broadcast %637 : vector<1x256xi32> to vector<18x256xi32>
    %639 = arith.cmpi eq, %60, %638 : vector<18x256xi32>
    %640 = vector.extract_strided_slice %54 {offsets = [7, 0], sizes = [1, 256], strides = [1, 1]} : vector<9x256xf32> to vector<1x256xf32>
    %cst_115 = arith.constant 0.000000e+00 : f32
    %641 = vector.shape_cast %640 : vector<1x256xf32> to vector<1x256xf32>
    %642 = vector.broadcast %641 : vector<1x256xf32> to vector<18x256xf32>
    %643 = vector.broadcast %cst_115 : f32 to vector<18x256xf32>
    %644 = arith.select %639, %642, %643 : vector<18x256xi1>, vector<18x256xf32>
    %645 = arith.addf %636, %644 : vector<18x256xf32>
    %646 = arith.truncf %645 : vector<18x256xf32> to vector<18x256xbf16>
    %647 = vector.extract_strided_slice %55 {offsets = [7, 0], sizes = [1, 256], strides = [1, 1]} : vector<9x256xi32> to vector<1x256xi32>
    %648 = vector.broadcast %647 : vector<1x256xi32> to vector<24x256xi32>
    %649 = arith.cmpi eq, %59, %648 : vector<24x256xi32>
    %650 = vector.extract_strided_slice %36 {offsets = [7, 0], sizes = [1, 256], strides = [1, 1]} : vector<9x256xf32> to vector<1x256xf32>
    %cst_116 = arith.constant 0.000000e+00 : f32
    %651 = vector.shape_cast %650 : vector<1x256xf32> to vector<1x256xf32>
    %652 = vector.broadcast %651 : vector<1x256xf32> to vector<24x256xf32>
    %653 = vector.broadcast %cst_116 : f32 to vector<24x256xf32>
    %654 = arith.select %649, %652, %653 : vector<24x256xi1>, vector<24x256xf32>
    %655 = vector.extract_strided_slice %56 {offsets = [7, 0], sizes = [1, 256], strides = [1, 1]} : vector<9x256xi32> to vector<1x256xi32>
    %656 = vector.broadcast %655 : vector<1x256xi32> to vector<24x256xi32>
    %657 = arith.cmpi eq, %59, %656 : vector<24x256xi32>
    %658 = vector.extract_strided_slice %39 {offsets = [7, 0], sizes = [1, 256], strides = [1, 1]} : vector<9x256xf32> to vector<1x256xf32>
    %cst_117 = arith.constant 0.000000e+00 : f32
    %659 = vector.shape_cast %658 : vector<1x256xf32> to vector<1x256xf32>
    %660 = vector.broadcast %659 : vector<1x256xf32> to vector<24x256xf32>
    %661 = vector.broadcast %cst_117 : f32 to vector<24x256xf32>
    %662 = arith.select %657, %660, %661 : vector<24x256xi1>, vector<24x256xf32>
    %663 = arith.addf %654, %662 : vector<24x256xf32>
    %664 = arith.truncf %663 : vector<24x256xf32> to vector<24x256xbf16>
    %665 = vector.extract_strided_slice %57 {offsets = [8, 0], sizes = [1, 256], strides = [1, 1]} : vector<9x256xi32> to vector<1x256xi32>
    %666 = vector.broadcast %665 : vector<1x256xi32> to vector<18x256xi32>
    %667 = arith.cmpi eq, %60, %666 : vector<18x256xi32>
    %668 = vector.extract_strided_slice %53 {offsets = [8, 0], sizes = [1, 256], strides = [1, 1]} : vector<9x256xf32> to vector<1x256xf32>
    %cst_118 = arith.constant 0.000000e+00 : f32
    %669 = vector.shape_cast %668 : vector<1x256xf32> to vector<1x256xf32>
    %670 = vector.broadcast %669 : vector<1x256xf32> to vector<18x256xf32>
    %671 = vector.broadcast %cst_118 : f32 to vector<18x256xf32>
    %672 = arith.select %667, %670, %671 : vector<18x256xi1>, vector<18x256xf32>
    %673 = vector.extract_strided_slice %58 {offsets = [8, 0], sizes = [1, 256], strides = [1, 1]} : vector<9x256xi32> to vector<1x256xi32>
    %674 = vector.broadcast %673 : vector<1x256xi32> to vector<18x256xi32>
    %675 = arith.cmpi eq, %60, %674 : vector<18x256xi32>
    %676 = vector.extract_strided_slice %54 {offsets = [8, 0], sizes = [1, 256], strides = [1, 1]} : vector<9x256xf32> to vector<1x256xf32>
    %cst_119 = arith.constant 0.000000e+00 : f32
    %677 = vector.shape_cast %676 : vector<1x256xf32> to vector<1x256xf32>
    %678 = vector.broadcast %677 : vector<1x256xf32> to vector<18x256xf32>
    %679 = vector.broadcast %cst_119 : f32 to vector<18x256xf32>
    %680 = arith.select %675, %678, %679 : vector<18x256xi1>, vector<18x256xf32>
    %681 = arith.addf %672, %680 : vector<18x256xf32>
    %682 = arith.truncf %681 : vector<18x256xf32> to vector<18x256xbf16>
    %683 = vector.extract_strided_slice %55 {offsets = [8, 0], sizes = [1, 256], strides = [1, 1]} : vector<9x256xi32> to vector<1x256xi32>
    %684 = vector.broadcast %683 : vector<1x256xi32> to vector<24x256xi32>
    %685 = arith.cmpi eq, %59, %684 : vector<24x256xi32>
    %686 = vector.extract_strided_slice %36 {offsets = [8, 0], sizes = [1, 256], strides = [1, 1]} : vector<9x256xf32> to vector<1x256xf32>
    %cst_120 = arith.constant 0.000000e+00 : f32
    %687 = vector.shape_cast %686 : vector<1x256xf32> to vector<1x256xf32>
    %688 = vector.broadcast %687 : vector<1x256xf32> to vector<24x256xf32>
    %689 = vector.broadcast %cst_120 : f32 to vector<24x256xf32>
    %690 = arith.select %685, %688, %689 : vector<24x256xi1>, vector<24x256xf32>
    %691 = vector.extract_strided_slice %56 {offsets = [8, 0], sizes = [1, 256], strides = [1, 1]} : vector<9x256xi32> to vector<1x256xi32>
    %692 = vector.broadcast %691 : vector<1x256xi32> to vector<24x256xi32>
    %693 = arith.cmpi eq, %59, %692 : vector<24x256xi32>
    %694 = vector.extract_strided_slice %39 {offsets = [8, 0], sizes = [1, 256], strides = [1, 1]} : vector<9x256xf32> to vector<1x256xf32>
    %cst_121 = arith.constant 0.000000e+00 : f32
    %695 = vector.shape_cast %694 : vector<1x256xf32> to vector<1x256xf32>
    %696 = vector.broadcast %695 : vector<1x256xf32> to vector<24x256xf32>
    %697 = vector.broadcast %cst_121 : f32 to vector<24x256xf32>
    %698 = arith.select %693, %696, %697 : vector<24x256xi1>, vector<24x256xf32>
    %699 = arith.addf %690, %698 : vector<24x256xf32>
    %700 = arith.truncf %699 : vector<24x256xf32> to vector<24x256xbf16>
    %701 = tpu.concatenate %610, %646, %682 in 1 : vector<18x256xbf16>, vector<18x256xbf16>, vector<18x256xbf16> -> vector<18x768xbf16>
    %c0_122 = arith.constant 0 : index
    %c0_123 = arith.constant 0 : index
    %c0_124 = arith.constant 0 : index
    %702 = vector.load %arg2[%c0_122, %c0_123, %c0_124] : memref<1x192x18xbf16, #tpu.memory_space<vmem>>, vector<1x192x18xbf16>
    %703 = vector.shape_cast %702 : vector<1x192x18xbf16> to vector<192x18xbf16>
    %cst_125 = arith.constant dense<0.000000e+00> : vector<192x768xf32>
    %704 = tpu.matmul %703, %701, %cst_125 {dimension_numbers = #tpu.dot_dimension_numbers<[1], [0], [0], [1], [0, 0, 1, 1], [], []>} : vector<192x18xbf16>, vector<18x768xbf16>, vector<192x768xf32> -> vector<192x768xf32>
    %705 = arith.truncf %704 : vector<192x768xf32> to vector<192x768xbf16>
    %706 = vector.extract_strided_slice %705 {offsets = [0, 0], sizes = [192, 256], strides = [1, 1]} : vector<192x768xbf16> to vector<192x256xbf16>
    %707 = vector.extract_strided_slice %706 {offsets = [0, 0], sizes = [24, 256], strides = [1, 1]} : vector<192x256xbf16> to vector<24x256xbf16>
    %708 = arith.mulf %707, %628 : vector<24x256xbf16>
    %709 = arith.extf %708 : vector<24x256xbf16> to vector<24x256xf32>
    %cst_126 = arith.constant dense<0.000000e+00> : vector<256xf32>
    %710 = vector.multi_reduction <add>, %709, %cst_126 [0] : vector<24x256xf32> to vector<256xf32>
    %711 = vector.shape_cast %710 : vector<256xf32> to vector<1x256xf32>
    %712 = arith.truncf %711 : vector<1x256xf32> to vector<1x256xbf16>
    %713 = vector.extract_strided_slice %706 {offsets = [24, 0], sizes = [24, 256], strides = [1, 1]} : vector<192x256xbf16> to vector<24x256xbf16>
    %714 = arith.mulf %713, %628 : vector<24x256xbf16>
    %715 = arith.extf %714 : vector<24x256xbf16> to vector<24x256xf32>
    %cst_127 = arith.constant dense<0.000000e+00> : vector<256xf32>
    %716 = vector.multi_reduction <add>, %715, %cst_127 [0] : vector<24x256xf32> to vector<256xf32>
    %717 = vector.shape_cast %716 : vector<256xf32> to vector<1x256xf32>
    %718 = arith.truncf %717 : vector<1x256xf32> to vector<1x256xbf16>
    %719 = vector.extract_strided_slice %706 {offsets = [48, 0], sizes = [24, 256], strides = [1, 1]} : vector<192x256xbf16> to vector<24x256xbf16>
    %720 = arith.mulf %719, %628 : vector<24x256xbf16>
    %721 = arith.extf %720 : vector<24x256xbf16> to vector<24x256xf32>
    %cst_128 = arith.constant dense<0.000000e+00> : vector<256xf32>
    %722 = vector.multi_reduction <add>, %721, %cst_128 [0] : vector<24x256xf32> to vector<256xf32>
    %723 = vector.shape_cast %722 : vector<256xf32> to vector<1x256xf32>
    %724 = arith.truncf %723 : vector<1x256xf32> to vector<1x256xbf16>
    %725 = vector.extract_strided_slice %706 {offsets = [72, 0], sizes = [24, 256], strides = [1, 1]} : vector<192x256xbf16> to vector<24x256xbf16>
    %726 = arith.mulf %725, %628 : vector<24x256xbf16>
    %727 = arith.extf %726 : vector<24x256xbf16> to vector<24x256xf32>
    %cst_129 = arith.constant dense<0.000000e+00> : vector<256xf32>
    %728 = vector.multi_reduction <add>, %727, %cst_129 [0] : vector<24x256xf32> to vector<256xf32>
    %729 = vector.shape_cast %728 : vector<256xf32> to vector<1x256xf32>
    %730 = arith.truncf %729 : vector<1x256xf32> to vector<1x256xbf16>
    %731 = vector.extract_strided_slice %706 {offsets = [96, 0], sizes = [24, 256], strides = [1, 1]} : vector<192x256xbf16> to vector<24x256xbf16>
    %732 = arith.mulf %731, %628 : vector<24x256xbf16>
    %733 = arith.extf %732 : vector<24x256xbf16> to vector<24x256xf32>
    %cst_130 = arith.constant dense<0.000000e+00> : vector<256xf32>
    %734 = vector.multi_reduction <add>, %733, %cst_130 [0] : vector<24x256xf32> to vector<256xf32>
    %735 = vector.shape_cast %734 : vector<256xf32> to vector<1x256xf32>
    %736 = arith.truncf %735 : vector<1x256xf32> to vector<1x256xbf16>
    %737 = vector.extract_strided_slice %706 {offsets = [120, 0], sizes = [24, 256], strides = [1, 1]} : vector<192x256xbf16> to vector<24x256xbf16>
    %738 = arith.mulf %737, %628 : vector<24x256xbf16>
    %739 = arith.extf %738 : vector<24x256xbf16> to vector<24x256xf32>
    %cst_131 = arith.constant dense<0.000000e+00> : vector<256xf32>
    %740 = vector.multi_reduction <add>, %739, %cst_131 [0] : vector<24x256xf32> to vector<256xf32>
    %741 = vector.shape_cast %740 : vector<256xf32> to vector<1x256xf32>
    %742 = arith.truncf %741 : vector<1x256xf32> to vector<1x256xbf16>
    %743 = vector.extract_strided_slice %706 {offsets = [144, 0], sizes = [24, 256], strides = [1, 1]} : vector<192x256xbf16> to vector<24x256xbf16>
    %744 = arith.mulf %743, %628 : vector<24x256xbf16>
    %745 = arith.extf %744 : vector<24x256xbf16> to vector<24x256xf32>
    %cst_132 = arith.constant dense<0.000000e+00> : vector<256xf32>
    %746 = vector.multi_reduction <add>, %745, %cst_132 [0] : vector<24x256xf32> to vector<256xf32>
    %747 = vector.shape_cast %746 : vector<256xf32> to vector<1x256xf32>
    %748 = arith.truncf %747 : vector<1x256xf32> to vector<1x256xbf16>
    %749 = vector.extract_strided_slice %706 {offsets = [168, 0], sizes = [24, 256], strides = [1, 1]} : vector<192x256xbf16> to vector<24x256xbf16>
    %750 = arith.mulf %749, %628 : vector<24x256xbf16>
    %751 = arith.extf %750 : vector<24x256xbf16> to vector<24x256xf32>
    %cst_133 = arith.constant dense<0.000000e+00> : vector<256xf32>
    %752 = vector.multi_reduction <add>, %751, %cst_133 [0] : vector<24x256xf32> to vector<256xf32>
    %753 = vector.shape_cast %752 : vector<256xf32> to vector<1x256xf32>
    %754 = arith.truncf %753 : vector<1x256xf32> to vector<1x256xbf16>
    %755 = tpu.concatenate %712, %718, %724, %730, %736, %742, %748, %754 in 0 : vector<1x256xbf16>, vector<1x256xbf16>, vector<1x256xbf16>, vector<1x256xbf16>, vector<1x256xbf16>, vector<1x256xbf16>, vector<1x256xbf16>, vector<1x256xbf16> -> vector<8x256xbf16>
    %c48 = arith.constant 48 : index
    %c0_134 = arith.constant 0 : index
    %756 = vector.load %arg7[%c48, %c0_134] : memref<72x256xbf16, #tpu.memory_space<vmem>>, vector<8x256xbf16>
    tpu.vector_store %arg7[%c48, %c0_134], %755 {strides = array<i32>} : memref<72x256xbf16, #tpu.memory_space<vmem>>, vector<8x256xbf16>,
    %757 = vector.extract_strided_slice %705 {offsets = [0, 256], sizes = [192, 256], strides = [1, 1]} : vector<192x768xbf16> to vector<192x256xbf16>
    %758 = vector.extract_strided_slice %757 {offsets = [0, 0], sizes = [24, 256], strides = [1, 1]} : vector<192x256xbf16> to vector<24x256xbf16>
    %759 = arith.mulf %758, %664 : vector<24x256xbf16>
    %760 = arith.extf %759 : vector<24x256xbf16> to vector<24x256xf32>
    %cst_135 = arith.constant dense<0.000000e+00> : vector<256xf32>
    %761 = vector.multi_reduction <add>, %760, %cst_135 [0] : vector<24x256xf32> to vector<256xf32>
    %762 = vector.shape_cast %761 : vector<256xf32> to vector<1x256xf32>
    %763 = arith.truncf %762 : vector<1x256xf32> to vector<1x256xbf16>
    %764 = vector.extract_strided_slice %757 {offsets = [24, 0], sizes = [24, 256], strides = [1, 1]} : vector<192x256xbf16> to vector<24x256xbf16>
    %765 = arith.mulf %764, %664 : vector<24x256xbf16>
    %766 = arith.extf %765 : vector<24x256xbf16> to vector<24x256xf32>
    %cst_136 = arith.constant dense<0.000000e+00> : vector<256xf32>
    %767 = vector.multi_reduction <add>, %766, %cst_136 [0] : vector<24x256xf32> to vector<256xf32>
    %768 = vector.shape_cast %767 : vector<256xf32> to vector<1x256xf32>
    %769 = arith.truncf %768 : vector<1x256xf32> to vector<1x256xbf16>
    %770 = vector.extract_strided_slice %757 {offsets = [48, 0], sizes = [24, 256], strides = [1, 1]} : vector<192x256xbf16> to vector<24x256xbf16>
    %771 = arith.mulf %770, %664 : vector<24x256xbf16>
    %772 = arith.extf %771 : vector<24x256xbf16> to vector<24x256xf32>
    %cst_137 = arith.constant dense<0.000000e+00> : vector<256xf32>
    %773 = vector.multi_reduction <add>, %772, %cst_137 [0] : vector<24x256xf32> to vector<256xf32>
    %774 = vector.shape_cast %773 : vector<256xf32> to vector<1x256xf32>
    %775 = arith.truncf %774 : vector<1x256xf32> to vector<1x256xbf16>
    %776 = vector.extract_strided_slice %757 {offsets = [72, 0], sizes = [24, 256], strides = [1, 1]} : vector<192x256xbf16> to vector<24x256xbf16>
    %777 = arith.mulf %776, %664 : vector<24x256xbf16>
    %778 = arith.extf %777 : vector<24x256xbf16> to vector<24x256xf32>
    %cst_138 = arith.constant dense<0.000000e+00> : vector<256xf32>
    %779 = vector.multi_reduction <add>, %778, %cst_138 [0] : vector<24x256xf32> to vector<256xf32>
    %780 = vector.shape_cast %779 : vector<256xf32> to vector<1x256xf32>
    %781 = arith.truncf %780 : vector<1x256xf32> to vector<1x256xbf16>
    %782 = vector.extract_strided_slice %757 {offsets = [96, 0], sizes = [24, 256], strides = [1, 1]} : vector<192x256xbf16> to vector<24x256xbf16>
    %783 = arith.mulf %782, %664 : vector<24x256xbf16>
    %784 = arith.extf %783 : vector<24x256xbf16> to vector<24x256xf32>
    %cst_139 = arith.constant dense<0.000000e+00> : vector<256xf32>
    %785 = vector.multi_reduction <add>, %784, %cst_139 [0] : vector<24x256xf32> to vector<256xf32>
    %786 = vector.shape_cast %785 : vector<256xf32> to vector<1x256xf32>
    %787 = arith.truncf %786 : vector<1x256xf32> to vector<1x256xbf16>
    %788 = vector.extract_strided_slice %757 {offsets = [120, 0], sizes = [24, 256], strides = [1, 1]} : vector<192x256xbf16> to vector<24x256xbf16>
    %789 = arith.mulf %788, %664 : vector<24x256xbf16>
    %790 = arith.extf %789 : vector<24x256xbf16> to vector<24x256xf32>
    %cst_140 = arith.constant dense<0.000000e+00> : vector<256xf32>
    %791 = vector.multi_reduction <add>, %790, %cst_140 [0] : vector<24x256xf32> to vector<256xf32>
    %792 = vector.shape_cast %791 : vector<256xf32> to vector<1x256xf32>
    %793 = arith.truncf %792 : vector<1x256xf32> to vector<1x256xbf16>
    %794 = vector.extract_strided_slice %757 {offsets = [144, 0], sizes = [24, 256], strides = [1, 1]} : vector<192x256xbf16> to vector<24x256xbf16>
    %795 = arith.mulf %794, %664 : vector<24x256xbf16>
    %796 = arith.extf %795 : vector<24x256xbf16> to vector<24x256xf32>
    %cst_141 = arith.constant dense<0.000000e+00> : vector<256xf32>
    %797 = vector.multi_reduction <add>, %796, %cst_141 [0] : vector<24x256xf32> to vector<256xf32>
    %798 = vector.shape_cast %797 : vector<256xf32> to vector<1x256xf32>
    %799 = arith.truncf %798 : vector<1x256xf32> to vector<1x256xbf16>
    %800 = vector.extract_strided_slice %757 {offsets = [168, 0], sizes = [24, 256], strides = [1, 1]} : vector<192x256xbf16> to vector<24x256xbf16>
    %801 = arith.mulf %800, %664 : vector<24x256xbf16>
    %802 = arith.extf %801 : vector<24x256xbf16> to vector<24x256xf32>
    %cst_142 = arith.constant dense<0.000000e+00> : vector<256xf32>
    %803 = vector.multi_reduction <add>, %802, %cst_142 [0] : vector<24x256xf32> to vector<256xf32>
    %804 = vector.shape_cast %803 : vector<256xf32> to vector<1x256xf32>
    %805 = arith.truncf %804 : vector<1x256xf32> to vector<1x256xbf16>
    %806 = tpu.concatenate %763, %769, %775, %781, %787, %793, %799, %805 in 0 : vector<1x256xbf16>, vector<1x256xbf16>, vector<1x256xbf16>, vector<1x256xbf16>, vector<1x256xbf16>, vector<1x256xbf16>, vector<1x256xbf16>, vector<1x256xbf16> -> vector<8x256xbf16>
    %c56 = arith.constant 56 : index
    %c0_143 = arith.constant 0 : index
    %807 = vector.load %arg7[%c56, %c0_143] : memref<72x256xbf16, #tpu.memory_space<vmem>>, vector<8x256xbf16>
    tpu.vector_store %arg7[%c56, %c0_143], %806 {strides = array<i32>} : memref<72x256xbf16, #tpu.memory_space<vmem>>, vector<8x256xbf16>,
    %808 = vector.extract_strided_slice %705 {offsets = [0, 512], sizes = [192, 256], strides = [1, 1]} : vector<192x768xbf16> to vector<192x256xbf16>
    %809 = vector.extract_strided_slice %808 {offsets = [0, 0], sizes = [24, 256], strides = [1, 1]} : vector<192x256xbf16> to vector<24x256xbf16>
    %810 = arith.mulf %809, %700 : vector<24x256xbf16>
    %811 = arith.extf %810 : vector<24x256xbf16> to vector<24x256xf32>
    %cst_144 = arith.constant dense<0.000000e+00> : vector<256xf32>
    %812 = vector.multi_reduction <add>, %811, %cst_144 [0] : vector<24x256xf32> to vector<256xf32>
    %813 = vector.shape_cast %812 : vector<256xf32> to vector<1x256xf32>
    %814 = arith.truncf %813 : vector<1x256xf32> to vector<1x256xbf16>
    %815 = vector.extract_strided_slice %808 {offsets = [24, 0], sizes = [24, 256], strides = [1, 1]} : vector<192x256xbf16> to vector<24x256xbf16>
    %816 = arith.mulf %815, %700 : vector<24x256xbf16>
    %817 = arith.extf %816 : vector<24x256xbf16> to vector<24x256xf32>
    %cst_145 = arith.constant dense<0.000000e+00> : vector<256xf32>
    %818 = vector.multi_reduction <add>, %817, %cst_145 [0] : vector<24x256xf32> to vector<256xf32>
    %819 = vector.shape_cast %818 : vector<256xf32> to vector<1x256xf32>
    %820 = arith.truncf %819 : vector<1x256xf32> to vector<1x256xbf16>
    %821 = vector.extract_strided_slice %808 {offsets = [48, 0], sizes = [24, 256], strides = [1, 1]} : vector<192x256xbf16> to vector<24x256xbf16>
    %822 = arith.mulf %821, %700 : vector<24x256xbf16>
    %823 = arith.extf %822 : vector<24x256xbf16> to vector<24x256xf32>
    %cst_146 = arith.constant dense<0.000000e+00> : vector<256xf32>
    %824 = vector.multi_reduction <add>, %823, %cst_146 [0] : vector<24x256xf32> to vector<256xf32>
    %825 = vector.shape_cast %824 : vector<256xf32> to vector<1x256xf32>
    %826 = arith.truncf %825 : vector<1x256xf32> to vector<1x256xbf16>
    %827 = vector.extract_strided_slice %808 {offsets = [72, 0], sizes = [24, 256], strides = [1, 1]} : vector<192x256xbf16> to vector<24x256xbf16>
    %828 = arith.mulf %827, %700 : vector<24x256xbf16>
    %829 = arith.extf %828 : vector<24x256xbf16> to vector<24x256xf32>
    %cst_147 = arith.constant dense<0.000000e+00> : vector<256xf32>
    %830 = vector.multi_reduction <add>, %829, %cst_147 [0] : vector<24x256xf32> to vector<256xf32>
    %831 = vector.shape_cast %830 : vector<256xf32> to vector<1x256xf32>
    %832 = arith.truncf %831 : vector<1x256xf32> to vector<1x256xbf16>
    %833 = vector.extract_strided_slice %808 {offsets = [96, 0], sizes = [24, 256], strides = [1, 1]} : vector<192x256xbf16> to vector<24x256xbf16>
    %834 = arith.mulf %833, %700 : vector<24x256xbf16>
    %835 = arith.extf %834 : vector<24x256xbf16> to vector<24x256xf32>
    %cst_148 = arith.constant dense<0.000000e+00> : vector<256xf32>
    %836 = vector.multi_reduction <add>, %835, %cst_148 [0] : vector<24x256xf32> to vector<256xf32>
    %837 = vector.shape_cast %836 : vector<256xf32> to vector<1x256xf32>
    %838 = arith.truncf %837 : vector<1x256xf32> to vector<1x256xbf16>
    %839 = vector.extract_strided_slice %808 {offsets = [120, 0], sizes = [24, 256], strides = [1, 1]} : vector<192x256xbf16> to vector<24x256xbf16>
    %840 = arith.mulf %839, %700 : vector<24x256xbf16>
    %841 = arith.extf %840 : vector<24x256xbf16> to vector<24x256xf32>
    %cst_149 = arith.constant dense<0.000000e+00> : vector<256xf32>
    %842 = vector.multi_reduction <add>, %841, %cst_149 [0] : vector<24x256xf32> to vector<256xf32>
    %843 = vector.shape_cast %842 : vector<256xf32> to vector<1x256xf32>
    %844 = arith.truncf %843 : vector<1x256xf32> to vector<1x256xbf16>
    %845 = vector.extract_strided_slice %808 {offsets = [144, 0], sizes = [24, 256], strides = [1, 1]} : vector<192x256xbf16> to vector<24x256xbf16>
    %846 = arith.mulf %845, %700 : vector<24x256xbf16>
    %847 = arith.extf %846 : vector<24x256xbf16> to vector<24x256xf32>
    %cst_150 = arith.constant dense<0.000000e+00> : vector<256xf32>
    %848 = vector.multi_reduction <add>, %847, %cst_150 [0] : vector<24x256xf32> to vector<256xf32>
    %849 = vector.shape_cast %848 : vector<256xf32> to vector<1x256xf32>
    %850 = arith.truncf %849 : vector<1x256xf32> to vector<1x256xbf16>
    %851 = vector.extract_strided_slice %808 {offsets = [168, 0], sizes = [24, 256], strides = [1, 1]} : vector<192x256xbf16> to vector<24x256xbf16>
    %852 = arith.mulf %851, %700 : vector<24x256xbf16>
    %853 = arith.extf %852 : vector<24x256xbf16> to vector<24x256xf32>
    %cst_151 = arith.constant dense<0.000000e+00> : vector<256xf32>
    %854 = vector.multi_reduction <add>, %853, %cst_151 [0] : vector<24x256xf32> to vector<256xf32>
    %855 = vector.shape_cast %854 : vector<256xf32> to vector<1x256xf32>
    %856 = arith.truncf %855 : vector<1x256xf32> to vector<1x256xbf16>
    %857 = tpu.concatenate %814, %820, %826, %832, %838, %844, %850, %856 in 0 : vector<1x256xbf16>, vector<1x256xbf16>, vector<1x256xbf16>, vector<1x256xbf16>, vector<1x256xbf16>, vector<1x256xbf16>, vector<1x256xbf16>, vector<1x256xbf16> -> vector<8x256xbf16>
    %c64 = arith.constant 64 : index
    %c0_152 = arith.constant 0 : index
    %858 = vector.load %arg7[%c64, %c0_152] : memref<72x256xbf16, #tpu.memory_space<vmem>>, vector<8x256xbf16>
    tpu.vector_store %arg7[%c64, %c0_152], %857 {strides = array<i32>} : memref<72x256xbf16, #tpu.memory_space<vmem>>, vector<8x256xbf16>,
    %c0_153 = arith.constant 0 : index
    %c0_154 = arith.constant 0 : index
    %859 = vector.load %arg5[%c0_153, %c0_154] : memref<8x72xbf16, #tpu.memory_space<vmem>>, vector<8x72xbf16>
    %c0_155 = arith.constant 0 : index
    %c0_156 = arith.constant 0 : index
    %860 = vector.load %arg7[%c0_155, %c0_156] : memref<72x256xbf16, #tpu.memory_space<vmem>>, vector<72x256xbf16>
    %cst_157 = arith.constant dense<0.000000e+00> : vector<8x256xf32>
    %861 = tpu.matmul %859, %860, %cst_157 {dimension_numbers = #tpu.dot_dimension_numbers<[1], [0], [0], [1], [0, 0, 1, 1], [], []>} : vector<8x72xbf16>, vector<72x256xbf16>, vector<8x256xf32> -> vector<8x256xf32>
    %c0_158 = arith.constant 0 : index
    %c0_159 = arith.constant 0 : index
    %c0_160 = arith.constant 0 : index
    %862 = vector.load %arg6[%c0_158, %c0_159, %c0_160] : memref<1x8x256xf32, #tpu.memory_space<vmem>>, vector<1x8x256xf32>
    %863 = vector.shape_cast %862 : vector<1x8x256xf32> to vector<8x256xf32>
    %864 = vector.shape_cast %861 : vector<8x256xf32> to vector<1x8x256xf32>
    tpu.vector_store %arg6[%c0_158, %c0_159, %c0_160], %864 {strides = array<i32>} : memref<1x8x256xf32, #tpu.memory_space<vmem>>, vector<1x8x256xf32>,
    return
  }
  func.func @transform_0(%arg0: i32, %arg1: i32) -> (i32, i32, i32) {
    %c0_i32 = arith.constant 0 : i32
    %c0_i32_0 = arith.constant 0 : i32
    %c0_i32_1 = arith.constant 0 : i32
    return %arg0, %c0_i32, %c0_i32_0 : i32, i32, i32
  }
  func.func @transform_1(%arg0: i32, %arg1: i32) -> (i32, i32, i32) {
    %c0_i32 = arith.constant 0 : i32
    %c0_i32_0 = arith.constant 0 : i32
    return %arg0, %c0_i32, %arg1 : i32, i32, i32
  }
  func.func @transform_2(%arg0: i32, %arg1: i32) -> (i32, i32, i32) {
    %c0_i32 = arith.constant 0 : i32
    %c0_i32_0 = arith.constant 0 : i32
    return %arg0, %c0_i32, %arg1 : i32, i32, i32
  }
  func.func @transform_3(%arg0: i32, %arg1: i32) -> (i32, i32) {
    %c0_i32 = arith.constant 0 : i32
    %c0_i32_0 = arith.constant 0 : i32
    %c0_i32_1 = arith.constant 0 : i32
    return %c0_i32, %c0_i32_0 : i32, i32
  }
  func.func @transform_4(%arg0: i32, %arg1: i32) -> (i32, i32, i32) {
    %c0_i32 = arith.constant 0 : i32
    %c0_i32_0 = arith.constant 0 : i32
    return %arg0, %c0_i32, %arg1 : i32, i32, i32
  }
}

</mosaic_0001>

<llo_original>
// kernel: tpu_custom_call.1
$region0: #{tpu_custom_call.1}
  #allocation0 [shape = 'u32[]', space=smem, size = 0x4, offset = 0x4, fixed_abs, tag = 'smem constant byte address 0x4 - core index']
  #allocation1 [shape = 'u32[144,128]{1,0:T(1,128)}', space=vmem, size = 0x12000, scoped, tag = 'internal scratch']
  #allocation2 [shape = 'bf16[72,256]{1,0:T(8,128)(2,1)}', space=vmem, size = 0x9000, scoped, tag = 'scratch operand']
  %s0 = inlined_call_operand.vmem [shape: bf16[2,192,18], index: 0, kind: input, shape index: {}]
  %s1 = inlined_call_operand.vmem [shape: f32[2,18,256], index: 1, kind: input, shape index: {}]
  %s2 = inlined_call_operand.vmem [shape: f32[2,9,256], index: 2, kind: input, shape index: {}]
  %s3 = inlined_call_operand.vmem [shape: bf16[8,72], index: 3, kind: input, shape index: {}]
  %s4 = inlined_call_operand.hbm [shape: f32[2,8,256], index: 4, kind: output, shape index: {}]
  %s5 = sld [smem:[#allocation0]]
  $region49: #{tpu_custom_call.1} parent=0
    _
  %s7 = ssub.s32 1, %s5
  %s8 = scalar_select 0, %s7, %s5
  $region1: #{tpu_custom_call.1} parent=0
    #allocation3 [shape = 'u8[16384]{0}', space=vmem, size = 0x4000, scoped, tag = 'output window, operand 0']
    #allocation4 [shape = 's32[2]{0}', space=sflag, size = 0x8, scoped, tag = 'scoped memory for tpu_custom_call.1']
    %9 = vsyncpa [#allocation4], 0
    %s10 = scalar_lea.sflag [#allocation4], 1
    %11 = vsyncpa %s10, 0
    loop: start=0, step=1, limit=4
    $region2: #{tpu_custom_call.1} parent=1 // loop_pre_header
      _
    $region3: #{tpu_custom_call.1} parent=1 // loop_header
      %s13 = sphi 0, %s17
      %p14 = scmp.ge.s32.totalorder %s13, 4
      %s20 = sphi 0, %s32
      %s21 = sphi 0, %s28
      %s22 = sphi 0, %s20
      %s23 = sphi 0, %s21
      %s24 = sphi 0, %s22
      %s25 = sphi 0, %s23
      %s35 = sphi 0, %s37
      %s38 = sphi 0, %s35
      %s39 = sphi 0, %s38
      %s55 = sphi 0, %s39
      %s63 = sphi 0, %s65
      %s66 = sphi 0, %s63
      %s67 = sphi 0, %s66
      %s83 = sphi 0, %s67
      %s91 = sphi 0, %s93
      %s94 = sphi 0, %s91
      %s95 = sphi 0, %s94
      %s111 = sphi 0, %s95
      %s115 = sphi 0, %s115
      %s117 = sphi 0, %s115
      %s118 = sphi 0, %s117
      %s132 = sphi 0, %s118
      %s140 = sphi 0, %s142
      %s143 = sphi 0, %s140
      %s144 = sphi 0, %s143
      %s160 = sphi 0, %s144
    $region4: #{tpu_custom_call.1} parent=1 // loop_header_branch
      %16 = sbr.rel (%p14) target = $region8
    $region5: #{tpu_custom_call.1} parent=1 // loop_body
      %s18 = ssub.s32 %s13, 1
      %s19 = ssub.s32 %s13, 2
      %s26 = sadd.s32 1, %s21
      %p27 = scmp.ge.s32.totalorder %s26, 1
      %s28 = scalar_select %p27, 0, %s26
      %s29 = sadd.s32 1, %s20
      %s30 = scalar_select %p27, %s29, %s20
      %p31 = scmp.ge.s32.totalorder %s30, 2
      %s32 = scalar_select %p31, 0, %s30
      %s33 = ssub.s32 %s20, %s32
      %p34 = scmp.eq.s32.totalorder %s33, 0
      %s36 = sadd.s32 %s35, 1
      %s37 = scalar_select %p34, %s35, %s36
      %p40 = pneg %p34
      %p41 = scmp.eq.s32.totalorder %s13, 1
      %p42 = por %p40, %p41
      %p43 = scmp.ne.s32.totalorder %s35, %s38
      %p44 = scmp.eq.s32.totalorder %s13, 0
      %p45 = por %p43, %p44
      %p46 = scmp.ne.s32.totalorder %s35, %s38
      %p47 = scmp.eq.s32.totalorder %s18, 1
      %p48 = por %p46, %p47
      %p49 = scmp.ne.s32.totalorder %s38, %s39
      %p50 = scmp.eq.s32.totalorder %s18, 0
      %p51 = por %p49, %p50
      %p52 = scmp.ne.s32.totalorder %s38, %s39
      %p53 = scmp.eq.s32.totalorder %s19, 1
      %p54 = por %p52, %p53
      %p56 = scmp.ne.s32.totalorder %s39, %s55
      %p57 = scmp.eq.s32.totalorder %s19, 0
      %p58 = por %p56, %p57
      %s59 = ssub.s32 %s20, %s32
      %s60 = ssub.s32 %s21, %s28
      %s61 = sor.u32 %s59, %s60
      %p62 = scmp.eq.s32.totalorder %s61, 0
      %s64 = sadd.s32 %s63, 1
      %s65 = scalar_select %p62, %s63, %s64
      %p68 = pneg %p62
      %p69 = scmp.eq.s32.totalorder %s13, 1
      %p70 = por %p68, %p69
      %p71 = scmp.ne.s32.totalorder %s63, %s66
      %p72 = scmp.eq.s32.totalorder %s13, 0
      %p73 = por %p71, %p72
      %p74 = scmp.ne.s32.totalorder %s63, %s66
      %p75 = scmp.eq.s32.totalorder %s18, 1
      %p76 = por %p74, %p75
      %p77 = scmp.ne.s32.totalorder %s66, %s67
      %p78 = scmp.eq.s32.totalorder %s18, 0
      %p79 = por %p77, %p78
      %p80 = scmp.ne.s32.totalorder %s66, %s67
      %p81 = scmp.eq.s32.totalorder %s19, 1
      %p82 = por %p80, %p81
      %p84 = scmp.ne.s32.totalorder %s67, %s83
      %p85 = scmp.eq.s32.totalorder %s19, 0
      %p86 = por %p84, %p85
      %s87 = ssub.s32 %s20, %s32
      %s88 = ssub.s32 %s21, %s28
      %s89 = sor.u32 %s87, %s88
      %p90 = scmp.eq.s32.totalorder %s89, 0
      %s92 = sadd.s32 %s91, 1
      %s93 = scalar_select %p90, %s91, %s92
      %p96 = pneg %p90
      %p97 = scmp.eq.s32.totalorder %s13, 1
      %p98 = por %p96, %p97
      %p99 = scmp.ne.s32.totalorder %s91, %s94
      %p100 = scmp.eq.s32.totalorder %s13, 0
      %p101 = por %p99, %p100
      %p102 = scmp.ne.s32.totalorder %s91, %s94
      %p103 = scmp.eq.s32.totalorder %s18, 1
      %p104 = por %p102, %p103
      %p105 = scmp.ne.s32.totalorder %s94, %s95
      %p106 = scmp.eq.s32.totalorder %s18, 0
      %p107 = por %p105, %p106
      %p108 = scmp.ne.s32.totalorder %s94, %s95
      %p109 = scmp.eq.s32.totalorder %s19, 1
      %p110 = por %p108, %p109
      %p112 = scmp.ne.s32.totalorder %s95, %s111
      %p113 = scmp.eq.s32.totalorder %s19, 0
      %p114 = por %p112, %p113
      %s116 = sadd.s32 %s115, 1
      %p119 = scmp.eq.s32.totalorder %s13, 1
      %p120 = scmp.ne.s32.totalorder %s115, %s117
      %p121 = scmp.eq.s32.totalorder %s13, 0
      %p122 = por %p120, %p121
      %p123 = scmp.ne.s32.totalorder %s115, %s117
      %p124 = scmp.eq.s32.totalorder %s18, 1
      %p125 = por %p123, %p124
      %p126 = scmp.ne.s32.totalorder %s117, %s118
      %p127 = scmp.eq.s32.totalorder %s18, 0
      %p128 = por %p126, %p127
      %p129 = scmp.ne.s32.totalorder %s117, %s118
      %p130 = scmp.eq.s32.totalorder %s19, 1
      %p131 = por %p129, %p130
      %p133 = scmp.ne.s32.totalorder %s118, %s132
      %p134 = scmp.eq.s32.totalorder %s19, 0
      %p135 = por %p133, %p134
      %s136 = ssub.s32 %s20, %s32
      %s137 = ssub.s32 %s21, %s28
      %s138 = sor.u32 %s136, %s137
      %p139 = scmp.eq.s32.totalorder %s138, 0
      %s141 = sadd.s32 %s140, 1
      %s142 = scalar_select %p139, %s140, %s141
      %p145 = pneg %p139
      %p146 = scmp.eq.s32.totalorder %s13, 1
      %p147 = por %p145, %p146
      %p148 = scmp.ne.s32.totalorder %s140, %s143
      %p149 = scmp.eq.s32.totalorder %s13, 0
      %p150 = por %p148, %p149
      %p151 = scmp.ne.s32.totalorder %s140, %s143
      %p152 = scmp.eq.s32.totalorder %s18, 1
      %p153 = por %p151, %p152
      %p154 = scmp.ne.s32.totalorder %s143, %s144
      %p155 = scmp.eq.s32.totalorder %s18, 0
      %p156 = por %p154, %p155
      %p157 = scmp.ne.s32.totalorder %s143, %s144
      %p158 = scmp.eq.s32.totalorder %s19, 1
      %p159 = por %p157, %p158
      %p161 = scmp.ne.s32.totalorder %s144, %s160
      %p162 = scmp.eq.s32.totalorder %s19, 0
      %p163 = por %p161, %p162
      %p164 = scmp.le.s32.totalorder 1, %s13
      %p165 = scmp.lt.s32.totalorder %s13, 3
      %p166 = pnand %p164, %p165
      %p167 = pneg %p166
      // Predicated region
      $region9: #{tpu_custom_call.1} parent=5 // pred_check
        _
      $region10: #{tpu_custom_call.1} parent=5 // pred_check_branch
        %169 = sbr.rel (%p166) target = $region12
      $region11: #{tpu_custom_call.1} parent=5 // pred_region
        %s170 = ssub.s32 %s13, 1
        // Predicated region
        $region13: #{tpu_custom_call.1} parent=11 // pred_check
          %p171 = pneg %p128
        $region14: #{tpu_custom_call.1} parent=11 // pred_check_branch
          %173 = sbr.rel (%p171) target = $region16
        $region15: #{tpu_custom_call.1} parent=11 // pred_region
          _
        $region16: #{tpu_custom_call.1} parent=11 // pred_fallthru
          _
      $region12: #{tpu_custom_call.1} parent=5 // pred_fallthru
        _
      %p174 = scmp.lt.s32.totalorder %s13, 2
      // Predicated region
      $region17: #{tpu_custom_call.1} parent=5 // pred_check
        %p175 = pneg %p174
      $region18: #{tpu_custom_call.1} parent=5 // pred_check_branch
        %177 = sbr.rel (%p175) target = $region20
      $region19: #{tpu_custom_call.1} parent=5 // pred_region
        // Predicated region
        $region21: #{tpu_custom_call.1} parent=19 // pred_check
          %p178 = pneg %p45
        $region22: #{tpu_custom_call.1} parent=19 // pred_check_branch
          %180 = sbr.rel (%p178) target = $region24
        $region23: #{tpu_custom_call.1} parent=19 // pred_region
          %p181 = scmp.lt.s32.totalorder %s20, 1
          %s182 = scalar_select %p181, %s20, 1
          %s183 = smul.addr %s182, 24
          %s184 = smul.addr %s183, 4
          %s185 = scalar_lea.vmem %s0, %s184
        $region24: #{tpu_custom_call.1} parent=19 // pred_fallthru
          _
        // Predicated region
        $region25: #{tpu_custom_call.1} parent=19 // pred_check
          %p186 = pneg %p73
        $region26: #{tpu_custom_call.1} parent=19 // pred_check_branch
          %188 = sbr.rel (%p186) target = $region28
        $region27: #{tpu_custom_call.1} parent=19 // pred_region
          %s189 = smul.u32 2, %s21
          %p190 = scmp.lt.s32.totalorder %s20, 1
          %s191 = scalar_select %p190, %s20, 1
          %p192 = scmp.lt.s32.totalorder %s189, 1
          %s193 = scalar_select %p192, %s189, 1
          %s194 = smul.addr %s191, 6
          %s195 = sadd.s32 %s193, %s194
          %s196 = smul.addr %s195, 8
          %s197 = scalar_lea.vmem %s1, %s196
          %s198 = smul.u32 2, %s21
        $region28: #{tpu_custom_call.1} parent=19 // pred_fallthru
          _
        // Predicated region
        $region29: #{tpu_custom_call.1} parent=19 // pred_check
          %p199 = pneg %p101
        $region30: #{tpu_custom_call.1} parent=19 // pred_check_branch
          %201 = sbr.rel (%p199) target = $region32
        $region31: #{tpu_custom_call.1} parent=19 // pred_region
          %s202 = smul.u32 2, %s21
          %p203 = scmp.lt.s32.totalorder %s20, 1
          %s204 = scalar_select %p203, %s20, 1
          %p205 = scmp.lt.s32.totalorder %s202, 1
          %s206 = scalar_select %p205, %s202, 1
          %s207 = smul.addr %s204, 4
          %s208 = sadd.s32 %s206, %s207
          %s209 = smul.addr %s208, 8
          %s210 = scalar_lea.vmem %s2, %s209
          %s211 = smul.u32 2, %s21
        $region32: #{tpu_custom_call.1} parent=19 // pred_fallthru
          _
      $region20: #{tpu_custom_call.1} parent=5 // pred_fallthru
        _
      %p212 = scmp.le.s32.totalorder 1, %s13
      %p213 = scmp.lt.s32.totalorder %s13, 3
      %p214 = pnand %p212, %p213
      %p215 = pneg %p214
      // Predicated region
      $region33: #{tpu_custom_call.1} parent=5 // pred_check
        _
      $region34: #{tpu_custom_call.1} parent=5 // pred_check_branch
        %217 = sbr.rel (%p214) target = $region36
      $region35: #{tpu_custom_call.1} parent=5 // pred_region
        %s218 = ssub.s32 %s13, 1
        %p219 = scmp.lt.s32.totalorder %s22, 1
        %s220 = scalar_select %p219, %s22, 1
        %s221 = smul.addr %s220, 24
        %s222 = smul.addr %s221, 4
        %s223 = scalar_lea.vmem %s0, %s222
        %p224 = pneg %p51
        %p225 = pneg %p48
        %s226 = smul.u32 2, %s23
        %p227 = scmp.lt.s32.totalorder %s22, 1
        %s228 = scalar_select %p227, %s22, 1
        %p229 = scmp.lt.s32.totalorder %s226, 1
        %s230 = scalar_select %p229, %s226, 1
        %s231 = smul.addr %s228, 6
        %s232 = sadd.s32 %s230, %s231
        %s233 = smul.addr %s232, 8
        %s234 = scalar_lea.vmem %s1, %s233
        %p235 = pneg %p79
        %p236 = pneg %p76
        %s237 = smul.u32 2, %s23
        %p238 = scmp.lt.s32.totalorder %s22, 1
        %s239 = scalar_select %p238, %s22, 1
        %p240 = scmp.lt.s32.totalorder %s237, 1
        %s241 = scalar_select %p240, %s237, 1
        %s242 = smul.addr %s239, 4
        %s243 = sadd.s32 %s241, %s242
        %s244 = smul.addr %s243, 8
        %s245 = scalar_lea.vmem %s2, %s244
        %p246 = pneg %p107
        %p247 = pneg %p104
        %p248 = pneg %p128
        %p249 = pneg %p125
        %p250 = pneg %p156
        %p251 = pneg %p153
        %s252 = sand.u32 %s143, 1
        %s253 = scalar_lea.sflag [#allocation4], %s252
        %s254 = sand.u32 %s143, 1
        %s255 = smul.addr %s254, 16
        %s256 = scalar_lea.vmem [#allocation3], %s255
        %p257 = scmp.lt.s32.totalorder %s22, 1
        %s258 = scalar_select %p257, %s22, 1
        %s259 = smul.addr %s258, 24
        %s260 = smul.addr %s259, 4
        %s261 = scalar_lea.vmem %s0, %s260
        %s262 = smul.u32 2, %s23
        %p263 = scmp.lt.s32.totalorder %s22, 1
        %s264 = scalar_select %p263, %s22, 1
        %p265 = scmp.lt.s32.totalorder %s262, 1
        %s266 = scalar_select %p265, %s262, 1
        %s267 = smul.addr %s264, 6
        %s268 = sadd.s32 %s266, %s267
        %s269 = smul.addr %s268, 8
        %s270 = scalar_lea.vmem %s1, %s269
        %s271 = smul.u32 2, %s23
        %s272 = smul.u32 2, %s23
        %p273 = scmp.lt.s32.totalorder %s22, 1
        %s274 = scalar_select %p273, %s22, 1
        %p275 = scmp.lt.s32.totalorder %s272, 1
        %s276 = scalar_select %p275, %s272, 1
        %s277 = smul.addr %s274, 4
        %s278 = sadd.s32 %s276, %s277
        %s279 = smul.addr %s278, 8
        %s280 = scalar_lea.vmem %s2, %s279
        %s281 = smul.u32 2, %s23
        %s282 = smul.u32 2, %s23
        %v284 = vld [vmem:[%s270] sm:$0xff]
        %v285 = vld [vmem:[%s270 + $0x8] sm:$0xff]
        %v286 = vld [vmem:[%s270 + $0x10] sm:$0xff]
        %v287 = vld [vmem:[%s270 + $0x18] sm:$0xff]
        %v288 = vld [vmem:[%s270 + $0x20] sm:$0x3]
        %v289 = vld [vmem:[%s270 + $0x28] sm:$0x3]
        %v290 = vfloor.f32 %v284
        %v291 = vfloor.f32 %v285
        %v292 = vfloor.f32 %v286
        %v293 = vfloor.f32 %v287
        %v294 = vfloor.f32 %v288
        %v295 = vfloor.f32 %v289
        %v296 = vmax.f32 %v290, 0.0
        %v297 = vmax.f32 %v291, 0.0
        %v298 = vmax.f32 %v292, 0.0
        %v299 = vmax.f32 %v293, 0.0
        %v300 = vmin.f32 %v296, 17.0
        %v301 = vmin.f32 %v297, 17.0
        %v302 = vmin.f32 %v298, 17.0
        %v303 = vmin.f32 %v299, 17.0
        %v304 = vadd.f32 %v290, 1.0
        %v305 = vadd.f32 %v291, 1.0
        %v306 = vadd.f32 %v292, 1.0
        %v307 = vadd.f32 %v293, 1.0
        %v308 = vmax.f32 %v304, 0.0
        %v309 = vmax.f32 %v305, 0.0
        %v310 = vmax.f32 %v306, 0.0
        %v311 = vmax.f32 %v307, 0.0
        %v312 = vmin.f32 %v308, 17.0
        %v313 = vmin.f32 %v309, 17.0
        %v314 = vmin.f32 %v310, 17.0
        %v315 = vmin.f32 %v311, 17.0
        %v316 = vmax.f32 %v294, 0.0
        %v317 = vmax.f32 %v295, 0.0
        %v318 = vmin.f32 %v316, 17.0
        %v319 = vmin.f32 %v317, 17.0
        %v320 = vadd.f32 %v294, 1.0
        %v321 = vadd.f32 %v295, 1.0
        %v322 = vmax.f32 %v320, 0.0
        %v323 = vmax.f32 %v321, 0.0
        %v324 = vmin.f32 %v322, 17.0
        %v325 = vmin.f32 %v323, 17.0
        %v326 = vmax.f32 %v284, 0.0
        %v327 = vmax.f32 %v285, 0.0
        %v328 = vmax.f32 %v286, 0.0
        %v329 = vmax.f32 %v287, 0.0
        %v330 = vmin.f32 %v326, 17.0
        %v331 = vmin.f32 %v327, 17.0
        %v332 = vmin.f32 %v328, 17.0
        %v333 = vmin.f32 %v329, 17.0
        %v334 = vmax.f32 %v288, 0.0
        %v335 = vmax.f32 %v289, 0.0
        %v336 = vmin.f32 %v334, 17.0
        %v337 = vmin.f32 %v335, 17.0
        %v338 = vsub.f32 %v300, %v330
        %v339 = vsub.f32 %v301, %v331
        %v340 = vsub.f32 %v302, %v332
        %v341 = vsub.f32 %v303, %v333
        %v342 = vadd.f32 %v338, 1.0
        %v343 = vadd.f32 %v339, 1.0
        %v344 = vadd.f32 %v340, 1.0
        %v345 = vadd.f32 %v341, 1.0
        %v346 = vsub.f32 %v312, %v330
        %v347 = vsub.f32 %v313, %v331
        %v348 = vsub.f32 %v314, %v332
        %v349 = vsub.f32 %v315, %v333
        %v350 = vsub.f32 1.0, %v346
        %v351 = vsub.f32 1.0, %v347
        %v352 = vsub.f32 1.0, %v348
        %v353 = vsub.f32 1.0, %v349
        %v354 = vsub.f32 %v318, %v336
        %v355 = vsub.f32 %v319, %v337
        %v356 = vadd.f32 %v354, 1.0
        %v357 = vadd.f32 %v355, 1.0
        %v358 = vsub.f32 %v324, %v336
        %v359 = vsub.f32 %v325, %v337
        %v360 = vsub.f32 1.0, %v358
        %v361 = vsub.f32 1.0, %v359
        %v362 = vld [vmem:[%s280] sm:$0xff]
        %v363 = vld [vmem:[%s280 + $0x8] sm:$0xff]
        %v364 = vld [vmem:[%s280 + $0x10] sm:$0x1]
        %v365 = vld [vmem:[%s280 + $0x18] sm:$0x1]
        %v366 = vxor.u32 %v362, 2147483648
        %v367 = vxor.u32 %v363, 2147483648
        %v368 = vxor.u32 %v364, 2147483648
        %v369 = vxor.u32 %v365, 2147483648
        %v370 = vmul.f32 %v366, 1.442695
        %v371 = vpow.pop %v370
        %v372 = vmul.f32 %v367, 1.442695
        %v373 = vpow.pop %v372
        %v374 = vmul.f32 %v368, 1.442695
        %v375 = vpow.pop %v374
        %v376 = vmul.f32 %v369, 1.442695
        %v377 = vpow.pop %v376
        %v378 = vadd.f32 %v371, 1.0
        %v379 = vadd.f32 %v373, 1.0
        %v380 = vadd.f32 %v375, 1.0
        %v381 = vadd.f32 %v377, 1.0
        %v382 = vrcp.pop %v378
        %v383 = vmul.f32 1.0, %v382
        %v384 = vrcp.pop %v379
        %v385 = vmul.f32 1.0, %v384
        %v386 = vrcp.pop %v380
        %v387 = vmul.f32 1.0, %v386
        %v388 = vrcp.pop %v381
        %v389 = vmul.f32 1.0, %v388
        %vm394 = vcmask 1040384
        %v395 = vrot.slane %v383, 7
        %v396 = vrot.slane %v385, 7
        %v397 = vrot.slane %v387, 7
        %v398 = vsel %vm394, %v395, %v397
        %v399 = vrot.slane %v389, 7
        %v400 = vsel %vm394, %v396, %v399
        %v405 = vmul.f32 %v344, %v395
        %v406 = vmul.f32 %v345, %v396
        %v407 = vmul.f32 %v356, %v398
        %v408 = vmul.f32 %v357, %v400
        %v409 = vmul.f32 %v352, %v395
        %v410 = vmul.f32 %v353, %v396
        %v411 = vmul.f32 %v360, %v398
        %v412 = vmul.f32 %v361, %v400
        %v413 = vcvt.f32.s32.to.zero.pseudo %v300
        %v414 = vcvt.f32.s32.to.zero.pseudo %v301
        %v415 = vcvt.f32.s32.to.zero.pseudo %v302
        %v416 = vcvt.f32.s32.to.zero.pseudo %v303
        %v417 = vcvt.f32.s32.to.zero.pseudo %v312
        %v418 = vcvt.f32.s32.to.zero.pseudo %v313
        %v419 = vcvt.f32.s32.to.zero.pseudo %v314
        %v420 = vcvt.f32.s32.to.zero.pseudo %v315
        %v421 = vcvt.f32.s32.to.zero.pseudo %v318
        %v422 = vcvt.f32.s32.to.zero.pseudo %v319
        %v423 = vcvt.f32.s32.to.zero.pseudo %v324
        %v424 = vcvt.f32.s32.to.zero.pseudo %v325
        %v425 = vlaneseq
        %v426 = vshrl.u32 %v425, 7
        %v427 = vadd.s32 %v426, 8
        %v428 = vadd.s32 %v426, 16
        %v429 = vlaneseq
        %v430 = vshrl.u32 %v429, 7
        %v431 = vsub.s32 1, %v430
        %v432 = vrot.slane %v415, %v431
        %v433 = vlaneseq
        %v434 = vshrl.u32 %v433, 7
        %v435 = vsub.s32 1, %v434
        %v436 = vrot.slane %v416, %v435
        %vm437 = vcmp.eq.s32.totalorder %v426, %v432
        %vm438 = vcmp.eq.s32.totalorder %v426, %v436
        %vm439 = vcmp.eq.s32.totalorder %v427, %v432
        %vm440 = vcmp.eq.s32.totalorder %v427, %v436
        %vm441 = vcmp.eq.s32.totalorder %v428, %v432
        %vm442 = vcmp.eq.s32.totalorder %v428, %v436
        %v443 = vlaneseq
        %v444 = vshrl.u32 %v443, 7
        %v445 = vsub.s32 1, %v444
        %v446 = vrot.slane %v405, %v445
        %v447 = vlaneseq
        %v448 = vshrl.u32 %v447, 7
        %v449 = vsub.s32 1, %v448
        %v450 = vrot.slane %v406, %v449
        %v451 = vsel %vm437, %v446, 0.0
        %v452 = vsel %vm438, %v450, 0.0
        %v453 = vsel %vm439, %v446, 0.0
        %v454 = vsel %vm440, %v450, 0.0
        %v455 = vsel %vm441, %v446, 0.0
        %v456 = vsel %vm442, %v450, 0.0
        %v457 = vlaneseq
        %v458 = vshrl.u32 %v457, 7
        %v459 = vsub.s32 1, %v458
        %v460 = vrot.slane %v419, %v459
        %v461 = vlaneseq
        %v462 = vshrl.u32 %v461, 7
        %v463 = vsub.s32 1, %v462
        %v464 = vrot.slane %v420, %v463
        %vm465 = vcmp.eq.s32.totalorder %v426, %v460
        %vm466 = vcmp.eq.s32.totalorder %v426, %v464
        %vm467 = vcmp.eq.s32.totalorder %v427, %v460
        %vm468 = vcmp.eq.s32.totalorder %v427, %v464
        %vm469 = vcmp.eq.s32.totalorder %v428, %v460
        %vm470 = vcmp.eq.s32.totalorder %v428, %v464
        %v471 = vlaneseq
        %v472 = vshrl.u32 %v471, 7
        %v473 = vsub.s32 1, %v472
        %v474 = vrot.slane %v409, %v473
        %v475 = vlaneseq
        %v476 = vshrl.u32 %v475, 7
        %v477 = vsub.s32 1, %v476
        %v478 = vrot.slane %v410, %v477
        %v479 = vsel %vm465, %v474, 0.0
        %v480 = vsel %vm466, %v478, 0.0
        %v481 = vsel %vm467, %v474, 0.0
        %v482 = vsel %vm468, %v478, 0.0
        %v483 = vsel %vm469, %v474, 0.0
        %v484 = vsel %vm470, %v478, 0.0
        %v485 = vadd.f32 %v451, %v479
        %v486 = vadd.f32 %v452, %v480
        %v487 = vadd.f32 %v453, %v481
        %v488 = vadd.f32 %v454, %v482
        %v489 = vadd.f32 %v455, %v483
        %v490 = vadd.f32 %v456, %v484
        %v491 = vpack.c.bf16 %v487, %v485
        %v492 = vpack.c.bf16 %v488, %v486
        %v493 = vpack.c.bf16 %v489, %v489
        %v494 = vpack.c.bf16 %v490, %v490
        %v495 = vlaneseq
        %v496 = vshrl.u32 %v495, 7
        %v497 = vsub.s32 0, %v496
        %v498 = vrot.slane %v413, %v497
        %v499 = vlaneseq
        %v500 = vshrl.u32 %v499, 7
        %v501 = vsub.s32 0, %v500
        %v502 = vrot.slane %v414, %v501
        %vm503 = vcmp.eq.s32.totalorder %v426, %v498
        %vm504 = vcmp.eq.s32.totalorder %v426, %v502
        %vm505 = vcmp.eq.s32.totalorder %v427, %v498
        %vm506 = vcmp.eq.s32.totalorder %v427, %v502
        %vm507 = vcmp.eq.s32.totalorder %v428, %v498
        %vm508 = vcmp.eq.s32.totalorder %v428, %v502
        %v509 = vlaneseq
        %v510 = vshrl.u32 %v509, 7
        %v511 = vsub.s32 0, %v510
        %v512 = vrot.slane %v342, %v511
        %v513 = vlaneseq
        %v514 = vshrl.u32 %v513, 7
        %v515 = vsub.s32 0, %v514
        %v516 = vrot.slane %v343, %v515
        %v517 = vsel %vm503, %v512, 0.0
        %v518 = vsel %vm504, %v516, 0.0
        %v519 = vsel %vm505, %v512, 0.0
        %v520 = vsel %vm506, %v516, 0.0
        %v521 = vsel %vm507, %v512, 0.0
        %v522 = vsel %vm508, %v516, 0.0
        %v523 = vlaneseq
        %v524 = vshrl.u32 %v523, 7
        %v525 = vsub.s32 0, %v524
        %v526 = vrot.slane %v417, %v525
        %v527 = vlaneseq
        %v528 = vshrl.u32 %v527, 7
        %v529 = vsub.s32 0, %v528
        %v530 = vrot.slane %v418, %v529
        %vm531 = vcmp.eq.s32.totalorder %v426, %v526
        %vm532 = vcmp.eq.s32.totalorder %v426, %v530
        %vm533 = vcmp.eq.s32.totalorder %v427, %v526
        %vm534 = vcmp.eq.s32.totalorder %v427, %v530
        %vm535 = vcmp.eq.s32.totalorder %v428, %v526
        %vm536 = vcmp.eq.s32.totalorder %v428, %v530
        %v537 = vlaneseq
        %v538 = vshrl.u32 %v537, 7
        %v539 = vsub.s32 0, %v538
        %v540 = vrot.slane %v350, %v539
        %v541 = vlaneseq
        %v542 = vshrl.u32 %v541, 7
        %v543 = vsub.s32 0, %v542
        %v544 = vrot.slane %v351, %v543
        %v545 = vsel %vm531, %v540, 0.0
        %v546 = vsel %vm532, %v544, 0.0
        %v547 = vsel %vm533, %v540, 0.0
        %v548 = vsel %vm534, %v544, 0.0
        %v549 = vsel %vm535, %v540, 0.0
        %v550 = vsel %vm536, %v544, 0.0
        %v551 = vadd.f32 %v517, %v545
        %v552 = vadd.f32 %v518, %v546
        %v553 = vadd.f32 %v519, %v547
        %v554 = vadd.f32 %v520, %v548
        %v555 = vadd.f32 %v521, %v549
        %v556 = vadd.f32 %v522, %v550
        %v557 = vpack.c.bf16 %v553, %v551
        %v558 = vpack.c.bf16 %v554, %v552
        %v559 = vpack.c.bf16 %v555, %v555
        %v560 = vpack.c.bf16 %v556, %v556
        %v561 = vlaneseq
        %v562 = vshrl.u32 %v561, 7
        %v563 = vsub.s32 2, %v562
        %v564 = vrot.slane %v415, %v563
        %v565 = vlaneseq
        %v566 = vshrl.u32 %v565, 7
        %v567 = vsub.s32 2, %v566
        %v568 = vrot.slane %v416, %v567
        %vm569 = vcmp.eq.s32.totalorder %v426, %v564
        %vm570 = vcmp.eq.s32.totalorder %v426, %v568
        %vm571 = vcmp.eq.s32.totalorder %v427, %v564
        %vm572 = vcmp.eq.s32.totalorder %v427, %v568
        %vm573 = vcmp.eq.s32.totalorder %v428, %v564
        %vm574 = vcmp.eq.s32.totalorder %v428, %v568
        %v575 = vlaneseq
        %v576 = vshrl.u32 %v575, 7
        %v577 = vsub.s32 2, %v576
        %v578 = vrot.slane %v405, %v577
        %v579 = vlaneseq
        %v580 = vshrl.u32 %v579, 7
        %v581 = vsub.s32 2, %v580
        %v582 = vrot.slane %v406, %v581
        %v583 = vsel %vm569, %v578, 0.0
        %v584 = vsel %vm570, %v582, 0.0
        %v585 = vsel %vm571, %v578, 0.0
        %v586 = vsel %vm572, %v582, 0.0
        %v587 = vsel %vm573, %v578, 0.0
        %v588 = vsel %vm574, %v582, 0.0
        %v589 = vlaneseq
        %v590 = vshrl.u32 %v589, 7
        %v591 = vsub.s32 2, %v590
        %v592 = vrot.slane %v419, %v591
        %v593 = vlaneseq
        %v594 = vshrl.u32 %v593, 7
        %v595 = vsub.s32 2, %v594
        %v596 = vrot.slane %v420, %v595
        %vm597 = vcmp.eq.s32.totalorder %v426, %v592
        %vm598 = vcmp.eq.s32.totalorder %v426, %v596
        %vm599 = vcmp.eq.s32.totalorder %v427, %v592
        %vm600 = vcmp.eq.s32.totalorder %v427, %v596
        %vm601 = vcmp.eq.s32.totalorder %v428, %v592
        %vm602 = vcmp.eq.s32.totalorder %v428, %v596
        %v603 = vlaneseq
        %v604 = vshrl.u32 %v603, 7
        %v605 = vsub.s32 2, %v604
        %v606 = vrot.slane %v409, %v605
        %v607 = vlaneseq
        %v608 = vshrl.u32 %v607, 7
        %v609 = vsub.s32 2, %v608
        %v610 = vrot.slane %v410, %v609
        %v611 = vsel %vm597, %v606, 0.0
        %v612 = vsel %vm598, %v610, 0.0
        %v613 = vsel %vm599, %v606, 0.0
        %v614 = vsel %vm600, %v610, 0.0
        %v615 = vsel %vm601, %v606, 0.0
        %v616 = vsel %vm602, %v610, 0.0
        %v617 = vadd.f32 %v583, %v611
        %v618 = vadd.f32 %v584, %v612
        %v619 = vadd.f32 %v585, %v613
        %v620 = vadd.f32 %v586, %v614
        %v621 = vadd.f32 %v587, %v615
        %v622 = vadd.f32 %v588, %v616
        %v623 = vpack.c.bf16 %v619, %v617
        %v624 = vpack.c.bf16 %v620, %v618
        %v625 = vpack.c.bf16 %v621, %v621
        %v626 = vpack.c.bf16 %v622, %v622
        %v627 = vlaneseq
        %v628 = vshrl.u32 %v627, 7
        %v629 = vsub.s32 1, %v628
        %v630 = vrot.slane %v413, %v629
        %v631 = vlaneseq
        %v632 = vshrl.u32 %v631, 7
        %v633 = vsub.s32 1, %v632
        %v634 = vrot.slane %v414, %v633
        %vm635 = vcmp.eq.s32.totalorder %v426, %v630
        %vm636 = vcmp.eq.s32.totalorder %v426, %v634
        %vm637 = vcmp.eq.s32.totalorder %v427, %v630
        %vm638 = vcmp.eq.s32.totalorder %v427, %v634
        %vm639 = vcmp.eq.s32.totalorder %v428, %v630
        %vm640 = vcmp.eq.s32.totalorder %v428, %v634
        %v641 = vlaneseq
        %v642 = vshrl.u32 %v641, 7
        %v643 = vsub.s32 1, %v642
        %v644 = vrot.slane %v342, %v643
        %v645 = vlaneseq
        %v646 = vshrl.u32 %v645, 7
        %v647 = vsub.s32 1, %v646
        %v648 = vrot.slane %v343, %v647
        %v649 = vsel %vm635, %v644, 0.0
        %v650 = vsel %vm636, %v648, 0.0
        %v651 = vsel %vm637, %v644, 0.0
        %v652 = vsel %vm638, %v648, 0.0
        %v653 = vsel %vm639, %v644, 0.0
        %v654 = vsel %vm640, %v648, 0.0
        %v655 = vlaneseq
        %v656 = vshrl.u32 %v655, 7
        %v657 = vsub.s32 1, %v656
        %v658 = vrot.slane %v417, %v657
        %v659 = vlaneseq
        %v660 = vshrl.u32 %v659, 7
        %v661 = vsub.s32 1, %v660
        %v662 = vrot.slane %v418, %v661
        %vm663 = vcmp.eq.s32.totalorder %v426, %v658
        %vm664 = vcmp.eq.s32.totalorder %v426, %v662
        %vm665 = vcmp.eq.s32.totalorder %v427, %v658
        %vm666 = vcmp.eq.s32.totalorder %v427, %v662
        %vm667 = vcmp.eq.s32.totalorder %v428, %v658
        %vm668 = vcmp.eq.s32.totalorder %v428, %v662
        %v669 = vlaneseq
        %v670 = vshrl.u32 %v669, 7
        %v671 = vsub.s32 1, %v670
        %v672 = vrot.slane %v350, %v671
        %v673 = vlaneseq
        %v674 = vshrl.u32 %v673, 7
        %v675 = vsub.s32 1, %v674
        %v676 = vrot.slane %v351, %v675
        %v677 = vsel %vm663, %v672, 0.0
        %v678 = vsel %vm664, %v676, 0.0
        %v679 = vsel %vm665, %v672, 0.0
        %v680 = vsel %vm666, %v676, 0.0
        %v681 = vsel %vm667, %v672, 0.0
        %v682 = vsel %vm668, %v676, 0.0
        %v683 = vadd.f32 %v649, %v677
        %v684 = vadd.f32 %v650, %v678
        %v685 = vadd.f32 %v651, %v679
        %v686 = vadd.f32 %v652, %v680
        %v687 = vadd.f32 %v653, %v681
        %v688 = vadd.f32 %v654, %v682
        %v689 = vpack.c.bf16 %v685, %v683
        %v690 = vpack.c.bf16 %v686, %v684
        %v691 = vpack.c.bf16 %v687, %v687
        %v692 = vpack.c.bf16 %v688, %v688
        %v693 = vlaneseq
        %v694 = vshrl.u32 %v693, 7
        %v695 = vsub.s32 3, %v694
        %v696 = vrot.slane %v415, %v695
        %v697 = vlaneseq
        %v698 = vshrl.u32 %v697, 7
        %v699 = vsub.s32 3, %v698
        %v700 = vrot.slane %v416, %v699
        %vm701 = vcmp.eq.s32.totalorder %v426, %v696
        %vm702 = vcmp.eq.s32.totalorder %v426, %v700
        %vm703 = vcmp.eq.s32.totalorder %v427, %v696
        %vm704 = vcmp.eq.s32.totalorder %v427, %v700
        %vm705 = vcmp.eq.s32.totalorder %v428, %v696
        %vm706 = vcmp.eq.s32.totalorder %v428, %v700
        %v707 = vlaneseq
        %v708 = vshrl.u32 %v707, 7
        %v709 = vsub.s32 3, %v708
        %v710 = vrot.slane %v405, %v709
        %v711 = vlaneseq
        %v712 = vshrl.u32 %v711, 7
        %v713 = vsub.s32 3, %v712
        %v714 = vrot.slane %v406, %v713
        %v715 = vsel %vm701, %v710, 0.0
        %v716 = vsel %vm702, %v714, 0.0
        %v717 = vsel %vm703, %v710, 0.0
        %v718 = vsel %vm704, %v714, 0.0
        %v719 = vsel %vm705, %v710, 0.0
        %v720 = vsel %vm706, %v714, 0.0
        %v721 = vlaneseq
        %v722 = vshrl.u32 %v721, 7
        %v723 = vsub.s32 3, %v722
        %v724 = vrot.slane %v419, %v723
        %v725 = vlaneseq
        %v726 = vshrl.u32 %v725, 7
        %v727 = vsub.s32 3, %v726
        %v728 = vrot.slane %v420, %v727
        %vm729 = vcmp.eq.s32.totalorder %v426, %v724
        %vm730 = vcmp.eq.s32.totalorder %v426, %v728
        %vm731 = vcmp.eq.s32.totalorder %v427, %v724
        %vm732 = vcmp.eq.s32.totalorder %v427, %v728
        %vm733 = vcmp.eq.s32.totalorder %v428, %v724
        %vm734 = vcmp.eq.s32.totalorder %v428, %v728
        %v735 = vlaneseq
        %v736 = vshrl.u32 %v735, 7
        %v737 = vsub.s32 3, %v736
        %v738 = vrot.slane %v409, %v737
        %v739 = vlaneseq
        %v740 = vshrl.u32 %v739, 7
        %v741 = vsub.s32 3, %v740
        %v742 = vrot.slane %v410, %v741
        %v743 = vsel %vm729, %v738, 0.0
        %v744 = vsel %vm730, %v742, 0.0
        %v745 = vsel %vm731, %v738, 0.0
        %v746 = vsel %vm732, %v742, 0.0
        %v747 = vsel %vm733, %v738, 0.0
        %v748 = vsel %vm734, %v742, 0.0
        %v749 = vadd.f32 %v715, %v743
        %v750 = vadd.f32 %v716, %v744
        %v751 = vadd.f32 %v717, %v745
        %v752 = vadd.f32 %v718, %v746
        %v753 = vadd.f32 %v719, %v747
        %v754 = vadd.f32 %v720, %v748
        %v755 = vpack.c.bf16 %v751, %v749
        %v756 = vpack.c.bf16 %v752, %v750
        %v757 = vpack.c.bf16 %v753, %v753
        %v758 = vpack.c.bf16 %v754, %v754
        %v759 = vlaneseq
        %v760 = vshrl.u32 %v759, 7
        %v761 = vsub.s32 2, %v760
        %v762 = vrot.slane %v413, %v761
        %v763 = vlaneseq
        %v764 = vshrl.u32 %v763, 7
        %v765 = vsub.s32 2, %v764
        %v766 = vrot.slane %v414, %v765
        %vm767 = vcmp.eq.s32.totalorder %v426, %v762
        %vm768 = vcmp.eq.s32.totalorder %v426, %v766
        %vm769 = vcmp.eq.s32.totalorder %v427, %v762
        %vm770 = vcmp.eq.s32.totalorder %v427, %v766
        %vm771 = vcmp.eq.s32.totalorder %v428, %v762
        %vm772 = vcmp.eq.s32.totalorder %v428, %v766
        %v773 = vlaneseq
        %v774 = vshrl.u32 %v773, 7
        %v775 = vsub.s32 2, %v774
        %v776 = vrot.slane %v342, %v775
        %v777 = vlaneseq
        %v778 = vshrl.u32 %v777, 7
        %v779 = vsub.s32 2, %v778
        %v780 = vrot.slane %v343, %v779
        %v781 = vsel %vm767, %v776, 0.0
        %v782 = vsel %vm768, %v780, 0.0
        %v783 = vsel %vm769, %v776, 0.0
        %v784 = vsel %vm770, %v780, 0.0
        %v785 = vsel %vm771, %v776, 0.0
        %v786 = vsel %vm772, %v780, 0.0
        %v787 = vlaneseq
        %v788 = vshrl.u32 %v787, 7
        %v789 = vsub.s32 2, %v788
        %v790 = vrot.slane %v417, %v789
        %v791 = vlaneseq
        %v792 = vshrl.u32 %v791, 7
        %v793 = vsub.s32 2, %v792
        %v794 = vrot.slane %v418, %v793
        %vm795 = vcmp.eq.s32.totalorder %v426, %v790
        %vm796 = vcmp.eq.s32.totalorder %v426, %v794
        %vm797 = vcmp.eq.s32.totalorder %v427, %v790
        %vm798 = vcmp.eq.s32.totalorder %v427, %v794
        %vm799 = vcmp.eq.s32.totalorder %v428, %v790
        %vm800 = vcmp.eq.s32.totalorder %v428, %v794
        %v801 = vlaneseq
        %v802 = vshrl.u32 %v801, 7
        %v803 = vsub.s32 2, %v802
        %v804 = vrot.slane %v350, %v803
        %v805 = vlaneseq
        %v806 = vshrl.u32 %v805, 7
        %v807 = vsub.s32 2, %v806
        %v808 = vrot.slane %v351, %v807
        %v809 = vsel %vm795, %v804, 0.0
        %v810 = vsel %vm796, %v808, 0.0
        %v811 = vsel %vm797, %v804, 0.0
        %v812 = vsel %vm798, %v808, 0.0
        %v813 = vsel %vm799, %v804, 0.0
        %v814 = vsel %vm800, %v808, 0.0
        %v815 = vadd.f32 %v781, %v809
        %v816 = vadd.f32 %v782, %v810
        %v817 = vadd.f32 %v783, %v811
        %v818 = vadd.f32 %v784, %v812
        %v819 = vadd.f32 %v785, %v813
        %v820 = vadd.f32 %v786, %v814
        %v821 = vpack.c.bf16 %v817, %v815
        %v822 = vpack.c.bf16 %v818, %v816
        %v823 = vpack.c.bf16 %v819, %v819
        %v824 = vpack.c.bf16 %v820, %v820
        %v825 = vld [vmem:[%s261] sm:$0xf]
        %v826 = vld [vmem:[%s261 + $0x4] sm:$0xf]
        %v827 = vld [vmem:[%s261 + $0x8] sm:$0xf]
        %v828 = vld [vmem:[%s261 + $0xc] sm:$0xf]
        %v829 = vld [vmem:[%s261 + $0x10] sm:$0xf]
        %v830 = vld [vmem:[%s261 + $0x14] sm:$0xf]
        %v831 = vld [vmem:[%s261 + $0x18] sm:$0xf]
        %v832 = vld [vmem:[%s261 + $0x1c] sm:$0xf]
        %v833 = vld [vmem:[%s261 + $0x20] sm:$0xf]
        %v834 = vld [vmem:[%s261 + $0x24] sm:$0xf]
        %v835 = vld [vmem:[%s261 + $0x28] sm:$0xf]
        %v836 = vld [vmem:[%s261 + $0x2c] sm:$0xf]
        %v837 = vld [vmem:[%s261 + $0x30] sm:$0xf]
        %v838 = vld [vmem:[%s261 + $0x34] sm:$0xf]
        %v839 = vld [vmem:[%s261 + $0x38] sm:$0xf]
        %v840 = vld [vmem:[%s261 + $0x3c] sm:$0xf]
        %v841 = vld [vmem:[%s261 + $0x40] sm:$0xf]
        %v842 = vld [vmem:[%s261 + $0x44] sm:$0xf]
        %v843 = vld [vmem:[%s261 + $0x48] sm:$0xf]
        %v844 = vld [vmem:[%s261 + $0x4c] sm:$0xf]
        %v845 = vld [vmem:[%s261 + $0x50] sm:$0xf]
        %v846 = vld [vmem:[%s261 + $0x54] sm:$0xf]
        %v847 = vld [vmem:[%s261 + $0x58] sm:$0xf]
        %v848 = vld [vmem:[%s261 + $0x5c] sm:$0xf]
        %v873 = vunpack.c.l.b16 %v825
        %v874 = vunpack.c.l.b16 %v826
        %v875 = vunpack.c.l.b16 %v827
        %v876 = vunpack.c.l.b16 %v828
        %v877 = vunpack.c.l.b16 %v829
        %v878 = vunpack.c.l.b16 %v830
        %v879 = vunpack.c.l.b16 %v831
        %v880 = vunpack.c.l.b16 %v832
        %v881 = vunpack.c.l.b16 %v833
        %v882 = vunpack.c.l.b16 %v834
        %v883 = vunpack.c.l.b16 %v835
        %v884 = vunpack.c.l.b16 %v836
        %v885 = vunpack.c.l.b16 %v837
        %v886 = vunpack.c.l.b16 %v838
        %v887 = vunpack.c.l.b16 %v839
        %v888 = vunpack.c.l.b16 %v840
        %v889 = vunpack.c.l.b16 %v841
        %v890 = vunpack.c.l.b16 %v842
        %v891 = vunpack.c.l.b16 %v843
        %v892 = vunpack.c.l.b16 %v844
        %v893 = vunpack.c.l.b16 %v845
        %v894 = vunpack.c.l.b16 %v846
        %v895 = vunpack.c.l.b16 %v847
        %v896 = vunpack.c.l.b16 %v848
        %v897 = vpack.c.b16 %v874, %v873
        %v898 = vpack.c.b16 %v876, %v875
        %v899 = vpack.c.b16 %v878, %v877
        %v900 = vpack.c.b16 %v880, %v879
        %v901 = vpack.c.b16 %v882, %v881
        %v902 = vpack.c.b16 %v884, %v883
        %v903 = vpack.c.b16 %v886, %v885
        %v904 = vpack.c.b16 %v888, %v887
        %v905 = vpack.c.b16 %v890, %v889
        %v906 = vpack.c.b16 %v892, %v891
        %v907 = vpack.c.b16 %v894, %v893
        %v908 = vpack.c.b16 %v896, %v895
        %vm909 = vcmask 146432
        %v911 = vsel %vm909, %v897, 0
        %v914 = vsel %vm909, %v898, 0
        %v917 = vsel %vm909, %v899, 0
        %v920 = vsel %vm909, %v900, 0
        %v923 = vsel %vm909, %v901, 0
        %v926 = vsel %vm909, %v902, 0
        %v929 = vsel %vm909, %v903, 0
        %v932 = vsel %vm909, %v904, 0
        %v935 = vsel %vm909, %v905, 0
        %v938 = vsel %vm909, %v906, 0
        %v941 = vsel %vm909, %v907, 0
        %v944 = vsel %vm909, %v908, 0
        %v947 = vsel %vm394, %v493, 0
        %v950 = vsel %vm394, %v494, 0
        %v953 = vsel %vm394, %v625, 0
        %v956 = vsel %vm394, %v626, 0
        %v959 = vsel %vm394, %v757, 0
        %v962 = vsel %vm394, %v758, 0
        %964 = vmatprep.subr.bf16.mxu0 %v492
        %965 = vmatpush1.bf16.msra.mxu0 %v491
        %966 = vmatprep.subr.bf16.mxu0 %v950
        %967 = vmatpush1.bf16.msra.mxu0 %v947
        %968 = vmatprep.subr.bf16.mxu0 0
        %969 = vmatpush1.bf16.msra.mxu0 0
        %970 = vmatprep.subr.bf16.mxu0 0
        %971 = vmatpush1.bf16.msra.mxu0 0
        %972 = vmatprep.subr.bf16.mxu0 0
        %973 = vmatpush1.bf16.msra.mxu0 0
        %974 = vmatprep.subr.bf16.mxu0 0
        %975 = vmatpush1.bf16.msra.mxu0 0
        %976 = vmatprep.subr.bf16.mxu0 0
        %977 = vmatpush1.bf16.msra.mxu0 0
        %978 = vmatprep.subr.bf16.mxu0 0
        %979 = vmatpush1.bf16.msra.mxu0 0
        %980 = vmatprep.subr.bf16.mxu0 0
        %981 = vmatpush1.bf16.msra.mxu0 0
        %982 = vmatprep.subr.bf16.mxu0 0
        %983 = vmatpush1.bf16.msra.mxu0 0
        %984 = vmatprep.subr.bf16.mxu0 0
        %985 = vmatpush1.bf16.msra.mxu0 0
        %986 = vmatprep.subr.bf16.mxu0 0
        %987 = vmatpush1.bf16.msra.mxu0 0
        %988 = vmatprep.subr.bf16.mxu0 0
        %989 = vmatpush1.bf16.msra.mxu0 0
        %990 = vmatprep.subr.bf16.mxu0 0
        %991 = vmatpush1.bf16.msra.mxu0 0
        %992 = vmatprep.subr.bf16.mxu0 0
        %993 = vmatpush1.bf16.msra.mxu0 0
        %994 = vmatprep.subr.bf16.mxu0 0
        %995 = vmatpush1.bf16.msra.mxu0 0
        %996 = vmatprep.mubr.bf16.mxu0 0
        %997 = vmatmul.mubr.bf16.gmra.mrb[0].mxu0 %v911
        %v998 = vpop.f32.mrb[0].mxu0
        %v999 = vadd.f32 0.0, %v998
        %v1000 = vpop.f32.mrb[0].mxu0
        %v1001 = vadd.f32 0.0, %v1000
        %v1002 = vpop.f32.mrb[0].mxu0
        %v1003 = vadd.f32 0.0, %v1002
        %v1004 = vpop.f32.mrb[0].mxu0
        %v1005 = vadd.f32 0.0, %v1004
        %1006 = vmatprep.mubr.bf16.mxu0 0
        %1007 = vmatmul.mubr.bf16.gmra.mrb[0].mxu0 %v914
        %v1008 = vpop.f32.mrb[0].mxu0
        %v1009 = vadd.f32 0.0, %v1008
        %v1010 = vpop.f32.mrb[0].mxu0
        %v1011 = vadd.f32 0.0, %v1010
        %v1012 = vpop.f32.mrb[0].mxu0
        %v1013 = vadd.f32 0.0, %v1012
        %v1014 = vpop.f32.mrb[0].mxu0
        %v1015 = vadd.f32 0.0, %v1014
        %1016 = vmatprep.mubr.bf16.mxu0 0
        %1017 = vmatmul.mubr.bf16.gmra.mrb[0].mxu0 %v917
        %v1018 = vpop.f32.mrb[0].mxu0
        %v1019 = vadd.f32 0.0, %v1018
        %v1020 = vpop.f32.mrb[0].mxu0
        %v1021 = vadd.f32 0.0, %v1020
        %v1022 = vpop.f32.mrb[0].mxu0
        %v1023 = vadd.f32 0.0, %v1022
        %v1024 = vpop.f32.mrb[0].mxu0
        %v1025 = vadd.f32 0.0, %v1024
        %1026 = vmatprep.mubr.bf16.mxu0 0
        %1027 = vmatmul.mubr.bf16.gmra.mrb[0].mxu0 %v920
        %v1028 = vpop.f32.mrb[0].mxu0
        %v1029 = vadd.f32 0.0, %v1028
        %v1030 = vpop.f32.mrb[0].mxu0
        %v1031 = vadd.f32 0.0, %v1030
        %v1032 = vpop.f32.mrb[0].mxu0
        %v1033 = vadd.f32 0.0, %v1032
        %v1034 = vpop.f32.mrb[0].mxu0
        %v1035 = vadd.f32 0.0, %v1034
        %1036 = vmatprep.mubr.bf16.mxu0 0
        %1037 = vmatmul.mubr.bf16.gmra.mrb[0].mxu0 %v923
        %v1038 = vpop.f32.mrb[0].mxu0
        %v1039 = vadd.f32 0.0, %v1038
        %v1040 = vpop.f32.mrb[0].mxu0
        %v1041 = vadd.f32 0.0, %v1040
        %v1042 = vpop.f32.mrb[0].mxu0
        %v1043 = vadd.f32 0.0, %v1042
        %v1044 = vpop.f32.mrb[0].mxu0
        %v1045 = vadd.f32 0.0, %v1044
        %1046 = vmatprep.mubr.bf16.mxu0 0
        %1047 = vmatmul.mubr.bf16.gmra.mrb[0].mxu0 %v926
        %v1048 = vpop.f32.mrb[0].mxu0
        %v1049 = vadd.f32 0.0, %v1048
        %v1050 = vpop.f32.mrb[0].mxu0
        %v1051 = vadd.f32 0.0, %v1050
        %v1052 = vpop.f32.mrb[0].mxu0
        %v1053 = vadd.f32 0.0, %v1052
        %v1054 = vpop.f32.mrb[0].mxu0
        %v1055 = vadd.f32 0.0, %v1054
        %1056 = vmatprep.mubr.bf16.mxu0 0
        %1057 = vmatmul.mubr.bf16.gmra.mrb[0].mxu0 %v929
        %v1058 = vpop.f32.mrb[0].mxu0
        %v1059 = vadd.f32 0.0, %v1058
        %v1060 = vpop.f32.mrb[0].mxu0
        %v1061 = vadd.f32 0.0, %v1060
        %v1062 = vpop.f32.mrb[0].mxu0
        %v1063 = vadd.f32 0.0, %v1062
        %v1064 = vpop.f32.mrb[0].mxu0
        %v1065 = vadd.f32 0.0, %v1064
        %1066 = vmatprep.mubr.bf16.mxu0 0
        %1067 = vmatmul.mubr.bf16.gmra.mrb[0].mxu0 %v932
        %v1068 = vpop.f32.mrb[0].mxu0
        %v1069 = vadd.f32 0.0, %v1068
        %v1070 = vpop.f32.mrb[0].mxu0
        %v1071 = vadd.f32 0.0, %v1070
        %v1072 = vpop.f32.mrb[0].mxu0
        %v1073 = vadd.f32 0.0, %v1072
        %v1074 = vpop.f32.mrb[0].mxu0
        %v1075 = vadd.f32 0.0, %v1074
        %1076 = vmatprep.mubr.bf16.mxu0 0
        %1077 = vmatmul.mubr.bf16.gmra.mrb[0].mxu0 %v935
        %v1078 = vpop.f32.mrb[0].mxu0
        %v1079 = vadd.f32 0.0, %v1078
        %v1080 = vpop.f32.mrb[0].mxu0
        %v1081 = vadd.f32 0.0, %v1080
        %v1082 = vpop.f32.mrb[0].mxu0
        %v1083 = vadd.f32 0.0, %v1082
        %v1084 = vpop.f32.mrb[0].mxu0
        %v1085 = vadd.f32 0.0, %v1084
        %1086 = vmatprep.mubr.bf16.mxu0 0
        %1087 = vmatmul.mubr.bf16.gmra.mrb[0].mxu0 %v938
        %v1088 = vpop.f32.mrb[0].mxu0
        %v1089 = vadd.f32 0.0, %v1088
        %v1090 = vpop.f32.mrb[0].mxu0
        %v1091 = vadd.f32 0.0, %v1090
        %v1092 = vpop.f32.mrb[0].mxu0
        %v1093 = vadd.f32 0.0, %v1092
        %v1094 = vpop.f32.mrb[0].mxu0
        %v1095 = vadd.f32 0.0, %v1094
        %1096 = vmatprep.mubr.bf16.mxu0 0
        %1097 = vmatmul.mubr.bf16.gmra.mrb[0].mxu0 %v941
        %v1098 = vpop.f32.mrb[0].mxu0
        %v1099 = vadd.f32 0.0, %v1098
        %v1100 = vpop.f32.mrb[0].mxu0
        %v1101 = vadd.f32 0.0, %v1100
        %v1102 = vpop.f32.mrb[0].mxu0
        %v1103 = vadd.f32 0.0, %v1102
        %v1104 = vpop.f32.mrb[0].mxu0
        %v1105 = vadd.f32 0.0, %v1104
        %1106 = vmatprep.mubr.bf16.mxu0 0
        %1107 = vmatmul.mubr.bf16.gmra.mrb[0].mxu0 %v944
        %v1108 = vpop.f32.mrb[0].mxu0
        %v1109 = vadd.f32 0.0, %v1108
        %v1110 = vpop.f32.mrb[0].mxu0
        %v1111 = vadd.f32 0.0, %v1110
        %v1112 = vpop.f32.mrb[0].mxu0
        %v1113 = vadd.f32 0.0, %v1112
        %v1114 = vpop.f32.mrb[0].mxu0
        %v1115 = vadd.f32 0.0, %v1114
        %1116 = vdwg.mxu0
        %1117 = vmatprep.subr.bf16.mxu0 %v624
        %1118 = vmatpush1.bf16.msra.mxu0 %v623
        %1119 = vmatprep.subr.bf16.mxu0 %v956
        %1120 = vmatpush1.bf16.msra.mxu0 %v953
        %1121 = vmatprep.subr.bf16.mxu0 0
        %1122 = vmatpush1.bf16.msra.mxu0 0
        %1123 = vmatprep.subr.bf16.mxu0 0
        %1124 = vmatpush1.bf16.msra.mxu0 0
        %1125 = vmatprep.subr.bf16.mxu0 0
        %1126 = vmatpush1.bf16.msra.mxu0 0
        %1127 = vmatprep.subr.bf16.mxu0 0
        %1128 = vmatpush1.bf16.msra.mxu0 0
        %1129 = vmatprep.subr.bf16.mxu0 0
        %1130 = vmatpush1.bf16.msra.mxu0 0
        %1131 = vmatprep.subr.bf16.mxu0 0
        %1132 = vmatpush1.bf16.msra.mxu0 0
        %1133 = vmatprep.subr.bf16.mxu0 0
        %1134 = vmatpush1.bf16.msra.mxu0 0
        %1135 = vmatprep.subr.bf16.mxu0 0
        %1136 = vmatpush1.bf16.msra.mxu0 0
        %1137 = vmatprep.subr.bf16.mxu0 0
        %1138 = vmatpush1.bf16.msra.mxu0 0
        %1139 = vmatprep.subr.bf16.mxu0 0
        %1140 = vmatpush1.bf16.msra.mxu0 0
        %1141 = vmatprep.subr.bf16.mxu0 0
        %1142 = vmatpush1.bf16.msra.mxu0 0
        %1143 = vmatprep.subr.bf16.mxu0 0
        %1144 = vmatpush1.bf16.msra.mxu0 0
        %1145 = vmatprep.subr.bf16.mxu0 0
        %1146 = vmatpush1.bf16.msra.mxu0 0
        %1147 = vmatprep.subr.bf16.mxu0 0
        %1148 = vmatpush1.bf16.msra.mxu0 0
        %1149 = vmatprep.mubr.bf16.mxu0 0
        %1150 = vmatmul.mubr.bf16.gmra.mrb[0].mxu0 %v911
        %v1151 = vpop.f32.mrb[0].mxu0
        %v1152 = vadd.f32 0.0, %v1151
        %v1153 = vpop.f32.mrb[0].mxu0
        %v1154 = vadd.f32 0.0, %v1153
        %v1155 = vpop.f32.mrb[0].mxu0
        %v1156 = vadd.f32 0.0, %v1155
        %v1157 = vpop.f32.mrb[0].mxu0
        %v1158 = vadd.f32 0.0, %v1157
        %1159 = vmatprep.mubr.bf16.mxu0 0
        %1160 = vmatmul.mubr.bf16.gmra.mrb[0].mxu0 %v914
        %v1161 = vpop.f32.mrb[0].mxu0
        %v1162 = vadd.f32 0.0, %v1161
        %v1163 = vpop.f32.mrb[0].mxu0
        %v1164 = vadd.f32 0.0, %v1163
        %v1165 = vpop.f32.mrb[0].mxu0
        %v1166 = vadd.f32 0.0, %v1165
        %v1167 = vpop.f32.mrb[0].mxu0
        %v1168 = vadd.f32 0.0, %v1167
        %1169 = vmatprep.mubr.bf16.mxu0 0
        %1170 = vmatmul.mubr.bf16.gmra.mrb[0].mxu0 %v917
        %v1171 = vpop.f32.mrb[0].mxu0
        %v1172 = vadd.f32 0.0, %v1171
        %v1173 = vpop.f32.mrb[0].mxu0
        %v1174 = vadd.f32 0.0, %v1173
        %v1175 = vpop.f32.mrb[0].mxu0
        %v1176 = vadd.f32 0.0, %v1175
        %v1177 = vpop.f32.mrb[0].mxu0
        %v1178 = vadd.f32 0.0, %v1177
        %1179 = vmatprep.mubr.bf16.mxu0 0
        %1180 = vmatmul.mubr.bf16.gmra.mrb[0].mxu0 %v920
        %v1181 = vpop.f32.mrb[0].mxu0
        %v1182 = vadd.f32 0.0, %v1181
        %v1183 = vpop.f32.mrb[0].mxu0
        %v1184 = vadd.f32 0.0, %v1183
        %v1185 = vpop.f32.mrb[0].mxu0
        %v1186 = vadd.f32 0.0, %v1185
        %v1187 = vpop.f32.mrb[0].mxu0
        %v1188 = vadd.f32 0.0, %v1187
        %1189 = vmatprep.mubr.bf16.mxu0 0
        %1190 = vmatmul.mubr.bf16.gmra.mrb[0].mxu0 %v923
        %v1191 = vpop.f32.mrb[0].mxu0
        %v1192 = vadd.f32 0.0, %v1191
        %v1193 = vpop.f32.mrb[0].mxu0
        %v1194 = vadd.f32 0.0, %v1193
        %v1195 = vpop.f32.mrb[0].mxu0
        %v1196 = vadd.f32 0.0, %v1195
        %v1197 = vpop.f32.mrb[0].mxu0
        %v1198 = vadd.f32 0.0, %v1197
        %1199 = vmatprep.mubr.bf16.mxu0 0
        %1200 = vmatmul.mubr.bf16.gmra.mrb[0].mxu0 %v926
        %v1201 = vpop.f32.mrb[0].mxu0
        %v1202 = vadd.f32 0.0, %v1201
        %v1203 = vpop.f32.mrb[0].mxu0
        %v1204 = vadd.f32 0.0, %v1203
        %v1205 = vpop.f32.mrb[0].mxu0
        %v1206 = vadd.f32 0.0, %v1205
        %v1207 = vpop.f32.mrb[0].mxu0
        %v1208 = vadd.f32 0.0, %v1207
        %1209 = vmatprep.mubr.bf16.mxu0 0
        %1210 = vmatmul.mubr.bf16.gmra.mrb[0].mxu0 %v929
        %v1211 = vpop.f32.mrb[0].mxu0
        %v1212 = vadd.f32 0.0, %v1211
        %v1213 = vpop.f32.mrb[0].mxu0
        %v1214 = vadd.f32 0.0, %v1213
        %v1215 = vpop.f32.mrb[0].mxu0
        %v1216 = vadd.f32 0.0, %v1215
        %v1217 = vpop.f32.mrb[0].mxu0
        %v1218 = vadd.f32 0.0, %v1217
        %1219 = vmatprep.mubr.bf16.mxu0 0
        %1220 = vmatmul.mubr.bf16.gmra.mrb[0].mxu0 %v932
        %v1221 = vpop.f32.mrb[0].mxu0
        %v1222 = vadd.f32 0.0, %v1221
        %v1223 = vpop.f32.mrb[0].mxu0
        %v1224 = vadd.f32 0.0, %v1223
        %v1225 = vpop.f32.mrb[0].mxu0
        %v1226 = vadd.f32 0.0, %v1225
        %v1227 = vpop.f32.mrb[0].mxu0
        %v1228 = vadd.f32 0.0, %v1227
        %1229 = vmatprep.mubr.bf16.mxu0 0
        %1230 = vmatmul.mubr.bf16.gmra.mrb[0].mxu0 %v935
        %v1231 = vpop.f32.mrb[0].mxu0
        %v1232 = vadd.f32 0.0, %v1231
        %v1233 = vpop.f32.mrb[0].mxu0
        %v1234 = vadd.f32 0.0, %v1233
        %v1235 = vpop.f32.mrb[0].mxu0
        %v1236 = vadd.f32 0.0, %v1235
        %v1237 = vpop.f32.mrb[0].mxu0
        %v1238 = vadd.f32 0.0, %v1237
        %1239 = vmatprep.mubr.bf16.mxu0 0
        %1240 = vmatmul.mubr.bf16.gmra.mrb[0].mxu0 %v938
        %v1241 = vpop.f32.mrb[0].mxu0
        %v1242 = vadd.f32 0.0, %v1241
        %v1243 = vpop.f32.mrb[0].mxu0
        %v1244 = vadd.f32 0.0, %v1243
        %v1245 = vpop.f32.mrb[0].mxu0
        %v1246 = vadd.f32 0.0, %v1245
        %v1247 = vpop.f32.mrb[0].mxu0
        %v1248 = vadd.f32 0.0, %v1247
        %1249 = vmatprep.mubr.bf16.mxu0 0
        %1250 = vmatmul.mubr.bf16.gmra.mrb[0].mxu0 %v941
        %v1251 = vpop.f32.mrb[0].mxu0
        %v1252 = vadd.f32 0.0, %v1251
        %v1253 = vpop.f32.mrb[0].mxu0
        %v1254 = vadd.f32 0.0, %v1253
        %v1255 = vpop.f32.mrb[0].mxu0
        %v1256 = vadd.f32 0.0, %v1255
        %v1257 = vpop.f32.mrb[0].mxu0
        %v1258 = vadd.f32 0.0, %v1257
        %1259 = vmatprep.mubr.bf16.mxu0 0
        %1260 = vmatmul.mubr.bf16.gmra.mrb[0].mxu0 %v944
        %v1261 = vpop.f32.mrb[0].mxu0
        %v1262 = vadd.f32 0.0, %v1261
        %v1263 = vpop.f32.mrb[0].mxu0
        %v1264 = vadd.f32 0.0, %v1263
        %v1265 = vpop.f32.mrb[0].mxu0
        %v1266 = vadd.f32 0.0, %v1265
        %v1267 = vpop.f32.mrb[0].mxu0
        %v1268 = vadd.f32 0.0, %v1267
        %1269 = vdwg.mxu0
        %1270 = vmatprep.subr.bf16.mxu0 %v756
        %1271 = vmatpush1.bf16.msra.mxu0 %v755
        %1272 = vmatprep.subr.bf16.mxu0 %v962
        %1273 = vmatpush1.bf16.msra.mxu0 %v959
        %1274 = vmatprep.subr.bf16.mxu0 0
        %1275 = vmatpush1.bf16.msra.mxu0 0
        %1276 = vmatprep.subr.bf16.mxu0 0
        %1277 = vmatpush1.bf16.msra.mxu0 0
        %1278 = vmatprep.subr.bf16.mxu0 0
        %1279 = vmatpush1.bf16.msra.mxu0 0
        %1280 = vmatprep.subr.bf16.mxu0 0
        %1281 = vmatpush1.bf16.msra.mxu0 0
        %1282 = vmatprep.subr.bf16.mxu0 0
        %1283 = vmatpush1.bf16.msra.mxu0 0
        %1284 = vmatprep.subr.bf16.mxu0 0
        %1285 = vmatpush1.bf16.msra.mxu0 0
        %1286 = vmatprep.subr.bf16.mxu0 0
        %1287 = vmatpush1.bf16.msra.mxu0 0
        %1288 = vmatprep.subr.bf16.mxu0 0
        %1289 = vmatpush1.bf16.msra.mxu0 0
        %1290 = vmatprep.subr.bf16.mxu0 0
        %1291 = vmatpush1.bf16.msra.mxu0 0
        %1292 = vmatprep.subr.bf16.mxu0 0
        %1293 = vmatpush1.bf16.msra.mxu0 0
        %1294 = vmatprep.subr.bf16.mxu0 0
        %1295 = vmatpush1.bf16.msra.mxu0 0
        %1296 = vmatprep.subr.bf16.mxu0 0
        %1297 = vmatpush1.bf16.msra.mxu0 0
        %1298 = vmatprep.subr.bf16.mxu0 0
        %1299 = vmatpush1.bf16.msra.mxu0 0
        %1300 = vmatprep.subr.bf16.mxu0 0
        %1301 = vmatpush1.bf16.msra.mxu0 0
        %1302 = vmatprep.mubr.bf16.mxu0 0
        %1303 = vmatmul.mubr.bf16.gmra.mrb[0].mxu0 %v911
        %v1304 = vpop.f32.mrb[0].mxu0
        %v1305 = vadd.f32 0.0, %v1304
        %v1306 = vpop.f32.mrb[0].mxu0
        %v1307 = vadd.f32 0.0, %v1306
        %v1308 = vpop.f32.mrb[0].mxu0
        %v1309 = vadd.f32 0.0, %v1308
        %v1310 = vpop.f32.mrb[0].mxu0
        %v1311 = vadd.f32 0.0, %v1310
        %1312 = vmatprep.mubr.bf16.mxu0 0
        %1313 = vmatmul.mubr.bf16.gmra.mrb[0].mxu0 %v914
        %v1314 = vpop.f32.mrb[0].mxu0
        %v1315 = vadd.f32 0.0, %v1314
        %v1316 = vpop.f32.mrb[0].mxu0
        %v1317 = vadd.f32 0.0, %v1316
        %v1318 = vpop.f32.mrb[0].mxu0
        %v1319 = vadd.f32 0.0, %v1318
        %v1320 = vpop.f32.mrb[0].mxu0
        %v1321 = vadd.f32 0.0, %v1320
        %1322 = vmatprep.mubr.bf16.mxu0 0
        %1323 = vmatmul.mubr.bf16.gmra.mrb[0].mxu0 %v917
        %v1324 = vpop.f32.mrb[0].mxu0
        %v1325 = vadd.f32 0.0, %v1324
        %v1326 = vpop.f32.mrb[0].mxu0
        %v1327 = vadd.f32 0.0, %v1326
        %v1328 = vpop.f32.mrb[0].mxu0
        %v1329 = vadd.f32 0.0, %v1328
        %v1330 = vpop.f32.mrb[0].mxu0
        %v1331 = vadd.f32 0.0, %v1330
        %1332 = vmatprep.mubr.bf16.mxu0 0
        %1333 = vmatmul.mubr.bf16.gmra.mrb[0].mxu0 %v920
        %v1334 = vpop.f32.mrb[0].mxu0
        %v1335 = vadd.f32 0.0, %v1334
        %v1336 = vpop.f32.mrb[0].mxu0
        %v1337 = vadd.f32 0.0, %v1336
        %v1338 = vpop.f32.mrb[0].mxu0
        %v1339 = vadd.f32 0.0, %v1338
        %v1340 = vpop.f32.mrb[0].mxu0
        %v1341 = vadd.f32 0.0, %v1340
        %1342 = vmatprep.mubr.bf16.mxu0 0
        %1343 = vmatmul.mubr.bf16.gmra.mrb[0].mxu0 %v923
        %v1344 = vpop.f32.mrb[0].mxu0
        %v1345 = vadd.f32 0.0, %v1344
        %v1346 = vpop.f32.mrb[0].mxu0
        %v1347 = vadd.f32 0.0, %v1346
        %v1348 = vpop.f32.mrb[0].mxu0
        %v1349 = vadd.f32 0.0, %v1348
        %v1350 = vpop.f32.mrb[0].mxu0
        %v1351 = vadd.f32 0.0, %v1350
        %1352 = vmatprep.mubr.bf16.mxu0 0
        %1353 = vmatmul.mubr.bf16.gmra.mrb[0].mxu0 %v926
        %v1354 = vpop.f32.mrb[0].mxu0
        %v1355 = vadd.f32 0.0, %v1354
        %v1356 = vpop.f32.mrb[0].mxu0
        %v1357 = vadd.f32 0.0, %v1356
        %v1358 = vpop.f32.mrb[0].mxu0
        %v1359 = vadd.f32 0.0, %v1358
        %v1360 = vpop.f32.mrb[0].mxu0
        %v1361 = vadd.f32 0.0, %v1360
        %1362 = vmatprep.mubr.bf16.mxu0 0
        %1363 = vmatmul.mubr.bf16.gmra.mrb[0].mxu0 %v929
        %v1364 = vpop.f32.mrb[0].mxu0
        %v1365 = vadd.f32 0.0, %v1364
        %v1366 = vpop.f32.mrb[0].mxu0
        %v1367 = vadd.f32 0.0, %v1366
        %v1368 = vpop.f32.mrb[0].mxu0
        %v1369 = vadd.f32 0.0, %v1368
        %v1370 = vpop.f32.mrb[0].mxu0
        %v1371 = vadd.f32 0.0, %v1370
        %1372 = vmatprep.mubr.bf16.mxu0 0
        %1373 = vmatmul.mubr.bf16.gmra.mrb[0].mxu0 %v932
        %v1374 = vpop.f32.mrb[0].mxu0
        %v1375 = vadd.f32 0.0, %v1374
        %v1376 = vpop.f32.mrb[0].mxu0
        %v1377 = vadd.f32 0.0, %v1376
        %v1378 = vpop.f32.mrb[0].mxu0
        %v1379 = vadd.f32 0.0, %v1378
        %v1380 = vpop.f32.mrb[0].mxu0
        %v1381 = vadd.f32 0.0, %v1380
        %1382 = vmatprep.mubr.bf16.mxu0 0
        %1383 = vmatmul.mubr.bf16.gmra.mrb[0].mxu0 %v935
        %v1384 = vpop.f32.mrb[0].mxu0
        %v1385 = vadd.f32 0.0, %v1384
        %v1386 = vpop.f32.mrb[0].mxu0
        %v1387 = vadd.f32 0.0, %v1386
        %v1388 = vpop.f32.mrb[0].mxu0
        %v1389 = vadd.f32 0.0, %v1388
        %v1390 = vpop.f32.mrb[0].mxu0
        %v1391 = vadd.f32 0.0, %v1390
        %1392 = vmatprep.mubr.bf16.mxu0 0
        %1393 = vmatmul.mubr.bf16.gmra.mrb[0].mxu0 %v938
        %v1394 = vpop.f32.mrb[0].mxu0
        %v1395 = vadd.f32 0.0, %v1394
        %v1396 = vpop.f32.mrb[0].mxu0
        %v1397 = vadd.f32 0.0, %v1396
        %v1398 = vpop.f32.mrb[0].mxu0
        %v1399 = vadd.f32 0.0, %v1398
        %v1400 = vpop.f32.mrb[0].mxu0
        %v1401 = vadd.f32 0.0, %v1400
        %1402 = vmatprep.mubr.bf16.mxu0 0
        %1403 = vmatmul.mubr.bf16.gmra.mrb[0].mxu0 %v941
        %v1404 = vpop.f32.mrb[0].mxu0
        %v1405 = vadd.f32 0.0, %v1404
        %v1406 = vpop.f32.mrb[0].mxu0
        %v1407 = vadd.f32 0.0, %v1406
        %v1408 = vpop.f32.mrb[0].mxu0
        %v1409 = vadd.f32 0.0, %v1408
        %v1410 = vpop.f32.mrb[0].mxu0
        %v1411 = vadd.f32 0.0, %v1410
        %1412 = vmatprep.mubr.bf16.mxu0 0
        %1413 = vmatmul.mubr.bf16.gmra.mrb[0].mxu0 %v944
        %v1414 = vpop.f32.mrb[0].mxu0
        %v1415 = vadd.f32 0.0, %v1414
        %v1416 = vpop.f32.mrb[0].mxu0
        %v1417 = vadd.f32 0.0, %v1416
        %v1418 = vpop.f32.mrb[0].mxu0
        %v1419 = vadd.f32 0.0, %v1418
        %v1420 = vpop.f32.mrb[0].mxu0
        %v1421 = vadd.f32 0.0, %v1420
        %1422 = vdwg.mxu0
        %v1423 = vpack.c.bf16 %v1003, %v999
        %v1424 = vpack.c.bf16 %v1005, %v1001
        %v1425 = vpack.c.bf16 %v1156, %v1152
        %v1426 = vpack.c.bf16 %v1158, %v1154
        %v1427 = vpack.c.bf16 %v1309, %v1305
        %v1428 = vpack.c.bf16 %v1311, %v1307
        %v1429 = vpack.c.bf16 %v1013, %v1009
        %v1430 = vpack.c.bf16 %v1015, %v1011
        %v1431 = vpack.c.bf16 %v1166, %v1162
        %v1432 = vpack.c.bf16 %v1168, %v1164
        %v1433 = vpack.c.bf16 %v1319, %v1315
        %v1434 = vpack.c.bf16 %v1321, %v1317
        %v1435 = vpack.c.bf16 %v1023, %v1019
        %v1436 = vpack.c.bf16 %v1025, %v1021
        %v1437 = vpack.c.bf16 %v1176, %v1172
        %v1438 = vpack.c.bf16 %v1178, %v1174
        %v1439 = vpack.c.bf16 %v1329, %v1325
        %v1440 = vpack.c.bf16 %v1331, %v1327
        %v1441 = vpack.c.bf16 %v1033, %v1029
        %v1442 = vpack.c.bf16 %v1035, %v1031
        %v1443 = vpack.c.bf16 %v1186, %v1182
        %v1444 = vpack.c.bf16 %v1188, %v1184
        %v1445 = vpack.c.bf16 %v1339, %v1335
        %v1446 = vpack.c.bf16 %v1341, %v1337
        %v1447 = vpack.c.bf16 %v1043, %v1039
        %v1448 = vpack.c.bf16 %v1045, %v1041
        %v1449 = vpack.c.bf16 %v1196, %v1192
        %v1450 = vpack.c.bf16 %v1198, %v1194
        %v1451 = vpack.c.bf16 %v1349, %v1345
        %v1452 = vpack.c.bf16 %v1351, %v1347
        %v1453 = vpack.c.bf16 %v1053, %v1049
        %v1454 = vpack.c.bf16 %v1055, %v1051
        %v1455 = vpack.c.bf16 %v1206, %v1202
        %v1456 = vpack.c.bf16 %v1208, %v1204
        %v1457 = vpack.c.bf16 %v1359, %v1355
        %v1458 = vpack.c.bf16 %v1361, %v1357
        %v1459 = vpack.c.bf16 %v1063, %v1059
        %v1460 = vpack.c.bf16 %v1065, %v1061
        %v1461 = vpack.c.bf16 %v1216, %v1212
        %v1462 = vpack.c.bf16 %v1218, %v1214
        %v1463 = vpack.c.bf16 %v1369, %v1365
        %v1464 = vpack.c.bf16 %v1371, %v1367
        %v1465 = vpack.c.bf16 %v1073, %v1069
        %v1466 = vpack.c.bf16 %v1075, %v1071
        %v1467 = vpack.c.bf16 %v1226, %v1222
        %v1468 = vpack.c.bf16 %v1228, %v1224
        %v1469 = vpack.c.bf16 %v1379, %v1375
        %v1470 = vpack.c.bf16 %v1381, %v1377
        %v1471 = vpack.c.bf16 %v1083, %v1079
        %v1472 = vpack.c.bf16 %v1085, %v1081
        %v1473 = vpack.c.bf16 %v1236, %v1232
        %v1474 = vpack.c.bf16 %v1238, %v1234
        %v1475 = vpack.c.bf16 %v1389, %v1385
        %v1476 = vpack.c.bf16 %v1391, %v1387
        %v1477 = vpack.c.bf16 %v1093, %v1089
        %v1478 = vpack.c.bf16 %v1095, %v1091
        %v1479 = vpack.c.bf16 %v1246, %v1242
        %v1480 = vpack.c.bf16 %v1248, %v1244
        %v1481 = vpack.c.bf16 %v1399, %v1395
        %v1482 = vpack.c.bf16 %v1401, %v1397
        %v1483 = vpack.c.bf16 %v1103, %v1099
        %v1484 = vpack.c.bf16 %v1105, %v1101
        %v1485 = vpack.c.bf16 %v1256, %v1252
        %v1486 = vpack.c.bf16 %v1258, %v1254
        %v1487 = vpack.c.bf16 %v1409, %v1405
        %v1488 = vpack.c.bf16 %v1411, %v1407
        %v1489 = vpack.c.bf16 %v1113, %v1109
        %v1490 = vpack.c.bf16 %v1115, %v1111
        %v1491 = vpack.c.bf16 %v1266, %v1262
        %v1492 = vpack.c.bf16 %v1268, %v1264
        %v1493 = vpack.c.bf16 %v1419, %v1415
        %v1494 = vpack.c.bf16 %v1421, %v1417
        %v1495 = vmul.bf16 %v1423, %v557
        %v1496 = vmul.bf16 %v1424, %v558
        %v1497 = vmul.bf16 %v1429, %v559
        %v1498 = vmul.bf16 %v1430, %v560
        %v1499 = vunpack.c.l.bf16 %v1495
        %v1500 = vunpack.c.l.bf16 %v1496
        %v1501 = vunpack.c.h.bf16 %v1495
        %v1502 = vunpack.c.h.bf16 %v1496
        %v1503 = vunpack.c.l.bf16 %v1497
        %v1504 = vunpack.c.l.bf16 %v1498
        %v1505 = vadd.f32 %v1499, %v1501
        %v1506 = vadd.f32 %v1505, %v1503
        %v1507 = vrot.slane %v1506, 4
        %v1508 = vadd.f32 %v1506, %v1507
        %v1509 = vrot.slane %v1508, 2
        %v1510 = vadd.f32 %v1508, %v1509
        %v1511 = vrot.slane %v1510, 1
        %v1512 = vadd.f32 %v1510, %v1511
        %v1513 = vadd.f32 %v1500, %v1502
        %v1514 = vadd.f32 %v1513, %v1504
        %v1515 = vrot.slane %v1514, 4
        %v1516 = vadd.f32 %v1514, %v1515
        %v1517 = vrot.slane %v1516, 2
        %v1518 = vadd.f32 %v1516, %v1517
        %v1519 = vrot.slane %v1518, 1
        %v1520 = vadd.f32 %v1518, %v1519
        %v1521 = vpack.c.bf16 %v1512, %v1512
        %v1522 = vpack.c.bf16 %v1520, %v1520
        %vm1527 = vcmask 1043456
        %v1528 = vrot.slane %v557, 4
        %v1529 = vrot.slane %v558, 4
        %v1530 = vrot.slane %v559, 4
        %v1531 = vsel %vm1527, %v1528, %v1530
        %v1532 = vrot.slane %v560, 4
        %v1533 = vsel %vm1527, %v1529, %v1532
        %v1538 = vmul.bf16 %v1429, %v1528
        %v1539 = vmul.bf16 %v1430, %v1529
        %v1540 = vmul.bf16 %v1435, %v1531
        %v1541 = vmul.bf16 %v1436, %v1533
        %v1546 = vrot.slane %v1538, 4
        %v1547 = vrot.slane %v1540, 4
        %v1548 = vsel %vm1527, %v1546, %v1547
        %v1549 = vrot.slane %v1539, 4
        %v1550 = vrot.slane %v1541, 4
        %v1551 = vsel %vm1527, %v1549, %v1550
        %v1556 = vunpack.c.l.bf16 %v1548
        %v1557 = vunpack.c.l.bf16 %v1551
        %v1558 = vunpack.c.h.bf16 %v1548
        %v1559 = vunpack.c.h.bf16 %v1551
        %v1560 = vunpack.c.l.bf16 %v1547
        %v1561 = vunpack.c.l.bf16 %v1550
        %v1562 = vadd.f32 %v1556, %v1558
        %v1563 = vadd.f32 %v1562, %v1560
        %v1564 = vrot.slane %v1563, 4
        %v1565 = vadd.f32 %v1563, %v1564
        %v1566 = vrot.slane %v1565, 2
        %v1567 = vadd.f32 %v1565, %v1566
        %v1568 = vrot.slane %v1567, 1
        %v1569 = vadd.f32 %v1567, %v1568
        %v1570 = vadd.f32 %v1557, %v1559
        %v1571 = vadd.f32 %v1570, %v1561
        %v1572 = vrot.slane %v1571, 4
        %v1573 = vadd.f32 %v1571, %v1572
        %v1574 = vrot.slane %v1573, 2
        %v1575 = vadd.f32 %v1573, %v1574
        %v1576 = vrot.slane %v1575, 1
        %v1577 = vadd.f32 %v1575, %v1576
        %v1578 = vpack.c.bf16 %v1569, %v1569
        %v1579 = vpack.c.bf16 %v1577, %v1577
        %v1580 = vmul.bf16 %v1441, %v557
        %v1581 = vmul.bf16 %v1442, %v558
        %v1582 = vmul.bf16 %v1447, %v559
        %v1583 = vmul.bf16 %v1448, %v560
        %v1584 = vunpack.c.l.bf16 %v1580
        %v1585 = vunpack.c.l.bf16 %v1581
        %v1586 = vunpack.c.h.bf16 %v1580
        %v1587 = vunpack.c.h.bf16 %v1581
        %v1588 = vunpack.c.l.bf16 %v1582
        %v1589 = vunpack.c.l.bf16 %v1583
        %v1590 = vadd.f32 %v1584, %v1586
        %v1591 = vadd.f32 %v1590, %v1588
        %v1592 = vrot.slane %v1591, 4
        %v1593 = vadd.f32 %v1591, %v1592
        %v1594 = vrot.slane %v1593, 2
        %v1595 = vadd.f32 %v1593, %v1594
        %v1596 = vrot.slane %v1595, 1
        %v1597 = vadd.f32 %v1595, %v1596
        %v1598 = vadd.f32 %v1585, %v1587
        %v1599 = vadd.f32 %v1598, %v1589
        %v1600 = vrot.slane %v1599, 4
        %v1601 = vadd.f32 %v1599, %v1600
        %v1602 = vrot.slane %v1601, 2
        %v1603 = vadd.f32 %v1601, %v1602
        %v1604 = vrot.slane %v1603, 1
        %v1605 = vadd.f32 %v1603, %v1604
        %v1606 = vpack.c.bf16 %v1597, %v1597
        %v1607 = vpack.c.bf16 %v1605, %v1605
        %v1608 = vmul.bf16 %v1447, %v1528
        %v1609 = vmul.bf16 %v1448, %v1529
        %v1610 = vmul.bf16 %v1453, %v1531
        %v1611 = vmul.bf16 %v1454, %v1533
        %v1616 = vrot.slane %v1608, 4
        %v1617 = vrot.slane %v1610, 4
        %v1618 = vsel %vm1527, %v1616, %v1617
        %v1619 = vrot.slane %v1609, 4
        %v1620 = vrot.slane %v1611, 4
        %v1621 = vsel %vm1527, %v1619, %v1620
        %v1626 = vunpack.c.l.bf16 %v1618
        %v1627 = vunpack.c.l.bf16 %v1621
        %v1628 = vunpack.c.h.bf16 %v1618
        %v1629 = vunpack.c.h.bf16 %v1621
        %v1630 = vunpack.c.l.bf16 %v1617
        %v1631 = vunpack.c.l.bf16 %v1620
        %v1632 = vadd.f32 %v1626, %v1628
        %v1633 = vadd.f32 %v1632, %v1630
        %v1634 = vrot.slane %v1633, 4
        %v1635 = vadd.f32 %v1633, %v1634
        %v1636 = vrot.slane %v1635, 2
        %v1637 = vadd.f32 %v1635, %v1636
        %v1638 = vrot.slane %v1637, 1
        %v1639 = vadd.f32 %v1637, %v1638
        %v1640 = vadd.f32 %v1627, %v1629
        %v1641 = vadd.f32 %v1640, %v1631
        %v1642 = vrot.slane %v1641, 4
        %v1643 = vadd.f32 %v1641, %v1642
        %v1644 = vrot.slane %v1643, 2
        %v1645 = vadd.f32 %v1643, %v1644
        %v1646 = vrot.slane %v1645, 1
        %v1647 = vadd.f32 %v1645, %v1646
        %v1648 = vpack.c.bf16 %v1639, %v1639
        %v1649 = vpack.c.bf16 %v1647, %v1647
        %v1650 = vmul.bf16 %v1459, %v557
        %v1651 = vmul.bf16 %v1460, %v558
        %v1652 = vmul.bf16 %v1465, %v559
        %v1653 = vmul.bf16 %v1466, %v560
        %v1654 = vunpack.c.l.bf16 %v1650
        %v1655 = vunpack.c.l.bf16 %v1651
        %v1656 = vunpack.c.h.bf16 %v1650
        %v1657 = vunpack.c.h.bf16 %v1651
        %v1658 = vunpack.c.l.bf16 %v1652
        %v1659 = vunpack.c.l.bf16 %v1653
        %v1660 = vadd.f32 %v1654, %v1656
        %v1661 = vadd.f32 %v1660, %v1658
        %v1662 = vrot.slane %v1661, 4
        %v1663 = vadd.f32 %v1661, %v1662
        %v1664 = vrot.slane %v1663, 2
        %v1665 = vadd.f32 %v1663, %v1664
        %v1666 = vrot.slane %v1665, 1
        %v1667 = vadd.f32 %v1665, %v1666
        %v1668 = vadd.f32 %v1655, %v1657
        %v1669 = vadd.f32 %v1668, %v1659
        %v1670 = vrot.slane %v1669, 4
        %v1671 = vadd.f32 %v1669, %v1670
        %v1672 = vrot.slane %v1671, 2
        %v1673 = vadd.f32 %v1671, %v1672
        %v1674 = vrot.slane %v1673, 1
        %v1675 = vadd.f32 %v1673, %v1674
        %v1676 = vpack.c.bf16 %v1667, %v1667
        %v1677 = vpack.c.bf16 %v1675, %v1675
        %v1678 = vmul.bf16 %v1465, %v1528
        %v1679 = vmul.bf16 %v1466, %v1529
        %v1680 = vmul.bf16 %v1471, %v1531
        %v1681 = vmul.bf16 %v1472, %v1533
        %v1686 = vrot.slane %v1678, 4
        %v1687 = vrot.slane %v1680, 4
        %v1688 = vsel %vm1527, %v1686, %v1687
        %v1689 = vrot.slane %v1679, 4
        %v1690 = vrot.slane %v1681, 4
        %v1691 = vsel %vm1527, %v1689, %v1690
        %v1696 = vunpack.c.l.bf16 %v1688
        %v1697 = vunpack.c.l.bf16 %v1691
        %v1698 = vunpack.c.h.bf16 %v1688
        %v1699 = vunpack.c.h.bf16 %v1691
        %v1700 = vunpack.c.l.bf16 %v1687
        %v1701 = vunpack.c.l.bf16 %v1690
        %v1702 = vadd.f32 %v1696, %v1698
        %v1703 = vadd.f32 %v1702, %v1700
        %v1704 = vrot.slane %v1703, 4
        %v1705 = vadd.f32 %v1703, %v1704
        %v1706 = vrot.slane %v1705, 2
        %v1707 = vadd.f32 %v1705, %v1706
        %v1708 = vrot.slane %v1707, 1
        %v1709 = vadd.f32 %v1707, %v1708
        %v1710 = vadd.f32 %v1697, %v1699
        %v1711 = vadd.f32 %v1710, %v1701
        %v1712 = vrot.slane %v1711, 4
        %v1713 = vadd.f32 %v1711, %v1712
        %v1714 = vrot.slane %v1713, 2
        %v1715 = vadd.f32 %v1713, %v1714
        %v1716 = vrot.slane %v1715, 1
        %v1717 = vadd.f32 %v1715, %v1716
        %v1718 = vpack.c.bf16 %v1709, %v1709
        %v1719 = vpack.c.bf16 %v1717, %v1717
        %v1720 = vmul.bf16 %v1477, %v557
        %v1721 = vmul.bf16 %v1478, %v558
        %v1722 = vmul.bf16 %v1483, %v559
        %v1723 = vmul.bf16 %v1484, %v560
        %v1724 = vunpack.c.l.bf16 %v1720
        %v1725 = vunpack.c.l.bf16 %v1721
        %v1726 = vunpack.c.h.bf16 %v1720
        %v1727 = vunpack.c.h.bf16 %v1721
        %v1728 = vunpack.c.l.bf16 %v1722
        %v1729 = vunpack.c.l.bf16 %v1723
        %v1730 = vadd.f32 %v1724, %v1726
        %v1731 = vadd.f32 %v1730, %v1728
        %v1732 = vrot.slane %v1731, 4
        %v1733 = vadd.f32 %v1731, %v1732
        %v1734 = vrot.slane %v1733, 2
        %v1735 = vadd.f32 %v1733, %v1734
        %v1736 = vrot.slane %v1735, 1
        %v1737 = vadd.f32 %v1735, %v1736
        %v1738 = vadd.f32 %v1725, %v1727
        %v1739 = vadd.f32 %v1738, %v1729
        %v1740 = vrot.slane %v1739, 4
        %v1741 = vadd.f32 %v1739, %v1740
        %v1742 = vrot.slane %v1741, 2
        %v1743 = vadd.f32 %v1741, %v1742
        %v1744 = vrot.slane %v1743, 1
        %v1745 = vadd.f32 %v1743, %v1744
        %v1746 = vpack.c.bf16 %v1737, %v1737
        %v1747 = vpack.c.bf16 %v1745, %v1745
        %v1748 = vmul.bf16 %v1483, %v1528
        %v1749 = vmul.bf16 %v1484, %v1529
        %v1750 = vmul.bf16 %v1489, %v1531
        %v1751 = vmul.bf16 %v1490, %v1533
        %v1756 = vrot.slane %v1748, 4
        %v1757 = vrot.slane %v1750, 4
        %v1758 = vsel %vm1527, %v1756, %v1757
        %v1759 = vrot.slane %v1749, 4
        %v1760 = vrot.slane %v1751, 4
        %v1761 = vsel %vm1527, %v1759, %v1760
        %v1766 = vunpack.c.l.bf16 %v1758
        %v1767 = vunpack.c.l.bf16 %v1761
        %v1768 = vunpack.c.h.bf16 %v1758
        %v1769 = vunpack.c.h.bf16 %v1761
        %v1770 = vunpack.c.l.bf16 %v1757
        %v1771 = vunpack.c.l.bf16 %v1760
        %v1772 = vadd.f32 %v1766, %v1768
        %v1773 = vadd.f32 %v1772, %v1770
        %v1774 = vrot.slane %v1773, 4
        %v1775 = vadd.f32 %v1773, %v1774
        %v1776 = vrot.slane %v1775, 2
        %v1777 = vadd.f32 %v1775, %v1776
        %v1778 = vrot.slane %v1777, 1
        %v1779 = vadd.f32 %v1777, %v1778
        %v1780 = vadd.f32 %v1767, %v1769
        %v1781 = vadd.f32 %v1780, %v1771
        %v1782 = vrot.slane %v1781, 4
        %v1783 = vadd.f32 %v1781, %v1782
        %v1784 = vrot.slane %v1783, 2
        %v1785 = vadd.f32 %v1783, %v1784
        %v1786 = vrot.slane %v1785, 1
        %v1787 = vadd.f32 %v1785, %v1786
        %v1788 = vpack.c.bf16 %v1779, %v1779
        %v1789 = vpack.c.bf16 %v1787, %v1787
        %vm1790 = vcmask 1040384
        %vm1791 = vsmask.f32 256
        %vm1792 = vmand %vm1790, %vm1791
        %v1793 = vsel %vm1792, %v1521, %v1578
        %v1794 = vsel %vm1792, %v1522, %v1579
        %v1797 = vsel %vm394, %v1793, %v1606
        %v1801 = vsel %vm394, %v1794, %v1607
        %vm1803 = vcmask 1041408
        %vm1804 = vsmask.f32 1280
        %vm1805 = vmand %vm1803, %vm1804
        %v1806 = vsel %vm1805, %v1797, %v1648
        %v1807 = vsel %vm1805, %v1801, %v1649
        %vm1808 = vcmask 1041408
        %v1811 = vsel %vm1808, %v1806, %v1676
        %v1815 = vsel %vm1808, %v1807, %v1677
        %vm1817 = vcmask 1042432
        %vm1818 = vsmask.f32 2304
        %vm1819 = vmand %vm1817, %vm1818
        %v1820 = vsel %vm1819, %v1811, %v1718
        %v1821 = vsel %vm1819, %v1815, %v1719
        %vm1822 = vcmask 1042432
        %v1825 = vsel %vm1822, %v1820, %v1746
        %v1829 = vsel %vm1822, %v1821, %v1747
        %vm1831 = vsmask.f32 3328
        %vm1832 = vmand %vm1527, %vm1831
        %v1833 = vsel %vm1832, %v1825, %v1788
        %v1834 = vsel %vm1832, %v1829, %v1789
        %v1837 = vunpack.c.l.b16 %v1833
        %v1838 = vunpack.c.l.b16 %v1834
        %v1839 = vpack.c.b16 %v1838, %v1837
        %1841 = vst [vmem:[#allocation2] sm:$0xff] %v1839
        %v1842 = vmul.bf16 %v1425, %v689
        %v1843 = vmul.bf16 %v1426, %v690
        %v1844 = vmul.bf16 %v1431, %v691
        %v1845 = vmul.bf16 %v1432, %v692
        %v1846 = vunpack.c.l.bf16 %v1842
        %v1847 = vunpack.c.l.bf16 %v1843
        %v1848 = vunpack.c.h.bf16 %v1842
        %v1849 = vunpack.c.h.bf16 %v1843
        %v1850 = vunpack.c.l.bf16 %v1844
        %v1851 = vunpack.c.l.bf16 %v1845
        %v1852 = vadd.f32 %v1846, %v1848
        %v1853 = vadd.f32 %v1852, %v1850
        %v1854 = vrot.slane %v1853, 4
        %v1855 = vadd.f32 %v1853, %v1854
        %v1856 = vrot.slane %v1855, 2
        %v1857 = vadd.f32 %v1855, %v1856
        %v1858 = vrot.slane %v1857, 1
        %v1859 = vadd.f32 %v1857, %v1858
        %v1860 = vadd.f32 %v1847, %v1849
        %v1861 = vadd.f32 %v1860, %v1851
        %v1862 = vrot.slane %v1861, 4
        %v1863 = vadd.f32 %v1861, %v1862
        %v1864 = vrot.slane %v1863, 2
        %v1865 = vadd.f32 %v1863, %v1864
        %v1866 = vrot.slane %v1865, 1
        %v1867 = vadd.f32 %v1865, %v1866
        %v1868 = vpack.c.bf16 %v1859, %v1859
        %v1869 = vpack.c.bf16 %v1867, %v1867
        %v1874 = vrot.slane %v689, 4
        %v1875 = vrot.slane %v690, 4
        %v1876 = vrot.slane %v691, 4
        %v1877 = vsel %vm1527, %v1874, %v1876
        %v1878 = vrot.slane %v692, 4
        %v1879 = vsel %vm1527, %v1875, %v1878
        %v1884 = vmul.bf16 %v1431, %v1874
        %v1885 = vmul.bf16 %v1432, %v1875
        %v1886 = vmul.bf16 %v1437, %v1877
        %v1887 = vmul.bf16 %v1438, %v1879
        %v1892 = vrot.slane %v1884, 4
        %v1893 = vrot.slane %v1886, 4
        %v1894 = vsel %vm1527, %v1892, %v1893
        %v1895 = vrot.slane %v1885, 4
        %v1896 = vrot.slane %v1887, 4
        %v1897 = vsel %vm1527, %v1895, %v1896
        %v1902 = vunpack.c.l.bf16 %v1894
        %v1903 = vunpack.c.l.bf16 %v1897
        %v1904 = vunpack.c.h.bf16 %v1894
        %v1905 = vunpack.c.h.bf16 %v1897
        %v1906 = vunpack.c.l.bf16 %v1893
        %v1907 = vunpack.c.l.bf16 %v1896
        %v1908 = vadd.f32 %v1902, %v1904
        %v1909 = vadd.f32 %v1908, %v1906
        %v1910 = vrot.slane %v1909, 4
        %v1911 = vadd.f32 %v1909, %v1910
        %v1912 = vrot.slane %v1911, 2
        %v1913 = vadd.f32 %v1911, %v1912
        %v1914 = vrot.slane %v1913, 1
        %v1915 = vadd.f32 %v1913, %v1914
        %v1916 = vadd.f32 %v1903, %v1905
        %v1917 = vadd.f32 %v1916, %v1907
        %v1918 = vrot.slane %v1917, 4
        %v1919 = vadd.f32 %v1917, %v1918
        %v1920 = vrot.slane %v1919, 2
        %v1921 = vadd.f32 %v1919, %v1920
        %v1922 = vrot.slane %v1921, 1
        %v1923 = vadd.f32 %v1921, %v1922
        %v1924 = vpack.c.bf16 %v1915, %v1915
        %v1925 = vpack.c.bf16 %v1923, %v1923
        %v1926 = vmul.bf16 %v1443, %v689
        %v1927 = vmul.bf16 %v1444, %v690
        %v1928 = vmul.bf16 %v1449, %v691
        %v1929 = vmul.bf16 %v1450, %v692
        %v1930 = vunpack.c.l.bf16 %v1926
        %v1931 = vunpack.c.l.bf16 %v1927
        %v1932 = vunpack.c.h.bf16 %v1926
        %v1933 = vunpack.c.h.bf16 %v1927
        %v1934 = vunpack.c.l.bf16 %v1928
        %v1935 = vunpack.c.l.bf16 %v1929
        %v1936 = vadd.f32 %v1930, %v1932
        %v1937 = vadd.f32 %v1936, %v1934
        %v1938 = vrot.slane %v1937, 4
        %v1939 = vadd.f32 %v1937, %v1938
        %v1940 = vrot.slane %v1939, 2
        %v1941 = vadd.f32 %v1939, %v1940
        %v1942 = vrot.slane %v1941, 1
        %v1943 = vadd.f32 %v1941, %v1942
        %v1944 = vadd.f32 %v1931, %v1933
        %v1945 = vadd.f32 %v1944, %v1935
        %v1946 = vrot.slane %v1945, 4
        %v1947 = vadd.f32 %v1945, %v1946
        %v1948 = vrot.slane %v1947, 2
        %v1949 = vadd.f32 %v1947, %v1948
        %v1950 = vrot.slane %v1949, 1
        %v1951 = vadd.f32 %v1949, %v1950
        %v1952 = vpack.c.bf16 %v1943, %v1943
        %v1953 = vpack.c.bf16 %v1951, %v1951
        %v1954 = vmul.bf16 %v1449, %v1874
        %v1955 = vmul.bf16 %v1450, %v1875
        %v1956 = vmul.bf16 %v1455, %v1877
        %v1957 = vmul.bf16 %v1456, %v1879
        %v1962 = vrot.slane %v1954, 4
        %v1963 = vrot.slane %v1956, 4
        %v1964 = vsel %vm1527, %v1962, %v1963
        %v1965 = vrot.slane %v1955, 4
        %v1966 = vrot.slane %v1957, 4
        %v1967 = vsel %vm1527, %v1965, %v1966
        %v1972 = vunpack.c.l.bf16 %v1964
        %v1973 = vunpack.c.l.bf16 %v1967
        %v1974 = vunpack.c.h.bf16 %v1964
        %v1975 = vunpack.c.h.bf16 %v1967
        %v1976 = vunpack.c.l.bf16 %v1963
        %v1977 = vunpack.c.l.bf16 %v1966
        %v1978 = vadd.f32 %v1972, %v1974
        %v1979 = vadd.f32 %v1978, %v1976
        %v1980 = vrot.slane %v1979, 4
        %v1981 = vadd.f32 %v1979, %v1980
        %v1982 = vrot.slane %v1981, 2
        %v1983 = vadd.f32 %v1981, %v1982
        %v1984 = vrot.slane %v1983, 1
        %v1985 = vadd.f32 %v1983, %v1984
        %v1986 = vadd.f32 %v1973, %v1975
        %v1987 = vadd.f32 %v1986, %v1977
        %v1988 = vrot.slane %v1987, 4
        %v1989 = vadd.f32 %v1987, %v1988
        %v1990 = vrot.slane %v1989, 2
        %v1991 = vadd.f32 %v1989, %v1990
        %v1992 = vrot.slane %v1991, 1
        %v1993 = vadd.f32 %v1991, %v1992
        %v1994 = vpack.c.bf16 %v1985, %v1985
        %v1995 = vpack.c.bf16 %v1993, %v1993
        %v1996 = vmul.bf16 %v1461, %v689
        %v1997 = vmul.bf16 %v1462, %v690
        %v1998 = vmul.bf16 %v1467, %v691
        %v1999 = vmul.bf16 %v1468, %v692
        %v2000 = vunpack.c.l.bf16 %v1996
        %v2001 = vunpack.c.l.bf16 %v1997
        %v2002 = vunpack.c.h.bf16 %v1996
        %v2003 = vunpack.c.h.bf16 %v1997
        %v2004 = vunpack.c.l.bf16 %v1998
        %v2005 = vunpack.c.l.bf16 %v1999
        %v2006 = vadd.f32 %v2000, %v2002
        %v2007 = vadd.f32 %v2006, %v2004
        %v2008 = vrot.slane %v2007, 4
        %v2009 = vadd.f32 %v2007, %v2008
        %v2010 = vrot.slane %v2009, 2
        %v2011 = vadd.f32 %v2009, %v2010
        %v2012 = vrot.slane %v2011, 1
        %v2013 = vadd.f32 %v2011, %v2012
        %v2014 = vadd.f32 %v2001, %v2003
        %v2015 = vadd.f32 %v2014, %v2005
        %v2016 = vrot.slane %v2015, 4
        %v2017 = vadd.f32 %v2015, %v2016
        %v2018 = vrot.slane %v2017, 2
        %v2019 = vadd.f32 %v2017, %v2018
        %v2020 = vrot.slane %v2019, 1
        %v2021 = vadd.f32 %v2019, %v2020
        %v2022 = vpack.c.bf16 %v2013, %v2013
        %v2023 = vpack.c.bf16 %v2021, %v2021
        %v2024 = vmul.bf16 %v1467, %v1874
        %v2025 = vmul.bf16 %v1468, %v1875
        %v2026 = vmul.bf16 %v1473, %v1877
        %v2027 = vmul.bf16 %v1474, %v1879
        %v2032 = vrot.slane %v2024, 4
        %v2033 = vrot.slane %v2026, 4
        %v2034 = vsel %vm1527, %v2032, %v2033
        %v2035 = vrot.slane %v2025, 4
        %v2036 = vrot.slane %v2027, 4
        %v2037 = vsel %vm1527, %v2035, %v2036
        %v2042 = vunpack.c.l.bf16 %v2034
        %v2043 = vunpack.c.l.bf16 %v2037
        %v2044 = vunpack.c.h.bf16 %v2034
        %v2045 = vunpack.c.h.bf16 %v2037
        %v2046 = vunpack.c.l.bf16 %v2033
        %v2047 = vunpack.c.l.bf16 %v2036
        %v2048 = vadd.f32 %v2042, %v2044
        %v2049 = vadd.f32 %v2048, %v2046
        %v2050 = vrot.slane %v2049, 4
        %v2051 = vadd.f32 %v2049, %v2050
        %v2052 = vrot.slane %v2051, 2
        %v2053 = vadd.f32 %v2051, %v2052
        %v2054 = vrot.slane %v2053, 1
        %v2055 = vadd.f32 %v2053, %v2054
        %v2056 = vadd.f32 %v2043, %v2045
        %v2057 = vadd.f32 %v2056, %v2047
        %v2058 = vrot.slane %v2057, 4
        %v2059 = vadd.f32 %v2057, %v2058
        %v2060 = vrot.slane %v2059, 2
        %v2061 = vadd.f32 %v2059, %v2060
        %v2062 = vrot.slane %v2061, 1
        %v2063 = vadd.f32 %v2061, %v2062
        %v2064 = vpack.c.bf16 %v2055, %v2055
        %v2065 = vpack.c.bf16 %v2063, %v2063
        %v2066 = vmul.bf16 %v1479, %v689
        %v2067 = vmul.bf16 %v1480, %v690
        %v2068 = vmul.bf16 %v1485, %v691
        %v2069 = vmul.bf16 %v1486, %v692
        %v2070 = vunpack.c.l.bf16 %v2066
        %v2071 = vunpack.c.l.bf16 %v2067
        %v2072 = vunpack.c.h.bf16 %v2066
        %v2073 = vunpack.c.h.bf16 %v2067
        %v2074 = vunpack.c.l.bf16 %v2068
        %v2075 = vunpack.c.l.bf16 %v2069
        %v2076 = vadd.f32 %v2070, %v2072
        %v2077 = vadd.f32 %v2076, %v2074
        %v2078 = vrot.slane %v2077, 4
        %v2079 = vadd.f32 %v2077, %v2078
        %v2080 = vrot.slane %v2079, 2
        %v2081 = vadd.f32 %v2079, %v2080
        %v2082 = vrot.slane %v2081, 1
        %v2083 = vadd.f32 %v2081, %v2082
        %v2084 = vadd.f32 %v2071, %v2073
        %v2085 = vadd.f32 %v2084, %v2075
        %v2086 = vrot.slane %v2085, 4
        %v2087 = vadd.f32 %v2085, %v2086
        %v2088 = vrot.slane %v2087, 2
        %v2089 = vadd.f32 %v2087, %v2088
        %v2090 = vrot.slane %v2089, 1
        %v2091 = vadd.f32 %v2089, %v2090
        %v2092 = vpack.c.bf16 %v2083, %v2083
        %v2093 = vpack.c.bf16 %v2091, %v2091
        %v2094 = vmul.bf16 %v1485, %v1874
        %v2095 = vmul.bf16 %v1486, %v1875
        %v2096 = vmul.bf16 %v1491, %v1877
        %v2097 = vmul.bf16 %v1492, %v1879
        %v2102 = vrot.slane %v2094, 4
        %v2103 = vrot.slane %v2096, 4
        %v2104 = vsel %vm1527, %v2102, %v2103
        %v2105 = vrot.slane %v2095, 4
        %v2106 = vrot.slane %v2097, 4
        %v2107 = vsel %vm1527, %v2105, %v2106
        %v2112 = vunpack.c.l.bf16 %v2104
        %v2113 = vunpack.c.l.bf16 %v2107
        %v2114 = vunpack.c.h.bf16 %v2104
        %v2115 = vunpack.c.h.bf16 %v2107
        %v2116 = vunpack.c.l.bf16 %v2103
        %v2117 = vunpack.c.l.bf16 %v2106
        %v2118 = vadd.f32 %v2112, %v2114
        %v2119 = vadd.f32 %v2118, %v2116
        %v2120 = vrot.slane %v2119, 4
        %v2121 = vadd.f32 %v2119, %v2120
        %v2122 = vrot.slane %v2121, 2
        %v2123 = vadd.f32 %v2121, %v2122
        %v2124 = vrot.slane %v2123, 1
        %v2125 = vadd.f32 %v2123, %v2124
        %v2126 = vadd.f32 %v2113, %v2115
        %v2127 = vadd.f32 %v2126, %v2117
        %v2128 = vrot.slane %v2127, 4
        %v2129 = vadd.f32 %v2127, %v2128
        %v2130 = vrot.slane %v2129, 2
        %v2131 = vadd.f32 %v2129, %v2130
        %v2132 = vrot.slane %v2131, 1
        %v2133 = vadd.f32 %v2131, %v2132
        %v2134 = vpack.c.bf16 %v2125, %v2125
        %v2135 = vpack.c.bf16 %v2133, %v2133
        %v2136 = vsel %vm1792, %v1868, %v1924
        %v2137 = vsel %vm1792, %v1869, %v1925
        %v2140 = vsel %vm394, %v2136, %v1952
        %v2144 = vsel %vm394, %v2137, %v1953
        %v2146 = vsel %vm1805, %v2140, %v1994
        %v2147 = vsel %vm1805, %v2144, %v1995
        %v2150 = vsel %vm1808, %v2146, %v2022
        %v2154 = vsel %vm1808, %v2147, %v2023
        %v2156 = vsel %vm1819, %v2150, %v2064
        %v2157 = vsel %vm1819, %v2154, %v2065
        %v2160 = vsel %vm1822, %v2156, %v2092
        %v2164 = vsel %vm1822, %v2157, %v2093
        %v2166 = vsel %vm1832, %v2160, %v2134
        %v2167 = vsel %vm1832, %v2164, %v2135
        %v2170 = vunpack.c.l.b16 %v2166
        %v2171 = vunpack.c.l.b16 %v2167
        %v2172 = vpack.c.b16 %v2171, %v2170
        %2174 = vst [vmem:[#allocation2 + $0x8] sm:$0xff] %v2172
        %v2175 = vmul.bf16 %v1427, %v821
        %v2176 = vmul.bf16 %v1428, %v822
        %v2177 = vmul.bf16 %v1433, %v823
        %v2178 = vmul.bf16 %v1434, %v824
        %v2179 = vunpack.c.l.bf16 %v2175
        %v2180 = vunpack.c.l.bf16 %v2176
        %v2181 = vunpack.c.h.bf16 %v2175
        %v2182 = vunpack.c.h.bf16 %v2176
        %v2183 = vunpack.c.l.bf16 %v2177
        %v2184 = vunpack.c.l.bf16 %v2178
        %v2185 = vadd.f32 %v2179, %v2181
        %v2186 = vadd.f32 %v2185, %v2183
        %v2187 = vrot.slane %v2186, 4
        %v2188 = vadd.f32 %v2186, %v2187
        %v2189 = vrot.slane %v2188, 2
        %v2190 = vadd.f32 %v2188, %v2189
        %v2191 = vrot.slane %v2190, 1
        %v2192 = vadd.f32 %v2190, %v2191
        %v2193 = vadd.f32 %v2180, %v2182
        %v2194 = vadd.f32 %v2193, %v2184
        %v2195 = vrot.slane %v2194, 4
        %v2196 = vadd.f32 %v2194, %v2195
        %v2197 = vrot.slane %v2196, 2
        %v2198 = vadd.f32 %v2196, %v2197
        %v2199 = vrot.slane %v2198, 1
        %v2200 = vadd.f32 %v2198, %v2199
        %v2201 = vpack.c.bf16 %v2192, %v2192
        %v2202 = vpack.c.bf16 %v2200, %v2200
        %v2207 = vrot.slane %v821, 4
        %v2208 = vrot.slane %v822, 4
        %v2209 = vrot.slane %v823, 4
        %v2210 = vsel %vm1527, %v2207, %v2209
        %v2211 = vrot.slane %v824, 4
        %v2212 = vsel %vm1527, %v2208, %v2211
        %v2217 = vmul.bf16 %v1433, %v2207
        %v2218 = vmul.bf16 %v1434, %v2208
        %v2219 = vmul.bf16 %v1439, %v2210
        %v2220 = vmul.bf16 %v1440, %v2212
        %v2225 = vrot.slane %v2217, 4
        %v2226 = vrot.slane %v2219, 4
        %v2227 = vsel %vm1527, %v2225, %v2226
        %v2228 = vrot.slane %v2218, 4
        %v2229 = vrot.slane %v2220, 4
        %v2230 = vsel %vm1527, %v2228, %v2229
        %v2235 = vunpack.c.l.bf16 %v2227
        %v2236 = vunpack.c.l.bf16 %v2230
        %v2237 = vunpack.c.h.bf16 %v2227
        %v2238 = vunpack.c.h.bf16 %v2230
        %v2239 = vunpack.c.l.bf16 %v2226
        %v2240 = vunpack.c.l.bf16 %v2229
        %v2241 = vadd.f32 %v2235, %v2237
        %v2242 = vadd.f32 %v2241, %v2239
        %v2243 = vrot.slane %v2242, 4
        %v2244 = vadd.f32 %v2242, %v2243
        %v2245 = vrot.slane %v2244, 2
        %v2246 = vadd.f32 %v2244, %v2245
        %v2247 = vrot.slane %v2246, 1
        %v2248 = vadd.f32 %v2246, %v2247
        %v2249 = vadd.f32 %v2236, %v2238
        %v2250 = vadd.f32 %v2249, %v2240
        %v2251 = vrot.slane %v2250, 4
        %v2252 = vadd.f32 %v2250, %v2251
        %v2253 = vrot.slane %v2252, 2
        %v2254 = vadd.f32 %v2252, %v2253
        %v2255 = vrot.slane %v2254, 1
        %v2256 = vadd.f32 %v2254, %v2255
        %v2257 = vpack.c.bf16 %v2248, %v2248
        %v2258 = vpack.c.bf16 %v2256, %v2256
        %v2259 = vmul.bf16 %v1445, %v821
        %v2260 = vmul.bf16 %v1446, %v822
        %v2261 = vmul.bf16 %v1451, %v823
        %v2262 = vmul.bf16 %v1452, %v824
        %v2263 = vunpack.c.l.bf16 %v2259
        %v2264 = vunpack.c.l.bf16 %v2260
        %v2265 = vunpack.c.h.bf16 %v2259
        %v2266 = vunpack.c.h.bf16 %v2260
        %v2267 = vunpack.c.l.bf16 %v2261
        %v2268 = vunpack.c.l.bf16 %v2262
        %v2269 = vadd.f32 %v2263, %v2265
        %v2270 = vadd.f32 %v2269, %v2267
        %v2271 = vrot.slane %v2270, 4
        %v2272 = vadd.f32 %v2270, %v2271
        %v2273 = vrot.slane %v2272, 2
        %v2274 = vadd.f32 %v2272, %v2273
        %v2275 = vrot.slane %v2274, 1
        %v2276 = vadd.f32 %v2274, %v2275
        %v2277 = vadd.f32 %v2264, %v2266
        %v2278 = vadd.f32 %v2277, %v2268
        %v2279 = vrot.slane %v2278, 4
        %v2280 = vadd.f32 %v2278, %v2279
        %v2281 = vrot.slane %v2280, 2
        %v2282 = vadd.f32 %v2280, %v2281
        %v2283 = vrot.slane %v2282, 1
        %v2284 = vadd.f32 %v2282, %v2283
        %v2285 = vpack.c.bf16 %v2276, %v2276
        %v2286 = vpack.c.bf16 %v2284, %v2284
        %v2287 = vmul.bf16 %v1451, %v2207
        %v2288 = vmul.bf16 %v1452, %v2208
        %v2289 = vmul.bf16 %v1457, %v2210
        %v2290 = vmul.bf16 %v1458, %v2212
        %v2295 = vrot.slane %v2287, 4
        %v2296 = vrot.slane %v2289, 4
        %v2297 = vsel %vm1527, %v2295, %v2296
        %v2298 = vrot.slane %v2288, 4
        %v2299 = vrot.slane %v2290, 4
        %v2300 = vsel %vm1527, %v2298, %v2299
        %v2305 = vunpack.c.l.bf16 %v2297
        %v2306 = vunpack.c.l.bf16 %v2300
        %v2307 = vunpack.c.h.bf16 %v2297
        %v2308 = vunpack.c.h.bf16 %v2300
        %v2309 = vunpack.c.l.bf16 %v2296
        %v2310 = vunpack.c.l.bf16 %v2299
        %v2311 = vadd.f32 %v2305, %v2307
        %v2312 = vadd.f32 %v2311, %v2309
        %v2313 = vrot.slane %v2312, 4
        %v2314 = vadd.f32 %v2312, %v2313
        %v2315 = vrot.slane %v2314, 2
        %v2316 = vadd.f32 %v2314, %v2315
        %v2317 = vrot.slane %v2316, 1
        %v2318 = vadd.f32 %v2316, %v2317
        %v2319 = vadd.f32 %v2306, %v2308
        %v2320 = vadd.f32 %v2319, %v2310
        %v2321 = vrot.slane %v2320, 4
        %v2322 = vadd.f32 %v2320, %v2321
        %v2323 = vrot.slane %v2322, 2
        %v2324 = vadd.f32 %v2322, %v2323
        %v2325 = vrot.slane %v2324, 1
        %v2326 = vadd.f32 %v2324, %v2325
        %v2327 = vpack.c.bf16 %v2318, %v2318
        %v2328 = vpack.c.bf16 %v2326, %v2326
        %v2329 = vmul.bf16 %v1463, %v821
        %v2330 = vmul.bf16 %v1464, %v822
        %v2331 = vmul.bf16 %v1469, %v823
        %v2332 = vmul.bf16 %v1470, %v824
        %v2333 = vunpack.c.l.bf16 %v2329
        %v2334 = vunpack.c.l.bf16 %v2330
        %v2335 = vunpack.c.h.bf16 %v2329
        %v2336 = vunpack.c.h.bf16 %v2330
        %v2337 = vunpack.c.l.bf16 %v2331
        %v2338 = vunpack.c.l.bf16 %v2332
        %v2339 = vadd.f32 %v2333, %v2335
        %v2340 = vadd.f32 %v2339, %v2337
        %v2341 = vrot.slane %v2340, 4
        %v2342 = vadd.f32 %v2340, %v2341
        %v2343 = vrot.slane %v2342, 2
        %v2344 = vadd.f32 %v2342, %v2343
        %v2345 = vrot.slane %v2344, 1
        %v2346 = vadd.f32 %v2344, %v2345
        %v2347 = vadd.f32 %v2334, %v2336
        %v2348 = vadd.f32 %v2347, %v2338
        %v2349 = vrot.slane %v2348, 4
        %v2350 = vadd.f32 %v2348, %v2349
        %v2351 = vrot.slane %v2350, 2
        %v2352 = vadd.f32 %v2350, %v2351
        %v2353 = vrot.slane %v2352, 1
        %v2354 = vadd.f32 %v2352, %v2353
        %v2355 = vpack.c.bf16 %v2346, %v2346
        %v2356 = vpack.c.bf16 %v2354, %v2354
        %v2357 = vmul.bf16 %v1469, %v2207
        %v2358 = vmul.bf16 %v1470, %v2208
        %v2359 = vmul.bf16 %v1475, %v2210
        %v2360 = vmul.bf16 %v1476, %v2212
        %v2365 = vrot.slane %v2357, 4
        %v2366 = vrot.slane %v2359, 4
        %v2367 = vsel %vm1527, %v2365, %v2366
        %v2368 = vrot.slane %v2358, 4
        %v2369 = vrot.slane %v2360, 4
        %v2370 = vsel %vm1527, %v2368, %v2369
        %v2375 = vunpack.c.l.bf16 %v2367
        %v2376 = vunpack.c.l.bf16 %v2370
        %v2377 = vunpack.c.h.bf16 %v2367
        %v2378 = vunpack.c.h.bf16 %v2370
        %v2379 = vunpack.c.l.bf16 %v2366
        %v2380 = vunpack.c.l.bf16 %v2369
        %v2381 = vadd.f32 %v2375, %v2377
        %v2382 = vadd.f32 %v2381, %v2379
        %v2383 = vrot.slane %v2382, 4
        %v2384 = vadd.f32 %v2382, %v2383
        %v2385 = vrot.slane %v2384, 2
        %v2386 = vadd.f32 %v2384, %v2385
        %v2387 = vrot.slane %v2386, 1
        %v2388 = vadd.f32 %v2386, %v2387
        %v2389 = vadd.f32 %v2376, %v2378
        %v2390 = vadd.f32 %v2389, %v2380
        %v2391 = vrot.slane %v2390, 4
        %v2392 = vadd.f32 %v2390, %v2391
        %v2393 = vrot.slane %v2392, 2
        %v2394 = vadd.f32 %v2392, %v2393
        %v2395 = vrot.slane %v2394, 1
        %v2396 = vadd.f32 %v2394, %v2395
        %v2397 = vpack.c.bf16 %v2388, %v2388
        %v2398 = vpack.c.bf16 %v2396, %v2396
        %v2399 = vmul.bf16 %v1481, %v821
        %v2400 = vmul.bf16 %v1482, %v822
        %v2401 = vmul.bf16 %v1487, %v823
        %v2402 = vmul.bf16 %v1488, %v824
        %v2403 = vunpack.c.l.bf16 %v2399
        %v2404 = vunpack.c.l.bf16 %v2400
        %v2405 = vunpack.c.h.bf16 %v2399
        %v2406 = vunpack.c.h.bf16 %v2400
        %v2407 = vunpack.c.l.bf16 %v2401
        %v2408 = vunpack.c.l.bf16 %v2402
        %v2409 = vadd.f32 %v2403, %v2405
        %v2410 = vadd.f32 %v2409, %v2407
        %v2411 = vrot.slane %v2410, 4
        %v2412 = vadd.f32 %v2410, %v2411
        %v2413 = vrot.slane %v2412, 2
        %v2414 = vadd.f32 %v2412, %v2413
        %v2415 = vrot.slane %v2414, 1
        %v2416 = vadd.f32 %v2414, %v2415
        %v2417 = vadd.f32 %v2404, %v2406
        %v2418 = vadd.f32 %v2417, %v2408
        %v2419 = vrot.slane %v2418, 4
        %v2420 = vadd.f32 %v2418, %v2419
        %v2421 = vrot.slane %v2420, 2
        %v2422 = vadd.f32 %v2420, %v2421
        %v2423 = vrot.slane %v2422, 1
        %v2424 = vadd.f32 %v2422, %v2423
        %v2425 = vpack.c.bf16 %v2416, %v2416
        %v2426 = vpack.c.bf16 %v2424, %v2424
        %v2427 = vmul.bf16 %v1487, %v2207
        %v2428 = vmul.bf16 %v1488, %v2208
        %v2429 = vmul.bf16 %v1493, %v2210
        %v2430 = vmul.bf16 %v1494, %v2212
        %v2435 = vrot.slane %v2427, 4
        %v2436 = vrot.slane %v2429, 4
        %v2437 = vsel %vm1527, %v2435, %v2436
        %v2438 = vrot.slane %v2428, 4
        %v2439 = vrot.slane %v2430, 4
        %v2440 = vsel %vm1527, %v2438, %v2439
        %v2445 = vunpack.c.l.bf16 %v2437
        %v2446 = vunpack.c.l.bf16 %v2440
        %v2447 = vunpack.c.h.bf16 %v2437
        %v2448 = vunpack.c.h.bf16 %v2440
        %v2449 = vunpack.c.l.bf16 %v2436
        %v2450 = vunpack.c.l.bf16 %v2439
        %v2451 = vadd.f32 %v2445, %v2447
        %v2452 = vadd.f32 %v2451, %v2449
        %v2453 = vrot.slane %v2452, 4
        %v2454 = vadd.f32 %v2452, %v2453
        %v2455 = vrot.slane %v2454, 2
        %v2456 = vadd.f32 %v2454, %v2455
        %v2457 = vrot.slane %v2456, 1
        %v2458 = vadd.f32 %v2456, %v2457
        %v2459 = vadd.f32 %v2446, %v2448
        %v2460 = vadd.f32 %v2459, %v2450
        %v2461 = vrot.slane %v2460, 4
        %v2462 = vadd.f32 %v2460, %v2461
        %v2463 = vrot.slane %v2462, 2
        %v2464 = vadd.f32 %v2462, %v2463
        %v2465 = vrot.slane %v2464, 1
        %v2466 = vadd.f32 %v2464, %v2465
        %v2467 = vpack.c.bf16 %v2458, %v2458
        %v2468 = vpack.c.bf16 %v2466, %v2466
        %v2469 = vsel %vm1792, %v2201, %v2257
        %v2470 = vsel %vm1792, %v2202, %v2258
        %v2473 = vsel %vm394, %v2469, %v2285
        %v2477 = vsel %vm394, %v2470, %v2286
        %v2479 = vsel %vm1805, %v2473, %v2327
        %v2480 = vsel %vm1805, %v2477, %v2328
        %v2483 = vsel %vm1808, %v2479, %v2355
        %v2487 = vsel %vm1808, %v2480, %v2356
        %v2489 = vsel %vm1819, %v2483, %v2397
        %v2490 = vsel %vm1819, %v2487, %v2398
        %v2493 = vsel %vm1822, %v2489, %v2425
        %v2497 = vsel %vm1822, %v2490, %v2426
        %v2499 = vsel %vm1832, %v2493, %v2467
        %v2500 = vsel %vm1832, %v2497, %v2468
        %v2503 = vunpack.c.l.b16 %v2499
        %v2504 = vunpack.c.l.b16 %v2500
        %v2505 = vpack.c.b16 %v2504, %v2503
        %2507 = vst [vmem:[#allocation2 + $0x10] sm:$0xff] %v2505
        %v2508 = vlaneseq
        %v2509 = vshrl.u32 %v2508, 7
        %v2510 = vsub.s32 4, %v2509
        %v2511 = vrot.slane %v415, %v2510
        %v2512 = vlaneseq
        %v2513 = vshrl.u32 %v2512, 7
        %v2514 = vsub.s32 4, %v2513
        %v2515 = vrot.slane %v416, %v2514
        %vm2516 = vcmp.eq.s32.totalorder %v426, %v2511
        %vm2517 = vcmp.eq.s32.totalorder %v426, %v2515
        %vm2518 = vcmp.eq.s32.totalorder %v427, %v2511
        %vm2519 = vcmp.eq.s32.totalorder %v427, %v2515
        %vm2520 = vcmp.eq.s32.totalorder %v428, %v2511
        %vm2521 = vcmp.eq.s32.totalorder %v428, %v2515
        %v2522 = vlaneseq
        %v2523 = vshrl.u32 %v2522, 7
        %v2524 = vsub.s32 4, %v2523
        %v2525 = vrot.slane %v405, %v2524
        %v2526 = vlaneseq
        %v2527 = vshrl.u32 %v2526, 7
        %v2528 = vsub.s32 4, %v2527
        %v2529 = vrot.slane %v406, %v2528
        %v2530 = vsel %vm2516, %v2525, 0.0
        %v2531 = vsel %vm2517, %v2529, 0.0
        %v2532 = vsel %vm2518, %v2525, 0.0
        %v2533 = vsel %vm2519, %v2529, 0.0
        %v2534 = vsel %vm2520, %v2525, 0.0
        %v2535 = vsel %vm2521, %v2529, 0.0
        %v2536 = vlaneseq
        %v2537 = vshrl.u32 %v2536, 7
        %v2538 = vsub.s32 4, %v2537
        %v2539 = vrot.slane %v419, %v2538
        %v2540 = vlaneseq
        %v2541 = vshrl.u32 %v2540, 7
        %v2542 = vsub.s32 4, %v2541
        %v2543 = vrot.slane %v420, %v2542
        %vm2544 = vcmp.eq.s32.totalorder %v426, %v2539
        %vm2545 = vcmp.eq.s32.totalorder %v426, %v2543
        %vm2546 = vcmp.eq.s32.totalorder %v427, %v2539
        %vm2547 = vcmp.eq.s32.totalorder %v427, %v2543
        %vm2548 = vcmp.eq.s32.totalorder %v428, %v2539
        %vm2549 = vcmp.eq.s32.totalorder %v428, %v2543
        %v2550 = vlaneseq
        %v2551 = vshrl.u32 %v2550, 7
        %v2552 = vsub.s32 4, %v2551
        %v2553 = vrot.slane %v409, %v2552
        %v2554 = vlaneseq
        %v2555 = vshrl.u32 %v2554, 7
        %v2556 = vsub.s32 4, %v2555
        %v2557 = vrot.slane %v410, %v2556
        %v2558 = vsel %vm2544, %v2553, 0.0
        %v2559 = vsel %vm2545, %v2557, 0.0
        %v2560 = vsel %vm2546, %v2553, 0.0
        %v2561 = vsel %vm2547, %v2557, 0.0
        %v2562 = vsel %vm2548, %v2553, 0.0
        %v2563 = vsel %vm2549, %v2557, 0.0
        %v2564 = vadd.f32 %v2530, %v2558
        %v2565 = vadd.f32 %v2531, %v2559
        %v2566 = vadd.f32 %v2532, %v2560
        %v2567 = vadd.f32 %v2533, %v2561
        %v2568 = vadd.f32 %v2534, %v2562
        %v2569 = vadd.f32 %v2535, %v2563
        %v2570 = vpack.c.bf16 %v2566, %v2564
        %v2571 = vpack.c.bf16 %v2567, %v2565
        %v2572 = vpack.c.bf16 %v2568, %v2568
        %v2573 = vpack.c.bf16 %v2569, %v2569
        %v2574 = vlaneseq
        %v2575 = vshrl.u32 %v2574, 7
        %v2576 = vsub.s32 3, %v2575
        %v2577 = vrot.slane %v413, %v2576
        %v2578 = vlaneseq
        %v2579 = vshrl.u32 %v2578, 7
        %v2580 = vsub.s32 3, %v2579
        %v2581 = vrot.slane %v414, %v2580
        %vm2582 = vcmp.eq.s32.totalorder %v426, %v2577
        %vm2583 = vcmp.eq.s32.totalorder %v426, %v2581
        %vm2584 = vcmp.eq.s32.totalorder %v427, %v2577
        %vm2585 = vcmp.eq.s32.totalorder %v427, %v2581
        %vm2586 = vcmp.eq.s32.totalorder %v428, %v2577
        %vm2587 = vcmp.eq.s32.totalorder %v428, %v2581
        %v2588 = vlaneseq
        %v2589 = vshrl.u32 %v2588, 7
        %v2590 = vsub.s32 3, %v2589
        %v2591 = vrot.slane %v342, %v2590
        %v2592 = vlaneseq
        %v2593 = vshrl.u32 %v2592, 7
        %v2594 = vsub.s32 3, %v2593
        %v2595 = vrot.slane %v343, %v2594
        %v2596 = vsel %vm2582, %v2591, 0.0
        %v2597 = vsel %vm2583, %v2595, 0.0
        %v2598 = vsel %vm2584, %v2591, 0.0
        %v2599 = vsel %vm2585, %v2595, 0.0
        %v2600 = vsel %vm2586, %v2591, 0.0
        %v2601 = vsel %vm2587, %v2595, 0.0
        %v2602 = vlaneseq
        %v2603 = vshrl.u32 %v2602, 7
        %v2604 = vsub.s32 3, %v2603
        %v2605 = vrot.slane %v417, %v2604
        %v2606 = vlaneseq
        %v2607 = vshrl.u32 %v2606, 7
        %v2608 = vsub.s32 3, %v2607
        %v2609 = vrot.slane %v418, %v2608
        %vm2610 = vcmp.eq.s32.totalorder %v426, %v2605
        %vm2611 = vcmp.eq.s32.totalorder %v426, %v2609
        %vm2612 = vcmp.eq.s32.totalorder %v427, %v2605
        %vm2613 = vcmp.eq.s32.totalorder %v427, %v2609
        %vm2614 = vcmp.eq.s32.totalorder %v428, %v2605
        %vm2615 = vcmp.eq.s32.totalorder %v428, %v2609
        %v2616 = vlaneseq
        %v2617 = vshrl.u32 %v2616, 7
        %v2618 = vsub.s32 3, %v2617
        %v2619 = vrot.slane %v350, %v2618
        %v2620 = vlaneseq
        %v2621 = vshrl.u32 %v2620, 7
        %v2622 = vsub.s32 3, %v2621
        %v2623 = vrot.slane %v351, %v2622
        %v2624 = vsel %vm2610, %v2619, 0.0
        %v2625 = vsel %vm2611, %v2623, 0.0
        %v2626 = vsel %vm2612, %v2619, 0.0
        %v2627 = vsel %vm2613, %v2623, 0.0
        %v2628 = vsel %vm2614, %v2619, 0.0
        %v2629 = vsel %vm2615, %v2623, 0.0
        %v2630 = vadd.f32 %v2596, %v2624
        %v2631 = vadd.f32 %v2597, %v2625
        %v2632 = vadd.f32 %v2598, %v2626
        %v2633 = vadd.f32 %v2599, %v2627
        %v2634 = vadd.f32 %v2600, %v2628
        %v2635 = vadd.f32 %v2601, %v2629
        %v2636 = vpack.c.bf16 %v2632, %v2630
        %v2637 = vpack.c.bf16 %v2633, %v2631
        %v2638 = vpack.c.bf16 %v2634, %v2634
        %v2639 = vpack.c.bf16 %v2635, %v2635
        %v2640 = vlaneseq
        %v2641 = vshrl.u32 %v2640, 7
        %v2642 = vsub.s32 5, %v2641
        %v2643 = vrot.slane %v415, %v2642
        %v2644 = vlaneseq
        %v2645 = vshrl.u32 %v2644, 7
        %v2646 = vsub.s32 5, %v2645
        %v2647 = vrot.slane %v416, %v2646
        %vm2648 = vcmp.eq.s32.totalorder %v426, %v2643
        %vm2649 = vcmp.eq.s32.totalorder %v426, %v2647
        %vm2650 = vcmp.eq.s32.totalorder %v427, %v2643
        %vm2651 = vcmp.eq.s32.totalorder %v427, %v2647
        %vm2652 = vcmp.eq.s32.totalorder %v428, %v2643
        %vm2653 = vcmp.eq.s32.totalorder %v428, %v2647
        %v2654 = vlaneseq
        %v2655 = vshrl.u32 %v2654, 7
        %v2656 = vsub.s32 5, %v2655
        %v2657 = vrot.slane %v405, %v2656
        %v2658 = vlaneseq
        %v2659 = vshrl.u32 %v2658, 7
        %v2660 = vsub.s32 5, %v2659
        %v2661 = vrot.slane %v406, %v2660
        %v2662 = vsel %vm2648, %v2657, 0.0
        %v2663 = vsel %vm2649, %v2661, 0.0
        %v2664 = vsel %vm2650, %v2657, 0.0
        %v2665 = vsel %vm2651, %v2661, 0.0
        %v2666 = vsel %vm2652, %v2657, 0.0
        %v2667 = vsel %vm2653, %v2661, 0.0
        %v2668 = vlaneseq
        %v2669 = vshrl.u32 %v2668, 7
        %v2670 = vsub.s32 5, %v2669
        %v2671 = vrot.slane %v419, %v2670
        %v2672 = vlaneseq
        %v2673 = vshrl.u32 %v2672, 7
        %v2674 = vsub.s32 5, %v2673
        %v2675 = vrot.slane %v420, %v2674
        %vm2676 = vcmp.eq.s32.totalorder %v426, %v2671
        %vm2677 = vcmp.eq.s32.totalorder %v426, %v2675
        %vm2678 = vcmp.eq.s32.totalorder %v427, %v2671
        %vm2679 = vcmp.eq.s32.totalorder %v427, %v2675
        %vm2680 = vcmp.eq.s32.totalorder %v428, %v2671
        %vm2681 = vcmp.eq.s32.totalorder %v428, %v2675
        %v2682 = vlaneseq
        %v2683 = vshrl.u32 %v2682, 7
        %v2684 = vsub.s32 5, %v2683
        %v2685 = vrot.slane %v409, %v2684
        %v2686 = vlaneseq
        %v2687 = vshrl.u32 %v2686, 7
        %v2688 = vsub.s32 5, %v2687
        %v2689 = vrot.slane %v410, %v2688
        %v2690 = vsel %vm2676, %v2685, 0.0
        %v2691 = vsel %vm2677, %v2689, 0.0
        %v2692 = vsel %vm2678, %v2685, 0.0
        %v2693 = vsel %vm2679, %v2689, 0.0
        %v2694 = vsel %vm2680, %v2685, 0.0
        %v2695 = vsel %vm2681, %v2689, 0.0
        %v2696 = vadd.f32 %v2662, %v2690
        %v2697 = vadd.f32 %v2663, %v2691
        %v2698 = vadd.f32 %v2664, %v2692
        %v2699 = vadd.f32 %v2665, %v2693
        %v2700 = vadd.f32 %v2666, %v2694
        %v2701 = vadd.f32 %v2667, %v2695
        %v2702 = vpack.c.bf16 %v2698, %v2696
        %v2703 = vpack.c.bf16 %v2699, %v2697
        %v2704 = vpack.c.bf16 %v2700, %v2700
        %v2705 = vpack.c.bf16 %v2701, %v2701
        %v2706 = vlaneseq
        %v2707 = vshrl.u32 %v2706, 7
        %v2708 = vsub.s32 4, %v2707
        %v2709 = vrot.slane %v413, %v2708
        %v2710 = vlaneseq
        %v2711 = vshrl.u32 %v2710, 7
        %v2712 = vsub.s32 4, %v2711
        %v2713 = vrot.slane %v414, %v2712
        %vm2714 = vcmp.eq.s32.totalorder %v426, %v2709
        %vm2715 = vcmp.eq.s32.totalorder %v426, %v2713
        %vm2716 = vcmp.eq.s32.totalorder %v427, %v2709
        %vm2717 = vcmp.eq.s32.totalorder %v427, %v2713
        %vm2718 = vcmp.eq.s32.totalorder %v428, %v2709
        %vm2719 = vcmp.eq.s32.totalorder %v428, %v2713
        %v2720 = vlaneseq
        %v2721 = vshrl.u32 %v2720, 7
        %v2722 = vsub.s32 4, %v2721
        %v2723 = vrot.slane %v342, %v2722
        %v2724 = vlaneseq
        %v2725 = vshrl.u32 %v2724, 7
        %v2726 = vsub.s32 4, %v2725
        %v2727 = vrot.slane %v343, %v2726
        %v2728 = vsel %vm2714, %v2723, 0.0
        %v2729 = vsel %vm2715, %v2727, 0.0
        %v2730 = vsel %vm2716, %v2723, 0.0
        %v2731 = vsel %vm2717, %v2727, 0.0
        %v2732 = vsel %vm2718, %v2723, 0.0
        %v2733 = vsel %vm2719, %v2727, 0.0
        %v2734 = vlaneseq
        %v2735 = vshrl.u32 %v2734, 7
        %v2736 = vsub.s32 4, %v2735
        %v2737 = vrot.slane %v417, %v2736
        %v2738 = vlaneseq
        %v2739 = vshrl.u32 %v2738, 7
        %v2740 = vsub.s32 4, %v2739
        %v2741 = vrot.slane %v418, %v2740
        %vm2742 = vcmp.eq.s32.totalorder %v426, %v2737
        %vm2743 = vcmp.eq.s32.totalorder %v426, %v2741
        %vm2744 = vcmp.eq.s32.totalorder %v427, %v2737
        %vm2745 = vcmp.eq.s32.totalorder %v427, %v2741
        %vm2746 = vcmp.eq.s32.totalorder %v428, %v2737
        %vm2747 = vcmp.eq.s32.totalorder %v428, %v2741
        %v2748 = vlaneseq
        %v2749 = vshrl.u32 %v2748, 7
        %v2750 = vsub.s32 4, %v2749
        %v2751 = vrot.slane %v350, %v2750
        %v2752 = vlaneseq
        %v2753 = vshrl.u32 %v2752, 7
        %v2754 = vsub.s32 4, %v2753
        %v2755 = vrot.slane %v351, %v2754
        %v2756 = vsel %vm2742, %v2751, 0.0
        %v2757 = vsel %vm2743, %v2755, 0.0
        %v2758 = vsel %vm2744, %v2751, 0.0
        %v2759 = vsel %vm2745, %v2755, 0.0
        %v2760 = vsel %vm2746, %v2751, 0.0
        %v2761 = vsel %vm2747, %v2755, 0.0
        %v2762 = vadd.f32 %v2728, %v2756
        %v2763 = vadd.f32 %v2729, %v2757
        %v2764 = vadd.f32 %v2730, %v2758
        %v2765 = vadd.f32 %v2731, %v2759
        %v2766 = vadd.f32 %v2732, %v2760
        %v2767 = vadd.f32 %v2733, %v2761
        %v2768 = vpack.c.bf16 %v2764, %v2762
        %v2769 = vpack.c.bf16 %v2765, %v2763
        %v2770 = vpack.c.bf16 %v2766, %v2766
        %v2771 = vpack.c.bf16 %v2767, %v2767
        %v2772 = vlaneseq
        %v2773 = vshrl.u32 %v2772, 7
        %v2774 = vsub.s32 6, %v2773
        %v2775 = vrot.slane %v415, %v2774
        %v2776 = vlaneseq
        %v2777 = vshrl.u32 %v2776, 7
        %v2778 = vsub.s32 6, %v2777
        %v2779 = vrot.slane %v416, %v2778
        %vm2780 = vcmp.eq.s32.totalorder %v426, %v2775
        %vm2781 = vcmp.eq.s32.totalorder %v426, %v2779
        %vm2782 = vcmp.eq.s32.totalorder %v427, %v2775
        %vm2783 = vcmp.eq.s32.totalorder %v427, %v2779
        %vm2784 = vcmp.eq.s32.totalorder %v428, %v2775
        %vm2785 = vcmp.eq.s32.totalorder %v428, %v2779
        %v2786 = vlaneseq
        %v2787 = vshrl.u32 %v2786, 7
        %v2788 = vsub.s32 6, %v2787
        %v2789 = vrot.slane %v405, %v2788
        %v2790 = vlaneseq
        %v2791 = vshrl.u32 %v2790, 7
        %v2792 = vsub.s32 6, %v2791
        %v2793 = vrot.slane %v406, %v2792
        %v2794 = vsel %vm2780, %v2789, 0.0
        %v2795 = vsel %vm2781, %v2793, 0.0
        %v2796 = vsel %vm2782, %v2789, 0.0
        %v2797 = vsel %vm2783, %v2793, 0.0
        %v2798 = vsel %vm2784, %v2789, 0.0
        %v2799 = vsel %vm2785, %v2793, 0.0
        %v2800 = vlaneseq
        %v2801 = vshrl.u32 %v2800, 7
        %v2802 = vsub.s32 6, %v2801
        %v2803 = vrot.slane %v419, %v2802
        %v2804 = vlaneseq
        %v2805 = vshrl.u32 %v2804, 7
        %v2806 = vsub.s32 6, %v2805
        %v2807 = vrot.slane %v420, %v2806
        %vm2808 = vcmp.eq.s32.totalorder %v426, %v2803
        %vm2809 = vcmp.eq.s32.totalorder %v426, %v2807
        %vm2810 = vcmp.eq.s32.totalorder %v427, %v2803
        %vm2811 = vcmp.eq.s32.totalorder %v427, %v2807
        %vm2812 = vcmp.eq.s32.totalorder %v428, %v2803
        %vm2813 = vcmp.eq.s32.totalorder %v428, %v2807
        %v2814 = vlaneseq
        %v2815 = vshrl.u32 %v2814, 7
        %v2816 = vsub.s32 6, %v2815
        %v2817 = vrot.slane %v409, %v2816
        %v2818 = vlaneseq
        %v2819 = vshrl.u32 %v2818, 7
        %v2820 = vsub.s32 6, %v2819
        %v2821 = vrot.slane %v410, %v2820
        %v2822 = vsel %vm2808, %v2817, 0.0
        %v2823 = vsel %vm2809, %v2821, 0.0
        %v2824 = vsel %vm2810, %v2817, 0.0
        %v2825 = vsel %vm2811, %v2821, 0.0
        %v2826 = vsel %vm2812, %v2817, 0.0
        %v2827 = vsel %vm2813, %v2821, 0.0
        %v2828 = vadd.f32 %v2794, %v2822
        %v2829 = vadd.f32 %v2795, %v2823
        %v2830 = vadd.f32 %v2796, %v2824
        %v2831 = vadd.f32 %v2797, %v2825
        %v2832 = vadd.f32 %v2798, %v2826
        %v2833 = vadd.f32 %v2799, %v2827
        %v2834 = vpack.c.bf16 %v2830, %v2828
        %v2835 = vpack.c.bf16 %v2831, %v2829
        %v2836 = vpack.c.bf16 %v2832, %v2832
        %v2837 = vpack.c.bf16 %v2833, %v2833
        %v2838 = vlaneseq
        %v2839 = vshrl.u32 %v2838, 7
        %v2840 = vsub.s32 5, %v2839
        %v2841 = vrot.slane %v413, %v2840
        %v2842 = vlaneseq
        %v2843 = vshrl.u32 %v2842, 7
        %v2844 = vsub.s32 5, %v2843
        %v2845 = vrot.slane %v414, %v2844
        %vm2846 = vcmp.eq.s32.totalorder %v426, %v2841
        %vm2847 = vcmp.eq.s32.totalorder %v426, %v2845
        %vm2848 = vcmp.eq.s32.totalorder %v427, %v2841
        %vm2849 = vcmp.eq.s32.totalorder %v427, %v2845
        %vm2850 = vcmp.eq.s32.totalorder %v428, %v2841
        %vm2851 = vcmp.eq.s32.totalorder %v428, %v2845
        %v2852 = vlaneseq
        %v2853 = vshrl.u32 %v2852, 7
        %v2854 = vsub.s32 5, %v2853
        %v2855 = vrot.slane %v342, %v2854
        %v2856 = vlaneseq
        %v2857 = vshrl.u32 %v2856, 7
        %v2858 = vsub.s32 5, %v2857
        %v2859 = vrot.slane %v343, %v2858
        %v2860 = vsel %vm2846, %v2855, 0.0
        %v2861 = vsel %vm2847, %v2859, 0.0
        %v2862 = vsel %vm2848, %v2855, 0.0
        %v2863 = vsel %vm2849, %v2859, 0.0
        %v2864 = vsel %vm2850, %v2855, 0.0
        %v2865 = vsel %vm2851, %v2859, 0.0
        %v2866 = vlaneseq
        %v2867 = vshrl.u32 %v2866, 7
        %v2868 = vsub.s32 5, %v2867
        %v2869 = vrot.slane %v417, %v2868
        %v2870 = vlaneseq
        %v2871 = vshrl.u32 %v2870, 7
        %v2872 = vsub.s32 5, %v2871
        %v2873 = vrot.slane %v418, %v2872
        %vm2874 = vcmp.eq.s32.totalorder %v426, %v2869
        %vm2875 = vcmp.eq.s32.totalorder %v426, %v2873
        %vm2876 = vcmp.eq.s32.totalorder %v427, %v2869
        %vm2877 = vcmp.eq.s32.totalorder %v427, %v2873
        %vm2878 = vcmp.eq.s32.totalorder %v428, %v2869
        %vm2879 = vcmp.eq.s32.totalorder %v428, %v2873
        %v2880 = vlaneseq
        %v2881 = vshrl.u32 %v2880, 7
        %v2882 = vsub.s32 5, %v2881
        %v2883 = vrot.slane %v350, %v2882
        %v2884 = vlaneseq
        %v2885 = vshrl.u32 %v2884, 7
        %v2886 = vsub.s32 5, %v2885
        %v2887 = vrot.slane %v351, %v2886
        %v2888 = vsel %vm2874, %v2883, 0.0
        %v2889 = vsel %vm2875, %v2887, 0.0
        %v2890 = vsel %vm2876, %v2883, 0.0
        %v2891 = vsel %vm2877, %v2887, 0.0
        %v2892 = vsel %vm2878, %v2883, 0.0
        %v2893 = vsel %vm2879, %v2887, 0.0
        %v2894 = vadd.f32 %v2860, %v2888
        %v2895 = vadd.f32 %v2861, %v2889
        %v2896 = vadd.f32 %v2862, %v2890
        %v2897 = vadd.f32 %v2863, %v2891
        %v2898 = vadd.f32 %v2864, %v2892
        %v2899 = vadd.f32 %v2865, %v2893
        %v2900 = vpack.c.bf16 %v2896, %v2894
        %v2901 = vpack.c.bf16 %v2897, %v2895
        %v2902 = vpack.c.bf16 %v2898, %v2898
        %v2903 = vpack.c.bf16 %v2899, %v2899
        %v2904 = vld [vmem:[%s261] sm:$0xf]
        %v2905 = vld [vmem:[%s261 + $0x4] sm:$0xf]
        %v2906 = vld [vmem:[%s261 + $0x8] sm:$0xf]
        %v2907 = vld [vmem:[%s261 + $0xc] sm:$0xf]
        %v2908 = vld [vmem:[%s261 + $0x10] sm:$0xf]
        %v2909 = vld [vmem:[%s261 + $0x14] sm:$0xf]
        %v2910 = vld [vmem:[%s261 + $0x18] sm:$0xf]
        %v2911 = vld [vmem:[%s261 + $0x1c] sm:$0xf]
        %v2912 = vld [vmem:[%s261 + $0x20] sm:$0xf]
        %v2913 = vld [vmem:[%s261 + $0x24] sm:$0xf]
        %v2914 = vld [vmem:[%s261 + $0x28] sm:$0xf]
        %v2915 = vld [vmem:[%s261 + $0x2c] sm:$0xf]
        %v2916 = vld [vmem:[%s261 + $0x30] sm:$0xf]
        %v2917 = vld [vmem:[%s261 + $0x34] sm:$0xf]
        %v2918 = vld [vmem:[%s261 + $0x38] sm:$0xf]
        %v2919 = vld [vmem:[%s261 + $0x3c] sm:$0xf]
        %v2920 = vld [vmem:[%s261 + $0x40] sm:$0xf]
        %v2921 = vld [vmem:[%s261 + $0x44] sm:$0xf]
        %v2922 = vld [vmem:[%s261 + $0x48] sm:$0xf]
        %v2923 = vld [vmem:[%s261 + $0x4c] sm:$0xf]
        %v2924 = vld [vmem:[%s261 + $0x50] sm:$0xf]
        %v2925 = vld [vmem:[%s261 + $0x54] sm:$0xf]
        %v2926 = vld [vmem:[%s261 + $0x58] sm:$0xf]
        %v2927 = vld [vmem:[%s261 + $0x5c] sm:$0xf]
        %v2952 = vunpack.c.l.b16 %v2904
        %v2953 = vunpack.c.l.b16 %v2905
        %v2954 = vunpack.c.l.b16 %v2906
        %v2955 = vunpack.c.l.b16 %v2907
        %v2956 = vunpack.c.l.b16 %v2908
        %v2957 = vunpack.c.l.b16 %v2909
        %v2958 = vunpack.c.l.b16 %v2910
        %v2959 = vunpack.c.l.b16 %v2911
        %v2960 = vunpack.c.l.b16 %v2912
        %v2961 = vunpack.c.l.b16 %v2913
        %v2962 = vunpack.c.l.b16 %v2914
        %v2963 = vunpack.c.l.b16 %v2915
        %v2964 = vunpack.c.l.b16 %v2916
        %v2965 = vunpack.c.l.b16 %v2917
        %v2966 = vunpack.c.l.b16 %v2918
        %v2967 = vunpack.c.l.b16 %v2919
        %v2968 = vunpack.c.l.b16 %v2920
        %v2969 = vunpack.c.l.b16 %v2921
        %v2970 = vunpack.c.l.b16 %v2922
        %v2971 = vunpack.c.l.b16 %v2923
        %v2972 = vunpack.c.l.b16 %v2924
        %v2973 = vunpack.c.l.b16 %v2925
        %v2974 = vunpack.c.l.b16 %v2926
        %v2975 = vunpack.c.l.b16 %v2927
        %v2976 = vpack.c.b16 %v2953, %v2952
        %v2977 = vpack.c.b16 %v2955, %v2954
        %v2978 = vpack.c.b16 %v2957, %v2956
        %v2979 = vpack.c.b16 %v2959, %v2958
        %v2980 = vpack.c.b16 %v2961, %v2960
        %v2981 = vpack.c.b16 %v2963, %v2962
        %v2982 = vpack.c.b16 %v2965, %v2964
        %v2983 = vpack.c.b16 %v2967, %v2966
        %v2984 = vpack.c.b16 %v2969, %v2968
        %v2985 = vpack.c.b16 %v2971, %v2970
        %v2986 = vpack.c.b16 %v2973, %v2972
        %v2987 = vpack.c.b16 %v2975, %v2974
        %v2989 = vsel %vm909, %v2976, 0
        %v2992 = vsel %vm909, %v2977, 0
        %v2995 = vsel %vm909, %v2978, 0
        %v2998 = vsel %vm909, %v2979, 0
        %v3001 = vsel %vm909, %v2980, 0
        %v3004 = vsel %vm909, %v2981, 0
        %v3007 = vsel %vm909, %v2982, 0
        %v3010 = vsel %vm909, %v2983, 0
        %v3013 = vsel %vm909, %v2984, 0
        %v3016 = vsel %vm909, %v2985, 0
        %v3019 = vsel %vm909, %v2986, 0
        %v3022 = vsel %vm909, %v2987, 0
        %v3025 = vsel %vm394, %v2572, 0
        %v3028 = vsel %vm394, %v2573, 0
        %v3031 = vsel %vm394, %v2704, 0
        %v3034 = vsel %vm394, %v2705, 0
        %v3037 = vsel %vm394, %v2836, 0
        %v3040 = vsel %vm394, %v2837, 0
        %3042 = vmatprep.subr.bf16.mxu0 %v2571
        %3043 = vmatpush1.bf16.msra.mxu0 %v2570
        %3044 = vmatprep.subr.bf16.mxu0 %v3028
        %3045 = vmatpush1.bf16.msra.mxu0 %v3025
        %3046 = vmatprep.subr.bf16.mxu0 0
        %3047 = vmatpush1.bf16.msra.mxu0 0
        %3048 = vmatprep.subr.bf16.mxu0 0
        %3049 = vmatpush1.bf16.msra.mxu0 0
        %3050 = vmatprep.subr.bf16.mxu0 0
        %3051 = vmatpush1.bf16.msra.mxu0 0
        %3052 = vmatprep.subr.bf16.mxu0 0
        %3053 = vmatpush1.bf16.msra.mxu0 0
        %3054 = vmatprep.subr.bf16.mxu0 0
        %3055 = vmatpush1.bf16.msra.mxu0 0
        %3056 = vmatprep.subr.bf16.mxu0 0
        %3057 = vmatpush1.bf16.msra.mxu0 0
        %3058 = vmatprep.subr.bf16.mxu0 0
        %3059 = vmatpush1.bf16.msra.mxu0 0
        %3060 = vmatprep.subr.bf16.mxu0 0
        %3061 = vmatpush1.bf16.msra.mxu0 0
        %3062 = vmatprep.subr.bf16.mxu0 0
        %3063 = vmatpush1.bf16.msra.mxu0 0
        %3064 = vmatprep.subr.bf16.mxu0 0
        %3065 = vmatpush1.bf16.msra.mxu0 0
        %3066 = vmatprep.subr.bf16.mxu0 0
        %3067 = vmatpush1.bf16.msra.mxu0 0
        %3068 = vmatprep.subr.bf16.mxu0 0
        %3069 = vmatpush1.bf16.msra.mxu0 0
        %3070 = vmatprep.subr.bf16.mxu0 0
        %3071 = vmatpush1.bf16.msra.mxu0 0
        %3072 = vmatprep.subr.bf16.mxu0 0
        %3073 = vmatpush1.bf16.msra.mxu0 0
        %3074 = vmatprep.mubr.bf16.mxu0 0
        %3075 = vmatmul.mubr.bf16.gmra.mrb[0].mxu0 %v2989
        %v3076 = vpop.f32.mrb[0].mxu0
        %v3077 = vadd.f32 0.0, %v3076
        %v3078 = vpop.f32.mrb[0].mxu0
        %v3079 = vadd.f32 0.0, %v3078
        %v3080 = vpop.f32.mrb[0].mxu0
        %v3081 = vadd.f32 0.0, %v3080
        %v3082 = vpop.f32.mrb[0].mxu0
        %v3083 = vadd.f32 0.0, %v3082
        %3084 = vmatprep.mubr.bf16.mxu0 0
        %3085 = vmatmul.mubr.bf16.gmra.mrb[0].mxu0 %v2992
        %v3086 = vpop.f32.mrb[0].mxu0
        %v3087 = vadd.f32 0.0, %v3086
        %v3088 = vpop.f32.mrb[0].mxu0
        %v3089 = vadd.f32 0.0, %v3088
        %v3090 = vpop.f32.mrb[0].mxu0
        %v3091 = vadd.f32 0.0, %v3090
        %v3092 = vpop.f32.mrb[0].mxu0
        %v3093 = vadd.f32 0.0, %v3092
        %3094 = vmatprep.mubr.bf16.mxu0 0
        %3095 = vmatmul.mubr.bf16.gmra.mrb[0].mxu0 %v2995
        %v3096 = vpop.f32.mrb[0].mxu0
        %v3097 = vadd.f32 0.0, %v3096
        %v3098 = vpop.f32.mrb[0].mxu0
        %v3099 = vadd.f32 0.0, %v3098
        %v3100 = vpop.f32.mrb[0].mxu0
        %v3101 = vadd.f32 0.0, %v3100
        %v3102 = vpop.f32.mrb[0].mxu0
        %v3103 = vadd.f32 0.0, %v3102
        %3104 = vmatprep.mubr.bf16.mxu0 0
        %3105 = vmatmul.mubr.bf16.gmra.mrb[0].mxu0 %v2998
        %v3106 = vpop.f32.mrb[0].mxu0
        %v3107 = vadd.f32 0.0, %v3106
        %v3108 = vpop.f32.mrb[0].mxu0
        %v3109 = vadd.f32 0.0, %v3108
        %v3110 = vpop.f32.mrb[0].mxu0
        %v3111 = vadd.f32 0.0, %v3110
        %v3112 = vpop.f32.mrb[0].mxu0
        %v3113 = vadd.f32 0.0, %v3112
        %3114 = vmatprep.mubr.bf16.mxu0 0
        %3115 = vmatmul.mubr.bf16.gmra.mrb[0].mxu0 %v3001
        %v3116 = vpop.f32.mrb[0].mxu0
        %v3117 = vadd.f32 0.0, %v3116
        %v3118 = vpop.f32.mrb[0].mxu0
        %v3119 = vadd.f32 0.0, %v3118
        %v3120 = vpop.f32.mrb[0].mxu0
        %v3121 = vadd.f32 0.0, %v3120
        %v3122 = vpop.f32.mrb[0].mxu0
        %v3123 = vadd.f32 0.0, %v3122
        %3124 = vmatprep.mubr.bf16.mxu0 0
        %3125 = vmatmul.mubr.bf16.gmra.mrb[0].mxu0 %v3004
        %v3126 = vpop.f32.mrb[0].mxu0
        %v3127 = vadd.f32 0.0, %v3126
        %v3128 = vpop.f32.mrb[0].mxu0
        %v3129 = vadd.f32 0.0, %v3128
        %v3130 = vpop.f32.mrb[0].mxu0
        %v3131 = vadd.f32 0.0, %v3130
        %v3132 = vpop.f32.mrb[0].mxu0
        %v3133 = vadd.f32 0.0, %v3132
        %3134 = vmatprep.mubr.bf16.mxu0 0
        %3135 = vmatmul.mubr.bf16.gmra.mrb[0].mxu0 %v3007
        %v3136 = vpop.f32.mrb[0].mxu0
        %v3137 = vadd.f32 0.0, %v3136
        %v3138 = vpop.f32.mrb[0].mxu0
        %v3139 = vadd.f32 0.0, %v3138
        %v3140 = vpop.f32.mrb[0].mxu0
        %v3141 = vadd.f32 0.0, %v3140
        %v3142 = vpop.f32.mrb[0].mxu0
        %v3143 = vadd.f32 0.0, %v3142
        %3144 = vmatprep.mubr.bf16.mxu0 0
        %3145 = vmatmul.mubr.bf16.gmra.mrb[0].mxu0 %v3010
        %v3146 = vpop.f32.mrb[0].mxu0
        %v3147 = vadd.f32 0.0, %v3146
        %v3148 = vpop.f32.mrb[0].mxu0
        %v3149 = vadd.f32 0.0, %v3148
        %v3150 = vpop.f32.mrb[0].mxu0
        %v3151 = vadd.f32 0.0, %v3150
        %v3152 = vpop.f32.mrb[0].mxu0
        %v3153 = vadd.f32 0.0, %v3152
        %3154 = vmatprep.mubr.bf16.mxu0 0
        %3155 = vmatmul.mubr.bf16.gmra.mrb[0].mxu0 %v3013
        %v3156 = vpop.f32.mrb[0].mxu0
        %v3157 = vadd.f32 0.0, %v3156
        %v3158 = vpop.f32.mrb[0].mxu0
        %v3159 = vadd.f32 0.0, %v3158
        %v3160 = vpop.f32.mrb[0].mxu0
        %v3161 = vadd.f32 0.0, %v3160
        %v3162 = vpop.f32.mrb[0].mxu0
        %v3163 = vadd.f32 0.0, %v3162
        %3164 = vmatprep.mubr.bf16.mxu0 0
        %3165 = vmatmul.mubr.bf16.gmra.mrb[0].mxu0 %v3016
        %v3166 = vpop.f32.mrb[0].mxu0
        %v3167 = vadd.f32 0.0, %v3166
        %v3168 = vpop.f32.mrb[0].mxu0
        %v3169 = vadd.f32 0.0, %v3168
        %v3170 = vpop.f32.mrb[0].mxu0
        %v3171 = vadd.f32 0.0, %v3170
        %v3172 = vpop.f32.mrb[0].mxu0
        %v3173 = vadd.f32 0.0, %v3172
        %3174 = vmatprep.mubr.bf16.mxu0 0
        %3175 = vmatmul.mubr.bf16.gmra.mrb[0].mxu0 %v3019
        %v3176 = vpop.f32.mrb[0].mxu0
        %v3177 = vadd.f32 0.0, %v3176
        %v3178 = vpop.f32.mrb[0].mxu0
        %v3179 = vadd.f32 0.0, %v3178
        %v3180 = vpop.f32.mrb[0].mxu0
        %v3181 = vadd.f32 0.0, %v3180
        %v3182 = vpop.f32.mrb[0].mxu0
        %v3183 = vadd.f32 0.0, %v3182
        %3184 = vmatprep.mubr.bf16.mxu0 0
        %3185 = vmatmul.mubr.bf16.gmra.mrb[0].mxu0 %v3022
        %v3186 = vpop.f32.mrb[0].mxu0
        %v3187 = vadd.f32 0.0, %v3186
        %v3188 = vpop.f32.mrb[0].mxu0
        %v3189 = vadd.f32 0.0, %v3188
        %v3190 = vpop.f32.mrb[0].mxu0
        %v3191 = vadd.f32 0.0, %v3190
        %v3192 = vpop.f32.mrb[0].mxu0
        %v3193 = vadd.f32 0.0, %v3192
        %3194 = vdwg.mxu0
        %3195 = vmatprep.subr.bf16.mxu0 %v2703
        %3196 = vmatpush1.bf16.msra.mxu0 %v2702
        %3197 = vmatprep.subr.bf16.mxu0 %v3034
        %3198 = vmatpush1.bf16.msra.mxu0 %v3031
        %3199 = vmatprep.subr.bf16.mxu0 0
        %3200 = vmatpush1.bf16.msra.mxu0 0
        %3201 = vmatprep.subr.bf16.mxu0 0
        %3202 = vmatpush1.bf16.msra.mxu0 0
        %3203 = vmatprep.subr.bf16.mxu0 0
        %3204 = vmatpush1.bf16.msra.mxu0 0
        %3205 = vmatprep.subr.bf16.mxu0 0
        %3206 = vmatpush1.bf16.msra.mxu0 0
        %3207 = vmatprep.subr.bf16.mxu0 0
        %3208 = vmatpush1.bf16.msra.mxu0 0
        %3209 = vmatprep.subr.bf16.mxu0 0
        %3210 = vmatpush1.bf16.msra.mxu0 0
        %3211 = vmatprep.subr.bf16.mxu0 0
        %3212 = vmatpush1.bf16.msra.mxu0 0
        %3213 = vmatprep.subr.bf16.mxu0 0
        %3214 = vmatpush1.bf16.msra.mxu0 0
        %3215 = vmatprep.subr.bf16.mxu0 0
        %3216 = vmatpush1.bf16.msra.mxu0 0
        %3217 = vmatprep.subr.bf16.mxu0 0
        %3218 = vmatpush1.bf16.msra.mxu0 0
        %3219 = vmatprep.subr.bf16.mxu0 0
        %3220 = vmatpush1.bf16.msra.mxu0 0
        %3221 = vmatprep.subr.bf16.mxu0 0
        %3222 = vmatpush1.bf16.msra.mxu0 0
        %3223 = vmatprep.subr.bf16.mxu0 0
        %3224 = vmatpush1.bf16.msra.mxu0 0
        %3225 = vmatprep.subr.bf16.mxu0 0
        %3226 = vmatpush1.bf16.msra.mxu0 0
        %3227 = vmatprep.mubr.bf16.mxu0 0
        %3228 = vmatmul.mubr.bf16.gmra.mrb[0].mxu0 %v2989
        %v3229 = vpop.f32.mrb[0].mxu0
        %v3230 = vadd.f32 0.0, %v3229
        %v3231 = vpop.f32.mrb[0].mxu0
        %v3232 = vadd.f32 0.0, %v3231
        %v3233 = vpop.f32.mrb[0].mxu0
        %v3234 = vadd.f32 0.0, %v3233
        %v3235 = vpop.f32.mrb[0].mxu0
        %v3236 = vadd.f32 0.0, %v3235
        %3237 = vmatprep.mubr.bf16.mxu0 0
        %3238 = vmatmul.mubr.bf16.gmra.mrb[0].mxu0 %v2992
        %v3239 = vpop.f32.mrb[0].mxu0
        %v3240 = vadd.f32 0.0, %v3239
        %v3241 = vpop.f32.mrb[0].mxu0
        %v3242 = vadd.f32 0.0, %v3241
        %v3243 = vpop.f32.mrb[0].mxu0
        %v3244 = vadd.f32 0.0, %v3243
        %v3245 = vpop.f32.mrb[0].mxu0
        %v3246 = vadd.f32 0.0, %v3245
        %3247 = vmatprep.mubr.bf16.mxu0 0
        %3248 = vmatmul.mubr.bf16.gmra.mrb[0].mxu0 %v2995
        %v3249 = vpop.f32.mrb[0].mxu0
        %v3250 = vadd.f32 0.0, %v3249
        %v3251 = vpop.f32.mrb[0].mxu0
        %v3252 = vadd.f32 0.0, %v3251
        %v3253 = vpop.f32.mrb[0].mxu0
        %v3254 = vadd.f32 0.0, %v3253
        %v3255 = vpop.f32.mrb[0].mxu0
        %v3256 = vadd.f32 0.0, %v3255
        %3257 = vmatprep.mubr.bf16.mxu0 0
        %3258 = vmatmul.mubr.bf16.gmra.mrb[0].mxu0 %v2998
        %v3259 = vpop.f32.mrb[0].mxu0
        %v3260 = vadd.f32 0.0, %v3259
        %v3261 = vpop.f32.mrb[0].mxu0
        %v3262 = vadd.f32 0.0, %v3261
        %v3263 = vpop.f32.mrb[0].mxu0
        %v3264 = vadd.f32 0.0, %v3263
        %v3265 = vpop.f32.mrb[0].mxu0
        %v3266 = vadd.f32 0.0, %v3265
        %3267 = vmatprep.mubr.bf16.mxu0 0
        %3268 = vmatmul.mubr.bf16.gmra.mrb[0].mxu0 %v3001
        %v3269 = vpop.f32.mrb[0].mxu0
        %v3270 = vadd.f32 0.0, %v3269
        %v3271 = vpop.f32.mrb[0].mxu0
        %v3272 = vadd.f32 0.0, %v3271
        %v3273 = vpop.f32.mrb[0].mxu0
        %v3274 = vadd.f32 0.0, %v3273
        %v3275 = vpop.f32.mrb[0].mxu0
        %v3276 = vadd.f32 0.0, %v3275
        %3277 = vmatprep.mubr.bf16.mxu0 0
        %3278 = vmatmul.mubr.bf16.gmra.mrb[0].mxu0 %v3004
        %v3279 = vpop.f32.mrb[0].mxu0
        %v3280 = vadd.f32 0.0, %v3279
        %v3281 = vpop.f32.mrb[0].mxu0
        %v3282 = vadd.f32 0.0, %v3281
        %v3283 = vpop.f32.mrb[0].mxu0
        %v3284 = vadd.f32 0.0, %v3283
        %v3285 = vpop.f32.mrb[0].mxu0
        %v3286 = vadd.f32 0.0, %v3285
        %3287 = vmatprep.mubr.bf16.mxu0 0
        %3288 = vmatmul.mubr.bf16.gmra.mrb[0].mxu0 %v3007
        %v3289 = vpop.f32.mrb[0].mxu0
        %v3290 = vadd.f32 0.0, %v3289
        %v3291 = vpop.f32.mrb[0].mxu0
        %v3292 = vadd.f32 0.0, %v3291
        %v3293 = vpop.f32.mrb[0].mxu0
        %v3294 = vadd.f32 0.0, %v3293
        %v3295 = vpop.f32.mrb[0].mxu0
        %v3296 = vadd.f32 0.0, %v3295
        %3297 = vmatprep.mubr.bf16.mxu0 0
        %3298 = vmatmul.mubr.bf16.gmra.mrb[0].mxu0 %v3010
        %v3299 = vpop.f32.mrb[0].mxu0
        %v3300 = vadd.f32 0.0, %v3299
        %v3301 = vpop.f32.mrb[0].mxu0
        %v3302 = vadd.f32 0.0, %v3301
        %v3303 = vpop.f32.mrb[0].mxu0
        %v3304 = vadd.f32 0.0, %v3303
        %v3305 = vpop.f32.mrb[0].mxu0
        %v3306 = vadd.f32 0.0, %v3305
        %3307 = vmatprep.mubr.bf16.mxu0 0
        %3308 = vmatmul.mubr.bf16.gmra.mrb[0].mxu0 %v3013
        %v3309 = vpop.f32.mrb[0].mxu0
        %v3310 = vadd.f32 0.0, %v3309
        %v3311 = vpop.f32.mrb[0].mxu0
        %v3312 = vadd.f32 0.0, %v3311
        %v3313 = vpop.f32.mrb[0].mxu0
        %v3314 = vadd.f32 0.0, %v3313
        %v3315 = vpop.f32.mrb[0].mxu0
        %v3316 = vadd.f32 0.0, %v3315
        %3317 = vmatprep.mubr.bf16.mxu0 0
        %3318 = vmatmul.mubr.bf16.gmra.mrb[0].mxu0 %v3016
        %v3319 = vpop.f32.mrb[0].mxu0
        %v3320 = vadd.f32 0.0, %v3319
        %v3321 = vpop.f32.mrb[0].mxu0
        %v3322 = vadd.f32 0.0, %v3321
        %v3323 = vpop.f32.mrb[0].mxu0
        %v3324 = vadd.f32 0.0, %v3323
        %v3325 = vpop.f32.mrb[0].mxu0
        %v3326 = vadd.f32 0.0, %v3325
        %3327 = vmatprep.mubr.bf16.mxu0 0
        %3328 = vmatmul.mubr.bf16.gmra.mrb[0].mxu0 %v3019
        %v3329 = vpop.f32.mrb[0].mxu0
        %v3330 = vadd.f32 0.0, %v3329
        %v3331 = vpop.f32.mrb[0].mxu0
        %v3332 = vadd.f32 0.0, %v3331
        %v3333 = vpop.f32.mrb[0].mxu0
        %v3334 = vadd.f32 0.0, %v3333
        %v3335 = vpop.f32.mrb[0].mxu0
        %v3336 = vadd.f32 0.0, %v3335
        %3337 = vmatprep.mubr.bf16.mxu0 0
        %3338 = vmatmul.mubr.bf16.gmra.mrb[0].mxu0 %v3022
        %v3339 = vpop.f32.mrb[0].mxu0
        %v3340 = vadd.f32 0.0, %v3339
        %v3341 = vpop.f32.mrb[0].mxu0
        %v3342 = vadd.f32 0.0, %v3341
        %v3343 = vpop.f32.mrb[0].mxu0
        %v3344 = vadd.f32 0.0, %v3343
        %v3345 = vpop.f32.mrb[0].mxu0
        %v3346 = vadd.f32 0.0, %v3345
        %3347 = vdwg.mxu0
        %3348 = vmatprep.subr.bf16.mxu0 %v2835
        %3349 = vmatpush1.bf16.msra.mxu0 %v2834
        %3350 = vmatprep.subr.bf16.mxu0 %v3040
        %3351 = vmatpush1.bf16.msra.mxu0 %v3037
        %3352 = vmatprep.subr.bf16.mxu0 0
        %3353 = vmatpush1.bf16.msra.mxu0 0
        %3354 = vmatprep.subr.bf16.mxu0 0
        %3355 = vmatpush1.bf16.msra.mxu0 0
        %3356 = vmatprep.subr.bf16.mxu0 0
        %3357 = vmatpush1.bf16.msra.mxu0 0
        %3358 = vmatprep.subr.bf16.mxu0 0
        %3359 = vmatpush1.bf16.msra.mxu0 0
        %3360 = vmatprep.subr.bf16.mxu0 0
        %3361 = vmatpush1.bf16.msra.mxu0 0
        %3362 = vmatprep.subr.bf16.mxu0 0
        %3363 = vmatpush1.bf16.msra.mxu0 0
        %3364 = vmatprep.subr.bf16.mxu0 0
        %3365 = vmatpush1.bf16.msra.mxu0 0
        %3366 = vmatprep.subr.bf16.mxu0 0
        %3367 = vmatpush1.bf16.msra.mxu0 0
        %3368 = vmatprep.subr.bf16.mxu0 0
        %3369 = vmatpush1.bf16.msra.mxu0 0
        %3370 = vmatprep.subr.bf16.mxu0 0
        %3371 = vmatpush1.bf16.msra.mxu0 0
        %3372 = vmatprep.subr.bf16.mxu0 0
        %3373 = vmatpush1.bf16.msra.mxu0 0
        %3374 = vmatprep.subr.bf16.mxu0 0
        %3375 = vmatpush1.bf16.msra.mxu0 0
        %3376 = vmatprep.subr.bf16.mxu0 0
        %3377 = vmatpush1.bf16.msra.mxu0 0
        %3378 = vmatprep.subr.bf16.mxu0 0
        %3379 = vmatpush1.bf16.msra.mxu0 0
        %3380 = vmatprep.mubr.bf16.mxu0 0
        %3381 = vmatmul.mubr.bf16.gmra.mrb[0].mxu0 %v2989
        %v3382 = vpop.f32.mrb[0].mxu0
        %v3383 = vadd.f32 0.0, %v3382
        %v3384 = vpop.f32.mrb[0].mxu0
        %v3385 = vadd.f32 0.0, %v3384
        %v3386 = vpop.f32.mrb[0].mxu0
        %v3387 = vadd.f32 0.0, %v3386
        %v3388 = vpop.f32.mrb[0].mxu0
        %v3389 = vadd.f32 0.0, %v3388
        %3390 = vmatprep.mubr.bf16.mxu0 0
        %3391 = vmatmul.mubr.bf16.gmra.mrb[0].mxu0 %v2992
        %v3392 = vpop.f32.mrb[0].mxu0
        %v3393 = vadd.f32 0.0, %v3392
        %v3394 = vpop.f32.mrb[0].mxu0
        %v3395 = vadd.f32 0.0, %v3394
        %v3396 = vpop.f32.mrb[0].mxu0
        %v3397 = vadd.f32 0.0, %v3396
        %v3398 = vpop.f32.mrb[0].mxu0
        %v3399 = vadd.f32 0.0, %v3398
        %3400 = vmatprep.mubr.bf16.mxu0 0
        %3401 = vmatmul.mubr.bf16.gmra.mrb[0].mxu0 %v2995
        %v3402 = vpop.f32.mrb[0].mxu0
        %v3403 = vadd.f32 0.0, %v3402
        %v3404 = vpop.f32.mrb[0].mxu0
        %v3405 = vadd.f32 0.0, %v3404
        %v3406 = vpop.f32.mrb[0].mxu0
        %v3407 = vadd.f32 0.0, %v3406
        %v3408 = vpop.f32.mrb[0].mxu0
        %v3409 = vadd.f32 0.0, %v3408
        %3410 = vmatprep.mubr.bf16.mxu0 0
        %3411 = vmatmul.mubr.bf16.gmra.mrb[0].mxu0 %v2998
        %v3412 = vpop.f32.mrb[0].mxu0
        %v3413 = vadd.f32 0.0, %v3412
        %v3414 = vpop.f32.mrb[0].mxu0
        %v3415 = vadd.f32 0.0, %v3414
        %v3416 = vpop.f32.mrb[0].mxu0
        %v3417 = vadd.f32 0.0, %v3416
        %v3418 = vpop.f32.mrb[0].mxu0
        %v3419 = vadd.f32 0.0, %v3418
        %3420 = vmatprep.mubr.bf16.mxu0 0
        %3421 = vmatmul.mubr.bf16.gmra.mrb[0].mxu0 %v3001
        %v3422 = vpop.f32.mrb[0].mxu0
        %v3423 = vadd.f32 0.0, %v3422
        %v3424 = vpop.f32.mrb[0].mxu0
        %v3425 = vadd.f32 0.0, %v3424
        %v3426 = vpop.f32.mrb[0].mxu0
        %v3427 = vadd.f32 0.0, %v3426
        %v3428 = vpop.f32.mrb[0].mxu0
        %v3429 = vadd.f32 0.0, %v3428
        %3430 = vmatprep.mubr.bf16.mxu0 0
        %3431 = vmatmul.mubr.bf16.gmra.mrb[0].mxu0 %v3004
        %v3432 = vpop.f32.mrb[0].mxu0
        %v3433 = vadd.f32 0.0, %v3432
        %v3434 = vpop.f32.mrb[0].mxu0
        %v3435 = vadd.f32 0.0, %v3434
        %v3436 = vpop.f32.mrb[0].mxu0
        %v3437 = vadd.f32 0.0, %v3436
        %v3438 = vpop.f32.mrb[0].mxu0
        %v3439 = vadd.f32 0.0, %v3438
        %3440 = vmatprep.mubr.bf16.mxu0 0
        %3441 = vmatmul.mubr.bf16.gmra.mrb[0].mxu0 %v3007
        %v3442 = vpop.f32.mrb[0].mxu0
        %v3443 = vadd.f32 0.0, %v3442
        %v3444 = vpop.f32.mrb[0].mxu0
        %v3445 = vadd.f32 0.0, %v3444
        %v3446 = vpop.f32.mrb[0].mxu0
        %v3447 = vadd.f32 0.0, %v3446
        %v3448 = vpop.f32.mrb[0].mxu0
        %v3449 = vadd.f32 0.0, %v3448
        %3450 = vmatprep.mubr.bf16.mxu0 0
        %3451 = vmatmul.mubr.bf16.gmra.mrb[0].mxu0 %v3010
        %v3452 = vpop.f32.mrb[0].mxu0
        %v3453 = vadd.f32 0.0, %v3452
        %v3454 = vpop.f32.mrb[0].mxu0
        %v3455 = vadd.f32 0.0, %v3454
        %v3456 = vpop.f32.mrb[0].mxu0
        %v3457 = vadd.f32 0.0, %v3456
        %v3458 = vpop.f32.mrb[0].mxu0
        %v3459 = vadd.f32 0.0, %v3458
        %3460 = vmatprep.mubr.bf16.mxu0 0
        %3461 = vmatmul.mubr.bf16.gmra.mrb[0].mxu0 %v3013
        %v3462 = vpop.f32.mrb[0].mxu0
        %v3463 = vadd.f32 0.0, %v3462
        %v3464 = vpop.f32.mrb[0].mxu0
        %v3465 = vadd.f32 0.0, %v3464
        %v3466 = vpop.f32.mrb[0].mxu0
        %v3467 = vadd.f32 0.0, %v3466
        %v3468 = vpop.f32.mrb[0].mxu0
        %v3469 = vadd.f32 0.0, %v3468
        %3470 = vmatprep.mubr.bf16.mxu0 0
        %3471 = vmatmul.mubr.bf16.gmra.mrb[0].mxu0 %v3016
        %v3472 = vpop.f32.mrb[0].mxu0
        %v3473 = vadd.f32 0.0, %v3472
        %v3474 = vpop.f32.mrb[0].mxu0
        %v3475 = vadd.f32 0.0, %v3474
        %v3476 = vpop.f32.mrb[0].mxu0
        %v3477 = vadd.f32 0.0, %v3476
        %v3478 = vpop.f32.mrb[0].mxu0
        %v3479 = vadd.f32 0.0, %v3478
        %3480 = vmatprep.mubr.bf16.mxu0 0
        %3481 = vmatmul.mubr.bf16.gmra.mrb[0].mxu0 %v3019
        %v3482 = vpop.f32.mrb[0].mxu0
        %v3483 = vadd.f32 0.0, %v3482
        %v3484 = vpop.f32.mrb[0].mxu0
        %v3485 = vadd.f32 0.0, %v3484
        %v3486 = vpop.f32.mrb[0].mxu0
        %v3487 = vadd.f32 0.0, %v3486
        %v3488 = vpop.f32.mrb[0].mxu0
        %v3489 = vadd.f32 0.0, %v3488
        %3490 = vmatprep.mubr.bf16.mxu0 0
        %3491 = vmatmul.mubr.bf16.gmra.mrb[0].mxu0 %v3022
        %v3492 = vpop.f32.mrb[0].mxu0
        %v3493 = vadd.f32 0.0, %v3492
        %v3494 = vpop.f32.mrb[0].mxu0
        %v3495 = vadd.f32 0.0, %v3494
        %v3496 = vpop.f32.mrb[0].mxu0
        %v3497 = vadd.f32 0.0, %v3496
        %v3498 = vpop.f32.mrb[0].mxu0
        %v3499 = vadd.f32 0.0, %v3498
        %3500 = vdwg.mxu0
        %v3501 = vpack.c.bf16 %v3081, %v3077
        %v3502 = vpack.c.bf16 %v3083, %v3079
        %v3503 = vpack.c.bf16 %v3234, %v3230
        %v3504 = vpack.c.bf16 %v3236, %v3232
        %v3505 = vpack.c.bf16 %v3387, %v3383
        %v3506 = vpack.c.bf16 %v3389, %v3385
        %v3507 = vpack.c.bf16 %v3091, %v3087
        %v3508 = vpack.c.bf16 %v3093, %v3089
        %v3509 = vpack.c.bf16 %v3244, %v3240
        %v3510 = vpack.c.bf16 %v3246, %v3242
        %v3511 = vpack.c.bf16 %v3397, %v3393
        %v3512 = vpack.c.bf16 %v3399, %v3395
        %v3513 = vpack.c.bf16 %v3101, %v3097
        %v3514 = vpack.c.bf16 %v3103, %v3099
        %v3515 = vpack.c.bf16 %v3254, %v3250
        %v3516 = vpack.c.bf16 %v3256, %v3252
        %v3517 = vpack.c.bf16 %v3407, %v3403
        %v3518 = vpack.c.bf16 %v3409, %v3405
        %v3519 = vpack.c.bf16 %v3111, %v3107
        %v3520 = vpack.c.bf16 %v3113, %v3109
        %v3521 = vpack.c.bf16 %v3264, %v3260
        %v3522 = vpack.c.bf16 %v3266, %v3262
        %v3523 = vpack.c.bf16 %v3417, %v3413
        %v3524 = vpack.c.bf16 %v3419, %v3415
        %v3525 = vpack.c.bf16 %v3121, %v3117
        %v3526 = vpack.c.bf16 %v3123, %v3119
        %v3527 = vpack.c.bf16 %v3274, %v3270
        %v3528 = vpack.c.bf16 %v3276, %v3272
        %v3529 = vpack.c.bf16 %v3427, %v3423
        %v3530 = vpack.c.bf16 %v3429, %v3425
        %v3531 = vpack.c.bf16 %v3131, %v3127
        %v3532 = vpack.c.bf16 %v3133, %v3129
        %v3533 = vpack.c.bf16 %v3284, %v3280
        %v3534 = vpack.c.bf16 %v3286, %v3282
        %v3535 = vpack.c.bf16 %v3437, %v3433
        %v3536 = vpack.c.bf16 %v3439, %v3435
        %v3537 = vpack.c.bf16 %v3141, %v3137
        %v3538 = vpack.c.bf16 %v3143, %v3139
        %v3539 = vpack.c.bf16 %v3294, %v3290
        %v3540 = vpack.c.bf16 %v3296, %v3292
        %v3541 = vpack.c.bf16 %v3447, %v3443
        %v3542 = vpack.c.bf16 %v3449, %v3445
        %v3543 = vpack.c.bf16 %v3151, %v3147
        %v3544 = vpack.c.bf16 %v3153, %v3149
        %v3545 = vpack.c.bf16 %v3304, %v3300
        %v3546 = vpack.c.bf16 %v3306, %v3302
        %v3547 = vpack.c.bf16 %v3457, %v3453
        %v3548 = vpack.c.bf16 %v3459, %v3455
        %v3549 = vpack.c.bf16 %v3161, %v3157
        %v3550 = vpack.c.bf16 %v3163, %v3159
        %v3551 = vpack.c.bf16 %v3314, %v3310
        %v3552 = vpack.c.bf16 %v3316, %v3312
        %v3553 = vpack.c.bf16 %v3467, %v3463
        %v3554 = vpack.c.bf16 %v3469, %v3465
        %v3555 = vpack.c.bf16 %v3171, %v3167
        %v3556 = vpack.c.bf16 %v3173, %v3169
        %v3557 = vpack.c.bf16 %v3324, %v3320
        %v3558 = vpack.c.bf16 %v3326, %v3322
        %v3559 = vpack.c.bf16 %v3477, %v3473
        %v3560 = vpack.c.bf16 %v3479, %v3475
        %v3561 = vpack.c.bf16 %v3181, %v3177
        %v3562 = vpack.c.bf16 %v3183, %v3179
        %v3563 = vpack.c.bf16 %v3334, %v3330
        %v3564 = vpack.c.bf16 %v3336, %v3332
        %v3565 = vpack.c.bf16 %v3487, %v3483
        %v3566 = vpack.c.bf16 %v3489, %v3485
        %v3567 = vpack.c.bf16 %v3191, %v3187
        %v3568 = vpack.c.bf16 %v3193, %v3189
        %v3569 = vpack.c.bf16 %v3344, %v3340
        %v3570 = vpack.c.bf16 %v3346, %v3342
        %v3571 = vpack.c.bf16 %v3497, %v3493
        %v3572 = vpack.c.bf16 %v3499, %v3495
        %v3573 = vmul.bf16 %v3501, %v2636
        %v3574 = vmul.bf16 %v3502, %v2637
        %v3575 = vmul.bf16 %v3507, %v2638
        %v3576 = vmul.bf16 %v3508, %v2639
        %v3577 = vunpack.c.l.bf16 %v3573
        %v3578 = vunpack.c.l.bf16 %v3574
        %v3579 = vunpack.c.h.bf16 %v3573
        %v3580 = vunpack.c.h.bf16 %v3574
        %v3581 = vunpack.c.l.bf16 %v3575
        %v3582 = vunpack.c.l.bf16 %v3576
        %v3583 = vadd.f32 %v3577, %v3579
        %v3584 = vadd.f32 %v3583, %v3581
        %v3585 = vrot.slane %v3584, 4
        %v3586 = vadd.f32 %v3584, %v3585
        %v3587 = vrot.slane %v3586, 2
        %v3588 = vadd.f32 %v3586, %v3587
        %v3589 = vrot.slane %v3588, 1
        %v3590 = vadd.f32 %v3588, %v3589
        %v3591 = vadd.f32 %v3578, %v3580
        %v3592 = vadd.f32 %v3591, %v3582
        %v3593 = vrot.slane %v3592, 4
        %v3594 = vadd.f32 %v3592, %v3593
        %v3595 = vrot.slane %v3594, 2
        %v3596 = vadd.f32 %v3594, %v3595
        %v3597 = vrot.slane %v3596, 1
        %v3598 = vadd.f32 %v3596, %v3597
        %v3599 = vpack.c.bf16 %v3590, %v3590
        %v3600 = vpack.c.bf16 %v3598, %v3598
        %v3605 = vrot.slane %v2636, 4
        %v3606 = vrot.slane %v2637, 4
        %v3607 = vrot.slane %v2638, 4
        %v3608 = vsel %vm1527, %v3605, %v3607
        %v3609 = vrot.slane %v2639, 4
        %v3610 = vsel %vm1527, %v3606, %v3609
        %v3615 = vmul.bf16 %v3507, %v3605
        %v3616 = vmul.bf16 %v3508, %v3606
        %v3617 = vmul.bf16 %v3513, %v3608
        %v3618 = vmul.bf16 %v3514, %v3610
        %v3623 = vrot.slane %v3615, 4
        %v3624 = vrot.slane %v3617, 4
        %v3625 = vsel %vm1527, %v3623, %v3624
        %v3626 = vrot.slane %v3616, 4
        %v3627 = vrot.slane %v3618, 4
        %v3628 = vsel %vm1527, %v3626, %v3627
        %v3633 = vunpack.c.l.bf16 %v3625
        %v3634 = vunpack.c.l.bf16 %v3628
        %v3635 = vunpack.c.h.bf16 %v3625
        %v3636 = vunpack.c.h.bf16 %v3628
        %v3637 = vunpack.c.l.bf16 %v3624
        %v3638 = vunpack.c.l.bf16 %v3627
        %v3639 = vadd.f32 %v3633, %v3635
        %v3640 = vadd.f32 %v3639, %v3637
        %v3641 = vrot.slane %v3640, 4
        %v3642 = vadd.f32 %v3640, %v3641
        %v3643 = vrot.slane %v3642, 2
        %v3644 = vadd.f32 %v3642, %v3643
        %v3645 = vrot.slane %v3644, 1
        %v3646 = vadd.f32 %v3644, %v3645
        %v3647 = vadd.f32 %v3634, %v3636
        %v3648 = vadd.f32 %v3647, %v3638
        %v3649 = vrot.slane %v3648, 4
        %v3650 = vadd.f32 %v3648, %v3649
        %v3651 = vrot.slane %v3650, 2
        %v3652 = vadd.f32 %v3650, %v3651
        %v3653 = vrot.slane %v3652, 1
        %v3654 = vadd.f32 %v3652, %v3653
        %v3655 = vpack.c.bf16 %v3646, %v3646
        %v3656 = vpack.c.bf16 %v3654, %v3654
        %v3657 = vmul.bf16 %v3519, %v2636
        %v3658 = vmul.bf16 %v3520, %v2637
        %v3659 = vmul.bf16 %v3525, %v2638
        %v3660 = vmul.bf16 %v3526, %v2639
        %v3661 = vunpack.c.l.bf16 %v3657
        %v3662 = vunpack.c.l.bf16 %v3658
        %v3663 = vunpack.c.h.bf16 %v3657
        %v3664 = vunpack.c.h.bf16 %v3658
        %v3665 = vunpack.c.l.bf16 %v3659
        %v3666 = vunpack.c.l.bf16 %v3660
        %v3667 = vadd.f32 %v3661, %v3663
        %v3668 = vadd.f32 %v3667, %v3665
        %v3669 = vrot.slane %v3668, 4
        %v3670 = vadd.f32 %v3668, %v3669
        %v3671 = vrot.slane %v3670, 2
        %v3672 = vadd.f32 %v3670, %v3671
        %v3673 = vrot.slane %v3672, 1
        %v3674 = vadd.f32 %v3672, %v3673
        %v3675 = vadd.f32 %v3662, %v3664
        %v3676 = vadd.f32 %v3675, %v3666
        %v3677 = vrot.slane %v3676, 4
        %v3678 = vadd.f32 %v3676, %v3677
        %v3679 = vrot.slane %v3678, 2
        %v3680 = vadd.f32 %v3678, %v3679
        %v3681 = vrot.slane %v3680, 1
        %v3682 = vadd.f32 %v3680, %v3681
        %v3683 = vpack.c.bf16 %v3674, %v3674
        %v3684 = vpack.c.bf16 %v3682, %v3682
        %v3685 = vmul.bf16 %v3525, %v3605
        %v3686 = vmul.bf16 %v3526, %v3606
        %v3687 = vmul.bf16 %v3531, %v3608
        %v3688 = vmul.bf16 %v3532, %v3610
        %v3693 = vrot.slane %v3685, 4
        %v3694 = vrot.slane %v3687, 4
        %v3695 = vsel %vm1527, %v3693, %v3694
        %v3696 = vrot.slane %v3686, 4
        %v3697 = vrot.slane %v3688, 4
        %v3698 = vsel %vm1527, %v3696, %v3697
        %v3703 = vunpack.c.l.bf16 %v3695
        %v3704 = vunpack.c.l.bf16 %v3698
        %v3705 = vunpack.c.h.bf16 %v3695
        %v3706 = vunpack.c.h.bf16 %v3698
        %v3707 = vunpack.c.l.bf16 %v3694
        %v3708 = vunpack.c.l.bf16 %v3697
        %v3709 = vadd.f32 %v3703, %v3705
        %v3710 = vadd.f32 %v3709, %v3707
        %v3711 = vrot.slane %v3710, 4
        %v3712 = vadd.f32 %v3710, %v3711
        %v3713 = vrot.slane %v3712, 2
        %v3714 = vadd.f32 %v3712, %v3713
        %v3715 = vrot.slane %v3714, 1
        %v3716 = vadd.f32 %v3714, %v3715
        %v3717 = vadd.f32 %v3704, %v3706
        %v3718 = vadd.f32 %v3717, %v3708
        %v3719 = vrot.slane %v3718, 4
        %v3720 = vadd.f32 %v3718, %v3719
        %v3721 = vrot.slane %v3720, 2
        %v3722 = vadd.f32 %v3720, %v3721
        %v3723 = vrot.slane %v3722, 1
        %v3724 = vadd.f32 %v3722, %v3723
        %v3725 = vpack.c.bf16 %v3716, %v3716
        %v3726 = vpack.c.bf16 %v3724, %v3724
        %v3727 = vmul.bf16 %v3537, %v2636
        %v3728 = vmul.bf16 %v3538, %v2637
        %v3729 = vmul.bf16 %v3543, %v2638
        %v3730 = vmul.bf16 %v3544, %v2639
        %v3731 = vunpack.c.l.bf16 %v3727
        %v3732 = vunpack.c.l.bf16 %v3728
        %v3733 = vunpack.c.h.bf16 %v3727
        %v3734 = vunpack.c.h.bf16 %v3728
        %v3735 = vunpack.c.l.bf16 %v3729
        %v3736 = vunpack.c.l.bf16 %v3730
        %v3737 = vadd.f32 %v3731, %v3733
        %v3738 = vadd.f32 %v3737, %v3735
        %v3739 = vrot.slane %v3738, 4
        %v3740 = vadd.f32 %v3738, %v3739
        %v3741 = vrot.slane %v3740, 2
        %v3742 = vadd.f32 %v3740, %v3741
        %v3743 = vrot.slane %v3742, 1
        %v3744 = vadd.f32 %v3742, %v3743
        %v3745 = vadd.f32 %v3732, %v3734
        %v3746 = vadd.f32 %v3745, %v3736
        %v3747 = vrot.slane %v3746, 4
        %v3748 = vadd.f32 %v3746, %v3747
        %v3749 = vrot.slane %v3748, 2
        %v3750 = vadd.f32 %v3748, %v3749
        %v3751 = vrot.slane %v3750, 1
        %v3752 = vadd.f32 %v3750, %v3751
        %v3753 = vpack.c.bf16 %v3744, %v3744
        %v3754 = vpack.c.bf16 %v3752, %v3752
        %v3755 = vmul.bf16 %v3543, %v3605
        %v3756 = vmul.bf16 %v3544, %v3606
        %v3757 = vmul.bf16 %v3549, %v3608
        %v3758 = vmul.bf16 %v3550, %v3610
        %v3763 = vrot.slane %v3755, 4
        %v3764 = vrot.slane %v3757, 4
        %v3765 = vsel %vm1527, %v3763, %v3764
        %v3766 = vrot.slane %v3756, 4
        %v3767 = vrot.slane %v3758, 4
        %v3768 = vsel %vm1527, %v3766, %v3767
        %v3773 = vunpack.c.l.bf16 %v3765
        %v3774 = vunpack.c.l.bf16 %v3768
        %v3775 = vunpack.c.h.bf16 %v3765
        %v3776 = vunpack.c.h.bf16 %v3768
        %v3777 = vunpack.c.l.bf16 %v3764
        %v3778 = vunpack.c.l.bf16 %v3767
        %v3779 = vadd.f32 %v3773, %v3775
        %v3780 = vadd.f32 %v3779, %v3777
        %v3781 = vrot.slane %v3780, 4
        %v3782 = vadd.f32 %v3780, %v3781
        %v3783 = vrot.slane %v3782, 2
        %v3784 = vadd.f32 %v3782, %v3783
        %v3785 = vrot.slane %v3784, 1
        %v3786 = vadd.f32 %v3784, %v3785
        %v3787 = vadd.f32 %v3774, %v3776
        %v3788 = vadd.f32 %v3787, %v3778
        %v3789 = vrot.slane %v3788, 4
        %v3790 = vadd.f32 %v3788, %v3789
        %v3791 = vrot.slane %v3790, 2
        %v3792 = vadd.f32 %v3790, %v3791
        %v3793 = vrot.slane %v3792, 1
        %v3794 = vadd.f32 %v3792, %v3793
        %v3795 = vpack.c.bf16 %v3786, %v3786
        %v3796 = vpack.c.bf16 %v3794, %v3794
        %v3797 = vmul.bf16 %v3555, %v2636
        %v3798 = vmul.bf16 %v3556, %v2637
        %v3799 = vmul.bf16 %v3561, %v2638
        %v3800 = vmul.bf16 %v3562, %v2639
        %v3801 = vunpack.c.l.bf16 %v3797
        %v3802 = vunpack.c.l.bf16 %v3798
        %v3803 = vunpack.c.h.bf16 %v3797
        %v3804 = vunpack.c.h.bf16 %v3798
        %v3805 = vunpack.c.l.bf16 %v3799
        %v3806 = vunpack.c.l.bf16 %v3800
        %v3807 = vadd.f32 %v3801, %v3803
        %v3808 = vadd.f32 %v3807, %v3805
        %v3809 = vrot.slane %v3808, 4
        %v3810 = vadd.f32 %v3808, %v3809
        %v3811 = vrot.slane %v3810, 2
        %v3812 = vadd.f32 %v3810, %v3811
        %v3813 = vrot.slane %v3812, 1
        %v3814 = vadd.f32 %v3812, %v3813
        %v3815 = vadd.f32 %v3802, %v3804
        %v3816 = vadd.f32 %v3815, %v3806
        %v3817 = vrot.slane %v3816, 4
        %v3818 = vadd.f32 %v3816, %v3817
        %v3819 = vrot.slane %v3818, 2
        %v3820 = vadd.f32 %v3818, %v3819
        %v3821 = vrot.slane %v3820, 1
        %v3822 = vadd.f32 %v3820, %v3821
        %v3823 = vpack.c.bf16 %v3814, %v3814
        %v3824 = vpack.c.bf16 %v3822, %v3822
        %v3825 = vmul.bf16 %v3561, %v3605
        %v3826 = vmul.bf16 %v3562, %v3606
        %v3827 = vmul.bf16 %v3567, %v3608
        %v3828 = vmul.bf16 %v3568, %v3610
        %v3833 = vrot.slane %v3825, 4
        %v3834 = vrot.slane %v3827, 4
        %v3835 = vsel %vm1527, %v3833, %v3834
        %v3836 = vrot.slane %v3826, 4
        %v3837 = vrot.slane %v3828, 4
        %v3838 = vsel %vm1527, %v3836, %v3837
        %v3843 = vunpack.c.l.bf16 %v3835
        %v3844 = vunpack.c.l.bf16 %v3838
        %v3845 = vunpack.c.h.bf16 %v3835
        %v3846 = vunpack.c.h.bf16 %v3838
        %v3847 = vunpack.c.l.bf16 %v3834
        %v3848 = vunpack.c.l.bf16 %v3837
        %v3849 = vadd.f32 %v3843, %v3845
        %v3850 = vadd.f32 %v3849, %v3847
        %v3851 = vrot.slane %v3850, 4
        %v3852 = vadd.f32 %v3850, %v3851
        %v3853 = vrot.slane %v3852, 2
        %v3854 = vadd.f32 %v3852, %v3853
        %v3855 = vrot.slane %v3854, 1
        %v3856 = vadd.f32 %v3854, %v3855
        %v3857 = vadd.f32 %v3844, %v3846
        %v3858 = vadd.f32 %v3857, %v3848
        %v3859 = vrot.slane %v3858, 4
        %v3860 = vadd.f32 %v3858, %v3859
        %v3861 = vrot.slane %v3860, 2
        %v3862 = vadd.f32 %v3860, %v3861
        %v3863 = vrot.slane %v3862, 1
        %v3864 = vadd.f32 %v3862, %v3863
        %v3865 = vpack.c.bf16 %v3856, %v3856
        %v3866 = vpack.c.bf16 %v3864, %v3864
        %v3867 = vsel %vm1792, %v3599, %v3655
        %v3868 = vsel %vm1792, %v3600, %v3656
        %v3871 = vsel %vm394, %v3867, %v3683
        %v3875 = vsel %vm394, %v3868, %v3684
        %v3877 = vsel %vm1805, %v3871, %v3725
        %v3878 = vsel %vm1805, %v3875, %v3726
        %v3881 = vsel %vm1808, %v3877, %v3753
        %v3885 = vsel %vm1808, %v3878, %v3754
        %v3887 = vsel %vm1819, %v3881, %v3795
        %v3888 = vsel %vm1819, %v3885, %v3796
        %v3891 = vsel %vm1822, %v3887, %v3823
        %v3895 = vsel %vm1822, %v3888, %v3824
        %v3897 = vsel %vm1832, %v3891, %v3865
        %v3898 = vsel %vm1832, %v3895, %v3866
        %v3901 = vunpack.c.l.b16 %v3897
        %v3902 = vunpack.c.l.b16 %v3898
        %v3903 = vpack.c.b16 %v3902, %v3901
        %3905 = vst [vmem:[#allocation2 + $0x18] sm:$0xff] %v3903
        %v3906 = vmul.bf16 %v3503, %v2768
        %v3907 = vmul.bf16 %v3504, %v2769
        %v3908 = vmul.bf16 %v3509, %v2770
        %v3909 = vmul.bf16 %v3510, %v2771
        %v3910 = vunpack.c.l.bf16 %v3906
        %v3911 = vunpack.c.l.bf16 %v3907
        %v3912 = vunpack.c.h.bf16 %v3906
        %v3913 = vunpack.c.h.bf16 %v3907
        %v3914 = vunpack.c.l.bf16 %v3908
        %v3915 = vunpack.c.l.bf16 %v3909
        %v3916 = vadd.f32 %v3910, %v3912
        %v3917 = vadd.f32 %v3916, %v3914
        %v3918 = vrot.slane %v3917, 4
        %v3919 = vadd.f32 %v3917, %v3918
        %v3920 = vrot.slane %v3919, 2
        %v3921 = vadd.f32 %v3919, %v3920
        %v3922 = vrot.slane %v3921, 1
        %v3923 = vadd.f32 %v3921, %v3922
        %v3924 = vadd.f32 %v3911, %v3913
        %v3925 = vadd.f32 %v3924, %v3915
        %v3926 = vrot.slane %v3925, 4
        %v3927 = vadd.f32 %v3925, %v3926
        %v3928 = vrot.slane %v3927, 2
        %v3929 = vadd.f32 %v3927, %v3928
        %v3930 = vrot.slane %v3929, 1
        %v3931 = vadd.f32 %v3929, %v3930
        %v3932 = vpack.c.bf16 %v3923, %v3923
        %v3933 = vpack.c.bf16 %v3931, %v3931
        %v3938 = vrot.slane %v2768, 4
        %v3939 = vrot.slane %v2769, 4
        %v3940 = vrot.slane %v2770, 4
        %v3941 = vsel %vm1527, %v3938, %v3940
        %v3942 = vrot.slane %v2771, 4
        %v3943 = vsel %vm1527, %v3939, %v3942
        %v3948 = vmul.bf16 %v3509, %v3938
        %v3949 = vmul.bf16 %v3510, %v3939
        %v3950 = vmul.bf16 %v3515, %v3941
        %v3951 = vmul.bf16 %v3516, %v3943
        %v3956 = vrot.slane %v3948, 4
        %v3957 = vrot.slane %v3950, 4
        %v3958 = vsel %vm1527, %v3956, %v3957
        %v3959 = vrot.slane %v3949, 4
        %v3960 = vrot.slane %v3951, 4
        %v3961 = vsel %vm1527, %v3959, %v3960
        %v3966 = vunpack.c.l.bf16 %v3958
        %v3967 = vunpack.c.l.bf16 %v3961
        %v3968 = vunpack.c.h.bf16 %v3958
        %v3969 = vunpack.c.h.bf16 %v3961
        %v3970 = vunpack.c.l.bf16 %v3957
        %v3971 = vunpack.c.l.bf16 %v3960
        %v3972 = vadd.f32 %v3966, %v3968
        %v3973 = vadd.f32 %v3972, %v3970
        %v3974 = vrot.slane %v3973, 4
        %v3975 = vadd.f32 %v3973, %v3974
        %v3976 = vrot.slane %v3975, 2
        %v3977 = vadd.f32 %v3975, %v3976
        %v3978 = vrot.slane %v3977, 1
        %v3979 = vadd.f32 %v3977, %v3978
        %v3980 = vadd.f32 %v3967, %v3969
        %v3981 = vadd.f32 %v3980, %v3971
        %v3982 = vrot.slane %v3981, 4
        %v3983 = vadd.f32 %v3981, %v3982
        %v3984 = vrot.slane %v3983, 2
        %v3985 = vadd.f32 %v3983, %v3984
        %v3986 = vrot.slane %v3985, 1
        %v3987 = vadd.f32 %v3985, %v3986
        %v3988 = vpack.c.bf16 %v3979, %v3979
        %v3989 = vpack.c.bf16 %v3987, %v3987
        %v3990 = vmul.bf16 %v3521, %v2768
        %v3991 = vmul.bf16 %v3522, %v2769
        %v3992 = vmul.bf16 %v3527, %v2770
        %v3993 = vmul.bf16 %v3528, %v2771
        %v3994 = vunpack.c.l.bf16 %v3990
        %v3995 = vunpack.c.l.bf16 %v3991
        %v3996 = vunpack.c.h.bf16 %v3990
        %v3997 = vunpack.c.h.bf16 %v3991
        %v3998 = vunpack.c.l.bf16 %v3992
        %v3999 = vunpack.c.l.bf16 %v3993
        %v4000 = vadd.f32 %v3994, %v3996
        %v4001 = vadd.f32 %v4000, %v3998
        %v4002 = vrot.slane %v4001, 4
        %v4003 = vadd.f32 %v4001, %v4002
        %v4004 = vrot.slane %v4003, 2
        %v4005 = vadd.f32 %v4003, %v4004
        %v4006 = vrot.slane %v4005, 1
        %v4007 = vadd.f32 %v4005, %v4006
        %v4008 = vadd.f32 %v3995, %v3997
        %v4009 = vadd.f32 %v4008, %v3999
        %v4010 = vrot.slane %v4009, 4
        %v4011 = vadd.f32 %v4009, %v4010
        %v4012 = vrot.slane %v4011, 2
        %v4013 = vadd.f32 %v4011, %v4012
        %v4014 = vrot.slane %v4013, 1
        %v4015 = vadd.f32 %v4013, %v4014
        %v4016 = vpack.c.bf16 %v4007, %v4007
        %v4017 = vpack.c.bf16 %v4015, %v4015
        %v4018 = vmul.bf16 %v3527, %v3938
        %v4019 = vmul.bf16 %v3528, %v3939
        %v4020 = vmul.bf16 %v3533, %v3941
        %v4021 = vmul.bf16 %v3534, %v3943
        %v4026 = vrot.slane %v4018, 4
        %v4027 = vrot.slane %v4020, 4
        %v4028 = vsel %vm1527, %v4026, %v4027
        %v4029 = vrot.slane %v4019, 4
        %v4030 = vrot.slane %v4021, 4
        %v4031 = vsel %vm1527, %v4029, %v4030
        %v4036 = vunpack.c.l.bf16 %v4028
        %v4037 = vunpack.c.l.bf16 %v4031
        %v4038 = vunpack.c.h.bf16 %v4028
        %v4039 = vunpack.c.h.bf16 %v4031
        %v4040 = vunpack.c.l.bf16 %v4027
        %v4041 = vunpack.c.l.bf16 %v4030
        %v4042 = vadd.f32 %v4036, %v4038
        %v4043 = vadd.f32 %v4042, %v4040
        %v4044 = vrot.slane %v4043, 4
        %v4045 = vadd.f32 %v4043, %v4044
        %v4046 = vrot.slane %v4045, 2
        %v4047 = vadd.f32 %v4045, %v4046
        %v4048 = vrot.slane %v4047, 1
        %v4049 = vadd.f32 %v4047, %v4048
        %v4050 = vadd.f32 %v4037, %v4039
        %v4051 = vadd.f32 %v4050, %v4041
        %v4052 = vrot.slane %v4051, 4
        %v4053 = vadd.f32 %v4051, %v4052
        %v4054 = vrot.slane %v4053, 2
        %v4055 = vadd.f32 %v4053, %v4054
        %v4056 = vrot.slane %v4055, 1
        %v4057 = vadd.f32 %v4055, %v4056
        %v4058 = vpack.c.bf16 %v4049, %v4049
        %v4059 = vpack.c.bf16 %v4057, %v4057
        %v4060 = vmul.bf16 %v3539, %v2768
        %v4061 = vmul.bf16 %v3540, %v2769
        %v4062 = vmul.bf16 %v3545, %v2770
        %v4063 = vmul.bf16 %v3546, %v2771
        %v4064 = vunpack.c.l.bf16 %v4060
        %v4065 = vunpack.c.l.bf16 %v4061
        %v4066 = vunpack.c.h.bf16 %v4060
        %v4067 = vunpack.c.h.bf16 %v4061
        %v4068 = vunpack.c.l.bf16 %v4062
        %v4069 = vunpack.c.l.bf16 %v4063
        %v4070 = vadd.f32 %v4064, %v4066
        %v4071 = vadd.f32 %v4070, %v4068
        %v4072 = vrot.slane %v4071, 4
        %v4073 = vadd.f32 %v4071, %v4072
        %v4074 = vrot.slane %v4073, 2
        %v4075 = vadd.f32 %v4073, %v4074
        %v4076 = vrot.slane %v4075, 1
        %v4077 = vadd.f32 %v4075, %v4076
        %v4078 = vadd.f32 %v4065, %v4067
        %v4079 = vadd.f32 %v4078, %v4069
        %v4080 = vrot.slane %v4079, 4
        %v4081 = vadd.f32 %v4079, %v4080
        %v4082 = vrot.slane %v4081, 2
        %v4083 = vadd.f32 %v4081, %v4082
        %v4084 = vrot.slane %v4083, 1
        %v4085 = vadd.f32 %v4083, %v4084
        %v4086 = vpack.c.bf16 %v4077, %v4077
        %v4087 = vpack.c.bf16 %v4085, %v4085
        %v4088 = vmul.bf16 %v3545, %v3938
        %v4089 = vmul.bf16 %v3546, %v3939
        %v4090 = vmul.bf16 %v3551, %v3941
        %v4091 = vmul.bf16 %v3552, %v3943
        %v4096 = vrot.slane %v4088, 4
        %v4097 = vrot.slane %v4090, 4
        %v4098 = vsel %vm1527, %v4096, %v4097
        %v4099 = vrot.slane %v4089, 4
        %v4100 = vrot.slane %v4091, 4
        %v4101 = vsel %vm1527, %v4099, %v4100
        %v4106 = vunpack.c.l.bf16 %v4098
        %v4107 = vunpack.c.l.bf16 %v4101
        %v4108 = vunpack.c.h.bf16 %v4098
        %v4109 = vunpack.c.h.bf16 %v4101
        %v4110 = vunpack.c.l.bf16 %v4097
        %v4111 = vunpack.c.l.bf16 %v4100
        %v4112 = vadd.f32 %v4106, %v4108
        %v4113 = vadd.f32 %v4112, %v4110
        %v4114 = vrot.slane %v4113, 4
        %v4115 = vadd.f32 %v4113, %v4114
        %v4116 = vrot.slane %v4115, 2
        %v4117 = vadd.f32 %v4115, %v4116
        %v4118 = vrot.slane %v4117, 1
        %v4119 = vadd.f32 %v4117, %v4118
        %v4120 = vadd.f32 %v4107, %v4109
        %v4121 = vadd.f32 %v4120, %v4111
        %v4122 = vrot.slane %v4121, 4
        %v4123 = vadd.f32 %v4121, %v4122
        %v4124 = vrot.slane %v4123, 2
        %v4125 = vadd.f32 %v4123, %v4124
        %v4126 = vrot.slane %v4125, 1
        %v4127 = vadd.f32 %v4125, %v4126
        %v4128 = vpack.c.bf16 %v4119, %v4119
        %v4129 = vpack.c.bf16 %v4127, %v4127
        %v4130 = vmul.bf16 %v3557, %v2768
        %v4131 = vmul.bf16 %v3558, %v2769
        %v4132 = vmul.bf16 %v3563, %v2770
        %v4133 = vmul.bf16 %v3564, %v2771
        %v4134 = vunpack.c.l.bf16 %v4130
        %v4135 = vunpack.c.l.bf16 %v4131
        %v4136 = vunpack.c.h.bf16 %v4130
        %v4137 = vunpack.c.h.bf16 %v4131
        %v4138 = vunpack.c.l.bf16 %v4132
        %v4139 = vunpack.c.l.bf16 %v4133
        %v4140 = vadd.f32 %v4134, %v4136
        %v4141 = vadd.f32 %v4140, %v4138
        %v4142 = vrot.slane %v4141, 4
        %v4143 = vadd.f32 %v4141, %v4142
        %v4144 = vrot.slane %v4143, 2
        %v4145 = vadd.f32 %v4143, %v4144
        %v4146 = vrot.slane %v4145, 1
        %v4147 = vadd.f32 %v4145, %v4146
        %v4148 = vadd.f32 %v4135, %v4137
        %v4149 = vadd.f32 %v4148, %v4139
        %v4150 = vrot.slane %v4149, 4
        %v4151 = vadd.f32 %v4149, %v4150
        %v4152 = vrot.slane %v4151, 2
        %v4153 = vadd.f32 %v4151, %v4152
        %v4154 = vrot.slane %v4153, 1
        %v4155 = vadd.f32 %v4153, %v4154
        %v4156 = vpack.c.bf16 %v4147, %v4147
        %v4157 = vpack.c.bf16 %v4155, %v4155
        %v4158 = vmul.bf16 %v3563, %v3938
        %v4159 = vmul.bf16 %v3564, %v3939
        %v4160 = vmul.bf16 %v3569, %v3941
        %v4161 = vmul.bf16 %v3570, %v3943
        %v4166 = vrot.slane %v4158, 4
        %v4167 = vrot.slane %v4160, 4
        %v4168 = vsel %vm1527, %v4166, %v4167
        %v4169 = vrot.slane %v4159, 4
        %v4170 = vrot.slane %v4161, 4
        %v4171 = vsel %vm1527, %v4169, %v4170
        %v4176 = vunpack.c.l.bf16 %v4168
        %v4177 = vunpack.c.l.bf16 %v4171
        %v4178 = vunpack.c.h.bf16 %v4168
        %v4179 = vunpack.c.h.bf16 %v4171
        %v4180 = vunpack.c.l.bf16 %v4167
        %v4181 = vunpack.c.l.bf16 %v4170
        %v4182 = vadd.f32 %v4176, %v4178
        %v4183 = vadd.f32 %v4182, %v4180
        %v4184 = vrot.slane %v4183, 4
        %v4185 = vadd.f32 %v4183, %v4184
        %v4186 = vrot.slane %v4185, 2
        %v4187 = vadd.f32 %v4185, %v4186
        %v4188 = vrot.slane %v4187, 1
        %v4189 = vadd.f32 %v4187, %v4188
        %v4190 = vadd.f32 %v4177, %v4179
        %v4191 = vadd.f32 %v4190, %v4181
        %v4192 = vrot.slane %v4191, 4
        %v4193 = vadd.f32 %v4191, %v4192
        %v4194 = vrot.slane %v4193, 2
        %v4195 = vadd.f32 %v4193, %v4194
        %v4196 = vrot.slane %v4195, 1
        %v4197 = vadd.f32 %v4195, %v4196
        %v4198 = vpack.c.bf16 %v4189, %v4189
        %v4199 = vpack.c.bf16 %v4197, %v4197
        %v4200 = vsel %vm1792, %v3932, %v3988
        %v4201 = vsel %vm1792, %v3933, %v3989
        %v4204 = vsel %vm394, %v4200, %v4016
        %v4208 = vsel %vm394, %v4201, %v4017
        %v4210 = vsel %vm1805, %v4204, %v4058
        %v4211 = vsel %vm1805, %v4208, %v4059
        %v4214 = vsel %vm1808, %v4210, %v4086
        %v4218 = vsel %vm1808, %v4211, %v4087
        %v4220 = vsel %vm1819, %v4214, %v4128
        %v4221 = vsel %vm1819, %v4218, %v4129
        %v4224 = vsel %vm1822, %v4220, %v4156
        %v4228 = vsel %vm1822, %v4221, %v4157
        %v4230 = vsel %vm1832, %v4224, %v4198
        %v4231 = vsel %vm1832, %v4228, %v4199
        %v4234 = vunpack.c.l.b16 %v4230
        %v4235 = vunpack.c.l.b16 %v4231
        %v4236 = vpack.c.b16 %v4235, %v4234
        %4238 = vst [vmem:[#allocation2 + $0x20] sm:$0xff] %v4236
        %v4239 = vmul.bf16 %v3505, %v2900
        %v4240 = vmul.bf16 %v3506, %v2901
        %v4241 = vmul.bf16 %v3511, %v2902
        %v4242 = vmul.bf16 %v3512, %v2903
        %v4243 = vunpack.c.l.bf16 %v4239
        %v4244 = vunpack.c.l.bf16 %v4240
        %v4245 = vunpack.c.h.bf16 %v4239
        %v4246 = vunpack.c.h.bf16 %v4240
        %v4247 = vunpack.c.l.bf16 %v4241
        %v4248 = vunpack.c.l.bf16 %v4242
        %v4249 = vadd.f32 %v4243, %v4245
        %v4250 = vadd.f32 %v4249, %v4247
        %v4251 = vrot.slane %v4250, 4
        %v4252 = vadd.f32 %v4250, %v4251
        %v4253 = vrot.slane %v4252, 2
        %v4254 = vadd.f32 %v4252, %v4253
        %v4255 = vrot.slane %v4254, 1
        %v4256 = vadd.f32 %v4254, %v4255
        %v4257 = vadd.f32 %v4244, %v4246
        %v4258 = vadd.f32 %v4257, %v4248
        %v4259 = vrot.slane %v4258, 4
        %v4260 = vadd.f32 %v4258, %v4259
        %v4261 = vrot.slane %v4260, 2
        %v4262 = vadd.f32 %v4260, %v4261
        %v4263 = vrot.slane %v4262, 1
        %v4264 = vadd.f32 %v4262, %v4263
        %v4265 = vpack.c.bf16 %v4256, %v4256
        %v4266 = vpack.c.bf16 %v4264, %v4264
        %v4271 = vrot.slane %v2900, 4
        %v4272 = vrot.slane %v2901, 4
        %v4273 = vrot.slane %v2902, 4
        %v4274 = vsel %vm1527, %v4271, %v4273
        %v4275 = vrot.slane %v2903, 4
        %v4276 = vsel %vm1527, %v4272, %v4275
        %v4281 = vmul.bf16 %v3511, %v4271
        %v4282 = vmul.bf16 %v3512, %v4272
        %v4283 = vmul.bf16 %v3517, %v4274
        %v4284 = vmul.bf16 %v3518, %v4276
        %v4289 = vrot.slane %v4281, 4
        %v4290 = vrot.slane %v4283, 4
        %v4291 = vsel %vm1527, %v4289, %v4290
        %v4292 = vrot.slane %v4282, 4
        %v4293 = vrot.slane %v4284, 4
        %v4294 = vsel %vm1527, %v4292, %v4293
        %v4299 = vunpack.c.l.bf16 %v4291
        %v4300 = vunpack.c.l.bf16 %v4294
        %v4301 = vunpack.c.h.bf16 %v4291
        %v4302 = vunpack.c.h.bf16 %v4294
        %v4303 = vunpack.c.l.bf16 %v4290
        %v4304 = vunpack.c.l.bf16 %v4293
        %v4305 = vadd.f32 %v4299, %v4301
        %v4306 = vadd.f32 %v4305, %v4303
        %v4307 = vrot.slane %v4306, 4
        %v4308 = vadd.f32 %v4306, %v4307
        %v4309 = vrot.slane %v4308, 2
        %v4310 = vadd.f32 %v4308, %v4309
        %v4311 = vrot.slane %v4310, 1
        %v4312 = vadd.f32 %v4310, %v4311
        %v4313 = vadd.f32 %v4300, %v4302
        %v4314 = vadd.f32 %v4313, %v4304
        %v4315 = vrot.slane %v4314, 4
        %v4316 = vadd.f32 %v4314, %v4315
        %v4317 = vrot.slane %v4316, 2
        %v4318 = vadd.f32 %v4316, %v4317
        %v4319 = vrot.slane %v4318, 1
        %v4320 = vadd.f32 %v4318, %v4319
        %v4321 = vpack.c.bf16 %v4312, %v4312
        %v4322 = vpack.c.bf16 %v4320, %v4320
        %v4323 = vmul.bf16 %v3523, %v2900
        %v4324 = vmul.bf16 %v3524, %v2901
        %v4325 = vmul.bf16 %v3529, %v2902
        %v4326 = vmul.bf16 %v3530, %v2903
        %v4327 = vunpack.c.l.bf16 %v4323
        %v4328 = vunpack.c.l.bf16 %v4324
        %v4329 = vunpack.c.h.bf16 %v4323
        %v4330 = vunpack.c.h.bf16 %v4324
        %v4331 = vunpack.c.l.bf16 %v4325
        %v4332 = vunpack.c.l.bf16 %v4326
        %v4333 = vadd.f32 %v4327, %v4329
        %v4334 = vadd.f32 %v4333, %v4331
        %v4335 = vrot.slane %v4334, 4
        %v4336 = vadd.f32 %v4334, %v4335
        %v4337 = vrot.slane %v4336, 2
        %v4338 = vadd.f32 %v4336, %v4337
        %v4339 = vrot.slane %v4338, 1
        %v4340 = vadd.f32 %v4338, %v4339
        %v4341 = vadd.f32 %v4328, %v4330
        %v4342 = vadd.f32 %v4341, %v4332
        %v4343 = vrot.slane %v4342, 4
        %v4344 = vadd.f32 %v4342, %v4343
        %v4345 = vrot.slane %v4344, 2
        %v4346 = vadd.f32 %v4344, %v4345
        %v4347 = vrot.slane %v4346, 1
        %v4348 = vadd.f32 %v4346, %v4347
        %v4349 = vpack.c.bf16 %v4340, %v4340
        %v4350 = vpack.c.bf16 %v4348, %v4348
        %v4351 = vmul.bf16 %v3529, %v4271
        %v4352 = vmul.bf16 %v3530, %v4272
        %v4353 = vmul.bf16 %v3535, %v4274
        %v4354 = vmul.bf16 %v3536, %v4276
        %v4359 = vrot.slane %v4351, 4
        %v4360 = vrot.slane %v4353, 4
        %v4361 = vsel %vm1527, %v4359, %v4360
        %v4362 = vrot.slane %v4352, 4
        %v4363 = vrot.slane %v4354, 4
        %v4364 = vsel %vm1527, %v4362, %v4363
        %v4369 = vunpack.c.l.bf16 %v4361
        %v4370 = vunpack.c.l.bf16 %v4364
        %v4371 = vunpack.c.h.bf16 %v4361
        %v4372 = vunpack.c.h.bf16 %v4364
        %v4373 = vunpack.c.l.bf16 %v4360
        %v4374 = vunpack.c.l.bf16 %v4363
        %v4375 = vadd.f32 %v4369, %v4371
        %v4376 = vadd.f32 %v4375, %v4373
        %v4377 = vrot.slane %v4376, 4
        %v4378 = vadd.f32 %v4376, %v4377
        %v4379 = vrot.slane %v4378, 2
        %v4380 = vadd.f32 %v4378, %v4379
        %v4381 = vrot.slane %v4380, 1
        %v4382 = vadd.f32 %v4380, %v4381
        %v4383 = vadd.f32 %v4370, %v4372
        %v4384 = vadd.f32 %v4383, %v4374
        %v4385 = vrot.slane %v4384, 4
        %v4386 = vadd.f32 %v4384, %v4385
        %v4387 = vrot.slane %v4386, 2
        %v4388 = vadd.f32 %v4386, %v4387
        %v4389 = vrot.slane %v4388, 1
        %v4390 = vadd.f32 %v4388, %v4389
        %v4391 = vpack.c.bf16 %v4382, %v4382
        %v4392 = vpack.c.bf16 %v4390, %v4390
        %v4393 = vmul.bf16 %v3541, %v2900
        %v4394 = vmul.bf16 %v3542, %v2901
        %v4395 = vmul.bf16 %v3547, %v2902
        %v4396 = vmul.bf16 %v3548, %v2903
        %v4397 = vunpack.c.l.bf16 %v4393
        %v4398 = vunpack.c.l.bf16 %v4394
        %v4399 = vunpack.c.h.bf16 %v4393
        %v4400 = vunpack.c.h.bf16 %v4394
        %v4401 = vunpack.c.l.bf16 %v4395
        %v4402 = vunpack.c.l.bf16 %v4396
        %v4403 = vadd.f32 %v4397, %v4399
        %v4404 = vadd.f32 %v4403, %v4401
        %v4405 = vrot.slane %v4404, 4
        %v4406 = vadd.f32 %v4404, %v4405
        %v4407 = vrot.slane %v4406, 2
        %v4408 = vadd.f32 %v4406, %v4407
        %v4409 = vrot.slane %v4408, 1
        %v4410 = vadd.f32 %v4408, %v4409
        %v4411 = vadd.f32 %v4398, %v4400
        %v4412 = vadd.f32 %v4411, %v4402
        %v4413 = vrot.slane %v4412, 4
        %v4414 = vadd.f32 %v4412, %v4413
        %v4415 = vrot.slane %v4414, 2
        %v4416 = vadd.f32 %v4414, %v4415
        %v4417 = vrot.slane %v4416, 1
        %v4418 = vadd.f32 %v4416, %v4417
        %v4419 = vpack.c.bf16 %v4410, %v4410
        %v4420 = vpack.c.bf16 %v4418, %v4418
        %v4421 = vmul.bf16 %v3547, %v4271
        %v4422 = vmul.bf16 %v3548, %v4272
        %v4423 = vmul.bf16 %v3553, %v4274
        %v4424 = vmul.bf16 %v3554, %v4276
        %v4429 = vrot.slane %v4421, 4
        %v4430 = vrot.slane %v4423, 4
        %v4431 = vsel %vm1527, %v4429, %v4430
        %v4432 = vrot.slane %v4422, 4
        %v4433 = vrot.slane %v4424, 4
        %v4434 = vsel %vm1527, %v4432, %v4433
        %v4439 = vunpack.c.l.bf16 %v4431
        %v4440 = vunpack.c.l.bf16 %v4434
        %v4441 = vunpack.c.h.bf16 %v4431
        %v4442 = vunpack.c.h.bf16 %v4434
        %v4443 = vunpack.c.l.bf16 %v4430
        %v4444 = vunpack.c.l.bf16 %v4433
        %v4445 = vadd.f32 %v4439, %v4441
        %v4446 = vadd.f32 %v4445, %v4443
        %v4447 = vrot.slane %v4446, 4
        %v4448 = vadd.f32 %v4446, %v4447
        %v4449 = vrot.slane %v4448, 2
        %v4450 = vadd.f32 %v4448, %v4449
        %v4451 = vrot.slane %v4450, 1
        %v4452 = vadd.f32 %v4450, %v4451
        %v4453 = vadd.f32 %v4440, %v4442
        %v4454 = vadd.f32 %v4453, %v4444
        %v4455 = vrot.slane %v4454, 4
        %v4456 = vadd.f32 %v4454, %v4455
        %v4457 = vrot.slane %v4456, 2
        %v4458 = vadd.f32 %v4456, %v4457
        %v4459 = vrot.slane %v4458, 1
        %v4460 = vadd.f32 %v4458, %v4459
        %v4461 = vpack.c.bf16 %v4452, %v4452
        %v4462 = vpack.c.bf16 %v4460, %v4460
        %v4463 = vmul.bf16 %v3559, %v2900
        %v4464 = vmul.bf16 %v3560, %v2901
        %v4465 = vmul.bf16 %v3565, %v2902
        %v4466 = vmul.bf16 %v3566, %v2903
        %v4467 = vunpack.c.l.bf16 %v4463
        %v4468 = vunpack.c.l.bf16 %v4464
        %v4469 = vunpack.c.h.bf16 %v4463
        %v4470 = vunpack.c.h.bf16 %v4464
        %v4471 = vunpack.c.l.bf16 %v4465
        %v4472 = vunpack.c.l.bf16 %v4466
        %v4473 = vadd.f32 %v4467, %v4469
        %v4474 = vadd.f32 %v4473, %v4471
        %v4475 = vrot.slane %v4474, 4
        %v4476 = vadd.f32 %v4474, %v4475
        %v4477 = vrot.slane %v4476, 2
        %v4478 = vadd.f32 %v4476, %v4477
        %v4479 = vrot.slane %v4478, 1
        %v4480 = vadd.f32 %v4478, %v4479
        %v4481 = vadd.f32 %v4468, %v4470
        %v4482 = vadd.f32 %v4481, %v4472
        %v4483 = vrot.slane %v4482, 4
        %v4484 = vadd.f32 %v4482, %v4483
        %v4485 = vrot.slane %v4484, 2
        %v4486 = vadd.f32 %v4484, %v4485
        %v4487 = vrot.slane %v4486, 1
        %v4488 = vadd.f32 %v4486, %v4487
        %v4489 = vpack.c.bf16 %v4480, %v4480
        %v4490 = vpack.c.bf16 %v4488, %v4488
        %v4491 = vmul.bf16 %v3565, %v4271
        %v4492 = vmul.bf16 %v3566, %v4272
        %v4493 = vmul.bf16 %v3571, %v4274
        %v4494 = vmul.bf16 %v3572, %v4276
        %v4499 = vrot.slane %v4491, 4
        %v4500 = vrot.slane %v4493, 4
        %v4501 = vsel %vm1527, %v4499, %v4500
        %v4502 = vrot.slane %v4492, 4
        %v4503 = vrot.slane %v4494, 4
        %v4504 = vsel %vm1527, %v4502, %v4503
        %v4509 = vunpack.c.l.bf16 %v4501
        %v4510 = vunpack.c.l.bf16 %v4504
        %v4511 = vunpack.c.h.bf16 %v4501
        %v4512 = vunpack.c.h.bf16 %v4504
        %v4513 = vunpack.c.l.bf16 %v4500
        %v4514 = vunpack.c.l.bf16 %v4503
        %v4515 = vadd.f32 %v4509, %v4511
        %v4516 = vadd.f32 %v4515, %v4513
        %v4517 = vrot.slane %v4516, 4
        %v4518 = vadd.f32 %v4516, %v4517
        %v4519 = vrot.slane %v4518, 2
        %v4520 = vadd.f32 %v4518, %v4519
        %v4521 = vrot.slane %v4520, 1
        %v4522 = vadd.f32 %v4520, %v4521
        %v4523 = vadd.f32 %v4510, %v4512
        %v4524 = vadd.f32 %v4523, %v4514
        %v4525 = vrot.slane %v4524, 4
        %v4526 = vadd.f32 %v4524, %v4525
        %v4527 = vrot.slane %v4526, 2
        %v4528 = vadd.f32 %v4526, %v4527
        %v4529 = vrot.slane %v4528, 1
        %v4530 = vadd.f32 %v4528, %v4529
        %v4531 = vpack.c.bf16 %v4522, %v4522
        %v4532 = vpack.c.bf16 %v4530, %v4530
        %v4533 = vsel %vm1792, %v4265, %v4321
        %v4534 = vsel %vm1792, %v4266, %v4322
        %v4537 = vsel %vm394, %v4533, %v4349
        %v4541 = vsel %vm394, %v4534, %v4350
        %v4543 = vsel %vm1805, %v4537, %v4391
        %v4544 = vsel %vm1805, %v4541, %v4392
        %v4547 = vsel %vm1808, %v4543, %v4419
        %v4551 = vsel %vm1808, %v4544, %v4420
        %v4553 = vsel %vm1819, %v4547, %v4461
        %v4554 = vsel %vm1819, %v4551, %v4462
        %v4557 = vsel %vm1822, %v4553, %v4489
        %v4561 = vsel %vm1822, %v4554, %v4490
        %v4563 = vsel %vm1832, %v4557, %v4531
        %v4564 = vsel %vm1832, %v4561, %v4532
        %v4567 = vunpack.c.l.b16 %v4563
        %v4568 = vunpack.c.l.b16 %v4564
        %v4569 = vpack.c.b16 %v4568, %v4567
        %4571 = vst [vmem:[#allocation2 + $0x28] sm:$0xff] %v4569
        %v4572 = vlaneseq
        %v4573 = vshrl.u32 %v4572, 7
        %v4574 = vsub.s32 7, %v4573
        %v4575 = vrot.slane %v415, %v4574
        %v4576 = vlaneseq
        %v4577 = vshrl.u32 %v4576, 7
        %v4578 = vsub.s32 7, %v4577
        %v4579 = vrot.slane %v416, %v4578
        %vm4580 = vcmp.eq.s32.totalorder %v426, %v4575
        %vm4581 = vcmp.eq.s32.totalorder %v426, %v4579
        %vm4582 = vcmp.eq.s32.totalorder %v427, %v4575
        %vm4583 = vcmp.eq.s32.totalorder %v427, %v4579
        %vm4584 = vcmp.eq.s32.totalorder %v428, %v4575
        %vm4585 = vcmp.eq.s32.totalorder %v428, %v4579
        %v4586 = vlaneseq
        %v4587 = vshrl.u32 %v4586, 7
        %v4588 = vsub.s32 7, %v4587
        %v4589 = vrot.slane %v405, %v4588
        %v4590 = vlaneseq
        %v4591 = vshrl.u32 %v4590, 7
        %v4592 = vsub.s32 7, %v4591
        %v4593 = vrot.slane %v406, %v4592
        %v4594 = vsel %vm4580, %v4589, 0.0
        %v4595 = vsel %vm4581, %v4593, 0.0
        %v4596 = vsel %vm4582, %v4589, 0.0
        %v4597 = vsel %vm4583, %v4593, 0.0
        %v4598 = vsel %vm4584, %v4589, 0.0
        %v4599 = vsel %vm4585, %v4593, 0.0
        %v4600 = vlaneseq
        %v4601 = vshrl.u32 %v4600, 7
        %v4602 = vsub.s32 7, %v4601
        %v4603 = vrot.slane %v419, %v4602
        %v4604 = vlaneseq
        %v4605 = vshrl.u32 %v4604, 7
        %v4606 = vsub.s32 7, %v4605
        %v4607 = vrot.slane %v420, %v4606
        %vm4608 = vcmp.eq.s32.totalorder %v426, %v4603
        %vm4609 = vcmp.eq.s32.totalorder %v426, %v4607
        %vm4610 = vcmp.eq.s32.totalorder %v427, %v4603
        %vm4611 = vcmp.eq.s32.totalorder %v427, %v4607
        %vm4612 = vcmp.eq.s32.totalorder %v428, %v4603
        %vm4613 = vcmp.eq.s32.totalorder %v428, %v4607
        %v4614 = vlaneseq
        %v4615 = vshrl.u32 %v4614, 7
        %v4616 = vsub.s32 7, %v4615
        %v4617 = vrot.slane %v409, %v4616
        %v4618 = vlaneseq
        %v4619 = vshrl.u32 %v4618, 7
        %v4620 = vsub.s32 7, %v4619
        %v4621 = vrot.slane %v410, %v4620
        %v4622 = vsel %vm4608, %v4617, 0.0
        %v4623 = vsel %vm4609, %v4621, 0.0
        %v4624 = vsel %vm4610, %v4617, 0.0
        %v4625 = vsel %vm4611, %v4621, 0.0
        %v4626 = vsel %vm4612, %v4617, 0.0
        %v4627 = vsel %vm4613, %v4621, 0.0
        %v4628 = vadd.f32 %v4594, %v4622
        %v4629 = vadd.f32 %v4595, %v4623
        %v4630 = vadd.f32 %v4596, %v4624
        %v4631 = vadd.f32 %v4597, %v4625
        %v4632 = vadd.f32 %v4598, %v4626
        %v4633 = vadd.f32 %v4599, %v4627
        %v4634 = vpack.c.bf16 %v4630, %v4628
        %v4635 = vpack.c.bf16 %v4631, %v4629
        %v4636 = vpack.c.bf16 %v4632, %v4632
        %v4637 = vpack.c.bf16 %v4633, %v4633
        %v4638 = vlaneseq
        %v4639 = vshrl.u32 %v4638, 7
        %v4640 = vsub.s32 6, %v4639
        %v4641 = vrot.slane %v413, %v4640
        %v4642 = vlaneseq
        %v4643 = vshrl.u32 %v4642, 7
        %v4644 = vsub.s32 6, %v4643
        %v4645 = vrot.slane %v414, %v4644
        %vm4646 = vcmp.eq.s32.totalorder %v426, %v4641
        %vm4647 = vcmp.eq.s32.totalorder %v426, %v4645
        %vm4648 = vcmp.eq.s32.totalorder %v427, %v4641
        %vm4649 = vcmp.eq.s32.totalorder %v427, %v4645
        %vm4650 = vcmp.eq.s32.totalorder %v428, %v4641
        %vm4651 = vcmp.eq.s32.totalorder %v428, %v4645
        %v4652 = vlaneseq
        %v4653 = vshrl.u32 %v4652, 7
        %v4654 = vsub.s32 6, %v4653
        %v4655 = vrot.slane %v342, %v4654
        %v4656 = vlaneseq
        %v4657 = vshrl.u32 %v4656, 7
        %v4658 = vsub.s32 6, %v4657
        %v4659 = vrot.slane %v343, %v4658
        %v4660 = vsel %vm4646, %v4655, 0.0
        %v4661 = vsel %vm4647, %v4659, 0.0
        %v4662 = vsel %vm4648, %v4655, 0.0
        %v4663 = vsel %vm4649, %v4659, 0.0
        %v4664 = vsel %vm4650, %v4655, 0.0
        %v4665 = vsel %vm4651, %v4659, 0.0
        %v4666 = vlaneseq
        %v4667 = vshrl.u32 %v4666, 7
        %v4668 = vsub.s32 6, %v4667
        %v4669 = vrot.slane %v417, %v4668
        %v4670 = vlaneseq
        %v4671 = vshrl.u32 %v4670, 7
        %v4672 = vsub.s32 6, %v4671
        %v4673 = vrot.slane %v418, %v4672
        %vm4674 = vcmp.eq.s32.totalorder %v426, %v4669
        %vm4675 = vcmp.eq.s32.totalorder %v426, %v4673
        %vm4676 = vcmp.eq.s32.totalorder %v427, %v4669
        %vm4677 = vcmp.eq.s32.totalorder %v427, %v4673
        %vm4678 = vcmp.eq.s32.totalorder %v428, %v4669
        %vm4679 = vcmp.eq.s32.totalorder %v428, %v4673
        %v4680 = vlaneseq
        %v4681 = vshrl.u32 %v4680, 7
        %v4682 = vsub.s32 6, %v4681
        %v4683 = vrot.slane %v350, %v4682
        %v4684 = vlaneseq
        %v4685 = vshrl.u32 %v4684, 7
        %v4686 = vsub.s32 6, %v4685
        %v4687 = vrot.slane %v351, %v4686
        %v4688 = vsel %vm4674, %v4683, 0.0
        %v4689 = vsel %vm4675, %v4687, 0.0
        %v4690 = vsel %vm4676, %v4683, 0.0
        %v4691 = vsel %vm4677, %v4687, 0.0
        %v4692 = vsel %vm4678, %v4683, 0.0
        %v4693 = vsel %vm4679, %v4687, 0.0
        %v4694 = vadd.f32 %v4660, %v4688
        %v4695 = vadd.f32 %v4661, %v4689
        %v4696 = vadd.f32 %v4662, %v4690
        %v4697 = vadd.f32 %v4663, %v4691
        %v4698 = vadd.f32 %v4664, %v4692
        %v4699 = vadd.f32 %v4665, %v4693
        %v4700 = vpack.c.bf16 %v4696, %v4694
        %v4701 = vpack.c.bf16 %v4697, %v4695
        %v4702 = vpack.c.bf16 %v4698, %v4698
        %v4703 = vpack.c.bf16 %v4699, %v4699
        %v4704 = vlaneseq
        %v4705 = vshrl.u32 %v4704, 7
        %v4706 = vsub.s32 0, %v4705
        %v4707 = vrot.slane %v421, %v4706
        %v4708 = vlaneseq
        %v4709 = vshrl.u32 %v4708, 7
        %v4710 = vsub.s32 0, %v4709
        %v4711 = vrot.slane %v422, %v4710
        %vm4712 = vcmp.eq.s32.totalorder %v426, %v4707
        %vm4713 = vcmp.eq.s32.totalorder %v426, %v4711
        %vm4714 = vcmp.eq.s32.totalorder %v427, %v4707
        %vm4715 = vcmp.eq.s32.totalorder %v427, %v4711
        %vm4716 = vcmp.eq.s32.totalorder %v428, %v4707
        %vm4717 = vcmp.eq.s32.totalorder %v428, %v4711
        %v4718 = vlaneseq
        %v4719 = vshrl.u32 %v4718, 7
        %v4720 = vsub.s32 0, %v4719
        %v4721 = vrot.slane %v407, %v4720
        %v4722 = vlaneseq
        %v4723 = vshrl.u32 %v4722, 7
        %v4724 = vsub.s32 0, %v4723
        %v4725 = vrot.slane %v408, %v4724
        %v4726 = vsel %vm4712, %v4721, 0.0
        %v4727 = vsel %vm4713, %v4725, 0.0
        %v4728 = vsel %vm4714, %v4721, 0.0
        %v4729 = vsel %vm4715, %v4725, 0.0
        %v4730 = vsel %vm4716, %v4721, 0.0
        %v4731 = vsel %vm4717, %v4725, 0.0
        %v4732 = vlaneseq
        %v4733 = vshrl.u32 %v4732, 7
        %v4734 = vsub.s32 0, %v4733
        %v4735 = vrot.slane %v423, %v4734
        %v4736 = vlaneseq
        %v4737 = vshrl.u32 %v4736, 7
        %v4738 = vsub.s32 0, %v4737
        %v4739 = vrot.slane %v424, %v4738
        %vm4740 = vcmp.eq.s32.totalorder %v426, %v4735
        %vm4741 = vcmp.eq.s32.totalorder %v426, %v4739
        %vm4742 = vcmp.eq.s32.totalorder %v427, %v4735
        %vm4743 = vcmp.eq.s32.totalorder %v427, %v4739
        %vm4744 = vcmp.eq.s32.totalorder %v428, %v4735
        %vm4745 = vcmp.eq.s32.totalorder %v428, %v4739
        %v4746 = vlaneseq
        %v4747 = vshrl.u32 %v4746, 7
        %v4748 = vsub.s32 0, %v4747
        %v4749 = vrot.slane %v411, %v4748
        %v4750 = vlaneseq
        %v4751 = vshrl.u32 %v4750, 7
        %v4752 = vsub.s32 0, %v4751
        %v4753 = vrot.slane %v412, %v4752
        %v4754 = vsel %vm4740, %v4749, 0.0
        %v4755 = vsel %vm4741, %v4753, 0.0
        %v4756 = vsel %vm4742, %v4749, 0.0
        %v4757 = vsel %vm4743, %v4753, 0.0
        %v4758 = vsel %vm4744, %v4749, 0.0
        %v4759 = vsel %vm4745, %v4753, 0.0
        %v4760 = vadd.f32 %v4726, %v4754
        %v4761 = vadd.f32 %v4727, %v4755
        %v4762 = vadd.f32 %v4728, %v4756
        %v4763 = vadd.f32 %v4729, %v4757
        %v4764 = vadd.f32 %v4730, %v4758
        %v4765 = vadd.f32 %v4731, %v4759
        %v4766 = vpack.c.bf16 %v4762, %v4760
        %v4767 = vpack.c.bf16 %v4763, %v4761
        %v4768 = vpack.c.bf16 %v4764, %v4764
        %v4769 = vpack.c.bf16 %v4765, %v4765
        %v4770 = vlaneseq
        %v4771 = vshrl.u32 %v4770, 7
        %v4772 = vsub.s32 7, %v4771
        %v4773 = vrot.slane %v413, %v4772
        %v4774 = vlaneseq
        %v4775 = vshrl.u32 %v4774, 7
        %v4776 = vsub.s32 7, %v4775
        %v4777 = vrot.slane %v414, %v4776
        %vm4778 = vcmp.eq.s32.totalorder %v426, %v4773
        %vm4779 = vcmp.eq.s32.totalorder %v426, %v4777
        %vm4780 = vcmp.eq.s32.totalorder %v427, %v4773
        %vm4781 = vcmp.eq.s32.totalorder %v427, %v4777
        %vm4782 = vcmp.eq.s32.totalorder %v428, %v4773
        %vm4783 = vcmp.eq.s32.totalorder %v428, %v4777
        %v4784 = vlaneseq
        %v4785 = vshrl.u32 %v4784, 7
        %v4786 = vsub.s32 7, %v4785
        %v4787 = vrot.slane %v342, %v4786
        %v4788 = vlaneseq
        %v4789 = vshrl.u32 %v4788, 7
        %v4790 = vsub.s32 7, %v4789
        %v4791 = vrot.slane %v343, %v4790
        %v4792 = vsel %vm4778, %v4787, 0.0
        %v4793 = vsel %vm4779, %v4791, 0.0
        %v4794 = vsel %vm4780, %v4787, 0.0
        %v4795 = vsel %vm4781, %v4791, 0.0
        %v4796 = vsel %vm4782, %v4787, 0.0
        %v4797 = vsel %vm4783, %v4791, 0.0
        %v4798 = vlaneseq
        %v4799 = vshrl.u32 %v4798, 7
        %v4800 = vsub.s32 7, %v4799
        %v4801 = vrot.slane %v417, %v4800
        %v4802 = vlaneseq
        %v4803 = vshrl.u32 %v4802, 7
        %v4804 = vsub.s32 7, %v4803
        %v4805 = vrot.slane %v418, %v4804
        %vm4806 = vcmp.eq.s32.totalorder %v426, %v4801
        %vm4807 = vcmp.eq.s32.totalorder %v426, %v4805
        %vm4808 = vcmp.eq.s32.totalorder %v427, %v4801
        %vm4809 = vcmp.eq.s32.totalorder %v427, %v4805
        %vm4810 = vcmp.eq.s32.totalorder %v428, %v4801
        %vm4811 = vcmp.eq.s32.totalorder %v428, %v4805
        %v4812 = vlaneseq
        %v4813 = vshrl.u32 %v4812, 7
        %v4814 = vsub.s32 7, %v4813
        %v4815 = vrot.slane %v350, %v4814
        %v4816 = vlaneseq
        %v4817 = vshrl.u32 %v4816, 7
        %v4818 = vsub.s32 7, %v4817
        %v4819 = vrot.slane %v351, %v4818
        %v4820 = vsel %vm4806, %v4815, 0.0
        %v4821 = vsel %vm4807, %v4819, 0.0
        %v4822 = vsel %vm4808, %v4815, 0.0
        %v4823 = vsel %vm4809, %v4819, 0.0
        %v4824 = vsel %vm4810, %v4815, 0.0
        %v4825 = vsel %vm4811, %v4819, 0.0
        %v4826 = vadd.f32 %v4792, %v4820
        %v4827 = vadd.f32 %v4793, %v4821
        %v4828 = vadd.f32 %v4794, %v4822
        %v4829 = vadd.f32 %v4795, %v4823
        %v4830 = vadd.f32 %v4796, %v4824
        %v4831 = vadd.f32 %v4797, %v4825
        %v4832 = vpack.c.bf16 %v4828, %v4826
        %v4833 = vpack.c.bf16 %v4829, %v4827
        %v4834 = vpack.c.bf16 %v4830, %v4830
        %v4835 = vpack.c.bf16 %v4831, %v4831
        %v4836 = vlaneseq
        %v4837 = vshrl.u32 %v4836, 7
        %v4838 = vsub.s32 1, %v4837
        %v4839 = vrot.slane %v421, %v4838
        %v4840 = vlaneseq
        %v4841 = vshrl.u32 %v4840, 7
        %v4842 = vsub.s32 1, %v4841
        %v4843 = vrot.slane %v422, %v4842
        %vm4844 = vcmp.eq.s32.totalorder %v426, %v4839
        %vm4845 = vcmp.eq.s32.totalorder %v426, %v4843
        %vm4846 = vcmp.eq.s32.totalorder %v427, %v4839
        %vm4847 = vcmp.eq.s32.totalorder %v427, %v4843
        %vm4848 = vcmp.eq.s32.totalorder %v428, %v4839
        %vm4849 = vcmp.eq.s32.totalorder %v428, %v4843
        %v4850 = vlaneseq
        %v4851 = vshrl.u32 %v4850, 7
        %v4852 = vsub.s32 1, %v4851
        %v4853 = vrot.slane %v407, %v4852
        %v4854 = vlaneseq
        %v4855 = vshrl.u32 %v4854, 7
        %v4856 = vsub.s32 1, %v4855
        %v4857 = vrot.slane %v408, %v4856
        %v4858 = vsel %vm4844, %v4853, 0.0
        %v4859 = vsel %vm4845, %v4857, 0.0
        %v4860 = vsel %vm4846, %v4853, 0.0
        %v4861 = vsel %vm4847, %v4857, 0.0
        %v4862 = vsel %vm4848, %v4853, 0.0
        %v4863 = vsel %vm4849, %v4857, 0.0
        %v4864 = vlaneseq
        %v4865 = vshrl.u32 %v4864, 7
        %v4866 = vsub.s32 1, %v4865
        %v4867 = vrot.slane %v423, %v4866
        %v4868 = vlaneseq
        %v4869 = vshrl.u32 %v4868, 7
        %v4870 = vsub.s32 1, %v4869
        %v4871 = vrot.slane %v424, %v4870
        %vm4872 = vcmp.eq.s32.totalorder %v426, %v4867
        %vm4873 = vcmp.eq.s32.totalorder %v426, %v4871
        %vm4874 = vcmp.eq.s32.totalorder %v427, %v4867
        %vm4875 = vcmp.eq.s32.totalorder %v427, %v4871
        %vm4876 = vcmp.eq.s32.totalorder %v428, %v4867
        %vm4877 = vcmp.eq.s32.totalorder %v428, %v4871
        %v4878 = vlaneseq
        %v4879 = vshrl.u32 %v4878, 7
        %v4880 = vsub.s32 1, %v4879
        %v4881 = vrot.slane %v411, %v4880
        %v4882 = vlaneseq
        %v4883 = vshrl.u32 %v4882, 7
        %v4884 = vsub.s32 1, %v4883
        %v4885 = vrot.slane %v412, %v4884
        %v4886 = vsel %vm4872, %v4881, 0.0
        %v4887 = vsel %vm4873, %v4885, 0.0
        %v4888 = vsel %vm4874, %v4881, 0.0
        %v4889 = vsel %vm4875, %v4885, 0.0
        %v4890 = vsel %vm4876, %v4881, 0.0
        %v4891 = vsel %vm4877, %v4885, 0.0
        %v4892 = vadd.f32 %v4858, %v4886
        %v4893 = vadd.f32 %v4859, %v4887
        %v4894 = vadd.f32 %v4860, %v4888
        %v4895 = vadd.f32 %v4861, %v4889
        %v4896 = vadd.f32 %v4862, %v4890
        %v4897 = vadd.f32 %v4863, %v4891
        %v4898 = vpack.c.bf16 %v4894, %v4892
        %v4899 = vpack.c.bf16 %v4895, %v4893
        %v4900 = vpack.c.bf16 %v4896, %v4896
        %v4901 = vpack.c.bf16 %v4897, %v4897
        %v4902 = vlaneseq
        %v4903 = vshrl.u32 %v4902, 7
        %v4904 = vsub.s32 0, %v4903
        %v4905 = vrot.slane %v415, %v4904
        %v4906 = vlaneseq
        %v4907 = vshrl.u32 %v4906, 7
        %v4908 = vsub.s32 0, %v4907
        %v4909 = vrot.slane %v416, %v4908
        %vm4910 = vcmp.eq.s32.totalorder %v426, %v4905
        %vm4911 = vcmp.eq.s32.totalorder %v426, %v4909
        %vm4912 = vcmp.eq.s32.totalorder %v427, %v4905
        %vm4913 = vcmp.eq.s32.totalorder %v427, %v4909
        %vm4914 = vcmp.eq.s32.totalorder %v428, %v4905
        %vm4915 = vcmp.eq.s32.totalorder %v428, %v4909
        %v4916 = vlaneseq
        %v4917 = vshrl.u32 %v4916, 7
        %v4918 = vsub.s32 0, %v4917
        %v4919 = vrot.slane %v344, %v4918
        %v4920 = vlaneseq
        %v4921 = vshrl.u32 %v4920, 7
        %v4922 = vsub.s32 0, %v4921
        %v4923 = vrot.slane %v345, %v4922
        %v4924 = vsel %vm4910, %v4919, 0.0
        %v4925 = vsel %vm4911, %v4923, 0.0
        %v4926 = vsel %vm4912, %v4919, 0.0
        %v4927 = vsel %vm4913, %v4923, 0.0
        %v4928 = vsel %vm4914, %v4919, 0.0
        %v4929 = vsel %vm4915, %v4923, 0.0
        %v4930 = vlaneseq
        %v4931 = vshrl.u32 %v4930, 7
        %v4932 = vsub.s32 0, %v4931
        %v4933 = vrot.slane %v419, %v4932
        %v4934 = vlaneseq
        %v4935 = vshrl.u32 %v4934, 7
        %v4936 = vsub.s32 0, %v4935
        %v4937 = vrot.slane %v420, %v4936
        %vm4938 = vcmp.eq.s32.totalorder %v426, %v4933
        %vm4939 = vcmp.eq.s32.totalorder %v426, %v4937
        %vm4940 = vcmp.eq.s32.totalorder %v427, %v4933
        %vm4941 = vcmp.eq.s32.totalorder %v427, %v4937
        %vm4942 = vcmp.eq.s32.totalorder %v428, %v4933
        %vm4943 = vcmp.eq.s32.totalorder %v428, %v4937
        %v4944 = vlaneseq
        %v4945 = vshrl.u32 %v4944, 7
        %v4946 = vsub.s32 0, %v4945
        %v4947 = vrot.slane %v352, %v4946
        %v4948 = vlaneseq
        %v4949 = vshrl.u32 %v4948, 7
        %v4950 = vsub.s32 0, %v4949
        %v4951 = vrot.slane %v353, %v4950
        %v4952 = vsel %vm4938, %v4947, 0.0
        %v4953 = vsel %vm4939, %v4951, 0.0
        %v4954 = vsel %vm4940, %v4947, 0.0
        %v4955 = vsel %vm4941, %v4951, 0.0
        %v4956 = vsel %vm4942, %v4947, 0.0
        %v4957 = vsel %vm4943, %v4951, 0.0
        %v4958 = vadd.f32 %v4924, %v4952
        %v4959 = vadd.f32 %v4925, %v4953
        %v4960 = vadd.f32 %v4926, %v4954
        %v4961 = vadd.f32 %v4927, %v4955
        %v4962 = vadd.f32 %v4928, %v4956
        %v4963 = vadd.f32 %v4929, %v4957
        %v4964 = vpack.c.bf16 %v4960, %v4958
        %v4965 = vpack.c.bf16 %v4961, %v4959
        %v4966 = vpack.c.bf16 %v4962, %v4962
        %v4967 = vpack.c.bf16 %v4963, %v4963
        %v4968 = vld [vmem:[%s261] sm:$0xf]
        %v4969 = vld [vmem:[%s261 + $0x4] sm:$0xf]
        %v4970 = vld [vmem:[%s261 + $0x8] sm:$0xf]
        %v4971 = vld [vmem:[%s261 + $0xc] sm:$0xf]
        %v4972 = vld [vmem:[%s261 + $0x10] sm:$0xf]
        %v4973 = vld [vmem:[%s261 + $0x14] sm:$0xf]
        %v4974 = vld [vmem:[%s261 + $0x18] sm:$0xf]
        %v4975 = vld [vmem:[%s261 + $0x1c] sm:$0xf]
        %v4976 = vld [vmem:[%s261 + $0x20] sm:$0xf]
        %v4977 = vld [vmem:[%s261 + $0x24] sm:$0xf]
        %v4978 = vld [vmem:[%s261 + $0x28] sm:$0xf]
        %v4979 = vld [vmem:[%s261 + $0x2c] sm:$0xf]
        %v4980 = vld [vmem:[%s261 + $0x30] sm:$0xf]
        %v4981 = vld [vmem:[%s261 + $0x34] sm:$0xf]
        %v4982 = vld [vmem:[%s261 + $0x38] sm:$0xf]
        %v4983 = vld [vmem:[%s261 + $0x3c] sm:$0xf]
        %v4984 = vld [vmem:[%s261 + $0x40] sm:$0xf]
        %v4985 = vld [vmem:[%s261 + $0x44] sm:$0xf]
        %v4986 = vld [vmem:[%s261 + $0x48] sm:$0xf]
        %v4987 = vld [vmem:[%s261 + $0x4c] sm:$0xf]
        %v4988 = vld [vmem:[%s261 + $0x50] sm:$0xf]
        %v4989 = vld [vmem:[%s261 + $0x54] sm:$0xf]
        %v4990 = vld [vmem:[%s261 + $0x58] sm:$0xf]
        %v4991 = vld [vmem:[%s261 + $0x5c] sm:$0xf]
        %v5016 = vunpack.c.l.b16 %v4968
        %v5017 = vunpack.c.l.b16 %v4969
        %v5018 = vunpack.c.l.b16 %v4970
        %v5019 = vunpack.c.l.b16 %v4971
        %v5020 = vunpack.c.l.b16 %v4972
        %v5021 = vunpack.c.l.b16 %v4973
        %v5022 = vunpack.c.l.b16 %v4974
        %v5023 = vunpack.c.l.b16 %v4975
        %v5024 = vunpack.c.l.b16 %v4976
        %v5025 = vunpack.c.l.b16 %v4977
        %v5026 = vunpack.c.l.b16 %v4978
        %v5027 = vunpack.c.l.b16 %v4979
        %v5028 = vunpack.c.l.b16 %v4980
        %v5029 = vunpack.c.l.b16 %v4981
        %v5030 = vunpack.c.l.b16 %v4982
        %v5031 = vunpack.c.l.b16 %v4983
        %v5032 = vunpack.c.l.b16 %v4984
        %v5033 = vunpack.c.l.b16 %v4985
        %v5034 = vunpack.c.l.b16 %v4986
        %v5035 = vunpack.c.l.b16 %v4987
        %v5036 = vunpack.c.l.b16 %v4988
        %v5037 = vunpack.c.l.b16 %v4989
        %v5038 = vunpack.c.l.b16 %v4990
        %v5039 = vunpack.c.l.b16 %v4991
        %v5040 = vpack.c.b16 %v5017, %v5016
        %v5041 = vpack.c.b16 %v5019, %v5018
        %v5042 = vpack.c.b16 %v5021, %v5020
        %v5043 = vpack.c.b16 %v5023, %v5022
        %v5044 = vpack.c.b16 %v5025, %v5024
        %v5045 = vpack.c.b16 %v5027, %v5026
        %v5046 = vpack.c.b16 %v5029, %v5028
        %v5047 = vpack.c.b16 %v5031, %v5030
        %v5048 = vpack.c.b16 %v5033, %v5032
        %v5049 = vpack.c.b16 %v5035, %v5034
        %v5050 = vpack.c.b16 %v5037, %v5036
        %v5051 = vpack.c.b16 %v5039, %v5038
        %v5053 = vsel %vm909, %v5040, 0
        %v5056 = vsel %vm909, %v5041, 0
        %v5059 = vsel %vm909, %v5042, 0
        %v5062 = vsel %vm909, %v5043, 0
        %v5065 = vsel %vm909, %v5044, 0
        %v5068 = vsel %vm909, %v5045, 0
        %v5071 = vsel %vm909, %v5046, 0
        %v5074 = vsel %vm909, %v5047, 0
        %v5077 = vsel %vm909, %v5048, 0
        %v5080 = vsel %vm909, %v5049, 0
        %v5083 = vsel %vm909, %v5050, 0
        %v5086 = vsel %vm909, %v5051, 0
        %v5089 = vsel %vm394, %v4636, 0
        %v5092 = vsel %vm394, %v4637, 0
        %v5095 = vsel %vm394, %v4768, 0
        %v5098 = vsel %vm394, %v4769, 0
        %v5101 = vsel %vm394, %v4900, 0
        %v5104 = vsel %vm394, %v4901, 0
        %5106 = vmatprep.subr.bf16.mxu0 %v4635
        %5107 = vmatpush1.bf16.msra.mxu0 %v4634
        %5108 = vmatprep.subr.bf16.mxu0 %v5092
        %5109 = vmatpush1.bf16.msra.mxu0 %v5089
        %5110 = vmatprep.subr.bf16.mxu0 0
        %5111 = vmatpush1.bf16.msra.mxu0 0
        %5112 = vmatprep.subr.bf16.mxu0 0
        %5113 = vmatpush1.bf16.msra.mxu0 0
        %5114 = vmatprep.subr.bf16.mxu0 0
        %5115 = vmatpush1.bf16.msra.mxu0 0
        %5116 = vmatprep.subr.bf16.mxu0 0
        %5117 = vmatpush1.bf16.msra.mxu0 0
        %5118 = vmatprep.subr.bf16.mxu0 0
        %5119 = vmatpush1.bf16.msra.mxu0 0
        %5120 = vmatprep.subr.bf16.mxu0 0
        %5121 = vmatpush1.bf16.msra.mxu0 0
        %5122 = vmatprep.subr.bf16.mxu0 0
        %5123 = vmatpush1.bf16.msra.mxu0 0
        %5124 = vmatprep.subr.bf16.mxu0 0
        %5125 = vmatpush1.bf16.msra.mxu0 0
        %5126 = vmatprep.subr.bf16.mxu0 0
        %5127 = vmatpush1.bf16.msra.mxu0 0
        %5128 = vmatprep.subr.bf16.mxu0 0
        %5129 = vmatpush1.bf16.msra.mxu0 0
        %5130 = vmatprep.subr.bf16.mxu0 0
        %5131 = vmatpush1.bf16.msra.mxu0 0
        %5132 = vmatprep.subr.bf16.mxu0 0
        %5133 = vmatpush1.bf16.msra.mxu0 0
        %5134 = vmatprep.subr.bf16.mxu0 0
        %5135 = vmatpush1.bf16.msra.mxu0 0
        %5136 = vmatprep.subr.bf16.mxu0 0
        %5137 = vmatpush1.bf16.msra.mxu0 0
        %5138 = vmatprep.mubr.bf16.mxu0 0
        %5139 = vmatmul.mubr.bf16.gmra.mrb[0].mxu0 %v5053
        %v5140 = vpop.f32.mrb[0].mxu0
        %v5141 = vadd.f32 0.0, %v5140
        %v5142 = vpop.f32.mrb[0].mxu0
        %v5143 = vadd.f32 0.0, %v5142
        %v5144 = vpop.f32.mrb[0].mxu0
        %v5145 = vadd.f32 0.0, %v5144
        %v5146 = vpop.f32.mrb[0].mxu0
        %v5147 = vadd.f32 0.0, %v5146
        %5148 = vmatprep.mubr.bf16.mxu0 0
        %5149 = vmatmul.mubr.bf16.gmra.mrb[0].mxu0 %v5056
        %v5150 = vpop.f32.mrb[0].mxu0
        %v5151 = vadd.f32 0.0, %v5150
        %v5152 = vpop.f32.mrb[0].mxu0
        %v5153 = vadd.f32 0.0, %v5152
        %v5154 = vpop.f32.mrb[0].mxu0
        %v5155 = vadd.f32 0.0, %v5154
        %v5156 = vpop.f32.mrb[0].mxu0
        %v5157 = vadd.f32 0.0, %v5156
        %5158 = vmatprep.mubr.bf16.mxu0 0
        %5159 = vmatmul.mubr.bf16.gmra.mrb[0].mxu0 %v5059
        %v5160 = vpop.f32.mrb[0].mxu0
        %v5161 = vadd.f32 0.0, %v5160
        %v5162 = vpop.f32.mrb[0].mxu0
        %v5163 = vadd.f32 0.0, %v5162
        %v5164 = vpop.f32.mrb[0].mxu0
        %v5165 = vadd.f32 0.0, %v5164
        %v5166 = vpop.f32.mrb[0].mxu0
        %v5167 = vadd.f32 0.0, %v5166
        %5168 = vmatprep.mubr.bf16.mxu0 0
        %5169 = vmatmul.mubr.bf16.gmra.mrb[0].mxu0 %v5062
        %v5170 = vpop.f32.mrb[0].mxu0
        %v5171 = vadd.f32 0.0, %v5170
        %v5172 = vpop.f32.mrb[0].mxu0
        %v5173 = vadd.f32 0.0, %v5172
        %v5174 = vpop.f32.mrb[0].mxu0
        %v5175 = vadd.f32 0.0, %v5174
        %v5176 = vpop.f32.mrb[0].mxu0
        %v5177 = vadd.f32 0.0, %v5176
        %5178 = vmatprep.mubr.bf16.mxu0 0
        %5179 = vmatmul.mubr.bf16.gmra.mrb[0].mxu0 %v5065
        %v5180 = vpop.f32.mrb[0].mxu0
        %v5181 = vadd.f32 0.0, %v5180
        %v5182 = vpop.f32.mrb[0].mxu0
        %v5183 = vadd.f32 0.0, %v5182
        %v5184 = vpop.f32.mrb[0].mxu0
        %v5185 = vadd.f32 0.0, %v5184
        %v5186 = vpop.f32.mrb[0].mxu0
        %v5187 = vadd.f32 0.0, %v5186
        %5188 = vmatprep.mubr.bf16.mxu0 0
        %5189 = vmatmul.mubr.bf16.gmra.mrb[0].mxu0 %v5068
        %v5190 = vpop.f32.mrb[0].mxu0
        %v5191 = vadd.f32 0.0, %v5190
        %v5192 = vpop.f32.mrb[0].mxu0
        %v5193 = vadd.f32 0.0, %v5192
        %v5194 = vpop.f32.mrb[0].mxu0
        %v5195 = vadd.f32 0.0, %v5194
        %v5196 = vpop.f32.mrb[0].mxu0
        %v5197 = vadd.f32 0.0, %v5196
        %5198 = vmatprep.mubr.bf16.mxu0 0
        %5199 = vmatmul.mubr.bf16.gmra.mrb[0].mxu0 %v5071
        %v5200 = vpop.f32.mrb[0].mxu0
        %v5201 = vadd.f32 0.0, %v5200
        %v5202 = vpop.f32.mrb[0].mxu0
        %v5203 = vadd.f32 0.0, %v5202
        %v5204 = vpop.f32.mrb[0].mxu0
        %v5205 = vadd.f32 0.0, %v5204
        %v5206 = vpop.f32.mrb[0].mxu0
        %v5207 = vadd.f32 0.0, %v5206
        %5208 = vmatprep.mubr.bf16.mxu0 0
        %5209 = vmatmul.mubr.bf16.gmra.mrb[0].mxu0 %v5074
        %v5210 = vpop.f32.mrb[0].mxu0
        %v5211 = vadd.f32 0.0, %v5210
        %v5212 = vpop.f32.mrb[0].mxu0
        %v5213 = vadd.f32 0.0, %v5212
        %v5214 = vpop.f32.mrb[0].mxu0
        %v5215 = vadd.f32 0.0, %v5214
        %v5216 = vpop.f32.mrb[0].mxu0
        %v5217 = vadd.f32 0.0, %v5216
        %5218 = vmatprep.mubr.bf16.mxu0 0
        %5219 = vmatmul.mubr.bf16.gmra.mrb[0].mxu0 %v5077
        %v5220 = vpop.f32.mrb[0].mxu0
        %v5221 = vadd.f32 0.0, %v5220
        %v5222 = vpop.f32.mrb[0].mxu0
        %v5223 = vadd.f32 0.0, %v5222
        %v5224 = vpop.f32.mrb[0].mxu0
        %v5225 = vadd.f32 0.0, %v5224
        %v5226 = vpop.f32.mrb[0].mxu0
        %v5227 = vadd.f32 0.0, %v5226
        %5228 = vmatprep.mubr.bf16.mxu0 0
        %5229 = vmatmul.mubr.bf16.gmra.mrb[0].mxu0 %v5080
        %v5230 = vpop.f32.mrb[0].mxu0
        %v5231 = vadd.f32 0.0, %v5230
        %v5232 = vpop.f32.mrb[0].mxu0
        %v5233 = vadd.f32 0.0, %v5232
        %v5234 = vpop.f32.mrb[0].mxu0
        %v5235 = vadd.f32 0.0, %v5234
        %v5236 = vpop.f32.mrb[0].mxu0
        %v5237 = vadd.f32 0.0, %v5236
        %5238 = vmatprep.mubr.bf16.mxu0 0
        %5239 = vmatmul.mubr.bf16.gmra.mrb[0].mxu0 %v5083
        %v5240 = vpop.f32.mrb[0].mxu0
        %v5241 = vadd.f32 0.0, %v5240
        %v5242 = vpop.f32.mrb[0].mxu0
        %v5243 = vadd.f32 0.0, %v5242
        %v5244 = vpop.f32.mrb[0].mxu0
        %v5245 = vadd.f32 0.0, %v5244
        %v5246 = vpop.f32.mrb[0].mxu0
        %v5247 = vadd.f32 0.0, %v5246
        %5248 = vmatprep.mubr.bf16.mxu0 0
        %5249 = vmatmul.mubr.bf16.gmra.mrb[0].mxu0 %v5086
        %v5250 = vpop.f32.mrb[0].mxu0
        %v5251 = vadd.f32 0.0, %v5250
        %v5252 = vpop.f32.mrb[0].mxu0
        %v5253 = vadd.f32 0.0, %v5252
        %v5254 = vpop.f32.mrb[0].mxu0
        %v5255 = vadd.f32 0.0, %v5254
        %v5256 = vpop.f32.mrb[0].mxu0
        %v5257 = vadd.f32 0.0, %v5256
        %5258 = vdwg.mxu0
        %5259 = vmatprep.subr.bf16.mxu0 %v4767
        %5260 = vmatpush1.bf16.msra.mxu0 %v4766
        %5261 = vmatprep.subr.bf16.mxu0 %v5098
        %5262 = vmatpush1.bf16.msra.mxu0 %v5095
        %5263 = vmatprep.subr.bf16.mxu0 0
        %5264 = vmatpush1.bf16.msra.mxu0 0
        %5265 = vmatprep.subr.bf16.mxu0 0
        %5266 = vmatpush1.bf16.msra.mxu0 0
        %5267 = vmatprep.subr.bf16.mxu0 0
        %5268 = vmatpush1.bf16.msra.mxu0 0
        %5269 = vmatprep.subr.bf16.mxu0 0
        %5270 = vmatpush1.bf16.msra.mxu0 0
        %5271 = vmatprep.subr.bf16.mxu0 0
        %5272 = vmatpush1.bf16.msra.mxu0 0
        %5273 = vmatprep.subr.bf16.mxu0 0
        %5274 = vmatpush1.bf16.msra.mxu0 0
        %5275 = vmatprep.subr.bf16.mxu0 0
        %5276 = vmatpush1.bf16.msra.mxu0 0
        %5277 = vmatprep.subr.bf16.mxu0 0
        %5278 = vmatpush1.bf16.msra.mxu0 0
        %5279 = vmatprep.subr.bf16.mxu0 0
        %5280 = vmatpush1.bf16.msra.mxu0 0
        %5281 = vmatprep.subr.bf16.mxu0 0
        %5282 = vmatpush1.bf16.msra.mxu0 0
        %5283 = vmatprep.subr.bf16.mxu0 0
        %5284 = vmatpush1.bf16.msra.mxu0 0
        %5285 = vmatprep.subr.bf16.mxu0 0
        %5286 = vmatpush1.bf16.msra.mxu0 0
        %5287 = vmatprep.subr.bf16.mxu0 0
        %5288 = vmatpush1.bf16.msra.mxu0 0
        %5289 = vmatprep.subr.bf16.mxu0 0
        %5290 = vmatpush1.bf16.msra.mxu0 0
        %5291 = vmatprep.mubr.bf16.mxu0 0
        %5292 = vmatmul.mubr.bf16.gmra.mrb[0].mxu0 %v5053
        %v5293 = vpop.f32.mrb[0].mxu0
        %v5294 = vadd.f32 0.0, %v5293
        %v5295 = vpop.f32.mrb[0].mxu0
        %v5296 = vadd.f32 0.0, %v5295
        %v5297 = vpop.f32.mrb[0].mxu0
        %v5298 = vadd.f32 0.0, %v5297
        %v5299 = vpop.f32.mrb[0].mxu0
        %v5300 = vadd.f32 0.0, %v5299
        %5301 = vmatprep.mubr.bf16.mxu0 0
        %5302 = vmatmul.mubr.bf16.gmra.mrb[0].mxu0 %v5056
        %v5303 = vpop.f32.mrb[0].mxu0
        %v5304 = vadd.f32 0.0, %v5303
        %v5305 = vpop.f32.mrb[0].mxu0
        %v5306 = vadd.f32 0.0, %v5305
        %v5307 = vpop.f32.mrb[0].mxu0
        %v5308 = vadd.f32 0.0, %v5307
        %v5309 = vpop.f32.mrb[0].mxu0
        %v5310 = vadd.f32 0.0, %v5309
        %5311 = vmatprep.mubr.bf16.mxu0 0
        %5312 = vmatmul.mubr.bf16.gmra.mrb[0].mxu0 %v5059
        %v5313 = vpop.f32.mrb[0].mxu0
        %v5314 = vadd.f32 0.0, %v5313
        %v5315 = vpop.f32.mrb[0].mxu0
        %v5316 = vadd.f32 0.0, %v5315
        %v5317 = vpop.f32.mrb[0].mxu0
        %v5318 = vadd.f32 0.0, %v5317
        %v5319 = vpop.f32.mrb[0].mxu0
        %v5320 = vadd.f32 0.0, %v5319
        %5321 = vmatprep.mubr.bf16.mxu0 0
        %5322 = vmatmul.mubr.bf16.gmra.mrb[0].mxu0 %v5062
        %v5323 = vpop.f32.mrb[0].mxu0
        %v5324 = vadd.f32 0.0, %v5323
        %v5325 = vpop.f32.mrb[0].mxu0
        %v5326 = vadd.f32 0.0, %v5325
        %v5327 = vpop.f32.mrb[0].mxu0
        %v5328 = vadd.f32 0.0, %v5327
        %v5329 = vpop.f32.mrb[0].mxu0
        %v5330 = vadd.f32 0.0, %v5329
        %5331 = vmatprep.mubr.bf16.mxu0 0
        %5332 = vmatmul.mubr.bf16.gmra.mrb[0].mxu0 %v5065
        %v5333 = vpop.f32.mrb[0].mxu0
        %v5334 = vadd.f32 0.0, %v5333
        %v5335 = vpop.f32.mrb[0].mxu0
        %v5336 = vadd.f32 0.0, %v5335
        %v5337 = vpop.f32.mrb[0].mxu0
        %v5338 = vadd.f32 0.0, %v5337
        %v5339 = vpop.f32.mrb[0].mxu0
        %v5340 = vadd.f32 0.0, %v5339
        %5341 = vmatprep.mubr.bf16.mxu0 0
        %5342 = vmatmul.mubr.bf16.gmra.mrb[0].mxu0 %v5068
        %v5343 = vpop.f32.mrb[0].mxu0
        %v5344 = vadd.f32 0.0, %v5343
        %v5345 = vpop.f32.mrb[0].mxu0
        %v5346 = vadd.f32 0.0, %v5345
        %v5347 = vpop.f32.mrb[0].mxu0
        %v5348 = vadd.f32 0.0, %v5347
        %v5349 = vpop.f32.mrb[0].mxu0
        %v5350 = vadd.f32 0.0, %v5349
        %5351 = vmatprep.mubr.bf16.mxu0 0
        %5352 = vmatmul.mubr.bf16.gmra.mrb[0].mxu0 %v5071
        %v5353 = vpop.f32.mrb[0].mxu0
        %v5354 = vadd.f32 0.0, %v5353
        %v5355 = vpop.f32.mrb[0].mxu0
        %v5356 = vadd.f32 0.0, %v5355
        %v5357 = vpop.f32.mrb[0].mxu0
        %v5358 = vadd.f32 0.0, %v5357
        %v5359 = vpop.f32.mrb[0].mxu0
        %v5360 = vadd.f32 0.0, %v5359
        %5361 = vmatprep.mubr.bf16.mxu0 0
        %5362 = vmatmul.mubr.bf16.gmra.mrb[0].mxu0 %v5074
        %v5363 = vpop.f32.mrb[0].mxu0
        %v5364 = vadd.f32 0.0, %v5363
        %v5365 = vpop.f32.mrb[0].mxu0
        %v5366 = vadd.f32 0.0, %v5365
        %v5367 = vpop.f32.mrb[0].mxu0
        %v5368 = vadd.f32 0.0, %v5367
        %v5369 = vpop.f32.mrb[0].mxu0
        %v5370 = vadd.f32 0.0, %v5369
        %5371 = vmatprep.mubr.bf16.mxu0 0
        %5372 = vmatmul.mubr.bf16.gmra.mrb[0].mxu0 %v5077
        %v5373 = vpop.f32.mrb[0].mxu0
        %v5374 = vadd.f32 0.0, %v5373
        %v5375 = vpop.f32.mrb[0].mxu0
        %v5376 = vadd.f32 0.0, %v5375
        %v5377 = vpop.f32.mrb[0].mxu0
        %v5378 = vadd.f32 0.0, %v5377
        %v5379 = vpop.f32.mrb[0].mxu0
        %v5380 = vadd.f32 0.0, %v5379
        %5381 = vmatprep.mubr.bf16.mxu0 0
        %5382 = vmatmul.mubr.bf16.gmra.mrb[0].mxu0 %v5080
        %v5383 = vpop.f32.mrb[0].mxu0
        %v5384 = vadd.f32 0.0, %v5383
        %v5385 = vpop.f32.mrb[0].mxu0
        %v5386 = vadd.f32 0.0, %v5385
        %v5387 = vpop.f32.mrb[0].mxu0
        %v5388 = vadd.f32 0.0, %v5387
        %v5389 = vpop.f32.mrb[0].mxu0
        %v5390 = vadd.f32 0.0, %v5389
        %5391 = vmatprep.mubr.bf16.mxu0 0
        %5392 = vmatmul.mubr.bf16.gmra.mrb[0].mxu0 %v5083
        %v5393 = vpop.f32.mrb[0].mxu0
        %v5394 = vadd.f32 0.0, %v5393
        %v5395 = vpop.f32.mrb[0].mxu0
        %v5396 = vadd.f32 0.0, %v5395
        %v5397 = vpop.f32.mrb[0].mxu0
        %v5398 = vadd.f32 0.0, %v5397
        %v5399 = vpop.f32.mrb[0].mxu0
        %v5400 = vadd.f32 0.0, %v5399
        %5401 = vmatprep.mubr.bf16.mxu0 0
        %5402 = vmatmul.mubr.bf16.gmra.mrb[0].mxu0 %v5086
        %v5403 = vpop.f32.mrb[0].mxu0
        %v5404 = vadd.f32 0.0, %v5403
        %v5405 = vpop.f32.mrb[0].mxu0
        %v5406 = vadd.f32 0.0, %v5405
        %v5407 = vpop.f32.mrb[0].mxu0
        %v5408 = vadd.f32 0.0, %v5407
        %v5409 = vpop.f32.mrb[0].mxu0
        %v5410 = vadd.f32 0.0, %v5409
        %5411 = vdwg.mxu0
        %5412 = vmatprep.subr.bf16.mxu0 %v4899
        %5413 = vmatpush1.bf16.msra.mxu0 %v4898
        %5414 = vmatprep.subr.bf16.mxu0 %v5104
        %5415 = vmatpush1.bf16.msra.mxu0 %v5101
        %5416 = vmatprep.subr.bf16.mxu0 0
        %5417 = vmatpush1.bf16.msra.mxu0 0
        %5418 = vmatprep.subr.bf16.mxu0 0
        %5419 = vmatpush1.bf16.msra.mxu0 0
        %5420 = vmatprep.subr.bf16.mxu0 0
        %5421 = vmatpush1.bf16.msra.mxu0 0
        %5422 = vmatprep.subr.bf16.mxu0 0
        %5423 = vmatpush1.bf16.msra.mxu0 0
        %5424 = vmatprep.subr.bf16.mxu0 0
        %5425 = vmatpush1.bf16.msra.mxu0 0
        %5426 = vmatprep.subr.bf16.mxu0 0
        %5427 = vmatpush1.bf16.msra.mxu0 0
        %5428 = vmatprep.subr.bf16.mxu0 0
        %5429 = vmatpush1.bf16.msra.mxu0 0
        %5430 = vmatprep.subr.bf16.mxu0 0
        %5431 = vmatpush1.bf16.msra.mxu0 0
        %5432 = vmatprep.subr.bf16.mxu0 0
        %5433 = vmatpush1.bf16.msra.mxu0 0
        %5434 = vmatprep.subr.bf16.mxu0 0
        %5435 = vmatpush1.bf16.msra.mxu0 0
        %5436 = vmatprep.subr.bf16.mxu0 0
        %5437 = vmatpush1.bf16.msra.mxu0 0
        %5438 = vmatprep.subr.bf16.mxu0 0
        %5439 = vmatpush1.bf16.msra.mxu0 0
        %5440 = vmatprep.subr.bf16.mxu0 0
        %5441 = vmatpush1.bf16.msra.mxu0 0
        %5442 = vmatprep.subr.bf16.mxu0 0
        %5443 = vmatpush1.bf16.msra.mxu0 0
        %5444 = vmatprep.mubr.bf16.mxu0 0
        %5445 = vmatmul.mubr.bf16.gmra.mrb[0].mxu0 %v5053
        %v5446 = vpop.f32.mrb[0].mxu0
        %v5447 = vadd.f32 0.0, %v5446
        %v5448 = vpop.f32.mrb[0].mxu0
        %v5449 = vadd.f32 0.0, %v5448
        %v5450 = vpop.f32.mrb[0].mxu0
        %v5451 = vadd.f32 0.0, %v5450
        %v5452 = vpop.f32.mrb[0].mxu0
        %v5453 = vadd.f32 0.0, %v5452
        %5454 = vmatprep.mubr.bf16.mxu0 0
        %5455 = vmatmul.mubr.bf16.gmra.mrb[0].mxu0 %v5056
        %v5456 = vpop.f32.mrb[0].mxu0
        %v5457 = vadd.f32 0.0, %v5456
        %v5458 = vpop.f32.mrb[0].mxu0
        %v5459 = vadd.f32 0.0, %v5458
        %v5460 = vpop.f32.mrb[0].mxu0
        %v5461 = vadd.f32 0.0, %v5460
        %v5462 = vpop.f32.mrb[0].mxu0
        %v5463 = vadd.f32 0.0, %v5462
        %5464 = vmatprep.mubr.bf16.mxu0 0
        %5465 = vmatmul.mubr.bf16.gmra.mrb[0].mxu0 %v5059
        %v5466 = vpop.f32.mrb[0].mxu0
        %v5467 = vadd.f32 0.0, %v5466
        %v5468 = vpop.f32.mrb[0].mxu0
        %v5469 = vadd.f32 0.0, %v5468
        %v5470 = vpop.f32.mrb[0].mxu0
        %v5471 = vadd.f32 0.0, %v5470
        %v5472 = vpop.f32.mrb[0].mxu0
        %v5473 = vadd.f32 0.0, %v5472
        %5474 = vmatprep.mubr.bf16.mxu0 0
        %5475 = vmatmul.mubr.bf16.gmra.mrb[0].mxu0 %v5062
        %v5476 = vpop.f32.mrb[0].mxu0
        %v5477 = vadd.f32 0.0, %v5476
        %v5478 = vpop.f32.mrb[0].mxu0
        %v5479 = vadd.f32 0.0, %v5478
        %v5480 = vpop.f32.mrb[0].mxu0
        %v5481 = vadd.f32 0.0, %v5480
        %v5482 = vpop.f32.mrb[0].mxu0
        %v5483 = vadd.f32 0.0, %v5482
        %5484 = vmatprep.mubr.bf16.mxu0 0
        %5485 = vmatmul.mubr.bf16.gmra.mrb[0].mxu0 %v5065
        %v5486 = vpop.f32.mrb[0].mxu0
        %v5487 = vadd.f32 0.0, %v5486
        %v5488 = vpop.f32.mrb[0].mxu0
        %v5489 = vadd.f32 0.0, %v5488
        %v5490 = vpop.f32.mrb[0].mxu0
        %v5491 = vadd.f32 0.0, %v5490
        %v5492 = vpop.f32.mrb[0].mxu0
        %v5493 = vadd.f32 0.0, %v5492
        %5494 = vmatprep.mubr.bf16.mxu0 0
        %5495 = vmatmul.mubr.bf16.gmra.mrb[0].mxu0 %v5068
        %v5496 = vpop.f32.mrb[0].mxu0
        %v5497 = vadd.f32 0.0, %v5496
        %v5498 = vpop.f32.mrb[0].mxu0
        %v5499 = vadd.f32 0.0, %v5498
        %v5500 = vpop.f32.mrb[0].mxu0
        %v5501 = vadd.f32 0.0, %v5500
        %v5502 = vpop.f32.mrb[0].mxu0
        %v5503 = vadd.f32 0.0, %v5502
        %5504 = vmatprep.mubr.bf16.mxu0 0
        %5505 = vmatmul.mubr.bf16.gmra.mrb[0].mxu0 %v5071
        %v5506 = vpop.f32.mrb[0].mxu0
        %v5507 = vadd.f32 0.0, %v5506
        %v5508 = vpop.f32.mrb[0].mxu0
        %v5509 = vadd.f32 0.0, %v5508
        %v5510 = vpop.f32.mrb[0].mxu0
        %v5511 = vadd.f32 0.0, %v5510
        %v5512 = vpop.f32.mrb[0].mxu0
        %v5513 = vadd.f32 0.0, %v5512
        %5514 = vmatprep.mubr.bf16.mxu0 0
        %5515 = vmatmul.mubr.bf16.gmra.mrb[0].mxu0 %v5074
        %v5516 = vpop.f32.mrb[0].mxu0
        %v5517 = vadd.f32 0.0, %v5516
        %v5518 = vpop.f32.mrb[0].mxu0
        %v5519 = vadd.f32 0.0, %v5518
        %v5520 = vpop.f32.mrb[0].mxu0
        %v5521 = vadd.f32 0.0, %v5520
        %v5522 = vpop.f32.mrb[0].mxu0
        %v5523 = vadd.f32 0.0, %v5522
        %5524 = vmatprep.mubr.bf16.mxu0 0
        %5525 = vmatmul.mubr.bf16.gmra.mrb[0].mxu0 %v5077
        %v5526 = vpop.f32.mrb[0].mxu0
        %v5527 = vadd.f32 0.0, %v5526
        %v5528 = vpop.f32.mrb[0].mxu0
        %v5529 = vadd.f32 0.0, %v5528
        %v5530 = vpop.f32.mrb[0].mxu0
        %v5531 = vadd.f32 0.0, %v5530
        %v5532 = vpop.f32.mrb[0].mxu0
        %v5533 = vadd.f32 0.0, %v5532
        %5534 = vmatprep.mubr.bf16.mxu0 0
        %5535 = vmatmul.mubr.bf16.gmra.mrb[0].mxu0 %v5080
        %v5536 = vpop.f32.mrb[0].mxu0
        %v5537 = vadd.f32 0.0, %v5536
        %v5538 = vpop.f32.mrb[0].mxu0
        %v5539 = vadd.f32 0.0, %v5538
        %v5540 = vpop.f32.mrb[0].mxu0
        %v5541 = vadd.f32 0.0, %v5540
        %v5542 = vpop.f32.mrb[0].mxu0
        %v5543 = vadd.f32 0.0, %v5542
        %5544 = vmatprep.mubr.bf16.mxu0 0
        %5545 = vmatmul.mubr.bf16.gmra.mrb[0].mxu0 %v5083
        %v5546 = vpop.f32.mrb[0].mxu0
        %v5547 = vadd.f32 0.0, %v5546
        %v5548 = vpop.f32.mrb[0].mxu0
        %v5549 = vadd.f32 0.0, %v5548
        %v5550 = vpop.f32.mrb[0].mxu0
        %v5551 = vadd.f32 0.0, %v5550
        %v5552 = vpop.f32.mrb[0].mxu0
        %v5553 = vadd.f32 0.0, %v5552
        %5554 = vmatprep.mubr.bf16.mxu0 0
        %5555 = vmatmul.mubr.bf16.gmra.mrb[0].mxu0 %v5086
        %v5556 = vpop.f32.mrb[0].mxu0
        %v5557 = vadd.f32 0.0, %v5556
        %v5558 = vpop.f32.mrb[0].mxu0
        %v5559 = vadd.f32 0.0, %v5558
        %v5560 = vpop.f32.mrb[0].mxu0
        %v5561 = vadd.f32 0.0, %v5560
        %v5562 = vpop.f32.mrb[0].mxu0
        %v5563 = vadd.f32 0.0, %v5562
        %5564 = vdwg.mxu0
        %v5565 = vpack.c.bf16 %v5145, %v5141
        %v5566 = vpack.c.bf16 %v5147, %v5143
        %v5567 = vpack.c.bf16 %v5298, %v5294
        %v5568 = vpack.c.bf16 %v5300, %v5296
        %v5569 = vpack.c.bf16 %v5451, %v5447
        %v5570 = vpack.c.bf16 %v5453, %v5449
        %v5571 = vpack.c.bf16 %v5155, %v5151
        %v5572 = vpack.c.bf16 %v5157, %v5153
        %v5573 = vpack.c.bf16 %v5308, %v5304
        %v5574 = vpack.c.bf16 %v5310, %v5306
        %v5575 = vpack.c.bf16 %v5461, %v5457
        %v5576 = vpack.c.bf16 %v5463, %v5459
        %v5577 = vpack.c.bf16 %v5165, %v5161
        %v5578 = vpack.c.bf16 %v5167, %v5163
        %v5579 = vpack.c.bf16 %v5318, %v5314
        %v5580 = vpack.c.bf16 %v5320, %v5316
        %v5581 = vpack.c.bf16 %v5471, %v5467
        %v5582 = vpack.c.bf16 %v5473, %v5469
        %v5583 = vpack.c.bf16 %v5175, %v5171
        %v5584 = vpack.c.bf16 %v5177, %v5173
        %v5585 = vpack.c.bf16 %v5328, %v5324
        %v5586 = vpack.c.bf16 %v5330, %v5326
        %v5587 = vpack.c.bf16 %v5481, %v5477
        %v5588 = vpack.c.bf16 %v5483, %v5479
        %v5589 = vpack.c.bf16 %v5185, %v5181
        %v5590 = vpack.c.bf16 %v5187, %v5183
        %v5591 = vpack.c.bf16 %v5338, %v5334
        %v5592 = vpack.c.bf16 %v5340, %v5336
        %v5593 = vpack.c.bf16 %v5491, %v5487
        %v5594 = vpack.c.bf16 %v5493, %v5489
        %v5595 = vpack.c.bf16 %v5195, %v5191
        %v5596 = vpack.c.bf16 %v5197, %v5193
        %v5597 = vpack.c.bf16 %v5348, %v5344
        %v5598 = vpack.c.bf16 %v5350, %v5346
        %v5599 = vpack.c.bf16 %v5501, %v5497
        %v5600 = vpack.c.bf16 %v5503, %v5499
        %v5601 = vpack.c.bf16 %v5205, %v5201
        %v5602 = vpack.c.bf16 %v5207, %v5203
        %v5603 = vpack.c.bf16 %v5358, %v5354
        %v5604 = vpack.c.bf16 %v5360, %v5356
        %v5605 = vpack.c.bf16 %v5511, %v5507
        %v5606 = vpack.c.bf16 %v5513, %v5509
        %v5607 = vpack.c.bf16 %v5215, %v5211
        %v5608 = vpack.c.bf16 %v5217, %v5213
        %v5609 = vpack.c.bf16 %v5368, %v5364
        %v5610 = vpack.c.bf16 %v5370, %v5366
        %v5611 = vpack.c.bf16 %v5521, %v5517
        %v5612 = vpack.c.bf16 %v5523, %v5519
        %v5613 = vpack.c.bf16 %v5225, %v5221
        %v5614 = vpack.c.bf16 %v5227, %v5223
        %v5615 = vpack.c.bf16 %v5378, %v5374
        %v5616 = vpack.c.bf16 %v5380, %v5376
        %v5617 = vpack.c.bf16 %v5531, %v5527
        %v5618 = vpack.c.bf16 %v5533, %v5529
        %v5619 = vpack.c.bf16 %v5235, %v5231
        %v5620 = vpack.c.bf16 %v5237, %v5233
        %v5621 = vpack.c.bf16 %v5388, %v5384
        %v5622 = vpack.c.bf16 %v5390, %v5386
        %v5623 = vpack.c.bf16 %v5541, %v5537
        %v5624 = vpack.c.bf16 %v5543, %v5539
        %v5625 = vpack.c.bf16 %v5245, %v5241
        %v5626 = vpack.c.bf16 %v5247, %v5243
        %v5627 = vpack.c.bf16 %v5398, %v5394
        %v5628 = vpack.c.bf16 %v5400, %v5396
        %v5629 = vpack.c.bf16 %v5551, %v5547
        %v5630 = vpack.c.bf16 %v5553, %v5549
        %v5631 = vpack.c.bf16 %v5255, %v5251
        %v5632 = vpack.c.bf16 %v5257, %v5253
        %v5633 = vpack.c.bf16 %v5408, %v5404
        %v5634 = vpack.c.bf16 %v5410, %v5406
        %v5635 = vpack.c.bf16 %v5561, %v5557
        %v5636 = vpack.c.bf16 %v5563, %v5559
        %v5637 = vmul.bf16 %v5565, %v4700
        %v5638 = vmul.bf16 %v5566, %v4701
        %v5639 = vmul.bf16 %v5571, %v4702
        %v5640 = vmul.bf16 %v5572, %v4703
        %v5641 = vunpack.c.l.bf16 %v5637
        %v5642 = vunpack.c.l.bf16 %v5638
        %v5643 = vunpack.c.h.bf16 %v5637
        %v5644 = vunpack.c.h.bf16 %v5638
        %v5645 = vunpack.c.l.bf16 %v5639
        %v5646 = vunpack.c.l.bf16 %v5640
        %v5647 = vadd.f32 %v5641, %v5643
        %v5648 = vadd.f32 %v5647, %v5645
        %v5649 = vrot.slane %v5648, 4
        %v5650 = vadd.f32 %v5648, %v5649
        %v5651 = vrot.slane %v5650, 2
        %v5652 = vadd.f32 %v5650, %v5651
        %v5653 = vrot.slane %v5652, 1
        %v5654 = vadd.f32 %v5652, %v5653
        %v5655 = vadd.f32 %v5642, %v5644
        %v5656 = vadd.f32 %v5655, %v5646
        %v5657 = vrot.slane %v5656, 4
        %v5658 = vadd.f32 %v5656, %v5657
        %v5659 = vrot.slane %v5658, 2
        %v5660 = vadd.f32 %v5658, %v5659
        %v5661 = vrot.slane %v5660, 1
        %v5662 = vadd.f32 %v5660, %v5661
        %v5663 = vpack.c.bf16 %v5654, %v5654
        %v5664 = vpack.c.bf16 %v5662, %v5662
        %v5669 = vrot.slane %v4700, 4
        %v5670 = vrot.slane %v4701, 4
        %v5671 = vrot.slane %v4702, 4
        %v5672 = vsel %vm1527, %v5669, %v5671
        %v5673 = vrot.slane %v4703, 4
        %v5674 = vsel %vm1527, %v5670, %v5673
        %v5679 = vmul.bf16 %v5571, %v5669
        %v5680 = vmul.bf16 %v5572, %v5670
        %v5681 = vmul.bf16 %v5577, %v5672
        %v5682 = vmul.bf16 %v5578, %v5674
        %v5687 = vrot.slane %v5679, 4
        %v5688 = vrot.slane %v5681, 4
        %v5689 = vsel %vm1527, %v5687, %v5688
        %v5690 = vrot.slane %v5680, 4
        %v5691 = vrot.slane %v5682, 4
        %v5692 = vsel %vm1527, %v5690, %v5691
        %v5697 = vunpack.c.l.bf16 %v5689
        %v5698 = vunpack.c.l.bf16 %v5692
        %v5699 = vunpack.c.h.bf16 %v5689
        %v5700 = vunpack.c.h.bf16 %v5692
        %v5701 = vunpack.c.l.bf16 %v5688
        %v5702 = vunpack.c.l.bf16 %v5691
        %v5703 = vadd.f32 %v5697, %v5699
        %v5704 = vadd.f32 %v5703, %v5701
        %v5705 = vrot.slane %v5704, 4
        %v5706 = vadd.f32 %v5704, %v5705
        %v5707 = vrot.slane %v5706, 2
        %v5708 = vadd.f32 %v5706, %v5707
        %v5709 = vrot.slane %v5708, 1
        %v5710 = vadd.f32 %v5708, %v5709
        %v5711 = vadd.f32 %v5698, %v5700
        %v5712 = vadd.f32 %v5711, %v5702
        %v5713 = vrot.slane %v5712, 4
        %v5714 = vadd.f32 %v5712, %v5713
        %v5715 = vrot.slane %v5714, 2
        %v5716 = vadd.f32 %v5714, %v5715
        %v5717 = vrot.slane %v5716, 1
        %v5718 = vadd.f32 %v5716, %v5717
        %v5719 = vpack.c.bf16 %v5710, %v5710
        %v5720 = vpack.c.bf16 %v5718, %v5718
        %v5721 = vmul.bf16 %v5583, %v4700
        %v5722 = vmul.bf16 %v5584, %v4701
        %v5723 = vmul.bf16 %v5589, %v4702
        %v5724 = vmul.bf16 %v5590, %v4703
        %v5725 = vunpack.c.l.bf16 %v5721
        %v5726 = vunpack.c.l.bf16 %v5722
        %v5727 = vunpack.c.h.bf16 %v5721
        %v5728 = vunpack.c.h.bf16 %v5722
        %v5729 = vunpack.c.l.bf16 %v5723
        %v5730 = vunpack.c.l.bf16 %v5724
        %v5731 = vadd.f32 %v5725, %v5727
        %v5732 = vadd.f32 %v5731, %v5729
        %v5733 = vrot.slane %v5732, 4
        %v5734 = vadd.f32 %v5732, %v5733
        %v5735 = vrot.slane %v5734, 2
        %v5736 = vadd.f32 %v5734, %v5735
        %v5737 = vrot.slane %v5736, 1
        %v5738 = vadd.f32 %v5736, %v5737
        %v5739 = vadd.f32 %v5726, %v5728
        %v5740 = vadd.f32 %v5739, %v5730
        %v5741 = vrot.slane %v5740, 4
        %v5742 = vadd.f32 %v5740, %v5741
        %v5743 = vrot.slane %v5742, 2
        %v5744 = vadd.f32 %v5742, %v5743
        %v5745 = vrot.slane %v5744, 1
        %v5746 = vadd.f32 %v5744, %v5745
        %v5747 = vpack.c.bf16 %v5738, %v5738
        %v5748 = vpack.c.bf16 %v5746, %v5746
        %v5749 = vmul.bf16 %v5589, %v5669
        %v5750 = vmul.bf16 %v5590, %v5670
        %v5751 = vmul.bf16 %v5595, %v5672
        %v5752 = vmul.bf16 %v5596, %v5674
        %v5757 = vrot.slane %v5749, 4
        %v5758 = vrot.slane %v5751, 4
        %v5759 = vsel %vm1527, %v5757, %v5758
        %v5760 = vrot.slane %v5750, 4
        %v5761 = vrot.slane %v5752, 4
        %v5762 = vsel %vm1527, %v5760, %v5761
        %v5767 = vunpack.c.l.bf16 %v5759
        %v5768 = vunpack.c.l.bf16 %v5762
        %v5769 = vunpack.c.h.bf16 %v5759
        %v5770 = vunpack.c.h.bf16 %v5762
        %v5771 = vunpack.c.l.bf16 %v5758
        %v5772 = vunpack.c.l.bf16 %v5761
        %v5773 = vadd.f32 %v5767, %v5769
        %v5774 = vadd.f32 %v5773, %v5771
        %v5775 = vrot.slane %v5774, 4
        %v5776 = vadd.f32 %v5774, %v5775
        %v5777 = vrot.slane %v5776, 2
        %v5778 = vadd.f32 %v5776, %v5777
        %v5779 = vrot.slane %v5778, 1
        %v5780 = vadd.f32 %v5778, %v5779
        %v5781 = vadd.f32 %v5768, %v5770
        %v5782 = vadd.f32 %v5781, %v5772
        %v5783 = vrot.slane %v5782, 4
        %v5784 = vadd.f32 %v5782, %v5783
        %v5785 = vrot.slane %v5784, 2
        %v5786 = vadd.f32 %v5784, %v5785
        %v5787 = vrot.slane %v5786, 1
        %v5788 = vadd.f32 %v5786, %v5787
        %v5789 = vpack.c.bf16 %v5780, %v5780
        %v5790 = vpack.c.bf16 %v5788, %v5788
        %v5791 = vmul.bf16 %v5601, %v4700
        %v5792 = vmul.bf16 %v5602, %v4701
        %v5793 = vmul.bf16 %v5607, %v4702
        %v5794 = vmul.bf16 %v5608, %v4703
        %v5795 = vunpack.c.l.bf16 %v5791
        %v5796 = vunpack.c.l.bf16 %v5792
        %v5797 = vunpack.c.h.bf16 %v5791
        %v5798 = vunpack.c.h.bf16 %v5792
        %v5799 = vunpack.c.l.bf16 %v5793
        %v5800 = vunpack.c.l.bf16 %v5794
        %v5801 = vadd.f32 %v5795, %v5797
        %v5802 = vadd.f32 %v5801, %v5799
        %v5803 = vrot.slane %v5802, 4
        %v5804 = vadd.f32 %v5802, %v5803
        %v5805 = vrot.slane %v5804, 2
        %v5806 = vadd.f32 %v5804, %v5805
        %v5807 = vrot.slane %v5806, 1
        %v5808 = vadd.f32 %v5806, %v5807
        %v5809 = vadd.f32 %v5796, %v5798
        %v5810 = vadd.f32 %v5809, %v5800
        %v5811 = vrot.slane %v5810, 4
        %v5812 = vadd.f32 %v5810, %v5811
        %v5813 = vrot.slane %v5812, 2
        %v5814 = vadd.f32 %v5812, %v5813
        %v5815 = vrot.slane %v5814, 1
        %v5816 = vadd.f32 %v5814, %v5815
        %v5817 = vpack.c.bf16 %v5808, %v5808
        %v5818 = vpack.c.bf16 %v5816, %v5816
        %v5819 = vmul.bf16 %v5607, %v5669
        %v5820 = vmul.bf16 %v5608, %v5670
        %v5821 = vmul.bf16 %v5613, %v5672
        %v5822 = vmul.bf16 %v5614, %v5674
        %v5827 = vrot.slane %v5819, 4
        %v5828 = vrot.slane %v5821, 4
        %v5829 = vsel %vm1527, %v5827, %v5828
        %v5830 = vrot.slane %v5820, 4
        %v5831 = vrot.slane %v5822, 4
        %v5832 = vsel %vm1527, %v5830, %v5831
        %v5837 = vunpack.c.l.bf16 %v5829
        %v5838 = vunpack.c.l.bf16 %v5832
        %v5839 = vunpack.c.h.bf16 %v5829
        %v5840 = vunpack.c.h.bf16 %v5832
        %v5841 = vunpack.c.l.bf16 %v5828
        %v5842 = vunpack.c.l.bf16 %v5831
        %v5843 = vadd.f32 %v5837, %v5839
        %v5844 = vadd.f32 %v5843, %v5841
        %v5845 = vrot.slane %v5844, 4
        %v5846 = vadd.f32 %v5844, %v5845
        %v5847 = vrot.slane %v5846, 2
        %v5848 = vadd.f32 %v5846, %v5847
        %v5849 = vrot.slane %v5848, 1
        %v5850 = vadd.f32 %v5848, %v5849
        %v5851 = vadd.f32 %v5838, %v5840
        %v5852 = vadd.f32 %v5851, %v5842
        %v5853 = vrot.slane %v5852, 4
        %v5854 = vadd.f32 %v5852, %v5853
        %v5855 = vrot.slane %v5854, 2
        %v5856 = vadd.f32 %v5854, %v5855
        %v5857 = vrot.slane %v5856, 1
        %v5858 = vadd.f32 %v5856, %v5857
        %v5859 = vpack.c.bf16 %v5850, %v5850
        %v5860 = vpack.c.bf16 %v5858, %v5858
        %v5861 = vmul.bf16 %v5619, %v4700
        %v5862 = vmul.bf16 %v5620, %v4701
        %v5863 = vmul.bf16 %v5625, %v4702
        %v5864 = vmul.bf16 %v5626, %v4703
        %v5865 = vunpack.c.l.bf16 %v5861
        %v5866 = vunpack.c.l.bf16 %v5862
        %v5867 = vunpack.c.h.bf16 %v5861
        %v5868 = vunpack.c.h.bf16 %v5862
        %v5869 = vunpack.c.l.bf16 %v5863
        %v5870 = vunpack.c.l.bf16 %v5864
        %v5871 = vadd.f32 %v5865, %v5867
        %v5872 = vadd.f32 %v5871, %v5869
        %v5873 = vrot.slane %v5872, 4
        %v5874 = vadd.f32 %v5872, %v5873
        %v5875 = vrot.slane %v5874, 2
        %v5876 = vadd.f32 %v5874, %v5875
        %v5877 = vrot.slane %v5876, 1
        %v5878 = vadd.f32 %v5876, %v5877
        %v5879 = vadd.f32 %v5866, %v5868
        %v5880 = vadd.f32 %v5879, %v5870
        %v5881 = vrot.slane %v5880, 4
        %v5882 = vadd.f32 %v5880, %v5881
        %v5883 = vrot.slane %v5882, 2
        %v5884 = vadd.f32 %v5882, %v5883
        %v5885 = vrot.slane %v5884, 1
        %v5886 = vadd.f32 %v5884, %v5885
        %v5887 = vpack.c.bf16 %v5878, %v5878
        %v5888 = vpack.c.bf16 %v5886, %v5886
        %v5889 = vmul.bf16 %v5625, %v5669
        %v5890 = vmul.bf16 %v5626, %v5670
        %v5891 = vmul.bf16 %v5631, %v5672
        %v5892 = vmul.bf16 %v5632, %v5674
        %v5897 = vrot.slane %v5889, 4
        %v5898 = vrot.slane %v5891, 4
        %v5899 = vsel %vm1527, %v5897, %v5898
        %v5900 = vrot.slane %v5890, 4
        %v5901 = vrot.slane %v5892, 4
        %v5902 = vsel %vm1527, %v5900, %v5901
        %v5907 = vunpack.c.l.bf16 %v5899
        %v5908 = vunpack.c.l.bf16 %v5902
        %v5909 = vunpack.c.h.bf16 %v5899
        %v5910 = vunpack.c.h.bf16 %v5902
        %v5911 = vunpack.c.l.bf16 %v5898
        %v5912 = vunpack.c.l.bf16 %v5901
        %v5913 = vadd.f32 %v5907, %v5909
        %v5914 = vadd.f32 %v5913, %v5911
        %v5915 = vrot.slane %v5914, 4
        %v5916 = vadd.f32 %v5914, %v5915
        %v5917 = vrot.slane %v5916, 2
        %v5918 = vadd.f32 %v5916, %v5917
        %v5919 = vrot.slane %v5918, 1
        %v5920 = vadd.f32 %v5918, %v5919
        %v5921 = vadd.f32 %v5908, %v5910
        %v5922 = vadd.f32 %v5921, %v5912
        %v5923 = vrot.slane %v5922, 4
        %v5924 = vadd.f32 %v5922, %v5923
        %v5925 = vrot.slane %v5924, 2
        %v5926 = vadd.f32 %v5924, %v5925
        %v5927 = vrot.slane %v5926, 1
        %v5928 = vadd.f32 %v5926, %v5927
        %v5929 = vpack.c.bf16 %v5920, %v5920
        %v5930 = vpack.c.bf16 %v5928, %v5928
        %v5931 = vsel %vm1792, %v5663, %v5719
        %v5932 = vsel %vm1792, %v5664, %v5720
        %v5935 = vsel %vm394, %v5931, %v5747
        %v5939 = vsel %vm394, %v5932, %v5748
        %v5941 = vsel %vm1805, %v5935, %v5789
        %v5942 = vsel %vm1805, %v5939, %v5790
        %v5945 = vsel %vm1808, %v5941, %v5817
        %v5949 = vsel %vm1808, %v5942, %v5818
        %v5951 = vsel %vm1819, %v5945, %v5859
        %v5952 = vsel %vm1819, %v5949, %v5860
        %v5955 = vsel %vm1822, %v5951, %v5887
        %v5959 = vsel %vm1822, %v5952, %v5888
        %v5961 = vsel %vm1832, %v5955, %v5929
        %v5962 = vsel %vm1832, %v5959, %v5930
        %v5965 = vunpack.c.l.b16 %v5961
        %v5966 = vunpack.c.l.b16 %v5962
        %v5967 = vpack.c.b16 %v5966, %v5965
        %5969 = vst [vmem:[#allocation2 + $0x30] sm:$0xff] %v5967
        %v5970 = vmul.bf16 %v5567, %v4832
        %v5971 = vmul.bf16 %v5568, %v4833
        %v5972 = vmul.bf16 %v5573, %v4834
        %v5973 = vmul.bf16 %v5574, %v4835
        %v5974 = vunpack.c.l.bf16 %v5970
        %v5975 = vunpack.c.l.bf16 %v5971
        %v5976 = vunpack.c.h.bf16 %v5970
        %v5977 = vunpack.c.h.bf16 %v5971
        %v5978 = vunpack.c.l.bf16 %v5972
        %v5979 = vunpack.c.l.bf16 %v5973
        %v5980 = vadd.f32 %v5974, %v5976
        %v5981 = vadd.f32 %v5980, %v5978
        %v5982 = vrot.slane %v5981, 4
        %v5983 = vadd.f32 %v5981, %v5982
        %v5984 = vrot.slane %v5983, 2
        %v5985 = vadd.f32 %v5983, %v5984
        %v5986 = vrot.slane %v5985, 1
        %v5987 = vadd.f32 %v5985, %v5986
        %v5988 = vadd.f32 %v5975, %v5977
        %v5989 = vadd.f32 %v5988, %v5979
        %v5990 = vrot.slane %v5989, 4
        %v5991 = vadd.f32 %v5989, %v5990
        %v5992 = vrot.slane %v5991, 2
        %v5993 = vadd.f32 %v5991, %v5992
        %v5994 = vrot.slane %v5993, 1
        %v5995 = vadd.f32 %v5993, %v5994
        %v5996 = vpack.c.bf16 %v5987, %v5987
        %v5997 = vpack.c.bf16 %v5995, %v5995
        %v6002 = vrot.slane %v4832, 4
        %v6003 = vrot.slane %v4833, 4
        %v6004 = vrot.slane %v4834, 4
        %v6005 = vsel %vm1527, %v6002, %v6004
        %v6006 = vrot.slane %v4835, 4
        %v6007 = vsel %vm1527, %v6003, %v6006
        %v6012 = vmul.bf16 %v5573, %v6002
        %v6013 = vmul.bf16 %v5574, %v6003
        %v6014 = vmul.bf16 %v5579, %v6005
        %v6015 = vmul.bf16 %v5580, %v6007
        %v6020 = vrot.slane %v6012, 4
        %v6021 = vrot.slane %v6014, 4
        %v6022 = vsel %vm1527, %v6020, %v6021
        %v6023 = vrot.slane %v6013, 4
        %v6024 = vrot.slane %v6015, 4
        %v6025 = vsel %vm1527, %v6023, %v6024
        %v6030 = vunpack.c.l.bf16 %v6022
        %v6031 = vunpack.c.l.bf16 %v6025
        %v6032 = vunpack.c.h.bf16 %v6022
        %v6033 = vunpack.c.h.bf16 %v6025
        %v6034 = vunpack.c.l.bf16 %v6021
        %v6035 = vunpack.c.l.bf16 %v6024
        %v6036 = vadd.f32 %v6030, %v6032
        %v6037 = vadd.f32 %v6036, %v6034
        %v6038 = vrot.slane %v6037, 4
        %v6039 = vadd.f32 %v6037, %v6038
        %v6040 = vrot.slane %v6039, 2
        %v6041 = vadd.f32 %v6039, %v6040
        %v6042 = vrot.slane %v6041, 1
        %v6043 = vadd.f32 %v6041, %v6042
        %v6044 = vadd.f32 %v6031, %v6033
        %v6045 = vadd.f32 %v6044, %v6035
        %v6046 = vrot.slane %v6045, 4
        %v6047 = vadd.f32 %v6045, %v6046
        %v6048 = vrot.slane %v6047, 2
        %v6049 = vadd.f32 %v6047, %v6048
        %v6050 = vrot.slane %v6049, 1
        %v6051 = vadd.f32 %v6049, %v6050
        %v6052 = vpack.c.bf16 %v6043, %v6043
        %v6053 = vpack.c.bf16 %v6051, %v6051
        %v6054 = vmul.bf16 %v5585, %v4832
        %v6055 = vmul.bf16 %v5586, %v4833
        %v6056 = vmul.bf16 %v5591, %v4834
        %v6057 = vmul.bf16 %v5592, %v4835
        %v6058 = vunpack.c.l.bf16 %v6054
        %v6059 = vunpack.c.l.bf16 %v6055
        %v6060 = vunpack.c.h.bf16 %v6054
        %v6061 = vunpack.c.h.bf16 %v6055
        %v6062 = vunpack.c.l.bf16 %v6056
        %v6063 = vunpack.c.l.bf16 %v6057
        %v6064 = vadd.f32 %v6058, %v6060
        %v6065 = vadd.f32 %v6064, %v6062
        %v6066 = vrot.slane %v6065, 4
        %v6067 = vadd.f32 %v6065, %v6066
        %v6068 = vrot.slane %v6067, 2
        %v6069 = vadd.f32 %v6067, %v6068
        %v6070 = vrot.slane %v6069, 1
        %v6071 = vadd.f32 %v6069, %v6070
        %v6072 = vadd.f32 %v6059, %v6061
        %v6073 = vadd.f32 %v6072, %v6063
        %v6074 = vrot.slane %v6073, 4
        %v6075 = vadd.f32 %v6073, %v6074
        %v6076 = vrot.slane %v6075, 2
        %v6077 = vadd.f32 %v6075, %v6076
        %v6078 = vrot.slane %v6077, 1
        %v6079 = vadd.f32 %v6077, %v6078
        %v6080 = vpack.c.bf16 %v6071, %v6071
        %v6081 = vpack.c.bf16 %v6079, %v6079
        %v6082 = vmul.bf16 %v5591, %v6002
        %v6083 = vmul.bf16 %v5592, %v6003
        %v6084 = vmul.bf16 %v5597, %v6005
        %v6085 = vmul.bf16 %v5598, %v6007
        %v6090 = vrot.slane %v6082, 4
        %v6091 = vrot.slane %v6084, 4
        %v6092 = vsel %vm1527, %v6090, %v6091
        %v6093 = vrot.slane %v6083, 4
        %v6094 = vrot.slane %v6085, 4
        %v6095 = vsel %vm1527, %v6093, %v6094
        %v6100 = vunpack.c.l.bf16 %v6092
        %v6101 = vunpack.c.l.bf16 %v6095
        %v6102 = vunpack.c.h.bf16 %v6092
        %v6103 = vunpack.c.h.bf16 %v6095
        %v6104 = vunpack.c.l.bf16 %v6091
        %v6105 = vunpack.c.l.bf16 %v6094
        %v6106 = vadd.f32 %v6100, %v6102
        %v6107 = vadd.f32 %v6106, %v6104
        %v6108 = vrot.slane %v6107, 4
        %v6109 = vadd.f32 %v6107, %v6108
        %v6110 = vrot.slane %v6109, 2
        %v6111 = vadd.f32 %v6109, %v6110
        %v6112 = vrot.slane %v6111, 1
        %v6113 = vadd.f32 %v6111, %v6112
        %v6114 = vadd.f32 %v6101, %v6103
        %v6115 = vadd.f32 %v6114, %v6105
        %v6116 = vrot.slane %v6115, 4
        %v6117 = vadd.f32 %v6115, %v6116
        %v6118 = vrot.slane %v6117, 2
        %v6119 = vadd.f32 %v6117, %v6118
        %v6120 = vrot.slane %v6119, 1
        %v6121 = vadd.f32 %v6119, %v6120
        %v6122 = vpack.c.bf16 %v6113, %v6113
        %v6123 = vpack.c.bf16 %v6121, %v6121
        %v6124 = vmul.bf16 %v5603, %v4832
        %v6125 = vmul.bf16 %v5604, %v4833
        %v6126 = vmul.bf16 %v5609, %v4834
        %v6127 = vmul.bf16 %v5610, %v4835
        %v6128 = vunpack.c.l.bf16 %v6124
        %v6129 = vunpack.c.l.bf16 %v6125
        %v6130 = vunpack.c.h.bf16 %v6124
        %v6131 = vunpack.c.h.bf16 %v6125
        %v6132 = vunpack.c.l.bf16 %v6126
        %v6133 = vunpack.c.l.bf16 %v6127
        %v6134 = vadd.f32 %v6128, %v6130
        %v6135 = vadd.f32 %v6134, %v6132
        %v6136 = vrot.slane %v6135, 4
        %v6137 = vadd.f32 %v6135, %v6136
        %v6138 = vrot.slane %v6137, 2
        %v6139 = vadd.f32 %v6137, %v6138
        %v6140 = vrot.slane %v6139, 1
        %v6141 = vadd.f32 %v6139, %v6140
        %v6142 = vadd.f32 %v6129, %v6131
        %v6143 = vadd.f32 %v6142, %v6133
        %v6144 = vrot.slane %v6143, 4
        %v6145 = vadd.f32 %v6143, %v6144
        %v6146 = vrot.slane %v6145, 2
        %v6147 = vadd.f32 %v6145, %v6146
        %v6148 = vrot.slane %v6147, 1
        %v6149 = vadd.f32 %v6147, %v6148
        %v6150 = vpack.c.bf16 %v6141, %v6141
        %v6151 = vpack.c.bf16 %v6149, %v6149
        %v6152 = vmul.bf16 %v5609, %v6002
        %v6153 = vmul.bf16 %v5610, %v6003
        %v6154 = vmul.bf16 %v5615, %v6005
        %v6155 = vmul.bf16 %v5616, %v6007
        %v6160 = vrot.slane %v6152, 4
        %v6161 = vrot.slane %v6154, 4
        %v6162 = vsel %vm1527, %v6160, %v6161
        %v6163 = vrot.slane %v6153, 4
        %v6164 = vrot.slane %v6155, 4
        %v6165 = vsel %vm1527, %v6163, %v6164
        %v6170 = vunpack.c.l.bf16 %v6162
        %v6171 = vunpack.c.l.bf16 %v6165
        %v6172 = vunpack.c.h.bf16 %v6162
        %v6173 = vunpack.c.h.bf16 %v6165
        %v6174 = vunpack.c.l.bf16 %v6161
        %v6175 = vunpack.c.l.bf16 %v6164
        %v6176 = vadd.f32 %v6170, %v6172
        %v6177 = vadd.f32 %v6176, %v6174
        %v6178 = vrot.slane %v6177, 4
        %v6179 = vadd.f32 %v6177, %v6178
        %v6180 = vrot.slane %v6179, 2
        %v6181 = vadd.f32 %v6179, %v6180
        %v6182 = vrot.slane %v6181, 1
        %v6183 = vadd.f32 %v6181, %v6182
        %v6184 = vadd.f32 %v6171, %v6173
        %v6185 = vadd.f32 %v6184, %v6175
        %v6186 = vrot.slane %v6185, 4
        %v6187 = vadd.f32 %v6185, %v6186
        %v6188 = vrot.slane %v6187, 2
        %v6189 = vadd.f32 %v6187, %v6188
        %v6190 = vrot.slane %v6189, 1
        %v6191 = vadd.f32 %v6189, %v6190
        %v6192 = vpack.c.bf16 %v6183, %v6183
        %v6193 = vpack.c.bf16 %v6191, %v6191
        %v6194 = vmul.bf16 %v5621, %v4832
        %v6195 = vmul.bf16 %v5622, %v4833
        %v6196 = vmul.bf16 %v5627, %v4834
        %v6197 = vmul.bf16 %v5628, %v4835
        %v6198 = vunpack.c.l.bf16 %v6194
        %v6199 = vunpack.c.l.bf16 %v6195
        %v6200 = vunpack.c.h.bf16 %v6194
        %v6201 = vunpack.c.h.bf16 %v6195
        %v6202 = vunpack.c.l.bf16 %v6196
        %v6203 = vunpack.c.l.bf16 %v6197
        %v6204 = vadd.f32 %v6198, %v6200
        %v6205 = vadd.f32 %v6204, %v6202
        %v6206 = vrot.slane %v6205, 4
        %v6207 = vadd.f32 %v6205, %v6206
        %v6208 = vrot.slane %v6207, 2
        %v6209 = vadd.f32 %v6207, %v6208
        %v6210 = vrot.slane %v6209, 1
        %v6211 = vadd.f32 %v6209, %v6210
        %v6212 = vadd.f32 %v6199, %v6201
        %v6213 = vadd.f32 %v6212, %v6203
        %v6214 = vrot.slane %v6213, 4
        %v6215 = vadd.f32 %v6213, %v6214
        %v6216 = vrot.slane %v6215, 2
        %v6217 = vadd.f32 %v6215, %v6216
        %v6218 = vrot.slane %v6217, 1
        %v6219 = vadd.f32 %v6217, %v6218
        %v6220 = vpack.c.bf16 %v6211, %v6211
        %v6221 = vpack.c.bf16 %v6219, %v6219
        %v6222 = vmul.bf16 %v5627, %v6002
        %v6223 = vmul.bf16 %v5628, %v6003
        %v6224 = vmul.bf16 %v5633, %v6005
        %v6225 = vmul.bf16 %v5634, %v6007
        %v6230 = vrot.slane %v6222, 4
        %v6231 = vrot.slane %v6224, 4
        %v6232 = vsel %vm1527, %v6230, %v6231
        %v6233 = vrot.slane %v6223, 4
        %v6234 = vrot.slane %v6225, 4
        %v6235 = vsel %vm1527, %v6233, %v6234
        %v6240 = vunpack.c.l.bf16 %v6232
        %v6241 = vunpack.c.l.bf16 %v6235
        %v6242 = vunpack.c.h.bf16 %v6232
        %v6243 = vunpack.c.h.bf16 %v6235
        %v6244 = vunpack.c.l.bf16 %v6231
        %v6245 = vunpack.c.l.bf16 %v6234
        %v6246 = vadd.f32 %v6240, %v6242
        %v6247 = vadd.f32 %v6246, %v6244
        %v6248 = vrot.slane %v6247, 4
        %v6249 = vadd.f32 %v6247, %v6248
        %v6250 = vrot.slane %v6249, 2
        %v6251 = vadd.f32 %v6249, %v6250
        %v6252 = vrot.slane %v6251, 1
        %v6253 = vadd.f32 %v6251, %v6252
        %v6254 = vadd.f32 %v6241, %v6243
        %v6255 = vadd.f32 %v6254, %v6245
        %v6256 = vrot.slane %v6255, 4
        %v6257 = vadd.f32 %v6255, %v6256
        %v6258 = vrot.slane %v6257, 2
        %v6259 = vadd.f32 %v6257, %v6258
        %v6260 = vrot.slane %v6259, 1
        %v6261 = vadd.f32 %v6259, %v6260
        %v6262 = vpack.c.bf16 %v6253, %v6253
        %v6263 = vpack.c.bf16 %v6261, %v6261
        %v6264 = vsel %vm1792, %v5996, %v6052
        %v6265 = vsel %vm1792, %v5997, %v6053
        %v6268 = vsel %vm394, %v6264, %v6080
        %v6272 = vsel %vm394, %v6265, %v6081
        %v6274 = vsel %vm1805, %v6268, %v6122
        %v6275 = vsel %vm1805, %v6272, %v6123
        %v6278 = vsel %vm1808, %v6274, %v6150
        %v6282 = vsel %vm1808, %v6275, %v6151
        %v6284 = vsel %vm1819, %v6278, %v6192
        %v6285 = vsel %vm1819, %v6282, %v6193
        %v6288 = vsel %vm1822, %v6284, %v6220
        %v6292 = vsel %vm1822, %v6285, %v6221
        %v6294 = vsel %vm1832, %v6288, %v6262
        %v6295 = vsel %vm1832, %v6292, %v6263
        %v6298 = vunpack.c.l.b16 %v6294
        %v6299 = vunpack.c.l.b16 %v6295
        %v6300 = vpack.c.b16 %v6299, %v6298
        %6302 = vst [vmem:[#allocation2 + $0x38] sm:$0xff] %v6300
        %v6303 = vmul.bf16 %v5569, %v4964
        %v6304 = vmul.bf16 %v5570, %v4965
        %v6305 = vmul.bf16 %v5575, %v4966
        %v6306 = vmul.bf16 %v5576, %v4967
        %v6307 = vunpack.c.l.bf16 %v6303
        %v6308 = vunpack.c.l.bf16 %v6304
        %v6309 = vunpack.c.h.bf16 %v6303
        %v6310 = vunpack.c.h.bf16 %v6304
        %v6311 = vunpack.c.l.bf16 %v6305
        %v6312 = vunpack.c.l.bf16 %v6306
        %v6313 = vadd.f32 %v6307, %v6309
        %v6314 = vadd.f32 %v6313, %v6311
        %v6315 = vrot.slane %v6314, 4
        %v6316 = vadd.f32 %v6314, %v6315
        %v6317 = vrot.slane %v6316, 2
        %v6318 = vadd.f32 %v6316, %v6317
        %v6319 = vrot.slane %v6318, 1
        %v6320 = vadd.f32 %v6318, %v6319
        %v6321 = vadd.f32 %v6308, %v6310
        %v6322 = vadd.f32 %v6321, %v6312
        %v6323 = vrot.slane %v6322, 4
        %v6324 = vadd.f32 %v6322, %v6323
        %v6325 = vrot.slane %v6324, 2
        %v6326 = vadd.f32 %v6324, %v6325
        %v6327 = vrot.slane %v6326, 1
        %v6328 = vadd.f32 %v6326, %v6327
        %v6329 = vpack.c.bf16 %v6320, %v6320
        %v6330 = vpack.c.bf16 %v6328, %v6328
        %v6335 = vrot.slane %v4964, 4
        %v6336 = vrot.slane %v4965, 4
        %v6337 = vrot.slane %v4966, 4
        %v6338 = vsel %vm1527, %v6335, %v6337
        %v6339 = vrot.slane %v4967, 4
        %v6340 = vsel %vm1527, %v6336, %v6339
        %v6345 = vmul.bf16 %v5575, %v6335
        %v6346 = vmul.bf16 %v5576, %v6336
        %v6347 = vmul.bf16 %v5581, %v6338
        %v6348 = vmul.bf16 %v5582, %v6340
        %v6353 = vrot.slane %v6345, 4
        %v6354 = vrot.slane %v6347, 4
        %v6355 = vsel %vm1527, %v6353, %v6354
        %v6356 = vrot.slane %v6346, 4
        %v6357 = vrot.slane %v6348, 4
        %v6358 = vsel %vm1527, %v6356, %v6357
        %v6363 = vunpack.c.l.bf16 %v6355
        %v6364 = vunpack.c.l.bf16 %v6358
        %v6365 = vunpack.c.h.bf16 %v6355
        %v6366 = vunpack.c.h.bf16 %v6358
        %v6367 = vunpack.c.l.bf16 %v6354
        %v6368 = vunpack.c.l.bf16 %v6357
        %v6369 = vadd.f32 %v6363, %v6365
        %v6370 = vadd.f32 %v6369, %v6367
        %v6371 = vrot.slane %v6370, 4
        %v6372 = vadd.f32 %v6370, %v6371
        %v6373 = vrot.slane %v6372, 2
        %v6374 = vadd.f32 %v6372, %v6373
        %v6375 = vrot.slane %v6374, 1
        %v6376 = vadd.f32 %v6374, %v6375
        %v6377 = vadd.f32 %v6364, %v6366
        %v6378 = vadd.f32 %v6377, %v6368
        %v6379 = vrot.slane %v6378, 4
        %v6380 = vadd.f32 %v6378, %v6379
        %v6381 = vrot.slane %v6380, 2
        %v6382 = vadd.f32 %v6380, %v6381
        %v6383 = vrot.slane %v6382, 1
        %v6384 = vadd.f32 %v6382, %v6383
        %v6385 = vpack.c.bf16 %v6376, %v6376
        %v6386 = vpack.c.bf16 %v6384, %v6384
        %v6387 = vmul.bf16 %v5587, %v4964
        %v6388 = vmul.bf16 %v5588, %v4965
        %v6389 = vmul.bf16 %v5593, %v4966
        %v6390 = vmul.bf16 %v5594, %v4967
        %v6391 = vunpack.c.l.bf16 %v6387
        %v6392 = vunpack.c.l.bf16 %v6388
        %v6393 = vunpack.c.h.bf16 %v6387
        %v6394 = vunpack.c.h.bf16 %v6388
        %v6395 = vunpack.c.l.bf16 %v6389
        %v6396 = vunpack.c.l.bf16 %v6390
        %v6397 = vadd.f32 %v6391, %v6393
        %v6398 = vadd.f32 %v6397, %v6395
        %v6399 = vrot.slane %v6398, 4
        %v6400 = vadd.f32 %v6398, %v6399
        %v6401 = vrot.slane %v6400, 2
        %v6402 = vadd.f32 %v6400, %v6401
        %v6403 = vrot.slane %v6402, 1
        %v6404 = vadd.f32 %v6402, %v6403
        %v6405 = vadd.f32 %v6392, %v6394
        %v6406 = vadd.f32 %v6405, %v6396
        %v6407 = vrot.slane %v6406, 4
        %v6408 = vadd.f32 %v6406, %v6407
        %v6409 = vrot.slane %v6408, 2
        %v6410 = vadd.f32 %v6408, %v6409
        %v6411 = vrot.slane %v6410, 1
        %v6412 = vadd.f32 %v6410, %v6411
        %v6413 = vpack.c.bf16 %v6404, %v6404
        %v6414 = vpack.c.bf16 %v6412, %v6412
        %v6415 = vmul.bf16 %v5593, %v6335
        %v6416 = vmul.bf16 %v5594, %v6336
        %v6417 = vmul.bf16 %v5599, %v6338
        %v6418 = vmul.bf16 %v5600, %v6340
        %v6423 = vrot.slane %v6415, 4
        %v6424 = vrot.slane %v6417, 4
        %v6425 = vsel %vm1527, %v6423, %v6424
        %v6426 = vrot.slane %v6416, 4
        %v6427 = vrot.slane %v6418, 4
        %v6428 = vsel %vm1527, %v6426, %v6427
        %v6433 = vunpack.c.l.bf16 %v6425
        %v6434 = vunpack.c.l.bf16 %v6428
        %v6435 = vunpack.c.h.bf16 %v6425
        %v6436 = vunpack.c.h.bf16 %v6428
        %v6437 = vunpack.c.l.bf16 %v6424
        %v6438 = vunpack.c.l.bf16 %v6427
        %v6439 = vadd.f32 %v6433, %v6435
        %v6440 = vadd.f32 %v6439, %v6437
        %v6441 = vrot.slane %v6440, 4
        %v6442 = vadd.f32 %v6440, %v6441
        %v6443 = vrot.slane %v6442, 2
        %v6444 = vadd.f32 %v6442, %v6443
        %v6445 = vrot.slane %v6444, 1
        %v6446 = vadd.f32 %v6444, %v6445
        %v6447 = vadd.f32 %v6434, %v6436
        %v6448 = vadd.f32 %v6447, %v6438
        %v6449 = vrot.slane %v6448, 4
        %v6450 = vadd.f32 %v6448, %v6449
        %v6451 = vrot.slane %v6450, 2
        %v6452 = vadd.f32 %v6450, %v6451
        %v6453 = vrot.slane %v6452, 1
        %v6454 = vadd.f32 %v6452, %v6453
        %v6455 = vpack.c.bf16 %v6446, %v6446
        %v6456 = vpack.c.bf16 %v6454, %v6454
        %v6457 = vmul.bf16 %v5605, %v4964
        %v6458 = vmul.bf16 %v5606, %v4965
        %v6459 = vmul.bf16 %v5611, %v4966
        %v6460 = vmul.bf16 %v5612, %v4967
        %v6461 = vunpack.c.l.bf16 %v6457
        %v6462 = vunpack.c.l.bf16 %v6458
        %v6463 = vunpack.c.h.bf16 %v6457
        %v6464 = vunpack.c.h.bf16 %v6458
        %v6465 = vunpack.c.l.bf16 %v6459
        %v6466 = vunpack.c.l.bf16 %v6460
        %v6467 = vadd.f32 %v6461, %v6463
        %v6468 = vadd.f32 %v6467, %v6465
        %v6469 = vrot.slane %v6468, 4
        %v6470 = vadd.f32 %v6468, %v6469
        %v6471 = vrot.slane %v6470, 2
        %v6472 = vadd.f32 %v6470, %v6471
        %v6473 = vrot.slane %v6472, 1
        %v6474 = vadd.f32 %v6472, %v6473
        %v6475 = vadd.f32 %v6462, %v6464
        %v6476 = vadd.f32 %v6475, %v6466
        %v6477 = vrot.slane %v6476, 4
        %v6478 = vadd.f32 %v6476, %v6477
        %v6479 = vrot.slane %v6478, 2
        %v6480 = vadd.f32 %v6478, %v6479
        %v6481 = vrot.slane %v6480, 1
        %v6482 = vadd.f32 %v6480, %v6481
        %v6483 = vpack.c.bf16 %v6474, %v6474
        %v6484 = vpack.c.bf16 %v6482, %v6482
        %v6485 = vmul.bf16 %v5611, %v6335
        %v6486 = vmul.bf16 %v5612, %v6336
        %v6487 = vmul.bf16 %v5617, %v6338
        %v6488 = vmul.bf16 %v5618, %v6340
        %v6493 = vrot.slane %v6485, 4
        %v6494 = vrot.slane %v6487, 4
        %v6495 = vsel %vm1527, %v6493, %v6494
        %v6496 = vrot.slane %v6486, 4
        %v6497 = vrot.slane %v6488, 4
        %v6498 = vsel %vm1527, %v6496, %v6497
        %v6503 = vunpack.c.l.bf16 %v6495
        %v6504 = vunpack.c.l.bf16 %v6498
        %v6505 = vunpack.c.h.bf16 %v6495
        %v6506 = vunpack.c.h.bf16 %v6498
        %v6507 = vunpack.c.l.bf16 %v6494
        %v6508 = vunpack.c.l.bf16 %v6497
        %v6509 = vadd.f32 %v6503, %v6505
        %v6510 = vadd.f32 %v6509, %v6507
        %v6511 = vrot.slane %v6510, 4
        %v6512 = vadd.f32 %v6510, %v6511
        %v6513 = vrot.slane %v6512, 2
        %v6514 = vadd.f32 %v6512, %v6513
        %v6515 = vrot.slane %v6514, 1
        %v6516 = vadd.f32 %v6514, %v6515
        %v6517 = vadd.f32 %v6504, %v6506
        %v6518 = vadd.f32 %v6517, %v6508
        %v6519 = vrot.slane %v6518, 4
        %v6520 = vadd.f32 %v6518, %v6519
        %v6521 = vrot.slane %v6520, 2
        %v6522 = vadd.f32 %v6520, %v6521
        %v6523 = vrot.slane %v6522, 1
        %v6524 = vadd.f32 %v6522, %v6523
        %v6525 = vpack.c.bf16 %v6516, %v6516
        %v6526 = vpack.c.bf16 %v6524, %v6524
        %v6527 = vmul.bf16 %v5623, %v4964
        %v6528 = vmul.bf16 %v5624, %v4965
        %v6529 = vmul.bf16 %v5629, %v4966
        %v6530 = vmul.bf16 %v5630, %v4967
        %v6531 = vunpack.c.l.bf16 %v6527
        %v6532 = vunpack.c.l.bf16 %v6528
        %v6533 = vunpack.c.h.bf16 %v6527
        %v6534 = vunpack.c.h.bf16 %v6528
        %v6535 = vunpack.c.l.bf16 %v6529
        %v6536 = vunpack.c.l.bf16 %v6530
        %v6537 = vadd.f32 %v6531, %v6533
        %v6538 = vadd.f32 %v6537, %v6535
        %v6539 = vrot.slane %v6538, 4
        %v6540 = vadd.f32 %v6538, %v6539
        %v6541 = vrot.slane %v6540, 2
        %v6542 = vadd.f32 %v6540, %v6541
        %v6543 = vrot.slane %v6542, 1
        %v6544 = vadd.f32 %v6542, %v6543
        %v6545 = vadd.f32 %v6532, %v6534
        %v6546 = vadd.f32 %v6545, %v6536
        %v6547 = vrot.slane %v6546, 4
        %v6548 = vadd.f32 %v6546, %v6547
        %v6549 = vrot.slane %v6548, 2
        %v6550 = vadd.f32 %v6548, %v6549
        %v6551 = vrot.slane %v6550, 1
        %v6552 = vadd.f32 %v6550, %v6551
        %v6553 = vpack.c.bf16 %v6544, %v6544
        %v6554 = vpack.c.bf16 %v6552, %v6552
        %v6555 = vmul.bf16 %v5629, %v6335
        %v6556 = vmul.bf16 %v5630, %v6336
        %v6557 = vmul.bf16 %v5635, %v6338
        %v6558 = vmul.bf16 %v5636, %v6340
        %v6563 = vrot.slane %v6555, 4
        %v6564 = vrot.slane %v6557, 4
        %v6565 = vsel %vm1527, %v6563, %v6564
        %v6566 = vrot.slane %v6556, 4
        %v6567 = vrot.slane %v6558, 4
        %v6568 = vsel %vm1527, %v6566, %v6567
        %v6573 = vunpack.c.l.bf16 %v6565
        %v6574 = vunpack.c.l.bf16 %v6568
        %v6575 = vunpack.c.h.bf16 %v6565
        %v6576 = vunpack.c.h.bf16 %v6568
        %v6577 = vunpack.c.l.bf16 %v6564
        %v6578 = vunpack.c.l.bf16 %v6567
        %v6579 = vadd.f32 %v6573, %v6575
        %v6580 = vadd.f32 %v6579, %v6577
        %v6581 = vrot.slane %v6580, 4
        %v6582 = vadd.f32 %v6580, %v6581
        %v6583 = vrot.slane %v6582, 2
        %v6584 = vadd.f32 %v6582, %v6583
        %v6585 = vrot.slane %v6584, 1
        %v6586 = vadd.f32 %v6584, %v6585
        %v6587 = vadd.f32 %v6574, %v6576
        %v6588 = vadd.f32 %v6587, %v6578
        %v6589 = vrot.slane %v6588, 4
        %v6590 = vadd.f32 %v6588, %v6589
        %v6591 = vrot.slane %v6590, 2
        %v6592 = vadd.f32 %v6590, %v6591
        %v6593 = vrot.slane %v6592, 1
        %v6594 = vadd.f32 %v6592, %v6593
        %v6595 = vpack.c.bf16 %v6586, %v6586
        %v6596 = vpack.c.bf16 %v6594, %v6594
        %v6597 = vsel %vm1792, %v6329, %v6385
        %v6598 = vsel %vm1792, %v6330, %v6386
        %v6601 = vsel %vm394, %v6597, %v6413
        %v6605 = vsel %vm394, %v6598, %v6414
        %v6607 = vsel %vm1805, %v6601, %v6455
        %v6608 = vsel %vm1805, %v6605, %v6456
        %v6611 = vsel %vm1808, %v6607, %v6483
        %v6615 = vsel %vm1808, %v6608, %v6484
        %v6617 = vsel %vm1819, %v6611, %v6525
        %v6618 = vsel %vm1819, %v6615, %v6526
        %v6621 = vsel %vm1822, %v6617, %v6553
        %v6625 = vsel %vm1822, %v6618, %v6554
        %v6627 = vsel %vm1832, %v6621, %v6595
        %v6628 = vsel %vm1832, %v6625, %v6596
        %v6631 = vunpack.c.l.b16 %v6627
        %v6632 = vunpack.c.l.b16 %v6628
        %v6633 = vpack.c.b16 %v6632, %v6631
        %6635 = vst [vmem:[#allocation2 + $0x40] sm:$0xff] %v6633
        %v6636 = vld [vmem:[%s3] sm:$0xf]
        %v6637 = vld [vmem:[#allocation2] sm:$0xff]
        %v6638 = vld [vmem:[#allocation2 + $0x8] sm:$0xff]
        %v6639 = vld [vmem:[#allocation2 + $0x10] sm:$0xff]
        %v6640 = vld [vmem:[#allocation2 + $0x18] sm:$0xff]
        %v6641 = vld [vmem:[#allocation2 + $0x20] sm:$0xff]
        %v6642 = vld [vmem:[#allocation2 + $0x28] sm:$0xff]
        %v6643 = vld [vmem:[#allocation2 + $0x30] sm:$0xff]
        %v6644 = vld [vmem:[#allocation2 + $0x38] sm:$0xff]
        %v6645 = vld [vmem:[#allocation2 + $0x40] sm:$0xff]
        %v6655 = vunpack.c.l.b16 %v6637
        %v6656 = vunpack.c.h.b16 %v6637
        %v6657 = vunpack.c.l.b16 %v6638
        %v6658 = vunpack.c.h.b16 %v6638
        %v6659 = vunpack.c.l.b16 %v6639
        %v6660 = vunpack.c.h.b16 %v6639
        %v6661 = vunpack.c.l.b16 %v6640
        %v6662 = vunpack.c.h.b16 %v6640
        %v6663 = vunpack.c.l.b16 %v6641
        %v6664 = vunpack.c.h.b16 %v6641
        %v6665 = vunpack.c.l.b16 %v6642
        %v6666 = vunpack.c.h.b16 %v6642
        %v6667 = vunpack.c.l.b16 %v6643
        %v6668 = vunpack.c.h.b16 %v6643
        %v6669 = vunpack.c.l.b16 %v6644
        %v6670 = vunpack.c.h.b16 %v6644
        %v6671 = vunpack.c.l.b16 %v6645
        %v6672 = vunpack.c.h.b16 %v6645
        %v6673 = vpack.c.b16 %v6657, %v6655
        %v6674 = vpack.c.b16 %v6658, %v6656
        %v6675 = vpack.c.b16 %v6661, %v6659
        %v6676 = vpack.c.b16 %v6662, %v6660
        %v6677 = vpack.c.b16 %v6665, %v6663
        %v6678 = vpack.c.b16 %v6666, %v6664
        %v6679 = vpack.c.b16 %v6669, %v6667
        %v6680 = vpack.c.b16 %v6670, %v6668
        %v6681 = vpack.c.b16 %v6671, %v6671
        %v6682 = vpack.c.b16 %v6672, %v6672
        %vm6691 = vcmask 588800
        %v6693 = vsel %vm6691, %v6636, 0
        %vm6695 = vcmask 1043456
        %v6697 = vsel %vm6695, %v6681, 0
        %v6700 = vsel %vm6695, %v6682, 0
        %6702 = vmatprep.subr.bf16.mxu0 %v6674
        %6703 = vmatpush1.bf16.msra.mxu0 %v6673
        %6704 = vmatprep.subr.bf16.mxu0 %v6676
        %6705 = vmatpush1.bf16.msra.mxu0 %v6675
        %6706 = vmatprep.subr.bf16.mxu0 %v6678
        %6707 = vmatpush1.bf16.msra.mxu0 %v6677
        %6708 = vmatprep.subr.bf16.mxu0 %v6680
        %6709 = vmatpush1.bf16.msra.mxu0 %v6679
        %6710 = vmatprep.subr.bf16.mxu0 %v6700
        %6711 = vmatpush1.bf16.msra.mxu0 %v6697
        %6712 = vmatprep.subr.bf16.mxu0 0
        %6713 = vmatpush1.bf16.msra.mxu0 0
        %6714 = vmatprep.subr.bf16.mxu0 0
        %6715 = vmatpush1.bf16.msra.mxu0 0
        %6716 = vmatprep.subr.bf16.mxu0 0
        %6717 = vmatpush1.bf16.msra.mxu0 0
        %6718 = vmatprep.subr.bf16.mxu0 0
        %6719 = vmatpush1.bf16.msra.mxu0 0
        %6720 = vmatprep.subr.bf16.mxu0 0
        %6721 = vmatpush1.bf16.msra.mxu0 0
        %6722 = vmatprep.subr.bf16.mxu0 0
        %6723 = vmatpush1.bf16.msra.mxu0 0
        %6724 = vmatprep.subr.bf16.mxu0 0
        %6725 = vmatpush1.bf16.msra.mxu0 0
        %6726 = vmatprep.subr.bf16.mxu0 0
        %6727 = vmatpush1.bf16.msra.mxu0 0
        %6728 = vmatprep.subr.bf16.mxu0 0
        %6729 = vmatpush1.bf16.msra.mxu0 0
        %6730 = vmatprep.subr.bf16.mxu0 0
        %6731 = vmatpush1.bf16.msra.mxu0 0
        %6732 = vmatprep.subr.bf16.mxu0 0
        %6733 = vmatpush1.bf16.msra.mxu0 0
        %6734 = vmatprep.mubr.bf16.mxu0 0
        %6735 = vmatmul.mubr.bf16.gmra.mrb[0].mxu0 %v6693
        %v6736 = vpop.f32.mrb[0].mxu0
        %v6737 = vadd.f32 0.0, %v6736
        %v6738 = vpop.f32.mrb[0].mxu0
        %v6739 = vadd.f32 0.0, %v6738
        %v6740 = vpop.f32.mrb[0].mxu0
        %v6741 = vpop.f32.mrb[0].mxu0
        %6742 = vdwg.mxu0
        %6743 = vst [vmem:[%s256] sm:$0xff] %v6737
        %6744 = vst [vmem:[%s256 + $0x8] sm:$0xff] %v6739
        %s6745 = sand.u32 %s143, 1
        %s6746 = scalar_lea.sflag [#allocation4], %s6745
        %s6747 = sand.u32 %s143, 1
        %s6748 = smul.addr %s6747, 16
        %s6749 = scalar_lea.vmem [#allocation3], %s6748
        // Predicated region
        $region37: #{tpu_custom_call.1} parent=35 // pred_check
          %p6750 = pneg %p153
        $region38: #{tpu_custom_call.1} parent=35 // pred_check_branch
          %6752 = sbr.rel (%p6750) target = $region40
        $region39: #{tpu_custom_call.1} parent=35 // pred_region
          %s6753 = smul.u32 2, %s23
          %s6755 = ssub.s32 256, 256
          %6756 = vsyncadd %s6746, %s6755
          %s6757 = smul.addr %s22, 2
          %s6758 = sadd.s32 %s6753, %s6757
          %s6759 = smul.addr %s6758, 128
          %s6760 = scalar_lea.hbm %s4, %s6759
          %s6762 = sshll.u32 %s6749, 4
          %s6763 = int_to_ptr.vmem [resolvable:$true] %s6762
          %6765 = dma.vmem_to_hbm [thread:$0]  %s6763, 256, %s6760, %s6746
        $region40: #{tpu_custom_call.1} parent=35 // pred_fallthru
          _
      $region36: #{tpu_custom_call.1} parent=5 // pred_fallthru
        _
      %p6766 = scmp.le.s32.totalorder 2, %s13
      // Predicated region
      $region41: #{tpu_custom_call.1} parent=5 // pred_check
        %p6767 = pneg %p6766
      $region42: #{tpu_custom_call.1} parent=5 // pred_check_branch
        %6769 = sbr.rel (%p6767) target = $region44
      $region43: #{tpu_custom_call.1} parent=5 // pred_region
        %s6770 = ssub.s32 %s13, 2
        // Predicated region
        $region45: #{tpu_custom_call.1} parent=43 // pred_check
          %p6771 = pneg %p159
        $region46: #{tpu_custom_call.1} parent=43 // pred_check_branch
          %6773 = sbr.rel (%p6771) target = $region48
        $region47: #{tpu_custom_call.1} parent=43 // pred_region
          %s6774 = sand.u32 %s144, 1
          %s6775 = scalar_lea.sflag [#allocation4], %s6774
          %s6776 = sand.u32 %s144, 1
          %s6777 = smul.addr %s6776, 16
          %s6778 = scalar_lea.vmem [#allocation3], %s6777
          %6779 = dma.done %s6775, 256
        $region48: #{tpu_custom_call.1} parent=43 // pred_fallthru
          _
      $region44: #{tpu_custom_call.1} parent=5 // pred_fallthru
        _
    $region6: #{tpu_custom_call.1} parent=1 // loop_footer
      %s17 = sadd.s32 1, %s13
    $region7: #{tpu_custom_call.1} parent=1 // loop_footer_branch
      %12 = sbr.rel target = $region3
    $region8: #{tpu_custom_call.1} parent=1 // loop_exit
      _
    %6780 = vsyncpa [#allocation4], 1
    %s6781 = scalar_lea.sflag [#allocation4], 1
    %6782 = vsyncpa %s6781, 1

</llo_original>
